<compile_context>
chip_gen: v7x
topology: tpu7x:2x2x1
jax: 0.10.0
libtpu: 0.0.40
codegen_flags: <defaults>
</compile_context>

<pallas_src>
import math
from functools import partial

import jax
import jax.numpy as jnp
from jax.experimental import pallas as pl
from jax.experimental.pallas import tpu as pltpu

LANE_TILE = 512          # lane tile for the big matmul / elementwise kernels
HEAD_LANE_TILE = 256     # lane tile for the fused fc1->relu->fc2 head
FUSED_BN_MAX_ELEMS = 1 << 20  # max K*N f32 elems for the single-block fused BN conv

# Set True on v6e/v7x to feed the MXU bf16 operands (f32 accumulation).  Kept
# False by default to preserve exact f32 forward semantics (v5e has no bf16 VPU
# benefit anyway).
MATMUL_BF16 = False


def _maybe_cast(v):
    return v.astype(jnp.bfloat16) if MATMUL_BF16 else v


def _apply_act(y, act):
    if act == "relu":
        return jnp.maximum(y, 0.0)
    if act == "lrelu":
        return jnp.where(y > 0, y, 0.1 * y)
    return y


# -----------------------------------------------------------------------------
# Pallas kernels (all outputs are (channels, lanes) -> lane-dense stores)
# -----------------------------------------------------------------------------
def _matmul_bias_act_kernel(w_ref, x_ref, b_ref, o_ref, *, act=None):
    y = jnp.dot(_maybe_cast(w_ref[...]), _maybe_cast(x_ref[...]),
                preferred_element_type=jnp.float32) + b_ref[...]
    o_ref[...] = _apply_act(y, act)


def _matmul_bn_lrelu_kernel(w_ref, x_ref, g_ref, bt_ref, o_ref):
    """Fused Conv(im2col matmul, bias=False) + BatchNorm3d(train) + LeakyReLU(0.1).

    Requires the WHOLE (Cout, N) conv output in one block (N = batch*spatial),
    since BatchNorm needs the full batch statistics."""
    y = jnp.dot(_maybe_cast(w_ref[...]), _maybe_cast(x_ref[...]),
                preferred_element_type=jnp.float32)          # (Cout, N)
    mean = jnp.mean(y, axis=1, keepdims=True)
    var = jnp.mean(jnp.square(y - mean), axis=1, keepdims=True)   # biased var
    yn = g_ref[...] * (y - mean) * jax.lax.rsqrt(var + 1e-5) + bt_ref[...]
    o_ref[...] = jnp.where(yn > 0, yn, 0.1 * yn)


def _add_relu_kernel(*refs):
    o_ref = refs[-1]
    acc = refs[0][...]
    for r in refs[1:-1]:
        acc = acc + r[...]
    o_ref[...] = jnp.maximum(acc, 0.0)


def _mlp_head_kernel(x_ref, w1_ref, b1_ref, w2_ref, b2_ref, o_ref):
    """Fused fc1 -> ReLU -> fc2 on a (width, lanes) tile."""
    h = jnp.dot(_maybe_cast(w1_ref[...]), _maybe_cast(x_ref[...]),
                preferred_element_type=jnp.float32) + b1_ref[...]
    h = jnp.maximum(h, 0.0)
    o_ref[...] = jnp.dot(_maybe_cast(w2_ref[...]), _maybe_cast(h),
                         preferred_element_type=jnp.float32) + b2_ref[...]


def _spectral_mix_kernel(x_ref, w_ref, o_ref):
    """Per-mode complex channel mixing (combined-real form), one grid step.

    x: (2Cin, B, M) = [xr; xi], w: (2Cin, 2Cout, M) = [[wr, wi], [-wi, wr]],
    o: (B, 2Cout, M) = [yr | yi].  y[b, o, m] = sum_i x[i, b, m] * w[i, o, m]."""
    two_cin, batch, _ = x_ref.shape
    two_cout = w_ref.shape[1]
    accs = [jnp.zeros((two_cout, x_ref.shape[2]), jnp.float32) for _ in range(batch)]
    for i in range(two_cin):                      # small, fully unrolled
        w_row = w_ref[i]                          # (2Cout, M)
        for b in range(batch):
            accs[b] = accs[b] + w_row * x_ref[i, b:b + 1, :]   # sublane broadcast
    for b in range(batch):
        o_ref[b] = accs[b]


# -----------------------------------------------------------------------------
# Pallas wrappers
# -----------------------------------------------------------------------------
def pallas_matmul_bias(w, x, b, act=None, lane_tile=LANE_TILE):
    """w:(M,K), x:(K,N), b:(M,) -> act(w @ x + b): (M,N).  N sits in lanes."""
    M, K = w.shape
    N = x.shape[1]
    tn = N if N <= lane_tile else lane_tile
    n_pad = (-N) % tn
    xp = jnp.pad(x, ((0, 0), (0, n_pad))) if n_pad else x
    Np = N + n_pad
    out = pl.pallas_call(
        partial(_matmul_bias_act_kernel, act=act),
        out_shape=jax.ShapeDtypeStruct((M, Np), jnp.float32),
        grid=(Np // tn,),
        in_specs=[
            pl.BlockSpec((M, K), lambda i: (0, 0)),
            pl.BlockSpec((K, tn), lambda i: (0, i)),
            pl.BlockSpec((M, 1), lambda i: (0, 0)),
        ],
        out_specs=pl.BlockSpec((M, tn), lambda i: (0, i)),
        compiler_params=pltpu.CompilerParams(dimension_semantics=("parallel",)),
    )(w, xp, b.reshape(M, 1))
    return out[:, :N] if n_pad else out


def fused_add_relu(*xs, lane_tile=LANE_TILE):
    """relu(sum(xs)); all xs share shape (C, ...spatial).  Lanes = B*spatial."""
    shape = xs[0].shape
    C = shape[0]
    flat = [x.reshape(C, -1) for x in xs]
    N = flat[0].shape[1]
    tn = N if N <= lane_tile else lane_tile
    n_pad = (-N) % tn
    if n_pad:
        flat = [jnp.pad(f, ((0, 0), (0, n_pad))) for f in flat]
    Np = N + n_pad
    out = pl.pallas_call(
        _add_relu_kernel,
        out_shape=jax.ShapeDtypeStruct((C, Np), jnp.float32),
        grid=(Np // tn,),
        in_specs=[pl.BlockSpec((C, tn), lambda i: (0, i)) for _ in flat],
        out_specs=pl.BlockSpec((C, tn), lambda i: (0, i)),
        compiler_params=pltpu.CompilerParams(dimension_semantics=("parallel",)),
    )(*flat)
    out = out[:, :N] if n_pad else out
    return out.reshape(shape)


def pallas_spectral_mix(x_comb, w_comb):
    """x:(2Cin,B,M), w:(2Cin,2Cout,M) -> (B,2Cout,M); single call, single step."""
    two_cin, B, M = x_comb.shape
    two_cout = w_comb.shape[1]
    return pl.pallas_call(
        _spectral_mix_kernel,
        out_shape=jax.ShapeDtypeStruct((B, two_cout, M), jnp.float32),
        grid=(1,),
        in_specs=[
            pl.BlockSpec((two_cin, B, M), lambda i: (0, 0, 0)),
            pl.BlockSpec((two_cin, two_cout, M), lambda i: (0, 0, 0)),
        ],
        out_specs=pl.BlockSpec((B, two_cout, M), lambda i: (0, 0, 0)),
        compiler_params=pltpu.CompilerParams(dimension_semantics=("arbitrary",)),
    )(x_comb, w_comb)


def mlp_head(x, p1, p2, lane_tile=HEAD_LANE_TILE):
    """Fused fc1 -> ReLU -> fc2.  x: (width, B, X, Y, T) -> (1, B, X, Y, T)."""
    C = x.shape[0]
    x2 = x.reshape(C, -1)
    N = x2.shape[1]
    H = p1["w"].shape[0]
    O = p2["w"].shape[0]
    tn = N if N <= lane_tile else lane_tile
    n_pad = (-N) % tn
    xp = jnp.pad(x2, ((0, 0), (0, n_pad))) if n_pad else x2
    Np = N + n_pad
    out = pl.pallas_call(
        _mlp_head_kernel,
        out_shape=jax.ShapeDtypeStruct((O, Np), jnp.float32),
        grid=(Np // tn,),
        in_specs=[
            pl.BlockSpec((C, tn), lambda i: (0, i)),
            pl.BlockSpec((H, C), lambda i: (0, 0)),
            pl.BlockSpec((H, 1), lambda i: (0, 0)),
            pl.BlockSpec((O, H), lambda i: (0, 0)),
            pl.BlockSpec((O, 1), lambda i: (0, 0)),
        ],
        out_specs=pl.BlockSpec((O, tn), lambda i: (0, i)),
        compiler_params=pltpu.CompilerParams(dimension_semantics=("parallel",)),
    )(xp, p1["w"], p1["b"].reshape(H, 1), p2["w"], p2["b"].reshape(O, 1))
    out = out[:, :N] if n_pad else out
    return out.reshape((O,) + x.shape[1:])


# -----------------------------------------------------------------------------
# Conv / deconv glue (channels-first im2col -> lane-dense Pallas matmul)
# -----------------------------------------------------------------------------
def _im2col_cf(x, k, stride, padding):
    """x: (Cin, B, D, H, W) -> patches (k^3*Cin, B*Do*Ho*Wo), rows = (tap, cin)."""
    Cin, B, D, H, W = x.shape
    xp = jnp.pad(x, ((0, 0), (0, 0), (padding, padding), (padding, padding),
                     (padding, padding)))
    Do = (D + 2 * padding - k) // stride + 1
    Ho = (H + 2 * padding - k) // stride + 1
    Wo = (W + 2 * padding - k) // stride + 1
    slabs = []
    for kd in range(k):
        for kh in range(k):
            for kw in range(k):
                slabs.append(
                    xp[:, :,
                       kd:kd + stride * (Do - 1) + 1:stride,
                       kh:kh + stride * (Ho - 1) + 1:stride,
                       kw:kw + stride * (Wo - 1) + 1:stride])
    patches = jnp.stack(slabs, axis=0)            # (k^3, Cin, B, Do, Ho, Wo)
    # TODO(synk): im2col stays in XLA; for production shapes an in-kernel
    # tap-reduction grid axis would avoid materializing this k^3-amplified buffer.
    return patches.reshape(k * k * k * Cin, B * Do * Ho * Wo), (Do, Ho, Wo)


def _conv_weight_2d(w):
    """(Cout, Cin, k, k, k) -> (Cout, k^3*Cin), columns ordered (tap, cin)."""
    Cout = w.shape[0]
    return jnp.transpose(w, (0, 2, 3, 4, 1)).reshape(Cout, -1)


def conv3d_cf(x, w, b, stride, padding, act=None):
    """Plain Conv3d (with bias), channels-first."""
    Cout = w.shape[0]
    patches, (Do, Ho, Wo) = _im2col_cf(x, w.shape[2], stride, padding)
    y = pallas_matmul_bias(_conv_weight_2d(w), patches, b, act=act)
    return y.reshape(Cout, x.shape[1], Do, Ho, Wo)


def conv_bn_lrelu(x, p, stride):
    """Conv3d(bias=False) + BatchNorm3d(train) + LeakyReLU(0.1), fused when the
    whole conv output fits one block (needed for the batch statistics)."""
    w = p["conv"]["w"]
    Cout = w.shape[0]
    patches, (Do, Ho, Wo) = _im2col_cf(x, w.shape[2], stride, 1)
    w2 = _conv_weight_2d(w)
    K, N = patches.shape
    if K * N <= FUSED_BN_MAX_ELEMS:
        out2d = pl.pallas_call(
            _matmul_bn_lrelu_kernel,
            out_shape=jax.ShapeDtypeStruct((Cout, N), jnp.float32),
            grid=(1,),
            in_specs=[
                pl.BlockSpec((Cout, K), lambda i: (0, 0)),
                pl.BlockSpec((K, N), lambda i: (0, 0)),
                pl.BlockSpec((Cout, 1), lambda i: (0, 0)),
                pl.BlockSpec((Cout, 1), lambda i: (0, 0)),
            ],
            out_specs=pl.BlockSpec((Cout, N), lambda i: (0, 0)),
            compiler_params=pltpu.CompilerParams(dimension_semantics=("arbitrary",)),
        )(w2, patches, p["gamma"].reshape(Cout, 1), p["beta"].reshape(Cout, 1))
    else:
        # TODO(synk): large-shape fallback keeps BatchNorm in XLA (needs global stats).
        y = pallas_matmul_bias(w2, patches, jnp.zeros((Cout,), jnp.float32))
        mean = jnp.mean(y, axis=1, keepdims=True)
        var = jnp.var(y, axis=1, keepdims=True)
        yn = (p["gamma"].reshape(Cout, 1) * (y - mean) * jax.lax.rsqrt(var + 1e-5)
              + p["beta"].reshape(Cout, 1))
        out2d = jnp.where(yn > 0, yn, 0.1 * yn)
    return out2d.reshape(Cout, x.shape[1], Do, Ho, Wo)


def deconv_block(x, p):
    """ConvTranspose3d(k=4, s=2, p=1) + LeakyReLU(0.1) via sub-pixel phase
    decomposition: 8 parity phases, each a 2x2x2 conv of the UNdilated input,
    evaluated as ONE matmul over a shared 3x3x3 im2col window, then interleaved.
    No zero-stuffed intermediate, ~2.4x fewer MACs than dilation+conv."""
    w, b = p["w"], p["b"]                          # w: (Cin, Cout, 4, 4, 4)
    Cin, B, D, H, W = x.shape
    Cout = w.shape[1]
    # Per-dim phase/tap -> original-kernel-index selection (derived from the
    # transposed-conv definition with k=4, s=2, p=1):
    #   even output (phase 0): taps [w3, w1, 0];  odd output (phase 1): [0, w2, w0]
    S = jnp.zeros((2, 3, 4), jnp.float32)
    S = S.at[0, 0, 3].set(1.0).at[0, 1, 1].set(1.0)
    S = S.at[1, 1, 2].set(1.0).at[1, 2, 0].set(1.0)
    weff = jnp.einsum("iodhw,atd,buh,cvw->abcotuvi", w, S, S, S)
    w2 = weff.reshape(8 * Cout, 27 * Cin)          # rows=(phase,o), cols=(tap,cin)
    patches, _ = _im2col_cf(x, 3, 1, 1)            # output spatial == input spatial
    bias = jnp.tile(b, 8)
    y = pallas_matmul_bias(w2, patches, bias, act="lrelu")   # (8*Cout, B*D*H*W)
    y = y.reshape(2, 2, 2, Cout, B, D, H, W)
    y = jnp.transpose(y, (3, 4, 5, 0, 6, 1, 7, 2))           # interleave phases
    return y.reshape(Cout, B, 2 * D, 2 * H, 2 * W)


def channel_mix(x, p, act=None):
    """Channel mixing on axis 0 (Linear / 1x1 Conv1d), channels-first."""
    C = x.shape[0]
    y = pallas_matmul_bias(p["w"], x.reshape(C, -1), p["b"], act=act)
    return y.reshape((p["w"].shape[0],) + x.shape[1:])


# -----------------------------------------------------------------------------
# SpectralConv3d
# -----------------------------------------------------------------------------
def spectral_conv3d(x, ws, m1, m2, m3):
    """x: (Cin, B, X, Y, T) f32 -> (Cout, B, X, Y, T) f32."""
    Cin, B, X, Y, Z = x.shape
    Cout = ws[0].shape[1]
    # TODO(synk): rFFT/irFFT stay in jnp (no Pallas FFT primitive).
    x_ft = jnp.fft.rfftn(x, axes=(-3, -2, -1))     # (Cin, B, X, Y, Zr) c64
    Zr = Z // 2 + 1
    corners = [
        (slice(0, m1), slice(0, m2)),
        (slice(X - m1, X), slice(0, m2)),
        (slice(0, m1), slice(Y - m2, Y)),
        (slice(X - m1, X), slice(Y - m2, Y)),
    ]
    Mc = m1 * m2 * m3
    xs = [x_ft[:, :, sx, sy, :m3].reshape(Cin, B, Mc) for (sx, sy) in corners]
    x_all = jnp.concatenate(xs, axis=-1)           # (Cin, B, 4Mc)
    w_all = jnp.concatenate([w.reshape(Cin, Cout, Mc) for w in ws], axis=-1)
    xr, xi = jnp.real(x_all), jnp.imag(x_all)
    wr, wi = jnp.real(w_all), jnp.imag(w_all)
    x_comb = jnp.concatenate([xr, xi], axis=0)                       # (2Cin, B, M)
    w_comb = jnp.concatenate(
        [jnp.concatenate([wr, wi], axis=1), jnp.concatenate([-wi, wr], axis=1)],
        axis=0)                                                      # (2Cin, 2Cout, M)
    y = pallas_spectral_mix(x_comb, w_comb)                          # (B, 2Cout, M)
    yc = jax.lax.complex(y[:, :Cout, :], y[:, Cout:, :])             # (B, Cout, M)
    yc = jnp.transpose(yc, (1, 0, 2))                                # (Cout, B, M)
    out_ft = jnp.zeros((Cout, B, X, Y, Zr), dtype=yc.dtype)
    for idx, (sx, sy) in enumerate(corners):
        blk = yc[:, :, idx * Mc:(idx + 1) * Mc].reshape(Cout, B, m1, m2, m3)
        out_ft = out_ft.at[:, :, sx, sy, :m3].set(blk)
    return jnp.fft.irfftn(out_ft, s=(X, Y, Z), axes=(-3, -2, -1)).astype(jnp.float32)


# -----------------------------------------------------------------------------
# U-net
# -----------------------------------------------------------------------------
def unet_forward(x, p):
    c1 = conv_bn_lrelu(x, p["conv1"], 2)
    c2 = conv_bn_lrelu(conv_bn_lrelu(c1, p["conv2"], 2), p["conv2_1"], 1)
    c3 = conv_bn_lrelu(conv_bn_lrelu(c2, p["conv3"], 2), p["conv3_1"], 1)
    r = c3
    for name in ("res1", "res2", "res3", "res4", "res5"):
        r = fused_add_relu(conv_bn_lrelu(r, p[name], 1), r)
    d2 = deconv_block(r, p["deconv2"])
    d1 = deconv_block(jnp.concatenate([c2, d2], axis=0), p["deconv1"])
    d0 = deconv_block(jnp.concatenate([c1, d1], axis=0), p["deconv0"])
    cat0 = jnp.concatenate([x, d0], axis=0)
    return conv3d_cf(cat0, p["out"]["w"], p["out"]["b"], 1, 1)


# -----------------------------------------------------------------------------
# SimpleBlock3d forward
# -----------------------------------------------------------------------------
def simple_block3d_forward(params, x, modes):
    m1, m2, m3 = modes
    a = jnp.transpose(x, (4, 0, 1, 2, 3))          # (12, B, X, Y, T) channels-first
    a = channel_mix(a, params["fc0"])              # (width, B, X, Y, T)
    for i in range(6):
        sp = params["conv"][i]
        x1 = spectral_conv3d(a, (sp["w1"], sp["w2"], sp["w3"], sp["w4"]), m1, m2, m3)
        x2 = channel_mix(a, params["w"][i])        # 1x1 Conv1d over channels
        if i >= 3:
            x3 = unet_forward(a, params["unet"][i - 3])
            a = fused_add_relu(x1, x2, x3)
        else:
            a = fused_add_relu(x1, x2)
    out = mlp_head(a, params["fc1"], params["fc2"])  # fused fc1->relu->fc2: (1,B,X,Y,T)
    return jnp.transpose(out, (1, 2, 3, 4, 0))       # (B, X, Y, T, 1)


# -----------------------------------------------------------------------------
# Deterministic parameter initialization (synthetic; mirrors module shapes)
# -----------------------------------------------------------------------------
class KeyGen:
    def __init__(self, seed):
        self.key = jax.random.PRNGKey(seed)

    def __call__(self):
        self.key, sub = jax.random.split(self.key)
        return sub


def init_params(kg, width, m1, m2, m3):
    def linear_p(cin, cout):
        s = 1.0 / math.sqrt(cin)
        return {
            "w": jax.random.uniform(kg(), (cout, cin), jnp.float32, -s, s),
            "b": jax.random.uniform(kg(), (cout,), jnp.float32, -s, s),
        }

    def spectral_p(cin, cout):
        scale = 1.0 / (cin * cout)

        def cw():
            re = scale * jax.random.uniform(kg(), (cin, cout, m1, m2, m3), jnp.float32)
            im = scale * jax.random.uniform(kg(), (cin, cout, m1, m2, m3), jnp.float32)
            return jax.lax.complex(re, im)

        return {"w1": cw(), "w2": cw(), "w3": cw(), "w4": cw()}

    def conv3d_p(cin, cout, k, bias):
        s = 1.0 / math.sqrt(cin * k ** 3)
        p = {"w": jax.random.uniform(kg(), (cout, cin, k, k, k), jnp.float32, -s, s)}
        p["b"] = (
            jax.random.uniform(kg(), (cout,), jnp.float32, -s, s)
            if bias
            else jnp.zeros((cout,), jnp.float32)
        )
        return p

    def conv_bn_p(cin, cout):
        return {
            "conv": conv3d_p(cin, cout, 3, False),
            "gamma": jnp.ones((cout,), jnp.float32),
            "beta": jnp.zeros((cout,), jnp.float32),
        }

    def deconv_p(cin, cout):
        s = 1.0 / math.sqrt(cin * 64)
        return {
            "w": jax.random.uniform(kg(), (cin, cout, 4, 4, 4), jnp.float32, -s, s),
            "b": jax.random.uniform(kg(), (cout,), jnp.float32, -s, s),
        }

    def unet_p(c):
        return {
            "conv1": conv_bn_p(c, c),
            "conv2": conv_bn_p(c, c),
            "conv2_1": conv_bn_p(c, c),
            "conv3": conv_bn_p(c, c),
            "conv3_1": conv_bn_p(c, c),
            "res1": conv_bn_p(c, c),
            "res2": conv_bn_p(c, c),
            "res3": conv_bn_p(c, c),
            "res4": conv_bn_p(c, c),
            "res5": conv_bn_p(c, c),
            "deconv2": deconv_p(c, c),
            "deconv1": deconv_p(2 * c, c),
            "deconv0": deconv_p(2 * c, c),
            "out": conv3d_p(2 * c, c, 3, True),
        }

    return {
        "fc0": linear_p(12, width),
        "conv": [spectral_p(width, width) for _ in range(6)],
        "w": [linear_p(width, width) for _ in range(6)],
        "unet": [unet_p(width) for _ in range(3)],
        "fc1": linear_p(width, 128),
        "fc2": linear_p(128, 1),
    }


# -----------------------------------------------------------------------------
if __name__ == "__main__":
    B, X, Y, T = 2, 8, 8, 8          # spatial must be divisible by 8 (3x stride-2 U-net)
    WIDTH = 8
    M1 = M2 = M3 = 2                 # Fourier modes

    kg = KeyGen(0)
    params = init_params(kg, WIDTH, M1, M2, M3)
    x = jax.random.normal(jax.random.PRNGKey(0), (B, X, Y, T, 12), dtype=jnp.float32)

    fwd = jax.jit(partial(simple_block3d_forward, modes=(M1, M2, M3)))
    out = fwd(params, x)
    out = jax.block_until_ready(out)

    assert out.shape == (B, X, Y, T, 1), out.shape
    assert out.dtype == jnp.float32
    assert bool(jnp.all(jnp.isfinite(out)))
    print("KERNEL_OK")
</pallas_src>

<mosaic_0001>
module attributes {stable_mosaic.version = 11 : i64} {
  func.func @_matmul_bias_act_kernel(%arg0: i32, %arg1: memref<8x12xf32, #tpu.memory_space<vmem>>, %arg2: memref<12x512xf32, #tpu.memory_space<vmem>>, %arg3: memref<8x1xf32, #tpu.memory_space<vmem>>, %arg4: memref<8x512xf32, #tpu.memory_space<vmem>>) attributes {dimension_semantics = [#tpu.dimension_semantics<parallel>], iteration_bounds = array<i64: 2>, scalar_prefetch = 0 : i64, scratch_operands = 0 : i64, tpu.core_type = #tpu.core_type<tc>, window_params = [{pipeline_mode = #tpu.pipeline_mode<synchronous>, transform_indices = @transform_0, window_bounds = array<i64: 8, 12>}, {transform_indices = @transform_1, window_bounds = array<i64: 12, 512>}, {pipeline_mode = #tpu.pipeline_mode<synchronous>, transform_indices = @transform_2, window_bounds = array<i64: 8, 1>}, {transform_indices = @transform_3, window_bounds = array<i64: 8, 512>}]} {
    %c0 = arith.constant 0 : index
    %c0_0 = arith.constant 0 : index
    %0 = vector.load %arg1[%c0, %c0_0] : memref<8x12xf32, #tpu.memory_space<vmem>>, vector<8x12xf32>
    %c0_1 = arith.constant 0 : index
    %c0_2 = arith.constant 0 : index
    %1 = vector.load %arg2[%c0_1, %c0_2] : memref<12x512xf32, #tpu.memory_space<vmem>>, vector<12x512xf32>
    %cst = arith.constant dense<0.000000e+00> : vector<8x512xf32>
    %2 = tpu.matmul %0, %1, %cst {dimension_numbers = #tpu.dot_dimension_numbers<[1], [0], [0], [1], [0, 0, 1, 1], [], []>} : vector<8x12xf32>, vector<12x512xf32>, vector<8x512xf32> -> vector<8x512xf32>
    %c0_3 = arith.constant 0 : index
    %c0_4 = arith.constant 0 : index
    %3 = vector.load %arg3[%c0_3, %c0_4] : memref<8x1xf32, #tpu.memory_space<vmem>>, vector<8x1xf32>
    %4 = vector.broadcast %3 : vector<8x1xf32> to vector<8x512xf32>
    %5 = arith.addf %2, %4 : vector<8x512xf32>
    %c0_5 = arith.constant 0 : index
    %c0_6 = arith.constant 0 : index
    %6 = vector.load %arg4[%c0_5, %c0_6] : memref<8x512xf32, #tpu.memory_space<vmem>>, vector<8x512xf32>
    tpu.vector_store %arg4[%c0_5, %c0_6], %5 {strides = array<i32>} : memref<8x512xf32, #tpu.memory_space<vmem>>, vector<8x512xf32>,
    return
  }
  func.func @transform_0(%arg0: i32) -> (i32, i32) {
    %c0_i32 = arith.constant 0 : i32
    %c0_i32_0 = arith.constant 0 : i32
    %c0_i32_1 = arith.constant 0 : i32
    return %c0_i32, %c0_i32_0 : i32, i32
  }
  func.func @transform_1(%arg0: i32) -> (i32, i32) {
    %c0_i32 = arith.constant 0 : i32
    %c0_i32_0 = arith.constant 0 : i32
    return %c0_i32, %arg0 : i32, i32
  }
  func.func @transform_2(%arg0: i32) -> (i32, i32) {
    %c0_i32 = arith.constant 0 : i32
    %c0_i32_0 = arith.constant 0 : i32
    %c0_i32_1 = arith.constant 0 : i32
    return %c0_i32, %c0_i32_0 : i32, i32
  }
  func.func @transform_3(%arg0: i32) -> (i32, i32) {
    %c0_i32 = arith.constant 0 : i32
    %c0_i32_0 = arith.constant 0 : i32
    return %c0_i32, %arg0 : i32, i32
  }
}

module attributes {stable_mosaic.version = 11 : i64} {
  func.func @_spectral_mix_kernel(%arg0: i32, %arg1: memref<16x2x32xf32, #tpu.memory_space<vmem>>, %arg2: memref<16x16x32xf32, #tpu.memory_space<vmem>>, %arg3: memref<2x16x32xf32, #tpu.memory_space<vmem>>) attributes {dimension_semantics = [#tpu.dimension_semantics<arbitrary>], iteration_bounds = array<i64: 1>, scalar_prefetch = 0 : i64, scratch_operands = 0 : i64, tpu.core_type = #tpu.core_type<tc>, window_params = [{pipeline_mode = #tpu.pipeline_mode<synchronous>, transform_indices = @transform_0, window_bounds = array<i64: 16, 2, 32>}, {pipeline_mode = #tpu.pipeline_mode<synchronous>, transform_indices = @transform_1, window_bounds = array<i64: 16, 16, 32>}, {pipeline_mode = #tpu.pipeline_mode<synchronous>, transform_indices = @transform_2, window_bounds = array<i64: 2, 16, 32>}]} {
    %cst = arith.constant 0.000000e+00 : f32
    %0 = vector.broadcast %cst : f32 to vector<16x32xf32>
    %cst_0 = arith.constant 0.000000e+00 : f32
    %1 = vector.broadcast %cst_0 : f32 to vector<16x32xf32>
    %c0 = arith.constant 0 : index
    %c0_1 = arith.constant 0 : index
    %c0_2 = arith.constant 0 : index
    %2 = vector.load %arg2[%c0, %c0_1, %c0_2] : memref<16x16x32xf32, #tpu.memory_space<vmem>>, vector<1x16x32xf32>
    %3 = vector.shape_cast %2 : vector<1x16x32xf32> to vector<16x32xf32>
    %c0_3 = arith.constant 0 : index
    %c0_4 = arith.constant 0 : index
    %c0_5 = arith.constant 0 : index
    %4 = vector.load %arg1[%c0_3, %c0_4, %c0_5] : memref<16x2x32xf32, #tpu.memory_space<vmem>>, vector<1x1x32xf32>
    %5 = vector.shape_cast %4 : vector<1x1x32xf32> to vector<1x32xf32>
    %6 = vector.broadcast %5 : vector<1x32xf32> to vector<16x32xf32>
    %7 = arith.mulf %3, %6 : vector<16x32xf32>
    %8 = arith.addf %0, %7 : vector<16x32xf32>
    %c0_6 = arith.constant 0 : index
    %c1 = arith.constant 1 : index
    %c0_7 = arith.constant 0 : index
    %9 = vector.load %arg1[%c0_6, %c1, %c0_7] : memref<16x2x32xf32, #tpu.memory_space<vmem>>, vector<1x1x32xf32>
    %10 = vector.shape_cast %9 : vector<1x1x32xf32> to vector<1x32xf32>
    %11 = vector.broadcast %10 : vector<1x32xf32> to vector<16x32xf32>
    %12 = arith.mulf %3, %11 : vector<16x32xf32>
    %13 = arith.addf %1, %12 : vector<16x32xf32>
    %c1_8 = arith.constant 1 : index
    %c0_9 = arith.constant 0 : index
    %c0_10 = arith.constant 0 : index
    %14 = vector.load %arg2[%c1_8, %c0_9, %c0_10] : memref<16x16x32xf32, #tpu.memory_space<vmem>>, vector<1x16x32xf32>
    %15 = vector.shape_cast %14 : vector<1x16x32xf32> to vector<16x32xf32>
    %c1_11 = arith.constant 1 : index
    %c0_12 = arith.constant 0 : index
    %c0_13 = arith.constant 0 : index
    %16 = vector.load %arg1[%c1_11, %c0_12, %c0_13] : memref<16x2x32xf32, #tpu.memory_space<vmem>>, vector<1x1x32xf32>
    %17 = vector.shape_cast %16 : vector<1x1x32xf32> to vector<1x32xf32>
    %18 = vector.broadcast %17 : vector<1x32xf32> to vector<16x32xf32>
    %19 = arith.mulf %15, %18 : vector<16x32xf32>
    %20 = arith.addf %8, %19 : vector<16x32xf32>
    %c1_14 = arith.constant 1 : index
    %c1_15 = arith.constant 1 : index
    %c0_16 = arith.constant 0 : index
    %21 = vector.load %arg1[%c1_14, %c1_15, %c0_16] : memref<16x2x32xf32, #tpu.memory_space<vmem>>, vector<1x1x32xf32>
    %22 = vector.shape_cast %21 : vector<1x1x32xf32> to vector<1x32xf32>
    %23 = vector.broadcast %22 : vector<1x32xf32> to vector<16x32xf32>
    %24 = arith.mulf %15, %23 : vector<16x32xf32>
    %25 = arith.addf %13, %24 : vector<16x32xf32>
    %c2 = arith.constant 2 : index
    %c0_17 = arith.constant 0 : index
    %c0_18 = arith.constant 0 : index
    %26 = vector.load %arg2[%c2, %c0_17, %c0_18] : memref<16x16x32xf32, #tpu.memory_space<vmem>>, vector<1x16x32xf32>
    %27 = vector.shape_cast %26 : vector<1x16x32xf32> to vector<16x32xf32>
    %c2_19 = arith.constant 2 : index
    %c0_20 = arith.constant 0 : index
    %c0_21 = arith.constant 0 : index
    %28 = vector.load %arg1[%c2_19, %c0_20, %c0_21] : memref<16x2x32xf32, #tpu.memory_space<vmem>>, vector<1x1x32xf32>
    %29 = vector.shape_cast %28 : vector<1x1x32xf32> to vector<1x32xf32>
    %30 = vector.broadcast %29 : vector<1x32xf32> to vector<16x32xf32>
    %31 = arith.mulf %27, %30 : vector<16x32xf32>
    %32 = arith.addf %20, %31 : vector<16x32xf32>
    %c2_22 = arith.constant 2 : index
    %c1_23 = arith.constant 1 : index
    %c0_24 = arith.constant 0 : index
    %33 = vector.load %arg1[%c2_22, %c1_23, %c0_24] : memref<16x2x32xf32, #tpu.memory_space<vmem>>, vector<1x1x32xf32>
    %34 = vector.shape_cast %33 : vector<1x1x32xf32> to vector<1x32xf32>
    %35 = vector.broadcast %34 : vector<1x32xf32> to vector<16x32xf32>
    %36 = arith.mulf %27, %35 : vector<16x32xf32>
    %37 = arith.addf %25, %36 : vector<16x32xf32>
    %c3 = arith.constant 3 : index
    %c0_25 = arith.constant 0 : index
    %c0_26 = arith.constant 0 : index
    %38 = vector.load %arg2[%c3, %c0_25, %c0_26] : memref<16x16x32xf32, #tpu.memory_space<vmem>>, vector<1x16x32xf32>
    %39 = vector.shape_cast %38 : vector<1x16x32xf32> to vector<16x32xf32>
    %c3_27 = arith.constant 3 : index
    %c0_28 = arith.constant 0 : index
    %c0_29 = arith.constant 0 : index
    %40 = vector.load %arg1[%c3_27, %c0_28, %c0_29] : memref<16x2x32xf32, #tpu.memory_space<vmem>>, vector<1x1x32xf32>
    %41 = vector.shape_cast %40 : vector<1x1x32xf32> to vector<1x32xf32>
    %42 = vector.broadcast %41 : vector<1x32xf32> to vector<16x32xf32>
    %43 = arith.mulf %39, %42 : vector<16x32xf32>
    %44 = arith.addf %32, %43 : vector<16x32xf32>
    %c3_30 = arith.constant 3 : index
    %c1_31 = arith.constant 1 : index
    %c0_32 = arith.constant 0 : index
    %45 = vector.load %arg1[%c3_30, %c1_31, %c0_32] : memref<16x2x32xf32, #tpu.memory_space<vmem>>, vector<1x1x32xf32>
    %46 = vector.shape_cast %45 : vector<1x1x32xf32> to vector<1x32xf32>
    %47 = vector.broadcast %46 : vector<1x32xf32> to vector<16x32xf32>
    %48 = arith.mulf %39, %47 : vector<16x32xf32>
    %49 = arith.addf %37, %48 : vector<16x32xf32>
    %c4 = arith.constant 4 : index
    %c0_33 = arith.constant 0 : index
    %c0_34 = arith.constant 0 : index
    %50 = vector.load %arg2[%c4, %c0_33, %c0_34] : memref<16x16x32xf32, #tpu.memory_space<vmem>>, vector<1x16x32xf32>
    %51 = vector.shape_cast %50 : vector<1x16x32xf32> to vector<16x32xf32>
    %c4_35 = arith.constant 4 : index
    %c0_36 = arith.constant 0 : index
    %c0_37 = arith.constant 0 : index
    %52 = vector.load %arg1[%c4_35, %c0_36, %c0_37] : memref<16x2x32xf32, #tpu.memory_space<vmem>>, vector<1x1x32xf32>
    %53 = vector.shape_cast %52 : vector<1x1x32xf32> to vector<1x32xf32>
    %54 = vector.broadcast %53 : vector<1x32xf32> to vector<16x32xf32>
    %55 = arith.mulf %51, %54 : vector<16x32xf32>
    %56 = arith.addf %44, %55 : vector<16x32xf32>
    %c4_38 = arith.constant 4 : index
    %c1_39 = arith.constant 1 : index
    %c0_40 = arith.constant 0 : index
    %57 = vector.load %arg1[%c4_38, %c1_39, %c0_40] : memref<16x2x32xf32, #tpu.memory_space<vmem>>, vector<1x1x32xf32>
    %58 = vector.shape_cast %57 : vector<1x1x32xf32> to vector<1x32xf32>
    %59 = vector.broadcast %58 : vector<1x32xf32> to vector<16x32xf32>
    %60 = arith.mulf %51, %59 : vector<16x32xf32>
    %61 = arith.addf %49, %60 : vector<16x32xf32>
    %c5 = arith.constant 5 : index
    %c0_41 = arith.constant 0 : index
    %c0_42 = arith.constant 0 : index
    %62 = vector.load %arg2[%c5, %c0_41, %c0_42] : memref<16x16x32xf32, #tpu.memory_space<vmem>>, vector<1x16x32xf32>
    %63 = vector.shape_cast %62 : vector<1x16x32xf32> to vector<16x32xf32>
    %c5_43 = arith.constant 5 : index
    %c0_44 = arith.constant 0 : index
    %c0_45 = arith.constant 0 : index
    %64 = vector.load %arg1[%c5_43, %c0_44, %c0_45] : memref<16x2x32xf32, #tpu.memory_space<vmem>>, vector<1x1x32xf32>
    %65 = vector.shape_cast %64 : vector<1x1x32xf32> to vector<1x32xf32>
    %66 = vector.broadcast %65 : vector<1x32xf32> to vector<16x32xf32>
    %67 = arith.mulf %63, %66 : vector<16x32xf32>
    %68 = arith.addf %56, %67 : vector<16x32xf32>
    %c5_46 = arith.constant 5 : index
    %c1_47 = arith.constant 1 : index
    %c0_48 = arith.constant 0 : index
    %69 = vector.load %arg1[%c5_46, %c1_47, %c0_48] : memref<16x2x32xf32, #tpu.memory_space<vmem>>, vector<1x1x32xf32>
    %70 = vector.shape_cast %69 : vector<1x1x32xf32> to vector<1x32xf32>
    %71 = vector.broadcast %70 : vector<1x32xf32> to vector<16x32xf32>
    %72 = arith.mulf %63, %71 : vector<16x32xf32>
    %73 = arith.addf %61, %72 : vector<16x32xf32>
    %c6 = arith.constant 6 : index
    %c0_49 = arith.constant 0 : index
    %c0_50 = arith.constant 0 : index
    %74 = vector.load %arg2[%c6, %c0_49, %c0_50] : memref<16x16x32xf32, #tpu.memory_space<vmem>>, vector<1x16x32xf32>
    %75 = vector.shape_cast %74 : vector<1x16x32xf32> to vector<16x32xf32>
    %c6_51 = arith.constant 6 : index
    %c0_52 = arith.constant 0 : index
    %c0_53 = arith.constant 0 : index
    %76 = vector.load %arg1[%c6_51, %c0_52, %c0_53] : memref<16x2x32xf32, #tpu.memory_space<vmem>>, vector<1x1x32xf32>
    %77 = vector.shape_cast %76 : vector<1x1x32xf32> to vector<1x32xf32>
    %78 = vector.broadcast %77 : vector<1x32xf32> to vector<16x32xf32>
    %79 = arith.mulf %75, %78 : vector<16x32xf32>
    %80 = arith.addf %68, %79 : vector<16x32xf32>
    %c6_54 = arith.constant 6 : index
    %c1_55 = arith.constant 1 : index
    %c0_56 = arith.constant 0 : index
    %81 = vector.load %arg1[%c6_54, %c1_55, %c0_56] : memref<16x2x32xf32, #tpu.memory_space<vmem>>, vector<1x1x32xf32>
    %82 = vector.shape_cast %81 : vector<1x1x32xf32> to vector<1x32xf32>
    %83 = vector.broadcast %82 : vector<1x32xf32> to vector<16x32xf32>
    %84 = arith.mulf %75, %83 : vector<16x32xf32>
    %85 = arith.addf %73, %84 : vector<16x32xf32>
    %c7 = arith.constant 7 : index
    %c0_57 = arith.constant 0 : index
    %c0_58 = arith.constant 0 : index
    %86 = vector.load %arg2[%c7, %c0_57, %c0_58] : memref<16x16x32xf32, #tpu.memory_space<vmem>>, vector<1x16x32xf32>
    %87 = vector.shape_cast %86 : vector<1x16x32xf32> to vector<16x32xf32>
    %c7_59 = arith.constant 7 : index
    %c0_60 = arith.constant 0 : index
    %c0_61 = arith.constant 0 : index
    %88 = vector.load %arg1[%c7_59, %c0_60, %c0_61] : memref<16x2x32xf32, #tpu.memory_space<vmem>>, vector<1x1x32xf32>
    %89 = vector.shape_cast %88 : vector<1x1x32xf32> to vector<1x32xf32>
    %90 = vector.broadcast %89 : vector<1x32xf32> to vector<16x32xf32>
    %91 = arith.mulf %87, %90 : vector<16x32xf32>
    %92 = arith.addf %80, %91 : vector<16x32xf32>
    %c7_62 = arith.constant 7 : index
    %c1_63 = arith.constant 1 : index
    %c0_64 = arith.constant 0 : index
    %93 = vector.load %arg1[%c7_62, %c1_63, %c0_64] : memref<16x2x32xf32, #tpu.memory_space<vmem>>, vector<1x1x32xf32>
    %94 = vector.shape_cast %93 : vector<1x1x32xf32> to vector<1x32xf32>
    %95 = vector.broadcast %94 : vector<1x32xf32> to vector<16x32xf32>
    %96 = arith.mulf %87, %95 : vector<16x32xf32>
    %97 = arith.addf %85, %96 : vector<16x32xf32>
    %c8 = arith.constant 8 : index
    %c0_65 = arith.constant 0 : index
    %c0_66 = arith.constant 0 : index
    %98 = vector.load %arg2[%c8, %c0_65, %c0_66] : memref<16x16x32xf32, #tpu.memory_space<vmem>>, vector<1x16x32xf32>
    %99 = vector.shape_cast %98 : vector<1x16x32xf32> to vector<16x32xf32>
    %c8_67 = arith.constant 8 : index
    %c0_68 = arith.constant 0 : index
    %c0_69 = arith.constant 0 : index
    %100 = vector.load %arg1[%c8_67, %c0_68, %c0_69] : memref<16x2x32xf32, #tpu.memory_space<vmem>>, vector<1x1x32xf32>
    %101 = vector.shape_cast %100 : vector<1x1x32xf32> to vector<1x32xf32>
    %102 = vector.broadcast %101 : vector<1x32xf32> to vector<16x32xf32>
    %103 = arith.mulf %99, %102 : vector<16x32xf32>
    %104 = arith.addf %92, %103 : vector<16x32xf32>
    %c8_70 = arith.constant 8 : index
    %c1_71 = arith.constant 1 : index
    %c0_72 = arith.constant 0 : index
    %105 = vector.load %arg1[%c8_70, %c1_71, %c0_72] : memref<16x2x32xf32, #tpu.memory_space<vmem>>, vector<1x1x32xf32>
    %106 = vector.shape_cast %105 : vector<1x1x32xf32> to vector<1x32xf32>
    %107 = vector.broadcast %106 : vector<1x32xf32> to vector<16x32xf32>
    %108 = arith.mulf %99, %107 : vector<16x32xf32>
    %109 = arith.addf %97, %108 : vector<16x32xf32>
    %c9 = arith.constant 9 : index
    %c0_73 = arith.constant 0 : index
    %c0_74 = arith.constant 0 : index
    %110 = vector.load %arg2[%c9, %c0_73, %c0_74] : memref<16x16x32xf32, #tpu.memory_space<vmem>>, vector<1x16x32xf32>
    %111 = vector.shape_cast %110 : vector<1x16x32xf32> to vector<16x32xf32>
    %c9_75 = arith.constant 9 : index
    %c0_76 = arith.constant 0 : index
    %c0_77 = arith.constant 0 : index
    %112 = vector.load %arg1[%c9_75, %c0_76, %c0_77] : memref<16x2x32xf32, #tpu.memory_space<vmem>>, vector<1x1x32xf32>
    %113 = vector.shape_cast %112 : vector<1x1x32xf32> to vector<1x32xf32>
    %114 = vector.broadcast %113 : vector<1x32xf32> to vector<16x32xf32>
    %115 = arith.mulf %111, %114 : vector<16x32xf32>
    %116 = arith.addf %104, %115 : vector<16x32xf32>
    %c9_78 = arith.constant 9 : index
    %c1_79 = arith.constant 1 : index
    %c0_80 = arith.constant 0 : index
    %117 = vector.load %arg1[%c9_78, %c1_79, %c0_80] : memref<16x2x32xf32, #tpu.memory_space<vmem>>, vector<1x1x32xf32>
    %118 = vector.shape_cast %117 : vector<1x1x32xf32> to vector<1x32xf32>
    %119 = vector.broadcast %118 : vector<1x32xf32> to vector<16x32xf32>
    %120 = arith.mulf %111, %119 : vector<16x32xf32>
    %121 = arith.addf %109, %120 : vector<16x32xf32>
    %c10 = arith.constant 10 : index
    %c0_81 = arith.constant 0 : index
    %c0_82 = arith.constant 0 : index
    %122 = vector.load %arg2[%c10, %c0_81, %c0_82] : memref<16x16x32xf32, #tpu.memory_space<vmem>>, vector<1x16x32xf32>
    %123 = vector.shape_cast %122 : vector<1x16x32xf32> to vector<16x32xf32>
    %c10_83 = arith.constant 10 : index
    %c0_84 = arith.constant 0 : index
    %c0_85 = arith.constant 0 : index
    %124 = vector.load %arg1[%c10_83, %c0_84, %c0_85] : memref<16x2x32xf32, #tpu.memory_space<vmem>>, vector<1x1x32xf32>
    %125 = vector.shape_cast %124 : vector<1x1x32xf32> to vector<1x32xf32>
    %126 = vector.broadcast %125 : vector<1x32xf32> to vector<16x32xf32>
    %127 = arith.mulf %123, %126 : vector<16x32xf32>
    %128 = arith.addf %116, %127 : vector<16x32xf32>
    %c10_86 = arith.constant 10 : index
    %c1_87 = arith.constant 1 : index
    %c0_88 = arith.constant 0 : index
    %129 = vector.load %arg1[%c10_86, %c1_87, %c0_88] : memref<16x2x32xf32, #tpu.memory_space<vmem>>, vector<1x1x32xf32>
    %130 = vector.shape_cast %129 : vector<1x1x32xf32> to vector<1x32xf32>
    %131 = vector.broadcast %130 : vector<1x32xf32> to vector<16x32xf32>
    %132 = arith.mulf %123, %131 : vector<16x32xf32>
    %133 = arith.addf %121, %132 : vector<16x32xf32>
    %c11 = arith.constant 11 : index
    %c0_89 = arith.constant 0 : index
    %c0_90 = arith.constant 0 : index
    %134 = vector.load %arg2[%c11, %c0_89, %c0_90] : memref<16x16x32xf32, #tpu.memory_space<vmem>>, vector<1x16x32xf32>
    %135 = vector.shape_cast %134 : vector<1x16x32xf32> to vector<16x32xf32>
    %c11_91 = arith.constant 11 : index
    %c0_92 = arith.constant 0 : index
    %c0_93 = arith.constant 0 : index
    %136 = vector.load %arg1[%c11_91, %c0_92, %c0_93] : memref<16x2x32xf32, #tpu.memory_space<vmem>>, vector<1x1x32xf32>
    %137 = vector.shape_cast %136 : vector<1x1x32xf32> to vector<1x32xf32>
    %138 = vector.broadcast %137 : vector<1x32xf32> to vector<16x32xf32>
    %139 = arith.mulf %135, %138 : vector<16x32xf32>
    %140 = arith.addf %128, %139 : vector<16x32xf32>
    %c11_94 = arith.constant 11 : index
    %c1_95 = arith.constant 1 : index
    %c0_96 = arith.constant 0 : index
    %141 = vector.load %arg1[%c11_94, %c1_95, %c0_96] : memref<16x2x32xf32, #tpu.memory_space<vmem>>, vector<1x1x32xf32>
    %142 = vector.shape_cast %141 : vector<1x1x32xf32> to vector<1x32xf32>
    %143 = vector.broadcast %142 : vector<1x32xf32> to vector<16x32xf32>
    %144 = arith.mulf %135, %143 : vector<16x32xf32>
    %145 = arith.addf %133, %144 : vector<16x32xf32>
    %c12 = arith.constant 12 : index
    %c0_97 = arith.constant 0 : index
    %c0_98 = arith.constant 0 : index
    %146 = vector.load %arg2[%c12, %c0_97, %c0_98] : memref<16x16x32xf32, #tpu.memory_space<vmem>>, vector<1x16x32xf32>
    %147 = vector.shape_cast %146 : vector<1x16x32xf32> to vector<16x32xf32>
    %c12_99 = arith.constant 12 : index
    %c0_100 = arith.constant 0 : index
    %c0_101 = arith.constant 0 : index
    %148 = vector.load %arg1[%c12_99, %c0_100, %c0_101] : memref<16x2x32xf32, #tpu.memory_space<vmem>>, vector<1x1x32xf32>
    %149 = vector.shape_cast %148 : vector<1x1x32xf32> to vector<1x32xf32>
    %150 = vector.broadcast %149 : vector<1x32xf32> to vector<16x32xf32>
    %151 = arith.mulf %147, %150 : vector<16x32xf32>
    %152 = arith.addf %140, %151 : vector<16x32xf32>
    %c12_102 = arith.constant 12 : index
    %c1_103 = arith.constant 1 : index
    %c0_104 = arith.constant 0 : index
    %153 = vector.load %arg1[%c12_102, %c1_103, %c0_104] : memref<16x2x32xf32, #tpu.memory_space<vmem>>, vector<1x1x32xf32>
    %154 = vector.shape_cast %153 : vector<1x1x32xf32> to vector<1x32xf32>
    %155 = vector.broadcast %154 : vector<1x32xf32> to vector<16x32xf32>
    %156 = arith.mulf %147, %155 : vector<16x32xf32>
    %157 = arith.addf %145, %156 : vector<16x32xf32>
    %c13 = arith.constant 13 : index
    %c0_105 = arith.constant 0 : index
    %c0_106 = arith.constant 0 : index
    %158 = vector.load %arg2[%c13, %c0_105, %c0_106] : memref<16x16x32xf32, #tpu.memory_space<vmem>>, vector<1x16x32xf32>
    %159 = vector.shape_cast %158 : vector<1x16x32xf32> to vector<16x32xf32>
    %c13_107 = arith.constant 13 : index
    %c0_108 = arith.constant 0 : index
    %c0_109 = arith.constant 0 : index
    %160 = vector.load %arg1[%c13_107, %c0_108, %c0_109] : memref<16x2x32xf32, #tpu.memory_space<vmem>>, vector<1x1x32xf32>
    %161 = vector.shape_cast %160 : vector<1x1x32xf32> to vector<1x32xf32>
    %162 = vector.broadcast %161 : vector<1x32xf32> to vector<16x32xf32>
    %163 = arith.mulf %159, %162 : vector<16x32xf32>
    %164 = arith.addf %152, %163 : vector<16x32xf32>
    %c13_110 = arith.constant 13 : index
    %c1_111 = arith.constant 1 : index
    %c0_112 = arith.constant 0 : index
    %165 = vector.load %arg1[%c13_110, %c1_111, %c0_112] : memref<16x2x32xf32, #tpu.memory_space<vmem>>, vector<1x1x32xf32>
    %166 = vector.shape_cast %165 : vector<1x1x32xf32> to vector<1x32xf32>
    %167 = vector.broadcast %166 : vector<1x32xf32> to vector<16x32xf32>
    %168 = arith.mulf %159, %167 : vector<16x32xf32>
    %169 = arith.addf %157, %168 : vector<16x32xf32>
    %c14 = arith.constant 14 : index
    %c0_113 = arith.constant 0 : index
    %c0_114 = arith.constant 0 : index
    %170 = vector.load %arg2[%c14, %c0_113, %c0_114] : memref<16x16x32xf32, #tpu.memory_space<vmem>>, vector<1x16x32xf32>
    %171 = vector.shape_cast %170 : vector<1x16x32xf32> to vector<16x32xf32>
    %c14_115 = arith.constant 14 : index
    %c0_116 = arith.constant 0 : index
    %c0_117 = arith.constant 0 : index
    %172 = vector.load %arg1[%c14_115, %c0_116, %c0_117] : memref<16x2x32xf32, #tpu.memory_space<vmem>>, vector<1x1x32xf32>
    %173 = vector.shape_cast %172 : vector<1x1x32xf32> to vector<1x32xf32>
    %174 = vector.broadcast %173 : vector<1x32xf32> to vector<16x32xf32>
    %175 = arith.mulf %171, %174 : vector<16x32xf32>
    %176 = arith.addf %164, %175 : vector<16x32xf32>
    %c14_118 = arith.constant 14 : index
    %c1_119 = arith.constant 1 : index
    %c0_120 = arith.constant 0 : index
    %177 = vector.load %arg1[%c14_118, %c1_119, %c0_120] : memref<16x2x32xf32, #tpu.memory_space<vmem>>, vector<1x1x32xf32>
    %178 = vector.shape_cast %177 : vector<1x1x32xf32> to vector<1x32xf32>
    %179 = vector.broadcast %178 : vector<1x32xf32> to vector<16x32xf32>
    %180 = arith.mulf %171, %179 : vector<16x32xf32>
    %181 = arith.addf %169, %180 : vector<16x32xf32>
    %c15 = arith.constant 15 : index
    %c0_121 = arith.constant 0 : index
    %c0_122 = arith.constant 0 : index
    %182 = vector.load %arg2[%c15, %c0_121, %c0_122] : memref<16x16x32xf32, #tpu.memory_space<vmem>>, vector<1x16x32xf32>
    %183 = vector.shape_cast %182 : vector<1x16x32xf32> to vector<16x32xf32>
    %c15_123 = arith.constant 15 : index
    %c0_124 = arith.constant 0 : index
    %c0_125 = arith.constant 0 : index
    %184 = vector.load %arg1[%c15_123, %c0_124, %c0_125] : memref<16x2x32xf32, #tpu.memory_space<vmem>>, vector<1x1x32xf32>
    %185 = vector.shape_cast %184 : vector<1x1x32xf32> to vector<1x32xf32>
    %186 = vector.broadcast %185 : vector<1x32xf32> to vector<16x32xf32>
    %187 = arith.mulf %183, %186 : vector<16x32xf32>
    %188 = arith.addf %176, %187 : vector<16x32xf32>
    %c15_126 = arith.constant 15 : index
    %c1_127 = arith.constant 1 : index
    %c0_128 = arith.constant 0 : index
    %189 = vector.load %arg1[%c15_126, %c1_127, %c0_128] : memref<16x2x32xf32, #tpu.memory_space<vmem>>, vector<1x1x32xf32>
    %190 = vector.shape_cast %189 : vector<1x1x32xf32> to vector<1x32xf32>
    %191 = vector.broadcast %190 : vector<1x32xf32> to vector<16x32xf32>
    %192 = arith.mulf %183, %191 : vector<16x32xf32>
    %193 = arith.addf %181, %192 : vector<16x32xf32>
    %c0_129 = arith.constant 0 : index
    %c0_130 = arith.constant 0 : index
    %c0_131 = arith.constant 0 : index
    %194 = vector.load %arg3[%c0_129, %c0_130, %c0_131] : memref<2x16x32xf32, #tpu.memory_space<vmem>>, vector<1x16x32xf32>
    %195 = vector.shape_cast %194 : vector<1x16x32xf32> to vector<16x32xf32>
    %196 = vector.shape_cast %188 : vector<16x32xf32> to vector<1x16x32xf32>
    tpu.vector_store %arg3[%c0_129, %c0_130, %c0_131], %196 {strides = array<i32>} : memref<2x16x32xf32, #tpu.memory_space<vmem>>, vector<1x16x32xf32>,
    %c1_132 = arith.constant 1 : index
    %c0_133 = arith.constant 0 : index
    %c0_134 = arith.constant 0 : index
    %197 = vector.load %arg3[%c1_132, %c0_133, %c0_134] : memref<2x16x32xf32, #tpu.memory_space<vmem>>, vector<1x16x32xf32>
    %198 = vector.shape_cast %197 : vector<1x16x32xf32> to vector<16x32xf32>
    %199 = vector.shape_cast %193 : vector<16x32xf32> to vector<1x16x32xf32>
    tpu.vector_store %arg3[%c1_132, %c0_133, %c0_134], %199 {strides = array<i32>} : memref<2x16x32xf32, #tpu.memory_space<vmem>>, vector<1x16x32xf32>,
    return
  }
  func.func @transform_0(%arg0: i32) -> (i32, i32, i32) {
    %c0_i32 = arith.constant 0 : i32
    %c0_i32_0 = arith.constant 0 : i32
    %c0_i32_1 = arith.constant 0 : i32
    %c0_i32_2 = arith.constant 0 : i32
    return %c0_i32, %c0_i32_0, %c0_i32_1 : i32, i32, i32
  }
  func.func @transform_1(%arg0: i32) -> (i32, i32, i32) {
    %c0_i32 = arith.constant 0 : i32
    %c0_i32_0 = arith.constant 0 : i32
    %c0_i32_1 = arith.constant 0 : i32
    %c0_i32_2 = arith.constant 0 : i32
    return %c0_i32, %c0_i32_0, %c0_i32_1 : i32, i32, i32
  }
  func.func @transform_2(%arg0: i32) -> (i32, i32, i32) {
    %c0_i32 = arith.constant 0 : i32
    %c0_i32_0 = arith.constant 0 : i32
    %c0_i32_1 = arith.constant 0 : i32
    %c0_i32_2 = arith.constant 0 : i32
    return %c0_i32, %c0_i32_0, %c0_i32_1 : i32, i32, i32
  }
}

module attributes {stable_mosaic.version = 11 : i64} {
  func.func @_matmul_bias_act_kernel(%arg0: i32, %arg1: memref<8x8xf32, #tpu.memory_space<vmem>>, %arg2: memref<8x512xf32, #tpu.memory_space<vmem>>, %arg3: memref<8x1xf32, #tpu.memory_space<vmem>>, %arg4: memref<8x512xf32, #tpu.memory_space<vmem>>) attributes {dimension_semantics = [#tpu.dimension_semantics<parallel>], iteration_bounds = array<i64: 2>, scalar_prefetch = 0 : i64, scratch_operands = 0 : i64, tpu.core_type = #tpu.core_type<tc>, window_params = [{pipeline_mode = #tpu.pipeline_mode<synchronous>, transform_indices = @transform_0, window_bounds = array<i64: 8, 8>}, {transform_indices = @transform_1, window_bounds = array<i64: 8, 512>}, {pipeline_mode = #tpu.pipeline_mode<synchronous>, transform_indices = @transform_2, window_bounds = array<i64: 8, 1>}, {transform_indices = @transform_3, window_bounds = array<i64: 8, 512>}]} {
    %c0 = arith.constant 0 : index
    %c0_0 = arith.constant 0 : index
    %0 = vector.load %arg1[%c0, %c0_0] : memref<8x8xf32, #tpu.memory_space<vmem>>, vector<8x8xf32>
    %c0_1 = arith.constant 0 : index
    %c0_2 = arith.constant 0 : index
    %1 = vector.load %arg2[%c0_1, %c0_2] : memref<8x512xf32, #tpu.memory_space<vmem>>, vector<8x512xf32>
    %cst = arith.constant dense<0.000000e+00> : vector<8x512xf32>
    %2 = tpu.matmul %0, %1, %cst {dimension_numbers = #tpu.dot_dimension_numbers<[1], [0], [0], [1], [0, 0, 1, 1], [], []>} : vector<8x8xf32>, vector<8x512xf32>, vector<8x512xf32> -> vector<8x512xf32>
    %c0_3 = arith.constant 0 : index
    %c0_4 = arith.constant 0 : index
    %3 = vector.load %arg3[%c0_3, %c0_4] : memref<8x1xf32, #tpu.memory_space<vmem>>, vector<8x1xf32>
    %4 = vector.broadcast %3 : vector<8x1xf32> to vector<8x512xf32>
    %5 = arith.addf %2, %4 : vector<8x512xf32>
    %c0_5 = arith.constant 0 : index
    %c0_6 = arith.constant 0 : index
    %6 = vector.load %arg4[%c0_5, %c0_6] : memref<8x512xf32, #tpu.memory_space<vmem>>, vector<8x512xf32>
    tpu.vector_store %arg4[%c0_5, %c0_6], %5 {strides = array<i32>} : memref<8x512xf32, #tpu.memory_space<vmem>>, vector<8x512xf32>,
    return
  }
  func.func @transform_0(%arg0: i32) -> (i32, i32) {
    %c0_i32 = arith.constant 0 : i32
    %c0_i32_0 = arith.constant 0 : i32
    %c0_i32_1 = arith.constant 0 : i32
    return %c0_i32, %c0_i32_0 : i32, i32
  }
  func.func @transform_1(%arg0: i32) -> (i32, i32) {
    %c0_i32 = arith.constant 0 : i32
    %c0_i32_0 = arith.constant 0 : i32
    return %c0_i32, %arg0 : i32, i32
  }
  func.func @transform_2(%arg0: i32) -> (i32, i32) {
    %c0_i32 = arith.constant 0 : i32
    %c0_i32_0 = arith.constant 0 : i32
    %c0_i32_1 = arith.constant 0 : i32
    return %c0_i32, %c0_i32_0 : i32, i32
  }
  func.func @transform_3(%arg0: i32) -> (i32, i32) {
    %c0_i32 = arith.constant 0 : i32
    %c0_i32_0 = arith.constant 0 : i32
    return %c0_i32, %arg0 : i32, i32
  }
}

module attributes {stable_mosaic.version = 11 : i64} {
  func.func @_add_relu_kernel(%arg0: i32, %arg1: memref<8x512xf32, #tpu.memory_space<vmem>>, %arg2: memref<8x512xf32, #tpu.memory_space<vmem>>, %arg3: memref<8x512xf32, #tpu.memory_space<vmem>>) attributes {dimension_semantics = [#tpu.dimension_semantics<parallel>], iteration_bounds = array<i64: 2>, scalar_prefetch = 0 : i64, scratch_operands = 0 : i64, tpu.core_type = #tpu.core_type<tc>, window_params = [{transform_indices = @transform_0, window_bounds = array<i64: 8, 512>}, {transform_indices = @transform_1, window_bounds = array<i64: 8, 512>}, {transform_indices = @transform_2, window_bounds = array<i64: 8, 512>}]} {
    %c0 = arith.constant 0 : index
    %c0_0 = arith.constant 0 : index
    %0 = vector.load %arg1[%c0, %c0_0] : memref<8x512xf32, #tpu.memory_space<vmem>>, vector<8x512xf32>
    %c0_1 = arith.constant 0 : index
    %c0_2 = arith.constant 0 : index
    %1 = vector.load %arg2[%c0_1, %c0_2] : memref<8x512xf32, #tpu.memory_space<vmem>>, vector<8x512xf32>
    %2 = arith.addf %0, %1 : vector<8x512xf32>
    %cst = arith.constant 0.000000e+00 : f32
    %3 = vector.broadcast %cst : f32 to vector<8x512xf32>
    %4 = arith.maximumf %2, %3 : vector<8x512xf32>
    %c0_3 = arith.constant 0 : index
    %c0_4 = arith.constant 0 : index
    %5 = vector.load %arg3[%c0_3, %c0_4] : memref<8x512xf32, #tpu.memory_space<vmem>>, vector<8x512xf32>
    tpu.vector_store %arg3[%c0_3, %c0_4], %4 {strides = array<i32>} : memref<8x512xf32, #tpu.memory_space<vmem>>, vector<8x512xf32>,
    return
  }
  func.func @transform_0(%arg0: i32) -> (i32, i32) {
    %c0_i32 = arith.constant 0 : i32
    %c0_i32_0 = arith.constant 0 : i32
    return %c0_i32, %arg0 : i32, i32
  }
  func.func @transform_1(%arg0: i32) -> (i32, i32) {
    %c0_i32 = arith.constant 0 : i32
    %c0_i32_0 = arith.constant 0 : i32
    return %c0_i32, %arg0 : i32, i32
  }
  func.func @transform_2(%arg0: i32) -> (i32, i32) {
    %c0_i32 = arith.constant 0 : i32
    %c0_i32_0 = arith.constant 0 : i32
    return %c0_i32, %arg0 : i32, i32
  }
}

module attributes {stable_mosaic.version = 11 : i64} {
  func.func @_matmul_bn_lrelu_kernel(%arg0: i32, %arg1: memref<8x216xf32, #tpu.memory_space<vmem>>, %arg2: memref<216x128xf32, #tpu.memory_space<vmem>>, %arg3: memref<8x1xf32, #tpu.memory_space<vmem>>, %arg4: memref<8x1xf32, #tpu.memory_space<vmem>>, %arg5: memref<8x128xf32, #tpu.memory_space<vmem>>) attributes {dimension_semantics = [#tpu.dimension_semantics<arbitrary>], iteration_bounds = array<i64: 1>, scalar_prefetch = 0 : i64, scratch_operands = 0 : i64, tpu.core_type = #tpu.core_type<tc>, window_params = [{pipeline_mode = #tpu.pipeline_mode<synchronous>, transform_indices = @transform_0, window_bounds = array<i64: 8, 216>}, {pipeline_mode = #tpu.pipeline_mode<synchronous>, transform_indices = @transform_1, window_bounds = array<i64: 216, 128>}, {pipeline_mode = #tpu.pipeline_mode<synchronous>, transform_indices = @transform_2, window_bounds = array<i64: 8, 1>}, {pipeline_mode = #tpu.pipeline_mode<synchronous>, transform_indices = @transform_3, window_bounds = array<i64: 8, 1>}, {pipeline_mode = #tpu.pipeline_mode<synchronous>, transform_indices = @transform_4, window_bounds = array<i64: 8, 128>}]} {
    %c0 = arith.constant 0 : index
    %c0_0 = arith.constant 0 : index
    %0 = vector.load %arg1[%c0, %c0_0] : memref<8x216xf32, #tpu.memory_space<vmem>>, vector<8x216xf32>
    %c0_1 = arith.constant 0 : index
    %c0_2 = arith.constant 0 : index
    %1 = vector.load %arg2[%c0_1, %c0_2] : memref<216x128xf32, #tpu.memory_space<vmem>>, vector<216x128xf32>
    %cst = arith.constant dense<0.000000e+00> : vector<8x128xf32>
    %2 = tpu.matmul %0, %1, %cst {dimension_numbers = #tpu.dot_dimension_numbers<[1], [0], [0], [1], [0, 0, 1, 1], [], []>} : vector<8x216xf32>, vector<216x128xf32>, vector<8x128xf32> -> vector<8x128xf32>
    %cst_3 = arith.constant dense<0.000000e+00> : vector<8xf32>
    %3 = vector.multi_reduction <add>, %2, %cst_3 [1] : vector<8x128xf32> to vector<8xf32>
    %4 = vector.shape_cast %3 : vector<8xf32> to vector<8x1xf32>
    %cst_4 = arith.constant 1.280000e+02 : f32
    %5 = vector.broadcast %cst_4 : f32 to vector<8x1xf32>
    %6 = arith.divf %4, %5 : vector<8x1xf32>
    %7 = vector.broadcast %6 : vector<8x1xf32> to vector<8x128xf32>
    %8 = arith.subf %2, %7 : vector<8x128xf32>
    %9 = arith.mulf %8, %8 : vector<8x128xf32>
    %cst_5 = arith.constant dense<0.000000e+00> : vector<8xf32>
    %10 = vector.multi_reduction <add>, %9, %cst_5 [1] : vector<8x128xf32> to vector<8xf32>
    %11 = vector.shape_cast %10 : vector<8xf32> to vector<8x1xf32>
    %cst_6 = arith.constant 1.280000e+02 : f32
    %12 = vector.broadcast %cst_6 : f32 to vector<8x1xf32>
    %13 = arith.divf %11, %12 : vector<8x1xf32>
    %c0_7 = arith.constant 0 : index
    %c0_8 = arith.constant 0 : index
    %14 = vector.load %arg3[%c0_7, %c0_8] : memref<8x1xf32, #tpu.memory_space<vmem>>, vector<8x1xf32>
    %15 = vector.broadcast %6 : vector<8x1xf32> to vector<8x128xf32>
    %16 = arith.subf %2, %15 : vector<8x128xf32>
    %17 = vector.broadcast %14 : vector<8x1xf32> to vector<8x128xf32>
    %18 = arith.mulf %17, %16 : vector<8x128xf32>
    %cst_9 = arith.constant 9.99999974E-6 : f32
    %19 = vector.broadcast %cst_9 : f32 to vector<8x1xf32>
    %20 = arith.addf %13, %19 : vector<8x1xf32>
    %21 = math.rsqrt %20 : vector<8x1xf32>
    %22 = vector.broadcast %21 : vector<8x1xf32> to vector<8x128xf32>
    %23 = arith.mulf %18, %22 : vector<8x128xf32>
    %c0_10 = arith.constant 0 : index
    %c0_11 = arith.constant 0 : index
    %24 = vector.load %arg4[%c0_10, %c0_11] : memref<8x1xf32, #tpu.memory_space<vmem>>, vector<8x1xf32>
    %25 = vector.broadcast %24 : vector<8x1xf32> to vector<8x128xf32>
    %26 = arith.addf %23, %25 : vector<8x128xf32>
    %cst_12 = arith.constant 0.000000e+00 : f32
    %27 = vector.broadcast %cst_12 : f32 to vector<8x128xf32>
    %28 = arith.cmpf ogt, %26, %27 : vector<8x128xf32>
    %cst_13 = arith.constant 1.000000e-01 : f32
    %29 = vector.broadcast %cst_13 : f32 to vector<8x128xf32>
    %30 = arith.mulf %29, %26 : vector<8x128xf32>
    %31 = arith.select %28, %26, %30 : vector<8x128xi1>, vector<8x128xf32>
    %c0_14 = arith.constant 0 : index
    %c0_15 = arith.constant 0 : index
    %32 = vector.load %arg5[%c0_14, %c0_15] : memref<8x128xf32, #tpu.memory_space<vmem>>, vector<8x128xf32>
    tpu.vector_store %arg5[%c0_14, %c0_15], %31 {strides = array<i32>} : memref<8x128xf32, #tpu.memory_space<vmem>>, vector<8x128xf32>,
    return
  }
  func.func @transform_0(%arg0: i32) -> (i32, i32) {
    %c0_i32 = arith.constant 0 : i32
    %c0_i32_0 = arith.constant 0 : i32
    %c0_i32_1 = arith.constant 0 : i32
    return %c0_i32, %c0_i32_0 : i32, i32
  }
  func.func @transform_1(%arg0: i32) -> (i32, i32) {
    %c0_i32 = arith.constant 0 : i32
    %c0_i32_0 = arith.constant 0 : i32
    %c0_i32_1 = arith.constant 0 : i32
    return %c0_i32, %c0_i32_0 : i32, i32
  }
  func.func @transform_2(%arg0: i32) -> (i32, i32) {
    %c0_i32 = arith.constant 0 : i32
    %c0_i32_0 = arith.constant 0 : i32
    %c0_i32_1 = arith.constant 0 : i32
    return %c0_i32, %c0_i32_0 : i32, i32
  }
  func.func @transform_3(%arg0: i32) -> (i32, i32) {
    %c0_i32 = arith.constant 0 : i32
    %c0_i32_0 = arith.constant 0 : i32
    %c0_i32_1 = arith.constant 0 : i32
    return %c0_i32, %c0_i32_0 : i32, i32
  }
  func.func @transform_4(%arg0: i32) -> (i32, i32) {
    %c0_i32 = arith.constant 0 : i32
    %c0_i32_0 = arith.constant 0 : i32
    %c0_i32_1 = arith.constant 0 : i32
    return %c0_i32, %c0_i32_0 : i32, i32
  }
}

module attributes {stable_mosaic.version = 11 : i64} {
  func.func @_matmul_bn_lrelu_kernel(%arg0: i32, %arg1: memref<8x216xf32, #tpu.memory_space<vmem>>, %arg2: memref<216x16xf32, #tpu.memory_space<vmem>>, %arg3: memref<8x1xf32, #tpu.memory_space<vmem>>, %arg4: memref<8x1xf32, #tpu.memory_space<vmem>>, %arg5: memref<8x16xf32, #tpu.memory_space<vmem>>) attributes {dimension_semantics = [#tpu.dimension_semantics<arbitrary>], iteration_bounds = array<i64: 1>, scalar_prefetch = 0 : i64, scratch_operands = 0 : i64, tpu.core_type = #tpu.core_type<tc>, window_params = [{pipeline_mode = #tpu.pipeline_mode<synchronous>, transform_indices = @transform_0, window_bounds = array<i64: 8, 216>}, {pipeline_mode = #tpu.pipeline_mode<synchronous>, transform_indices = @transform_1, window_bounds = array<i64: 216, 16>}, {pipeline_mode = #tpu.pipeline_mode<synchronous>, transform_indices = @transform_2, window_bounds = array<i64: 8, 1>}, {pipeline_mode = #tpu.pipeline_mode<synchronous>, transform_indices = @transform_3, window_bounds = array<i64: 8, 1>}, {pipeline_mode = #tpu.pipeline_mode<synchronous>, transform_indices = @transform_4, window_bounds = array<i64: 8, 16>}]} {
    %c0 = arith.constant 0 : index
    %c0_0 = arith.constant 0 : index
    %0 = vector.load %arg1[%c0, %c0_0] : memref<8x216xf32, #tpu.memory_space<vmem>>, vector<8x216xf32>
    %c0_1 = arith.constant 0 : index
    %c0_2 = arith.constant 0 : index
    %1 = vector.load %arg2[%c0_1, %c0_2] : memref<216x16xf32, #tpu.memory_space<vmem>>, vector<216x16xf32>
    %cst = arith.constant dense<0.000000e+00> : vector<8x16xf32>
    %2 = tpu.matmul %0, %1, %cst {dimension_numbers = #tpu.dot_dimension_numbers<[1], [0], [0], [1], [0, 0, 1, 1], [], []>} : vector<8x216xf32>, vector<216x16xf32>, vector<8x16xf32> -> vector<8x16xf32>
    %cst_3 = arith.constant dense<0.000000e+00> : vector<8xf32>
    %3 = vector.multi_reduction <add>, %2, %cst_3 [1] : vector<8x16xf32> to vector<8xf32>
    %4 = vector.shape_cast %3 : vector<8xf32> to vector<8x1xf32>
    %cst_4 = arith.constant 1.600000e+01 : f32
    %5 = vector.broadcast %cst_4 : f32 to vector<8x1xf32>
    %6 = arith.divf %4, %5 : vector<8x1xf32>
    %7 = vector.broadcast %6 : vector<8x1xf32> to vector<8x16xf32>
    %8 = arith.subf %2, %7 : vector<8x16xf32>
    %9 = arith.mulf %8, %8 : vector<8x16xf32>
    %cst_5 = arith.constant dense<0.000000e+00> : vector<8xf32>
    %10 = vector.multi_reduction <add>, %9, %cst_5 [1] : vector<8x16xf32> to vector<8xf32>
    %11 = vector.shape_cast %10 : vector<8xf32> to vector<8x1xf32>
    %cst_6 = arith.constant 1.600000e+01 : f32
    %12 = vector.broadcast %cst_6 : f32 to vector<8x1xf32>
    %13 = arith.divf %11, %12 : vector<8x1xf32>
    %c0_7 = arith.constant 0 : index
    %c0_8 = arith.constant 0 : index
    %14 = vector.load %arg3[%c0_7, %c0_8] : memref<8x1xf32, #tpu.memory_space<vmem>>, vector<8x1xf32>
    %15 = vector.broadcast %6 : vector<8x1xf32> to vector<8x16xf32>
    %16 = arith.subf %2, %15 : vector<8x16xf32>
    %17 = vector.broadcast %14 : vector<8x1xf32> to vector<8x16xf32>
    %18 = arith.mulf %17, %16 : vector<8x16xf32>
    %cst_9 = arith.constant 9.99999974E-6 : f32
    %19 = vector.broadcast %cst_9 : f32 to vector<8x1xf32>
    %20 = arith.addf %13, %19 : vector<8x1xf32>
    %21 = math.rsqrt %20 : vector<8x1xf32>
    %22 = vector.broadcast %21 : vector<8x1xf32> to vector<8x16xf32>
    %23 = arith.mulf %18, %22 : vector<8x16xf32>
    %c0_10 = arith.constant 0 : index
    %c0_11 = arith.constant 0 : index
    %24 = vector.load %arg4[%c0_10, %c0_11] : memref<8x1xf32, #tpu.memory_space<vmem>>, vector<8x1xf32>
    %25 = vector.broadcast %24 : vector<8x1xf32> to vector<8x16xf32>
    %26 = arith.addf %23, %25 : vector<8x16xf32>
    %cst_12 = arith.constant 0.000000e+00 : f32
    %27 = vector.broadcast %cst_12 : f32 to vector<8x16xf32>
    %28 = arith.cmpf ogt, %26, %27 : vector<8x16xf32>
    %cst_13 = arith.constant 1.000000e-01 : f32
    %29 = vector.broadcast %cst_13 : f32 to vector<8x16xf32>
    %30 = arith.mulf %29, %26 : vector<8x16xf32>
    %31 = arith.select %28, %26, %30 : vector<8x16xi1>, vector<8x16xf32>
    %c0_14 = arith.constant 0 : index
    %c0_15 = arith.constant 0 : index
    %32 = vector.load %arg5[%c0_14, %c0_15] : memref<8x16xf32, #tpu.memory_space<vmem>>, vector<8x16xf32>
    tpu.vector_store %arg5[%c0_14, %c0_15], %31 {strides = array<i32>} : memref<8x16xf32, #tpu.memory_space<vmem>>, vector<8x16xf32>,
    return
  }
  func.func @transform_0(%arg0: i32) -> (i32, i32) {
    %c0_i32 = arith.constant 0 : i32
    %c0_i32_0 = arith.constant 0 : i32
    %c0_i32_1 = arith.constant 0 : i32
    return %c0_i32, %c0_i32_0 : i32, i32
  }
  func.func @transform_1(%arg0: i32) -> (i32, i32) {
    %c0_i32 = arith.constant 0 : i32
    %c0_i32_0 = arith.constant 0 : i32
    %c0_i32_1 = arith.constant 0 : i32
    return %c0_i32, %c0_i32_0 : i32, i32
  }
  func.func @transform_2(%arg0: i32) -> (i32, i32) {
    %c0_i32 = arith.constant 0 : i32
    %c0_i32_0 = arith.constant 0 : i32
    %c0_i32_1 = arith.constant 0 : i32
    return %c0_i32, %c0_i32_0 : i32, i32
  }
  func.func @transform_3(%arg0: i32) -> (i32, i32) {
    %c0_i32 = arith.constant 0 : i32
    %c0_i32_0 = arith.constant 0 : i32
    %c0_i32_1 = arith.constant 0 : i32
    return %c0_i32, %c0_i32_0 : i32, i32
  }
  func.func @transform_4(%arg0: i32) -> (i32, i32) {
    %c0_i32 = arith.constant 0 : i32
    %c0_i32_0 = arith.constant 0 : i32
    %c0_i32_1 = arith.constant 0 : i32
    return %c0_i32, %c0_i32_0 : i32, i32
  }
}

module attributes {stable_mosaic.version = 11 : i64} {
  func.func @_matmul_bn_lrelu_kernel(%arg0: i32, %arg1: memref<8x216xf32, #tpu.memory_space<vmem>>, %arg2: memref<216x2xf32, #tpu.memory_space<vmem>>, %arg3: memref<8x1xf32, #tpu.memory_space<vmem>>, %arg4: memref<8x1xf32, #tpu.memory_space<vmem>>, %arg5: memref<8x2xf32, #tpu.memory_space<vmem>>) attributes {dimension_semantics = [#tpu.dimension_semantics<arbitrary>], iteration_bounds = array<i64: 1>, scalar_prefetch = 0 : i64, scratch_operands = 0 : i64, tpu.core_type = #tpu.core_type<tc>, window_params = [{pipeline_mode = #tpu.pipeline_mode<synchronous>, transform_indices = @transform_0, window_bounds = array<i64: 8, 216>}, {pipeline_mode = #tpu.pipeline_mode<synchronous>, transform_indices = @transform_1, window_bounds = array<i64: 216, 2>}, {pipeline_mode = #tpu.pipeline_mode<synchronous>, transform_indices = @transform_2, window_bounds = array<i64: 8, 1>}, {pipeline_mode = #tpu.pipeline_mode<synchronous>, transform_indices = @transform_3, window_bounds = array<i64: 8, 1>}, {pipeline_mode = #tpu.pipeline_mode<synchronous>, transform_indices = @transform_4, window_bounds = array<i64: 8, 2>}]} {
    %c0 = arith.constant 0 : index
    %c0_0 = arith.constant 0 : index
    %0 = vector.load %arg1[%c0, %c0_0] : memref<8x216xf32, #tpu.memory_space<vmem>>, vector<8x216xf32>
    %c0_1 = arith.constant 0 : index
    %c0_2 = arith.constant 0 : index
    %1 = vector.load %arg2[%c0_1, %c0_2] : memref<216x2xf32, #tpu.memory_space<vmem>>, vector<216x2xf32>
    %cst = arith.constant dense<0.000000e+00> : vector<8x2xf32>
    %2 = tpu.matmul %0, %1, %cst {dimension_numbers = #tpu.dot_dimension_numbers<[1], [0], [0], [1], [0, 0, 1, 1], [], []>} : vector<8x216xf32>, vector<216x2xf32>, vector<8x2xf32> -> vector<8x2xf32>
    %cst_3 = arith.constant dense<0.000000e+00> : vector<8xf32>
    %3 = vector.multi_reduction <add>, %2, %cst_3 [1] : vector<8x2xf32> to vector<8xf32>
    %4 = vector.shape_cast %3 : vector<8xf32> to vector<8x1xf32>
    %cst_4 = arith.constant 2.000000e+00 : f32
    %5 = vector.broadcast %cst_4 : f32 to vector<8x1xf32>
    %6 = arith.divf %4, %5 : vector<8x1xf32>
    %7 = vector.broadcast %6 : vector<8x1xf32> to vector<8x2xf32>
    %8 = arith.subf %2, %7 : vector<8x2xf32>
    %9 = arith.mulf %8, %8 : vector<8x2xf32>
    %cst_5 = arith.constant dense<0.000000e+00> : vector<8xf32>
    %10 = vector.multi_reduction <add>, %9, %cst_5 [1] : vector<8x2xf32> to vector<8xf32>
    %11 = vector.shape_cast %10 : vector<8xf32> to vector<8x1xf32>
    %cst_6 = arith.constant 2.000000e+00 : f32
    %12 = vector.broadcast %cst_6 : f32 to vector<8x1xf32>
    %13 = arith.divf %11, %12 : vector<8x1xf32>
    %c0_7 = arith.constant 0 : index
    %c0_8 = arith.constant 0 : index
    %14 = vector.load %arg3[%c0_7, %c0_8] : memref<8x1xf32, #tpu.memory_space<vmem>>, vector<8x1xf32>
    %15 = vector.broadcast %6 : vector<8x1xf32> to vector<8x2xf32>
    %16 = arith.subf %2, %15 : vector<8x2xf32>
    %17 = vector.broadcast %14 : vector<8x1xf32> to vector<8x2xf32>
    %18 = arith.mulf %17, %16 : vector<8x2xf32>
    %cst_9 = arith.constant 9.99999974E-6 : f32
    %19 = vector.broadcast %cst_9 : f32 to vector<8x1xf32>
    %20 = arith.addf %13, %19 : vector<8x1xf32>
    %21 = math.rsqrt %20 : vector<8x1xf32>
    %22 = vector.broadcast %21 : vector<8x1xf32> to vector<8x2xf32>
    %23 = arith.mulf %18, %22 : vector<8x2xf32>
    %c0_10 = arith.constant 0 : index
    %c0_11 = arith.constant 0 : index
    %24 = vector.load %arg4[%c0_10, %c0_11] : memref<8x1xf32, #tpu.memory_space<vmem>>, vector<8x1xf32>
    %25 = vector.broadcast %24 : vector<8x1xf32> to vector<8x2xf32>
    %26 = arith.addf %23, %25 : vector<8x2xf32>
    %cst_12 = arith.constant 0.000000e+00 : f32
    %27 = vector.broadcast %cst_12 : f32 to vector<8x2xf32>
    %28 = arith.cmpf ogt, %26, %27 : vector<8x2xf32>
    %cst_13 = arith.constant 1.000000e-01 : f32
    %29 = vector.broadcast %cst_13 : f32 to vector<8x2xf32>
    %30 = arith.mulf %29, %26 : vector<8x2xf32>
    %31 = arith.select %28, %26, %30 : vector<8x2xi1>, vector<8x2xf32>
    %c0_14 = arith.constant 0 : index
    %c0_15 = arith.constant 0 : index
    %32 = vector.load %arg5[%c0_14, %c0_15] : memref<8x2xf32, #tpu.memory_space<vmem>>, vector<8x2xf32>
    tpu.vector_store %arg5[%c0_14, %c0_15], %31 {strides = array<i32>} : memref<8x2xf32, #tpu.memory_space<vmem>>, vector<8x2xf32>,
    return
  }
  func.func @transform_0(%arg0: i32) -> (i32, i32) {
    %c0_i32 = arith.constant 0 : i32
    %c0_i32_0 = arith.constant 0 : i32
    %c0_i32_1 = arith.constant 0 : i32
    return %c0_i32, %c0_i32_0 : i32, i32
  }
  func.func @transform_1(%arg0: i32) -> (i32, i32) {
    %c0_i32 = arith.constant 0 : i32
    %c0_i32_0 = arith.constant 0 : i32
    %c0_i32_1 = arith.constant 0 : i32
    return %c0_i32, %c0_i32_0 : i32, i32
  }
  func.func @transform_2(%arg0: i32) -> (i32, i32) {
    %c0_i32 = arith.constant 0 : i32
    %c0_i32_0 = arith.constant 0 : i32
    %c0_i32_1 = arith.constant 0 : i32
    return %c0_i32, %c0_i32_0 : i32, i32
  }
  func.func @transform_3(%arg0: i32) -> (i32, i32) {
    %c0_i32 = arith.constant 0 : i32
    %c0_i32_0 = arith.constant 0 : i32
    %c0_i32_1 = arith.constant 0 : i32
    return %c0_i32, %c0_i32_0 : i32, i32
  }
  func.func @transform_4(%arg0: i32) -> (i32, i32) {
    %c0_i32 = arith.constant 0 : i32
    %c0_i32_0 = arith.constant 0 : i32
    %c0_i32_1 = arith.constant 0 : i32
    return %c0_i32, %c0_i32_0 : i32, i32
  }
}

module attributes {stable_mosaic.version = 11 : i64} {
  func.func @_add_relu_kernel(%arg0: i32, %arg1: memref<8x2xf32, #tpu.memory_space<vmem>>, %arg2: memref<8x2xf32, #tpu.memory_space<vmem>>, %arg3: memref<8x2xf32, #tpu.memory_space<vmem>>) attributes {dimension_semantics = [#tpu.dimension_semantics<parallel>], iteration_bounds = array<i64: 1>, scalar_prefetch = 0 : i64, scratch_operands = 0 : i64, tpu.core_type = #tpu.core_type<tc>, window_params = [{transform_indices = @transform_0, window_bounds = array<i64: 8, 2>}, {transform_indices = @transform_1, window_bounds = array<i64: 8, 2>}, {transform_indices = @transform_2, window_bounds = array<i64: 8, 2>}]} {
    %c0 = arith.constant 0 : index
    %c0_0 = arith.constant 0 : index
    %0 = vector.load %arg1[%c0, %c0_0] : memref<8x2xf32, #tpu.memory_space<vmem>>, vector<8x2xf32>
    %c0_1 = arith.constant 0 : index
    %c0_2 = arith.constant 0 : index
    %1 = vector.load %arg2[%c0_1, %c0_2] : memref<8x2xf32, #tpu.memory_space<vmem>>, vector<8x2xf32>
    %2 = arith.addf %0, %1 : vector<8x2xf32>
    %cst = arith.constant 0.000000e+00 : f32
    %3 = vector.broadcast %cst : f32 to vector<8x2xf32>
    %4 = arith.maximumf %2, %3 : vector<8x2xf32>
    %c0_3 = arith.constant 0 : index
    %c0_4 = arith.constant 0 : index
    %5 = vector.load %arg3[%c0_3, %c0_4] : memref<8x2xf32, #tpu.memory_space<vmem>>, vector<8x2xf32>
    tpu.vector_store %arg3[%c0_3, %c0_4], %4 {strides = array<i32>} : memref<8x2xf32, #tpu.memory_space<vmem>>, vector<8x2xf32>,
    return
  }
  func.func @transform_0(%arg0: i32) -> (i32, i32) {
    %c0_i32 = arith.constant 0 : i32
    %c0_i32_0 = arith.constant 0 : i32
    return %c0_i32, %arg0 : i32, i32
  }
  func.func @transform_1(%arg0: i32) -> (i32, i32) {
    %c0_i32 = arith.constant 0 : i32
    %c0_i32_0 = arith.constant 0 : i32
    return %c0_i32, %arg0 : i32, i32
  }
  func.func @transform_2(%arg0: i32) -> (i32, i32) {
    %c0_i32 = arith.constant 0 : i32
    %c0_i32_0 = arith.constant 0 : i32
    return %c0_i32, %arg0 : i32, i32
  }
}

module attributes {stable_mosaic.version = 11 : i64} {
  func.func @_matmul_bias_act_kernel(%arg0: i32, %arg1: memref<64x216xf32, #tpu.memory_space<vmem>>, %arg2: memref<216x2xf32, #tpu.memory_space<vmem>>, %arg3: memref<64x1xf32, #tpu.memory_space<vmem>>, %arg4: memref<64x2xf32, #tpu.memory_space<vmem>>) attributes {dimension_semantics = [#tpu.dimension_semantics<parallel>], iteration_bounds = array<i64: 1>, scalar_prefetch = 0 : i64, scratch_operands = 0 : i64, tpu.core_type = #tpu.core_type<tc>, window_params = [{pipeline_mode = #tpu.pipeline_mode<synchronous>, transform_indices = @transform_0, window_bounds = array<i64: 64, 216>}, {transform_indices = @transform_1, window_bounds = array<i64: 216, 2>}, {pipeline_mode = #tpu.pipeline_mode<synchronous>, transform_indices = @transform_2, window_bounds = array<i64: 64, 1>}, {transform_indices = @transform_3, window_bounds = array<i64: 64, 2>}]} {
    %c0 = arith.constant 0 : index
    %c0_0 = arith.constant 0 : index
    %0 = vector.load %arg1[%c0, %c0_0] : memref<64x216xf32, #tpu.memory_space<vmem>>, vector<64x216xf32>
    %c0_1 = arith.constant 0 : index
    %c0_2 = arith.constant 0 : index
    %1 = vector.load %arg2[%c0_1, %c0_2] : memref<216x2xf32, #tpu.memory_space<vmem>>, vector<216x2xf32>
    %cst = arith.constant dense<0.000000e+00> : vector<64x2xf32>
    %2 = tpu.matmul %0, %1, %cst {dimension_numbers = #tpu.dot_dimension_numbers<[1], [0], [0], [1], [0, 0, 1, 1], [], []>} : vector<64x216xf32>, vector<216x2xf32>, vector<64x2xf32> -> vector<64x2xf32>
    %c0_3 = arith.constant 0 : index
    %c0_4 = arith.constant 0 : index
    %3 = vector.load %arg3[%c0_3, %c0_4] : memref<64x1xf32, #tpu.memory_space<vmem>>, vector<64x1xf32>
    %4 = vector.broadcast %3 : vector<64x1xf32> to vector<64x2xf32>
    %5 = arith.addf %2, %4 : vector<64x2xf32>
    %cst_5 = arith.constant 0.000000e+00 : f32
    %6 = vector.broadcast %cst_5 : f32 to vector<64x2xf32>
    %7 = arith.cmpf ogt, %5, %6 : vector<64x2xf32>
    %cst_6 = arith.constant 1.000000e-01 : f32
    %8 = vector.broadcast %cst_6 : f32 to vector<64x2xf32>
    %9 = arith.mulf %8, %5 : vector<64x2xf32>
    %10 = arith.select %7, %5, %9 : vector<64x2xi1>, vector<64x2xf32>
    %c0_7 = arith.constant 0 : index
    %c0_8 = arith.constant 0 : index
    %11 = vector.load %arg4[%c0_7, %c0_8] : memref<64x2xf32, #tpu.memory_space<vmem>>, vector<64x2xf32>
    tpu.vector_store %arg4[%c0_7, %c0_8], %10 {strides = array<i32>} : memref<64x2xf32, #tpu.memory_space<vmem>>, vector<64x2xf32>,
    return
  }
  func.func @transform_0(%arg0: i32) -> (i32, i32) {
    %c0_i32 = arith.constant 0 : i32
    %c0_i32_0 = arith.constant 0 : i32
    %c0_i32_1 = arith.constant 0 : i32
    return %c0_i32, %c0_i32_0 : i32, i32
  }
  func.func @transform_1(%arg0: i32) -> (i32, i32) {
    %c0_i32 = arith.constant 0 : i32
    %c0_i32_0 = arith.constant 0 : i32
    return %c0_i32, %arg0 : i32, i32
  }
  func.func @transform_2(%arg0: i32) -> (i32, i32) {
    %c0_i32 = arith.constant 0 : i32
    %c0_i32_0 = arith.constant 0 : i32
    %c0_i32_1 = arith.constant 0 : i32
    return %c0_i32, %c0_i32_0 : i32, i32
  }
  func.func @transform_3(%arg0: i32) -> (i32, i32) {
    %c0_i32 = arith.constant 0 : i32
    %c0_i32_0 = arith.constant 0 : i32
    return %c0_i32, %arg0 : i32, i32
  }
}

module attributes {stable_mosaic.version = 11 : i64} {
  func.func @_matmul_bias_act_kernel(%arg0: i32, %arg1: memref<64x432xf32, #tpu.memory_space<vmem>>, %arg2: memref<432x16xf32, #tpu.memory_space<vmem>>, %arg3: memref<64x1xf32, #tpu.memory_space<vmem>>, %arg4: memref<64x16xf32, #tpu.memory_space<vmem>>) attributes {dimension_semantics = [#tpu.dimension_semantics<parallel>], iteration_bounds = array<i64: 1>, scalar_prefetch = 0 : i64, scratch_operands = 0 : i64, tpu.core_type = #tpu.core_type<tc>, window_params = [{pipeline_mode = #tpu.pipeline_mode<synchronous>, transform_indices = @transform_0, window_bounds = array<i64: 64, 432>}, {transform_indices = @transform_1, window_bounds = array<i64: 432, 16>}, {pipeline_mode = #tpu.pipeline_mode<synchronous>, transform_indices = @transform_2, window_bounds = array<i64: 64, 1>}, {transform_indices = @transform_3, window_bounds = array<i64: 64, 16>}]} {
    %c0 = arith.constant 0 : index
    %c0_0 = arith.constant 0 : index
    %0 = vector.load %arg1[%c0, %c0_0] : memref<64x432xf32, #tpu.memory_space<vmem>>, vector<64x432xf32>
    %c0_1 = arith.constant 0 : index
    %c0_2 = arith.constant 0 : index
    %1 = vector.load %arg2[%c0_1, %c0_2] : memref<432x16xf32, #tpu.memory_space<vmem>>, vector<432x16xf32>
    %cst = arith.constant dense<0.000000e+00> : vector<64x16xf32>
    %2 = tpu.matmul %0, %1, %cst {dimension_numbers = #tpu.dot_dimension_numbers<[1], [0], [0], [1], [0, 0, 1, 1], [], []>} : vector<64x432xf32>, vector<432x16xf32>, vector<64x16xf32> -> vector<64x16xf32>
    %c0_3 = arith.constant 0 : index
    %c0_4 = arith.constant 0 : index
    %3 = vector.load %arg3[%c0_3, %c0_4] : memref<64x1xf32, #tpu.memory_space<vmem>>, vector<64x1xf32>
    %4 = vector.broadcast %3 : vector<64x1xf32> to vector<64x16xf32>
    %5 = arith.addf %2, %4 : vector<64x16xf32>
    %cst_5 = arith.constant 0.000000e+00 : f32
    %6 = vector.broadcast %cst_5 : f32 to vector<64x16xf32>
    %7 = arith.cmpf ogt, %5, %6 : vector<64x16xf32>
    %cst_6 = arith.constant 1.000000e-01 : f32
    %8 = vector.broadcast %cst_6 : f32 to vector<64x16xf32>
    %9 = arith.mulf %8, %5 : vector<64x16xf32>
    %10 = arith.select %7, %5, %9 : vector<64x16xi1>, vector<64x16xf32>
    %c0_7 = arith.constant 0 : index
    %c0_8 = arith.constant 0 : index
    %11 = vector.load %arg4[%c0_7, %c0_8] : memref<64x16xf32, #tpu.memory_space<vmem>>, vector<64x16xf32>
    tpu.vector_store %arg4[%c0_7, %c0_8], %10 {strides = array<i32>} : memref<64x16xf32, #tpu.memory_space<vmem>>, vector<64x16xf32>,
    return
  }
  func.func @transform_0(%arg0: i32) -> (i32, i32) {
    %c0_i32 = arith.constant 0 : i32
    %c0_i32_0 = arith.constant 0 : i32
    %c0_i32_1 = arith.constant 0 : i32
    return %c0_i32, %c0_i32_0 : i32, i32
  }
  func.func @transform_1(%arg0: i32) -> (i32, i32) {
    %c0_i32 = arith.constant 0 : i32
    %c0_i32_0 = arith.constant 0 : i32
    return %c0_i32, %arg0 : i32, i32
  }
  func.func @transform_2(%arg0: i32) -> (i32, i32) {
    %c0_i32 = arith.constant 0 : i32
    %c0_i32_0 = arith.constant 0 : i32
    %c0_i32_1 = arith.constant 0 : i32
    return %c0_i32, %c0_i32_0 : i32, i32
  }
  func.func @transform_3(%arg0: i32) -> (i32, i32) {
    %c0_i32 = arith.constant 0 : i32
    %c0_i32_0 = arith.constant 0 : i32
    return %c0_i32, %arg0 : i32, i32
  }
}

module attributes {stable_mosaic.version = 11 : i64} {
  func.func @_matmul_bias_act_kernel(%arg0: i32, %arg1: memref<64x432xf32, #tpu.memory_space<vmem>>, %arg2: memref<432x128xf32, #tpu.memory_space<vmem>>, %arg3: memref<64x1xf32, #tpu.memory_space<vmem>>, %arg4: memref<64x128xf32, #tpu.memory_space<vmem>>) attributes {dimension_semantics = [#tpu.dimension_semantics<parallel>], iteration_bounds = array<i64: 1>, scalar_prefetch = 0 : i64, scratch_operands = 0 : i64, tpu.core_type = #tpu.core_type<tc>, window_params = [{pipeline_mode = #tpu.pipeline_mode<synchronous>, transform_indices = @transform_0, window_bounds = array<i64: 64, 432>}, {transform_indices = @transform_1, window_bounds = array<i64: 432, 128>}, {pipeline_mode = #tpu.pipeline_mode<synchronous>, transform_indices = @transform_2, window_bounds = array<i64: 64, 1>}, {transform_indices = @transform_3, window_bounds = array<i64: 64, 128>}]} {
    %c0 = arith.constant 0 : index
    %c0_0 = arith.constant 0 : index
    %0 = vector.load %arg1[%c0, %c0_0] : memref<64x432xf32, #tpu.memory_space<vmem>>, vector<64x432xf32>
    %c0_1 = arith.constant 0 : index
    %c0_2 = arith.constant 0 : index
    %1 = vector.load %arg2[%c0_1, %c0_2] : memref<432x128xf32, #tpu.memory_space<vmem>>, vector<432x128xf32>
    %cst = arith.constant dense<0.000000e+00> : vector<64x128xf32>
    %2 = tpu.matmul %0, %1, %cst {dimension_numbers = #tpu.dot_dimension_numbers<[1], [0], [0], [1], [0, 0, 1, 1], [], []>} : vector<64x432xf32>, vector<432x128xf32>, vector<64x128xf32> -> vector<64x128xf32>
    %c0_3 = arith.constant 0 : index
    %c0_4 = arith.constant 0 : index
    %3 = vector.load %arg3[%c0_3, %c0_4] : memref<64x1xf32, #tpu.memory_space<vmem>>, vector<64x1xf32>
    %4 = vector.broadcast %3 : vector<64x1xf32> to vector<64x128xf32>
    %5 = arith.addf %2, %4 : vector<64x128xf32>
    %cst_5 = arith.constant 0.000000e+00 : f32
    %6 = vector.broadcast %cst_5 : f32 to vector<64x128xf32>
    %7 = arith.cmpf ogt, %5, %6 : vector<64x128xf32>
    %cst_6 = arith.constant 1.000000e-01 : f32
    %8 = vector.broadcast %cst_6 : f32 to vector<64x128xf32>
    %9 = arith.mulf %8, %5 : vector<64x128xf32>
    %10 = arith.select %7, %5, %9 : vector<64x128xi1>, vector<64x128xf32>
    %c0_7 = arith.constant 0 : index
    %c0_8 = arith.constant 0 : index
    %11 = vector.load %arg4[%c0_7, %c0_8] : memref<64x128xf32, #tpu.memory_space<vmem>>, vector<64x128xf32>
    tpu.vector_store %arg4[%c0_7, %c0_8], %10 {strides = array<i32>} : memref<64x128xf32, #tpu.memory_space<vmem>>, vector<64x128xf32>,
    return
  }
  func.func @transform_0(%arg0: i32) -> (i32, i32) {
    %c0_i32 = arith.constant 0 : i32
    %c0_i32_0 = arith.constant 0 : i32
    %c0_i32_1 = arith.constant 0 : i32
    return %c0_i32, %c0_i32_0 : i32, i32
  }
  func.func @transform_1(%arg0: i32) -> (i32, i32) {
    %c0_i32 = arith.constant 0 : i32
    %c0_i32_0 = arith.constant 0 : i32
    return %c0_i32, %arg0 : i32, i32
  }
  func.func @transform_2(%arg0: i32) -> (i32, i32) {
    %c0_i32 = arith.constant 0 : i32
    %c0_i32_0 = arith.constant 0 : i32
    %c0_i32_1 = arith.constant 0 : i32
    return %c0_i32, %c0_i32_0 : i32, i32
  }
  func.func @transform_3(%arg0: i32) -> (i32, i32) {
    %c0_i32 = arith.constant 0 : i32
    %c0_i32_0 = arith.constant 0 : i32
    return %c0_i32, %arg0 : i32, i32
  }
}

module attributes {stable_mosaic.version = 11 : i64} {
  func.func @_matmul_bias_act_kernel(%arg0: i32, %arg1: memref<8x432xf32, #tpu.memory_space<vmem>>, %arg2: memref<432x512xf32, #tpu.memory_space<vmem>>, %arg3: memref<8x1xf32, #tpu.memory_space<vmem>>, %arg4: memref<8x512xf32, #tpu.memory_space<vmem>>) attributes {dimension_semantics = [#tpu.dimension_semantics<parallel>], iteration_bounds = array<i64: 2>, scalar_prefetch = 0 : i64, scratch_operands = 0 : i64, tpu.core_type = #tpu.core_type<tc>, window_params = [{pipeline_mode = #tpu.pipeline_mode<synchronous>, transform_indices = @transform_0, window_bounds = array<i64: 8, 432>}, {transform_indices = @transform_1, window_bounds = array<i64: 432, 512>}, {pipeline_mode = #tpu.pipeline_mode<synchronous>, transform_indices = @transform_2, window_bounds = array<i64: 8, 1>}, {transform_indices = @transform_3, window_bounds = array<i64: 8, 512>}]} {
    %c0 = arith.constant 0 : index
    %c0_0 = arith.constant 0 : index
    %0 = vector.load %arg1[%c0, %c0_0] : memref<8x432xf32, #tpu.memory_space<vmem>>, vector<8x432xf32>
    %c0_1 = arith.constant 0 : index
    %c0_2 = arith.constant 0 : index
    %1 = vector.load %arg2[%c0_1, %c0_2] : memref<432x512xf32, #tpu.memory_space<vmem>>, vector<432x512xf32>
    %cst = arith.constant dense<0.000000e+00> : vector<8x512xf32>
    %2 = tpu.matmul %0, %1, %cst {dimension_numbers = #tpu.dot_dimension_numbers<[1], [0], [0], [1], [0, 0, 1, 1], [], []>} : vector<8x432xf32>, vector<432x512xf32>, vector<8x512xf32> -> vector<8x512xf32>
    %c0_3 = arith.constant 0 : index
    %c0_4 = arith.constant 0 : index
    %3 = vector.load %arg3[%c0_3, %c0_4] : memref<8x1xf32, #tpu.memory_space<vmem>>, vector<8x1xf32>
    %4 = vector.broadcast %3 : vector<8x1xf32> to vector<8x512xf32>
    %5 = arith.addf %2, %4 : vector<8x512xf32>
    %c0_5 = arith.constant 0 : index
    %c0_6 = arith.constant 0 : index
    %6 = vector.load %arg4[%c0_5, %c0_6] : memref<8x512xf32, #tpu.memory_space<vmem>>, vector<8x512xf32>
    tpu.vector_store %arg4[%c0_5, %c0_6], %5 {strides = array<i32>} : memref<8x512xf32, #tpu.memory_space<vmem>>, vector<8x512xf32>,
    return
  }
  func.func @transform_0(%arg0: i32) -> (i32, i32) {
    %c0_i32 = arith.constant 0 : i32
    %c0_i32_0 = arith.constant 0 : i32
    %c0_i32_1 = arith.constant 0 : i32
    return %c0_i32, %c0_i32_0 : i32, i32
  }
  func.func @transform_1(%arg0: i32) -> (i32, i32) {
    %c0_i32 = arith.constant 0 : i32
    %c0_i32_0 = arith.constant 0 : i32
    return %c0_i32, %arg0 : i32, i32
  }
  func.func @transform_2(%arg0: i32) -> (i32, i32) {
    %c0_i32 = arith.constant 0 : i32
    %c0_i32_0 = arith.constant 0 : i32
    %c0_i32_1 = arith.constant 0 : i32
    return %c0_i32, %c0_i32_0 : i32, i32
  }
  func.func @transform_3(%arg0: i32) -> (i32, i32) {
    %c0_i32 = arith.constant 0 : i32
    %c0_i32_0 = arith.constant 0 : i32
    return %c0_i32, %arg0 : i32, i32
  }
}

module attributes {stable_mosaic.version = 11 : i64} {
  func.func @_add_relu_kernel(%arg0: i32, %arg1: memref<8x512xf32, #tpu.memory_space<vmem>>, %arg2: memref<8x512xf32, #tpu.memory_space<vmem>>, %arg3: memref<8x512xf32, #tpu.memory_space<vmem>>, %arg4: memref<8x512xf32, #tpu.memory_space<vmem>>) attributes {dimension_semantics = [#tpu.dimension_semantics<parallel>], iteration_bounds = array<i64: 2>, scalar_prefetch = 0 : i64, scratch_operands = 0 : i64, tpu.core_type = #tpu.core_type<tc>, window_params = [{transform_indices = @transform_0, window_bounds = array<i64: 8, 512>}, {transform_indices = @transform_1, window_bounds = array<i64: 8, 512>}, {transform_indices = @transform_2, window_bounds = array<i64: 8, 512>}, {transform_indices = @transform_3, window_bounds = array<i64: 8, 512>}]} {
    %c0 = arith.constant 0 : index
    %c0_0 = arith.constant 0 : index
    %0 = vector.load %arg1[%c0, %c0_0] : memref<8x512xf32, #tpu.memory_space<vmem>>, vector<8x512xf32>
    %c0_1 = arith.constant 0 : index
    %c0_2 = arith.constant 0 : index
    %1 = vector.load %arg2[%c0_1, %c0_2] : memref<8x512xf32, #tpu.memory_space<vmem>>, vector<8x512xf32>
    %2 = arith.addf %0, %1 : vector<8x512xf32>
    %c0_3 = arith.constant 0 : index
    %c0_4 = arith.constant 0 : index
    %3 = vector.load %arg3[%c0_3, %c0_4] : memref<8x512xf32, #tpu.memory_space<vmem>>, vector<8x512xf32>
    %4 = arith.addf %2, %3 : vector<8x512xf32>
    %cst = arith.constant 0.000000e+00 : f32
    %5 = vector.broadcast %cst : f32 to vector<8x512xf32>
    %6 = arith.maximumf %4, %5 : vector<8x512xf32>
    %c0_5 = arith.constant 0 : index
    %c0_6 = arith.constant 0 : index
    %7 = vector.load %arg4[%c0_5, %c0_6] : memref<8x512xf32, #tpu.memory_space<vmem>>, vector<8x512xf32>
    tpu.vector_store %arg4[%c0_5, %c0_6], %6 {strides = array<i32>} : memref<8x512xf32, #tpu.memory_space<vmem>>, vector<8x512xf32>,
    return
  }
  func.func @transform_0(%arg0: i32) -> (i32, i32) {
    %c0_i32 = arith.constant 0 : i32
    %c0_i32_0 = arith.constant 0 : i32
    return %c0_i32, %arg0 : i32, i32
  }
  func.func @transform_1(%arg0: i32) -> (i32, i32) {
    %c0_i32 = arith.constant 0 : i32
    %c0_i32_0 = arith.constant 0 : i32
    return %c0_i32, %arg0 : i32, i32
  }
  func.func @transform_2(%arg0: i32) -> (i32, i32) {
    %c0_i32 = arith.constant 0 : i32
    %c0_i32_0 = arith.constant 0 : i32
    return %c0_i32, %arg0 : i32, i32
  }
  func.func @transform_3(%arg0: i32) -> (i32, i32) {
    %c0_i32 = arith.constant 0 : i32
    %c0_i32_0 = arith.constant 0 : i32
    return %c0_i32, %arg0 : i32, i32
  }
}

module attributes {stable_mosaic.version = 11 : i64} {
  func.func @_mlp_head_kernel(%arg0: i32, %arg1: memref<8x256xf32, #tpu.memory_space<vmem>>, %arg2: memref<128x8xf32, #tpu.memory_space<vmem>>, %arg3: memref<128x1xf32, #tpu.memory_space<vmem>>, %arg4: memref<1x128xf32, #tpu.memory_space<vmem>>, %arg5: memref<1x1xf32, #tpu.memory_space<vmem>>, %arg6: memref<1x256xf32, #tpu.memory_space<vmem>>) attributes {dimension_semantics = [#tpu.dimension_semantics<parallel>], iteration_bounds = array<i64: 4>, scalar_prefetch = 0 : i64, scratch_operands = 0 : i64, tpu.core_type = #tpu.core_type<tc>, window_params = [{transform_indices = @transform_0, window_bounds = array<i64: 8, 256>}, {pipeline_mode = #tpu.pipeline_mode<synchronous>, transform_indices = @transform_1, window_bounds = array<i64: 128, 8>}, {pipeline_mode = #tpu.pipeline_mode<synchronous>, transform_indices = @transform_2, window_bounds = array<i64: 128, 1>}, {pipeline_mode = #tpu.pipeline_mode<synchronous>, transform_indices = @transform_3, window_bounds = array<i64: 1, 128>}, {pipeline_mode = #tpu.pipeline_mode<synchronous>, transform_indices = @transform_4, window_bounds = array<i64: 1, 1>}, {transform_indices = @transform_5, window_bounds = array<i64: 1, 256>}]} {
    %c0 = arith.constant 0 : index
    %c0_0 = arith.constant 0 : index
    %0 = vector.load %arg2[%c0, %c0_0] : memref<128x8xf32, #tpu.memory_space<vmem>>, vector<128x8xf32>
    %c0_1 = arith.constant 0 : index
    %c0_2 = arith.constant 0 : index
    %1 = vector.load %arg1[%c0_1, %c0_2] : memref<8x256xf32, #tpu.memory_space<vmem>>, vector<8x256xf32>
    %cst = arith.constant dense<0.000000e+00> : vector<128x256xf32>
    %2 = tpu.matmul %0, %1, %cst {dimension_numbers = #tpu.dot_dimension_numbers<[1], [0], [0], [1], [0, 0, 1, 1], [], []>} : vector<128x8xf32>, vector<8x256xf32>, vector<128x256xf32> -> vector<128x256xf32>
    %c0_3 = arith.constant 0 : index
    %c0_4 = arith.constant 0 : index
    %3 = vector.load %arg3[%c0_3, %c0_4] : memref<128x1xf32, #tpu.memory_space<vmem>>, vector<128x1xf32>
    %4 = vector.broadcast %3 : vector<128x1xf32> to vector<128x256xf32>
    %5 = arith.addf %2, %4 : vector<128x256xf32>
    %cst_5 = arith.constant 0.000000e+00 : f32
    %6 = vector.broadcast %cst_5 : f32 to vector<128x256xf32>
    %7 = arith.maximumf %5, %6 : vector<128x256xf32>
    %c0_6 = arith.constant 0 : index
    %c0_7 = arith.constant 0 : index
    %8 = vector.load %arg4[%c0_6, %c0_7] : memref<1x128xf32, #tpu.memory_space<vmem>>, vector<1x128xf32>
    %cst_8 = arith.constant dense<0.000000e+00> : vector<1x256xf32>
    %9 = tpu.matmul %8, %7, %cst_8 {dimension_numbers = #tpu.dot_dimension_numbers<[1], [0], [0], [1], [0, 0, 1, 1], [], []>} : vector<1x128xf32>, vector<128x256xf32>, vector<1x256xf32> -> vector<1x256xf32>
    %c0_9 = arith.constant 0 : index
    %c0_10 = arith.constant 0 : index
    %10 = vector.load %arg5[%c0_9, %c0_10] : memref<1x1xf32, #tpu.memory_space<vmem>>, vector<1x1xf32>
    %11 = vector.broadcast %10 : vector<1x1xf32> to vector<1x256xf32>
    %12 = arith.addf %9, %11 : vector<1x256xf32>
    %c0_11 = arith.constant 0 : index
    %c0_12 = arith.constant 0 : index
    %13 = vector.load %arg6[%c0_11, %c0_12] : memref<1x256xf32, #tpu.memory_space<vmem>>, vector<1x256xf32>
    tpu.vector_store %arg6[%c0_11, %c0_12], %12 {strides = array<i32>} : memref<1x256xf32, #tpu.memory_space<vmem>>, vector<1x256xf32>,
    return
  }
  func.func @transform_0(%arg0: i32) -> (i32, i32) {
    %c0_i32 = arith.constant 0 : i32
    %c0_i32_0 = arith.constant 0 : i32
    return %c0_i32, %arg0 : i32, i32
  }
  func.func @transform_1(%arg0: i32) -> (i32, i32) {
    %c0_i32 = arith.constant 0 : i32
    %c0_i32_0 = arith.constant 0 : i32
    %c0_i32_1 = arith.constant 0 : i32
    return %c0_i32, %c0_i32_0 : i32, i32
  }
  func.func @transform_2(%arg0: i32) -> (i32, i32) {
    %c0_i32 = arith.constant 0 : i32
    %c0_i32_0 = arith.constant 0 : i32
    %c0_i32_1 = arith.constant 0 : i32
    return %c0_i32, %c0_i32_0 : i32, i32
  }
  func.func @transform_3(%arg0: i32) -> (i32, i32) {
    %c0_i32 = arith.constant 0 : i32
    %c0_i32_0 = arith.constant 0 : i32
    %c0_i32_1 = arith.constant 0 : i32
    return %c0_i32, %c0_i32_0 : i32, i32
  }
  func.func @transform_4(%arg0: i32) -> (i32, i32) {
    %c0_i32 = arith.constant 0 : i32
    %c0_i32_0 = arith.constant 0 : i32
    %c0_i32_1 = arith.constant 0 : i32
    return %c0_i32, %c0_i32_0 : i32, i32
  }
  func.func @transform_5(%arg0: i32) -> (i32, i32) {
    %c0_i32 = arith.constant 0 : i32
    %c0_i32_0 = arith.constant 0 : i32
    return %c0_i32, %arg0 : i32, i32
  }
}

</mosaic_0001>

<llo_original>
// kernel: simple_block3d_forward.77
$region0: #{simple_block3d_forward.77}
  #allocation0 [shape = 'u32[]', space=smem, size = 0x4, offset = 0x4, fixed_abs, tag = 'smem constant byte address 0x4 - core index']
  #allocation1 [shape = 'u32[144,128]{1,0:T(1,128)}', space=vmem, size = 0x12000, scoped, tag = 'internal scratch']
  %s0 = inlined_call_operand.hbm [shape: f32[8,12], index: 0, kind: input, shape index: {}]
  %s1 = inlined_call_operand.vmem [shape: f32[12,1024], index: 1, kind: input, shape index: {}]
  %s2 = inlined_call_operand.vmem [shape: f32[8,1], index: 2, kind: input, shape index: {}]
  %s3 = inlined_call_operand.vmem [shape: f32[8,1024], index: 3, kind: output, shape index: {}]
  %s4 = sld [smem:[#allocation0]]
  $region72: #{simple_block3d_forward.77} parent=0
    _
  %s6 = ssub.s32 1, %s4
  %s7 = scalar_select 0, %s6, %s4
  $region1: #{simple_block3d_forward.77} parent=0
    #allocation2 [shape = 'u8[4096]{0}', space=vmem, size = 0x1000, scoped, tag = 'input window, operand 0, single buffered']
    #allocation3 [shape = 's32[2]{0}', space=sflag, size = 0x8, scoped, tag = 'scoped memory for simple_block3d_forward.77']
    #allocation4 [shape = 'u8[65536]{0}', space=vmem, size = 0x10000, scoped, tag = 'input window, operand 1']
    %8 = vsyncpa [#allocation3], 0
    loop: start=0, step=1, limit=4
    $region2: #{simple_block3d_forward.77} parent=1 // loop_pre_header
      _
    $region3: #{simple_block3d_forward.77} parent=1 // loop_header
      %s10 = sphi 0, %s14
      %p11 = scmp.ge.s32.totalorder %s10, 4
      %s18 = sphi 0, %s18
      %s20 = sphi 0, %s18
      %s21 = sphi 0, %s20
      %s35 = sphi 0, %s21
      %s41 = sphi 0, %s43
      %s44 = sphi 0, %s41
      %s45 = sphi 0, %s44
      %s61 = sphi 0, %s45
      %s65 = sphi 0, %s65
      %s67 = sphi 0, %s65
      %s68 = sphi 0, %s67
      %s82 = sphi 0, %s68
      %s88 = sphi 0, %s90
      %s91 = sphi 0, %s88
      %s92 = sphi 0, %s91
      %s108 = sphi 0, %s92
    $region4: #{simple_block3d_forward.77} parent=1 // loop_header_branch
      %13 = sbr.rel (%p11) target = $region8
    $region5: #{simple_block3d_forward.77} parent=1 // loop_body
      %s15 = ssub.s32 %s10, 1
      %s16 = ssub.s32 %s10, 2
      %s17 = sadd.s32 %s10, 1
      %s19 = sadd.s32 %s18, 1
      %p22 = scmp.eq.s32.totalorder %s10, 1
      %p23 = scmp.ne.s32.totalorder %s18, %s20
      %p24 = scmp.eq.s32.totalorder %s10, 0
      %p25 = por %p23, %p24
      %p26 = scmp.ne.s32.totalorder %s18, %s20
      %p27 = scmp.eq.s32.totalorder %s15, 1
      %p28 = por %p26, %p27
      %p29 = scmp.ne.s32.totalorder %s20, %s21
      %p30 = scmp.eq.s32.totalorder %s15, 0
      %p31 = por %p29, %p30
      %p32 = scmp.ne.s32.totalorder %s20, %s21
      %p33 = scmp.eq.s32.totalorder %s16, 1
      %p34 = por %p32, %p33
      %p36 = scmp.ne.s32.totalorder %s21, %s35
      %p37 = scmp.eq.s32.totalorder %s16, 0
      %p38 = por %p36, %p37
      %s39 = ssub.s32 %s10, %s17
      %p40 = scmp.eq.s32.totalorder %s39, 0
      %s42 = sadd.s32 %s41, 1
      %s43 = scalar_select %p40, %s41, %s42
      %p46 = pneg %p40
      %p47 = scmp.eq.s32.totalorder %s10, 1
      %p48 = por %p46, %p47
      %p49 = scmp.ne.s32.totalorder %s41, %s44
      %p50 = scmp.eq.s32.totalorder %s10, 0
      %p51 = por %p49, %p50
      %p52 = scmp.ne.s32.totalorder %s41, %s44
      %p53 = scmp.eq.s32.totalorder %s15, 1
      %p54 = por %p52, %p53
      %p55 = scmp.ne.s32.totalorder %s44, %s45
      %p56 = scmp.eq.s32.totalorder %s15, 0
      %p57 = por %p55, %p56
      %p58 = scmp.ne.s32.totalorder %s44, %s45
      %p59 = scmp.eq.s32.totalorder %s16, 1
      %p60 = por %p58, %p59
      %p62 = scmp.ne.s32.totalorder %s45, %s61
      %p63 = scmp.eq.s32.totalorder %s16, 0
      %p64 = por %p62, %p63
      %s66 = sadd.s32 %s65, 1
      %p69 = scmp.eq.s32.totalorder %s10, 1
      %p70 = scmp.ne.s32.totalorder %s65, %s67
      %p71 = scmp.eq.s32.totalorder %s10, 0
      %p72 = por %p70, %p71
      %p73 = scmp.ne.s32.totalorder %s65, %s67
      %p74 = scmp.eq.s32.totalorder %s15, 1
      %p75 = por %p73, %p74
      %p76 = scmp.ne.s32.totalorder %s67, %s68
      %p77 = scmp.eq.s32.totalorder %s15, 0
      %p78 = por %p76, %p77
      %p79 = scmp.ne.s32.totalorder %s67, %s68
      %p80 = scmp.eq.s32.totalorder %s16, 1
      %p81 = por %p79, %p80
      %p83 = scmp.ne.s32.totalorder %s68, %s82
      %p84 = scmp.eq.s32.totalorder %s16, 0
      %p85 = por %p83, %p84
      %s86 = ssub.s32 %s10, %s17
      %p87 = scmp.eq.s32.totalorder %s86, 0
      %s89 = sadd.s32 %s88, 1
      %s90 = scalar_select %p87, %s88, %s89
      %p93 = pneg %p87
      %p94 = scmp.eq.s32.totalorder %s10, 1
      %p95 = por %p93, %p94
      %p96 = scmp.ne.s32.totalorder %s88, %s91
      %p97 = scmp.eq.s32.totalorder %s10, 0
      %p98 = por %p96, %p97
      %p99 = scmp.ne.s32.totalorder %s88, %s91
      %p100 = scmp.eq.s32.totalorder %s15, 1
      %p101 = por %p99, %p100
      %p102 = scmp.ne.s32.totalorder %s91, %s92
      %p103 = scmp.eq.s32.totalorder %s15, 0
      %p104 = por %p102, %p103
      %p105 = scmp.ne.s32.totalorder %s91, %s92
      %p106 = scmp.eq.s32.totalorder %s16, 1
      %p107 = por %p105, %p106
      %p109 = scmp.ne.s32.totalorder %s92, %s108
      %p110 = scmp.eq.s32.totalorder %s16, 0
      %p111 = por %p109, %p110
      %p112 = scmp.le.s32.totalorder 1, %s10
      %p113 = scmp.lt.s32.totalorder %s10, 3
      %p114 = pnand %p112, %p113
      %p115 = pneg %p114
      // Predicated region
      $region9: #{simple_block3d_forward.77} parent=5 // pred_check
        _
      $region10: #{simple_block3d_forward.77} parent=5 // pred_check_branch
        %117 = sbr.rel (%p114) target = $region12
      $region11: #{simple_block3d_forward.77} parent=5 // pred_region
        %s118 = ssub.s32 %s10, 1
        // Predicated region
        $region13: #{simple_block3d_forward.77} parent=11 // pred_check
          %p119 = pneg %p31
        $region14: #{simple_block3d_forward.77} parent=11 // pred_check_branch
          %121 = sbr.rel (%p119) target = $region16
        $region15: #{simple_block3d_forward.77} parent=11 // pred_region
          %s123 = ssub.s32 128, 128
          %124 = vsyncadd [#allocation3], %s123
          %s126 = sshll.u32 [#allocation2], 4
          %s127 = int_to_ptr.vmem [resolvable:$true] %s126
          %129 = dma.hbm_to_vmem [thread:$0]  %s0, 128, %s127, [#allocation3]
        $region16: #{simple_block3d_forward.77} parent=11 // pred_fallthru
          _
        // Predicated region
        $region17: #{simple_block3d_forward.77} parent=11 // pred_check
          %p130 = pneg %p78
        $region18: #{simple_block3d_forward.77} parent=11 // pred_check_branch
          %132 = sbr.rel (%p130) target = $region20
        $region19: #{simple_block3d_forward.77} parent=11 // pred_region
          _
        $region20: #{simple_block3d_forward.77} parent=11 // pred_fallthru
          _
      $region12: #{simple_block3d_forward.77} parent=5 // pred_fallthru
        _
      %p133 = scmp.lt.s32.totalorder %s10, 2
      // Predicated region
      $region21: #{simple_block3d_forward.77} parent=5 // pred_check
        %p134 = pneg %p133
      $region22: #{simple_block3d_forward.77} parent=5 // pred_check_branch
        %136 = sbr.rel (%p134) target = $region24
      $region23: #{simple_block3d_forward.77} parent=5 // pred_region
        // Predicated region
        $region25: #{simple_block3d_forward.77} parent=23 // pred_check
          %p137 = pneg %p51
        $region26: #{simple_block3d_forward.77} parent=23 // pred_check_branch
          %139 = sbr.rel (%p137) target = $region28
        $region27: #{simple_block3d_forward.77} parent=23 // pred_region
          %s140 = sand.u32 %s41, 1
          %s141 = sand.u32 %s41, 1
          %s142 = smul.addr %s141, 64
          %s143 = scalar_lea.vmem [#allocation4], %s142
          %s144 = smul.u32 4, %s10
          %s145 = smul.addr %s144, 8
          %s146 = scalar_lea.vmem %s1, %s145
          // Predicated region
          $region29: #{simple_block3d_forward.77} parent=27 // pred_check
            _
          $region30: #{simple_block3d_forward.77} parent=27 // pred_check_branch
            %148 = sbr.rel (0) target = $region32
          $region31: #{simple_block3d_forward.77} parent=27 // pred_region
            // Predicated region
            $region33: #{simple_block3d_forward.77} parent=31 // pred_check
              _
            $region34: #{simple_block3d_forward.77} parent=31 // pred_check_branch
              %150 = sbr.rel (0) target = $region36
            $region35: #{simple_block3d_forward.77} parent=31 // pred_region
              loop: start=0, step=1, limit=1
              $region37: #{simple_block3d_forward.77} parent=35 // loop_pre_header
                _
              $region38: #{simple_block3d_forward.77} parent=35 // loop_header
                %s152 = sphi 0, %s156
                %p153 = scmp.ge.s32.totalorder %s152, 1
                %s157 = sphi %s146, %s146
                %s158 = sphi %s143, %s143
              $region39: #{simple_block3d_forward.77} parent=35 // loop_header_branch
                %155 = sbr.rel (%p153) target = $region43
              $region40: #{simple_block3d_forward.77} parent=35 // loop_body
                %v159 = vld [vmem:[%s157] sm:$0xff]
                %160 = vst [vmem:[%s158] sm:$0xff] %v159
                %v161 = vld [vmem:[%s157 + $0x8] sm:$0xff]
                %162 = vst [vmem:[%s158 + $0x8] sm:$0xff] %v161
                %v163 = vld [vmem:[%s157 + $0x10] sm:$0xff]
                %164 = vst [vmem:[%s158 + $0x10] sm:$0xff] %v163
                %v165 = vld [vmem:[%s157 + $0x18] sm:$0xff]
                %166 = vst [vmem:[%s158 + $0x18] sm:$0xff] %v165
                %v167 = vld [vmem:[%s157 + $0x40] sm:$0xff]
                %168 = vst [vmem:[%s158 + $0x20] sm:$0xff] %v167
                %v169 = vld [vmem:[%s157 + $0x48] sm:$0xff]
                %170 = vst [vmem:[%s158 + $0x28] sm:$0xff] %v169
                %v171 = vld [vmem:[%s157 + $0x50] sm:$0xff]
                %172 = vst [vmem:[%s158 + $0x30] sm:$0xff] %v171
                %v173 = vld [vmem:[%s157 + $0x58] sm:$0xff]
                %174 = vst [vmem:[%s158 + $0x38] sm:$0xff] %v173
              $region41: #{simple_block3d_forward.77} parent=35 // loop_footer
                %s156 = sadd.s32 1, %s152
              $region42: #{simple_block3d_forward.77} parent=35 // loop_footer_branch
                %151 = sbr.rel target = $region38
              $region43: #{simple_block3d_forward.77} parent=35 // loop_exit
                _
            $region36: #{simple_block3d_forward.77} parent=31 // pred_fallthru
              _
            // Predicated region
            $region44: #{simple_block3d_forward.77} parent=31 // pred_check
              _
            $region45: #{simple_block3d_forward.77} parent=31 // pred_check_branch
              %176 = sbr.rel target = $region47
            $region46: #{simple_block3d_forward.77} parent=31 // pred_region
              _
            $region47: #{simple_block3d_forward.77} parent=31 // pred_fallthru
              _
          $region32: #{simple_block3d_forward.77} parent=27 // pred_fallthru
            _
          %177 = vnop
        $region28: #{simple_block3d_forward.77} parent=23 // pred_fallthru
          _
      $region24: #{simple_block3d_forward.77} parent=5 // pred_fallthru
        _
      %p178 = scmp.le.s32.totalorder 1, %s10
      %p179 = scmp.lt.s32.totalorder %s10, 3
      %p180 = pnand %p178, %p179
      %p181 = pneg %p180
      // Predicated region
      $region48: #{simple_block3d_forward.77} parent=5 // pred_check
        _
      $region49: #{simple_block3d_forward.77} parent=5 // pred_check_branch
        %183 = sbr.rel (%p180) target = $region51
      $region50: #{simple_block3d_forward.77} parent=5 // pred_region
        %s184 = ssub.s32 %s10, 1
        // Predicated region
        $region52: #{simple_block3d_forward.77} parent=50 // pred_check
          %p185 = pneg %p31
        $region53: #{simple_block3d_forward.77} parent=50 // pred_check_branch
          %187 = sbr.rel (%p185) target = $region55
        $region54: #{simple_block3d_forward.77} parent=50 // pred_region
          %188 = dma.done [#allocation3], 128
        $region55: #{simple_block3d_forward.77} parent=50 // pred_fallthru
          _
        %s189 = sand.u32 %s44, 1
        %s190 = sand.u32 %s44, 1
        %s191 = smul.addr %s190, 64
        %s192 = scalar_lea.vmem [#allocation4], %s191
        // Predicated region
        $region56: #{simple_block3d_forward.77} parent=50 // pred_check
          %p193 = pneg %p57
        $region57: #{simple_block3d_forward.77} parent=50 // pred_check_branch
          %195 = sbr.rel (%p193) target = $region59
        $region58: #{simple_block3d_forward.77} parent=50 // pred_region
          _
        $region59: #{simple_block3d_forward.77} parent=50 // pred_fallthru
          _
        %p196 = pneg %p31
        %p197 = pneg %p28
        %s198 = sand.u32 %s44, 1
        %s199 = sand.u32 %s44, 1
        %s200 = smul.addr %s199, 64
        %s201 = scalar_lea.vmem [#allocation4], %s200
        %p202 = pneg %p57
        %p203 = pneg %p54
        %p204 = pneg %p78
        %p205 = pneg %p75
        %p206 = pneg %p104
        %p207 = pneg %p101
        %s208 = smul.u32 4, %s15
        %p209 = scmp.lt.s32.totalorder %s208, 7
        %s210 = scalar_select %p209, %s208, 7
        %s211 = smul.addr %s210, 8
        %s212 = scalar_lea.vmem %s3, %s211
        %s213 = smul.u32 4, %s15
        %s214 = smul.u32 4, %s15
        %p215 = scmp.lt.s32.totalorder %s214, 7
        %s216 = scalar_select %p215, %s214, 7
        %s217 = smul.addr %s216, 8
        %s218 = scalar_lea.vmem %s3, %s217
        %s219 = smul.u32 4, %s15
        %v220 = vld [vmem:[#allocation2] sm:$0xff]
        %v221 = vld [vmem:[%s192] sm:$0xff]
        %v222 = vld [vmem:[%s192 + $0x8] sm:$0xff]
        %v223 = vld [vmem:[%s192 + $0x10] sm:$0xff]
        %v224 = vld [vmem:[%s192 + $0x18] sm:$0xff]
        %v225 = vld [vmem:[%s192 + $0x20] sm:$0xf]
        %v226 = vld [vmem:[%s192 + $0x28] sm:$0xf]
        %v227 = vld [vmem:[%s192 + $0x30] sm:$0xf]
        %v228 = vld [vmem:[%s192 + $0x38] sm:$0xf]
        %v229 = vld [vmem:[%s2] sm:$0xff]
        %231 = vset.pattern.permute.xlu0 0
        %232 = vperm.xlu0 %231, %v229
        %v233 = vpop.permute.xlu0 %232
        %vm235 = vcmask 97280
        %v237 = vsel %vm235, %v220, 0
        %vm239 = vcmask 1043456
        %v241 = vsel %vm239, %v225, 0
        %v244 = vsel %vm239, %v226, 0
        %v247 = vsel %vm239, %v227, 0
        %v250 = vsel %vm239, %v228, 0
        %252 = vmatprep.subr.mxu0 %v222
        %253 = vmatpush1.msra.mxu0 %v221
        %254 = vmatprep.subr.mxu0 %v244
        %255 = vmatpush1.msra.mxu0 %v241
        %256 = vmatprep.subr.mxu0 0.0
        %257 = vmatpush1.msra.mxu0 0.0
        %258 = vmatprep.subr.mxu0 0.0
        %259 = vmatpush1.msra.mxu0 0.0
        %260 = vmatprep.subr.mxu0 0.0
        %261 = vmatpush1.msra.mxu0 0.0
        %262 = vmatprep.subr.mxu0 0.0
        %263 = vmatpush1.msra.mxu0 0.0
        %264 = vmatprep.subr.mxu0 0.0
        %265 = vmatpush1.msra.mxu0 0.0
        %266 = vmatprep.subr.mxu0 0.0
        %267 = vmatpush1.msra.mxu0 0.0
        %268 = vmatprep.subr.mxu0 0.0
        %269 = vmatpush1.msra.mxu0 0.0
        %270 = vmatprep.subr.mxu0 0.0
        %271 = vmatpush1.msra.mxu0 0.0
        %272 = vmatprep.subr.mxu0 0.0
        %273 = vmatpush1.msra.mxu0 0.0
        %274 = vmatprep.subr.mxu0 0.0
        %275 = vmatpush1.msra.mxu0 0.0
        %276 = vmatprep.subr.mxu0 0.0
        %277 = vmatpush1.msra.mxu0 0.0
        %278 = vmatprep.subr.mxu0 0.0
        %279 = vmatpush1.msra.mxu0 0.0
        %280 = vmatprep.subr.mxu0 0.0
        %281 = vmatpush1.msra.mxu0 0.0
        %282 = vmatprep.subr.mxu0 0.0
        %283 = vmatpush1.msra.mxu0 0.0
        %284 = vmatprep.subr.mxu0 0.0
        %285 = vmatpush1.msra.mxu0 0.0
        %286 = vmatprep.subr.mxu0 0.0
        %287 = vmatpush1.msra.mxu0 0.0
        %288 = vmatprep.subr.mxu0 0.0
        %289 = vmatpush1.msra.mxu0 0.0
        %290 = vmatprep.subr.mxu0 0.0
        %291 = vmatpush1.msra.mxu0 0.0
        %292 = vmatprep.subr.mxu0 0.0
        %293 = vmatpush1.msra.mxu0 0.0
        %294 = vmatprep.subr.mxu0 0.0
        %295 = vmatpush1.msra.mxu0 0.0
        %296 = vmatprep.subr.mxu0 0.0
        %297 = vmatpush1.msra.mxu0 0.0
        %298 = vmatprep.subr.mxu0 0.0
        %299 = vmatpush1.msra.mxu0 0.0
        %300 = vmatprep.subr.mxu0 0.0
        %301 = vmatpush1.msra.mxu0 0.0
        %302 = vmatprep.subr.mxu0 0.0
        %303 = vmatpush1.msra.mxu0 0.0
        %304 = vmatprep.subr.mxu0 0.0
        %305 = vmatpush1.msra.mxu0 0.0
        %306 = vmatprep.subr.mxu0 0.0
        %307 = vmatpush1.msra.mxu0 0.0
        %308 = vmatprep.subr.mxu0 0.0
        %309 = vmatpush1.msra.mxu0 0.0
        %310 = vmatprep.subr.mxu0 0.0
        %311 = vmatpush1.msra.mxu0 0.0
        %312 = vmatprep.subr.mxu0 0.0
        %313 = vmatpush1.msra.mxu0 0.0
        %314 = vmatprep.subr.mxu0 0.0
        %315 = vmatpush1.msra.mxu0 0.0
        %316 = vmatprep.mubr.f32.mxu0 0.0
        %317 = vmatmul.mubr.f32.gmra.mrb[0].mxu0 %v237
        %v318 = vpop.f32.mrb[0].mxu0
        %v319 = vadd.f32 %v233, %v318
        %v320 = vpop.f32.mrb[0].mxu0
        %v321 = vadd.f32 %v233, %v320
        %322 = vdwg.mxu0
        %323 = vmatprep.subr.mxu0 %v224
        %324 = vmatpush1.msra.mxu0 %v223
        %325 = vmatprep.subr.mxu0 %v250
        %326 = vmatpush1.msra.mxu0 %v247
        %327 = vmatprep.subr.mxu0 0.0
        %328 = vmatpush1.msra.mxu0 0.0
        %329 = vmatprep.subr.mxu0 0.0
        %330 = vmatpush1.msra.mxu0 0.0
        %331 = vmatprep.subr.mxu0 0.0
        %332 = vmatpush1.msra.mxu0 0.0
        %333 = vmatprep.subr.mxu0 0.0
        %334 = vmatpush1.msra.mxu0 0.0
        %335 = vmatprep.subr.mxu0 0.0
        %336 = vmatpush1.msra.mxu0 0.0
        %337 = vmatprep.subr.mxu0 0.0
        %338 = vmatpush1.msra.mxu0 0.0
        %339 = vmatprep.subr.mxu0 0.0
        %340 = vmatpush1.msra.mxu0 0.0
        %341 = vmatprep.subr.mxu0 0.0
        %342 = vmatpush1.msra.mxu0 0.0
        %343 = vmatprep.subr.mxu0 0.0
        %344 = vmatpush1.msra.mxu0 0.0
        %345 = vmatprep.subr.mxu0 0.0
        %346 = vmatpush1.msra.mxu0 0.0
        %347 = vmatprep.subr.mxu0 0.0
        %348 = vmatpush1.msra.mxu0 0.0
        %349 = vmatprep.subr.mxu0 0.0
        %350 = vmatpush1.msra.mxu0 0.0
        %351 = vmatprep.subr.mxu0 0.0
        %352 = vmatpush1.msra.mxu0 0.0
        %353 = vmatprep.subr.mxu0 0.0
        %354 = vmatpush1.msra.mxu0 0.0
        %355 = vmatprep.subr.mxu0 0.0
        %356 = vmatpush1.msra.mxu0 0.0
        %357 = vmatprep.subr.mxu0 0.0
        %358 = vmatpush1.msra.mxu0 0.0
        %359 = vmatprep.subr.mxu0 0.0
        %360 = vmatpush1.msra.mxu0 0.0
        %361 = vmatprep.subr.mxu0 0.0
        %362 = vmatpush1.msra.mxu0 0.0
        %363 = vmatprep.subr.mxu0 0.0
        %364 = vmatpush1.msra.mxu0 0.0
        %365 = vmatprep.subr.mxu0 0.0
        %366 = vmatpush1.msra.mxu0 0.0
        %367 = vmatprep.subr.mxu0 0.0
        %368 = vmatpush1.msra.mxu0 0.0
        %369 = vmatprep.subr.mxu0 0.0
        %370 = vmatpush1.msra.mxu0 0.0
        %371 = vmatprep.subr.mxu0 0.0
        %372 = vmatpush1.msra.mxu0 0.0
        %373 = vmatprep.subr.mxu0 0.0
        %374 = vmatpush1.msra.mxu0 0.0
        %375 = vmatprep.subr.mxu0 0.0
        %376 = vmatpush1.msra.mxu0 0.0
        %377 = vmatprep.subr.mxu0 0.0
        %378 = vmatpush1.msra.mxu0 0.0
        %379 = vmatprep.subr.mxu0 0.0
        %380 = vmatpush1.msra.mxu0 0.0
        %381 = vmatprep.subr.mxu0 0.0
        %382 = vmatpush1.msra.mxu0 0.0
        %383 = vmatprep.subr.mxu0 0.0
        %384 = vmatpush1.msra.mxu0 0.0
        %385 = vmatprep.subr.mxu0 0.0
        %386 = vmatpush1.msra.mxu0 0.0
        %387 = vmatprep.mubr.f32.mxu0 0.0
        %388 = vmatmul.mubr.f32.gmra.mrb[0].mxu0 %v237
        %v389 = vpop.f32.mrb[0].mxu0
        %v390 = vadd.f32 %v233, %v389
        %v391 = vpop.f32.mrb[0].mxu0
        %v392 = vadd.f32 %v233, %v391
        %393 = vdwg.mxu0
        %394 = vst [vmem:[%s218] sm:$0xff] %v319
        %395 = vst [vmem:[%s218 + $0x8] sm:$0xff] %v321
        %396 = vst [vmem:[%s218 + $0x10] sm:$0xff] %v390
        %397 = vst [vmem:[%s218 + $0x18] sm:$0xff] %v392
        %s398 = smul.u32 4, %s15
        %p399 = scmp.lt.s32.totalorder %s398, 7
        %s400 = scalar_select %p399, %s398, 7
        %s401 = smul.addr %s400, 8
        %s402 = scalar_lea.vmem %s3, %s401
        // Predicated region
        $region60: #{simple_block3d_forward.77} parent=50 // pred_check
          %p403 = pneg %p101
        $region61: #{simple_block3d_forward.77} parent=50 // pred_check_branch
          %405 = sbr.rel (%p403) target = $region63
        $region62: #{simple_block3d_forward.77} parent=50 // pred_region
          %s406 = smul.u32 4, %s15
        $region63: #{simple_block3d_forward.77} parent=50 // pred_fallthru
          _
      $region51: #{simple_block3d_forward.77} parent=5 // pred_fallthru
        _
      %p407 = scmp.le.s32.totalorder 2, %s10
      // Predicated region
      $region64: #{simple_block3d_forward.77} parent=5 // pred_check
        %p408 = pneg %p407
      $region65: #{simple_block3d_forward.77} parent=5 // pred_check_branch
        %410 = sbr.rel (%p408) target = $region67
      $region66: #{simple_block3d_forward.77} parent=5 // pred_region
        %s411 = ssub.s32 %s10, 2
        // Predicated region
        $region68: #{simple_block3d_forward.77} parent=66 // pred_check
          %p412 = pneg %p107
        $region69: #{simple_block3d_forward.77} parent=66 // pred_check_branch
          %414 = sbr.rel (%p412) target = $region71
        $region70: #{simple_block3d_forward.77} parent=66 // pred_region
          %s415 = smul.u32 4, %s16
          %p416 = scmp.lt.s32.totalorder %s415, 7
          %s417 = scalar_select %p416, %s415, 7
          %s418 = smul.addr %s417, 8
          %s419 = scalar_lea.vmem %s3, %s418
        $region71: #{simple_block3d_forward.77} parent=66 // pred_fallthru
          _
      $region67: #{simple_block3d_forward.77} parent=5 // pred_fallthru
        _
    $region6: #{simple_block3d_forward.77} parent=1 // loop_footer
      %s14 = sadd.s32 1, %s10
    $region7: #{simple_block3d_forward.77} parent=1 // loop_footer_branch
      %9 = sbr.rel target = $region3
    $region8: #{simple_block3d_forward.77} parent=1 // loop_exit
      _
    %420 = vsyncpa [#allocation3], 1
    %s421 = scalar_lea.sflag [#allocation3], 1
    %422 = vsyncpa %s421, 1

// kernel: custom-call.6
$region0: #{custom-call.6}
  %s0 = inlined_call_operand.vmem [shape: c64[8,8,2,2,2], index: 0, kind: input, shape index: {}]
  %s1 = inlined_call_operand.vmem [shape: f32[8,8,2,2,2], index: 1, kind: output, shape index: {}]
  %v2 = vld [vmem:[%s0] sm:$0xff]
  %3 = vst [vmem:[%s1] sm:$0xff] %v2
  %s4 = scalar_lea.vmem %s1, 8
  %s5 = scalar_lea.vmem %s0, 8
  %v6 = vld [vmem:[%s5] sm:$0xff]
  %7 = vst [vmem:[%s4] sm:$0xff] %v6
  %s8 = scalar_lea.vmem %s1, 16
  %s9 = scalar_lea.vmem %s0, 16
  %v10 = vld [vmem:[%s9] sm:$0xff]
  %11 = vst [vmem:[%s8] sm:$0xff] %v10
  %s12 = scalar_lea.vmem %s1, 24
  %s13 = scalar_lea.vmem %s0, 24
  %v14 = vld [vmem:[%s13] sm:$0xff]
  %15 = vst [vmem:[%s12] sm:$0xff] %v14
  %s16 = scalar_lea.vmem %s1, 32
  %s17 = scalar_lea.vmem %s0, 32
  %v18 = vld [vmem:[%s17] sm:$0xff]
  %19 = vst [vmem:[%s16] sm:$0xff] %v18
  %s20 = scalar_lea.vmem %s1, 40
  %s21 = scalar_lea.vmem %s0, 40
  %v22 = vld [vmem:[%s21] sm:$0xff]
  %23 = vst [vmem:[%s20] sm:$0xff] %v22
  %s24 = scalar_lea.vmem %s1, 48
  %s25 = scalar_lea.vmem %s0, 48
  %v26 = vld [vmem:[%s25] sm:$0xff]
  %27 = vst [vmem:[%s24] sm:$0xff] %v26
  %s28 = scalar_lea.vmem %s1, 56
  %s29 = scalar_lea.vmem %s0, 56
  %v30 = vld [vmem:[%s29] sm:$0xff]
  %31 = vst [vmem:[%s28] sm:$0xff] %v30

// kernel: custom-call.7
$region0: #{custom-call.7}
  %s0 = inlined_call_operand.vmem [shape: c64[8,8,2,2,2], index: 0, kind: input, shape index: {}]
  %s1 = inlined_call_operand.vmem [shape: f32[8,8,2,2,2], index: 1, kind: output, shape index: {}]
  %s2 = scalar_lea.vmem %s0, 64
  %v3 = vld [vmem:[%s2] sm:$0xff]
  %4 = vst [vmem:[%s1] sm:$0xff] %v3
  %s5 = scalar_lea.vmem %s1, 8
  %s6 = scalar_lea.vmem %s2, 8
  %v7 = vld [vmem:[%s6] sm:$0xff]
  %8 = vst [vmem:[%s5] sm:$0xff] %v7
  %s9 = scalar_lea.vmem %s1, 16
  %s10 = scalar_lea.vmem %s2, 16
  %v11 = vld [vmem:[%s10] sm:$0xff]
  %12 = vst [vmem:[%s9] sm:$0xff] %v11
  %s13 = scalar_lea.vmem %s1, 24
  %s14 = scalar_lea.vmem %s2, 24
  %v15 = vld [vmem:[%s14] sm:$0xff]
  %16 = vst [vmem:[%s13] sm:$0xff] %v15
  %s17 = scalar_lea.vmem %s1, 32
  %s18 = scalar_lea.vmem %s2, 32
  %v19 = vld [vmem:[%s18] sm:$0xff]
  %20 = vst [vmem:[%s17] sm:$0xff] %v19
  %s21 = scalar_lea.vmem %s1, 40
  %s22 = scalar_lea.vmem %s2, 40
  %v23 = vld [vmem:[%s22] sm:$0xff]
  %24 = vst [vmem:[%s21] sm:$0xff] %v23
  %s25 = scalar_lea.vmem %s1, 48
  %s26 = scalar_lea.vmem %s2, 48
  %v27 = vld [vmem:[%s26] sm:$0xff]
  %28 = vst [vmem:[%s25] sm:$0xff] %v27
  %s29 = scalar_lea.vmem %s1, 56
  %s30 = scalar_lea.vmem %s2, 56
  %v31 = vld [vmem:[%s30] sm:$0xff]
  %32 = vst [vmem:[%s29] sm:$0xff] %v31

// kernel: simple_block3d_forward.78
$region0: #{simple_block3d_forward.78}
  #allocation0 [shape = 'u32[]', space=smem, size = 0x4, offset = 0x4, fixed_abs, tag = 'smem constant byte address 0x4 - core index']
  #allocation1 [shape = 'u32[144,128]{1,0:T(1,128)}', space=vmem, size = 0x12000, scoped, tag = 'internal scratch']
  %s0 = inlined_call_operand.vmem [shape: f32[16,2,32], index: 0, kind: input, shape index: {}]
  %s1 = inlined_call_operand.vmem [shape: f32[16,16,32], index: 1, kind: input, shape index: {}]
  %s2 = inlined_call_operand.vmem [shape: f32[2,16,32], index: 2, kind: output, shape index: {}]
  %s3 = sld [smem:[#allocation0]]
  $region18: #{simple_block3d_forward.78} parent=0
    _
  %s5 = ssub.s32 1, %s3
  %s6 = scalar_select 0, %s5, %s3
  // Predicated region
  $region2: #{simple_block3d_forward.78} parent=0 // pred_check
    _
  $region3: #{simple_block3d_forward.78} parent=0 // pred_check_branch
    %8 = sbr.rel (0) target = $region5
  $region4: #{simple_block3d_forward.78} parent=0 // pred_region
    _
  $region5: #{simple_block3d_forward.78} parent=0 // pred_fallthru
    _
  // Predicated region
  $region6: #{simple_block3d_forward.78} parent=0 // pred_check
    _
  $region7: #{simple_block3d_forward.78} parent=0 // pred_check_branch
    %10 = sbr.rel (0) target = $region9
  $region8: #{simple_block3d_forward.78} parent=0 // pred_region
    _
  $region9: #{simple_block3d_forward.78} parent=0 // pred_fallthru
    _
  %v11 = vld [vmem:[%s1] sm:$0xff]
  %v12 = vld [vmem:[%s1 + $0x8] sm:$0xff]
  %v13 = vld [vmem:[%s0] sm:$0x1]
  %v14 = vlaneseq
  %v15 = vshrl.u32 %v14, 7
  %v16 = vsub.s32 0, %v15
  %v17 = vrot.slane %v13, %v16
  %v18 = vmul.f32 %v11, %v17
  %v19 = vmul.f32 %v12, %v17
  %v20 = vadd.f32 %v18, 0.0
  %v21 = vadd.f32 %v19, 0.0
  %v22 = vld [vmem:[%s0 + $0x1] sm:$0x1]
  %v23 = vlaneseq
  %v24 = vshrl.u32 %v23, 7
  %v25 = vsub.s32 0, %v24
  %v26 = vrot.slane %v22, %v25
  %v27 = vmul.f32 %v11, %v26
  %v28 = vmul.f32 %v12, %v26
  %v29 = vadd.f32 %v27, 0.0
  %v30 = vadd.f32 %v28, 0.0
  %s31 = scalar_lea.vmem %s1, 16
  %v32 = vld [vmem:[%s31] sm:$0xff]
  %v33 = vld [vmem:[%s31 + $0x8] sm:$0xff]
  %s34 = scalar_lea.vmem %s0, 2
  %v35 = vld [vmem:[%s34] sm:$0x1]
  %v36 = vlaneseq
  %v37 = vshrl.u32 %v36, 7
  %v38 = vsub.s32 0, %v37
  %v39 = vrot.slane %v35, %v38
  %v40 = vmul.f32 %v32, %v39
  %v41 = vmul.f32 %v33, %v39
  %v42 = vadd.f32 %v20, %v40
  %v43 = vadd.f32 %v21, %v41
  %v44 = vld [vmem:[%s34 + $0x1] sm:$0x1]
  %v45 = vlaneseq
  %v46 = vshrl.u32 %v45, 7
  %v47 = vsub.s32 0, %v46
  %v48 = vrot.slane %v44, %v47
  %v49 = vmul.f32 %v32, %v48
  %v50 = vmul.f32 %v33, %v48
  %v51 = vadd.f32 %v29, %v49
  %v52 = vadd.f32 %v30, %v50
  %s53 = scalar_lea.vmem %s1, 32
  %v54 = vld [vmem:[%s53] sm:$0xff]
  %v55 = vld [vmem:[%s53 + $0x8] sm:$0xff]
  %s56 = scalar_lea.vmem %s0, 4
  %v57 = vld [vmem:[%s56] sm:$0x1]
  %v58 = vlaneseq
  %v59 = vshrl.u32 %v58, 7
  %v60 = vsub.s32 0, %v59
  %v61 = vrot.slane %v57, %v60
  %v62 = vmul.f32 %v54, %v61
  %v63 = vmul.f32 %v55, %v61
  %v64 = vadd.f32 %v42, %v62
  %v65 = vadd.f32 %v43, %v63
  %v66 = vld [vmem:[%s56 + $0x1] sm:$0x1]
  %v67 = vlaneseq
  %v68 = vshrl.u32 %v67, 7
  %v69 = vsub.s32 0, %v68
  %v70 = vrot.slane %v66, %v69
  %v71 = vmul.f32 %v54, %v70
  %v72 = vmul.f32 %v55, %v70
  %v73 = vadd.f32 %v51, %v71
  %v74 = vadd.f32 %v52, %v72
  %s75 = scalar_lea.vmem %s1, 48
  %v76 = vld [vmem:[%s75] sm:$0xff]
  %v77 = vld [vmem:[%s75 + $0x8] sm:$0xff]
  %s78 = scalar_lea.vmem %s0, 6
  %v79 = vld [vmem:[%s78] sm:$0x1]
  %v80 = vlaneseq
  %v81 = vshrl.u32 %v80, 7
  %v82 = vsub.s32 0, %v81
  %v83 = vrot.slane %v79, %v82
  %v84 = vmul.f32 %v76, %v83
  %v85 = vmul.f32 %v77, %v83
  %v86 = vadd.f32 %v64, %v84
  %v87 = vadd.f32 %v65, %v85
  %v88 = vld [vmem:[%s78 + $0x1] sm:$0x1]
  %v89 = vlaneseq
  %v90 = vshrl.u32 %v89, 7
  %v91 = vsub.s32 0, %v90
  %v92 = vrot.slane %v88, %v91
  %v93 = vmul.f32 %v76, %v92
  %v94 = vmul.f32 %v77, %v92
  %v95 = vadd.f32 %v73, %v93
  %v96 = vadd.f32 %v74, %v94
  %s97 = scalar_lea.vmem %s1, 64
  %v98 = vld [vmem:[%s97] sm:$0xff]
  %v99 = vld [vmem:[%s97 + $0x8] sm:$0xff]
  %s100 = scalar_lea.vmem %s0, 8
  %v101 = vld [vmem:[%s100] sm:$0x1]
  %v102 = vlaneseq
  %v103 = vshrl.u32 %v102, 7
  %v104 = vsub.s32 0, %v103
  %v105 = vrot.slane %v101, %v104
  %v106 = vmul.f32 %v98, %v105
  %v107 = vmul.f32 %v99, %v105
  %v108 = vadd.f32 %v86, %v106
  %v109 = vadd.f32 %v87, %v107
  %v110 = vld [vmem:[%s100 + $0x1] sm:$0x1]
  %v111 = vlaneseq
  %v112 = vshrl.u32 %v111, 7
  %v113 = vsub.s32 0, %v112
  %v114 = vrot.slane %v110, %v113
  %v115 = vmul.f32 %v98, %v114
  %v116 = vmul.f32 %v99, %v114
  %v117 = vadd.f32 %v95, %v115
  %v118 = vadd.f32 %v96, %v116
  %s119 = scalar_lea.vmem %s1, 80
  %v120 = vld [vmem:[%s119] sm:$0xff]
  %v121 = vld [vmem:[%s119 + $0x8] sm:$0xff]
  %s122 = scalar_lea.vmem %s0, 10
  %v123 = vld [vmem:[%s122] sm:$0x1]
  %v124 = vlaneseq
  %v125 = vshrl.u32 %v124, 7
  %v126 = vsub.s32 0, %v125
  %v127 = vrot.slane %v123, %v126
  %v128 = vmul.f32 %v120, %v127
  %v129 = vmul.f32 %v121, %v127
  %v130 = vadd.f32 %v108, %v128
  %v131 = vadd.f32 %v109, %v129
  %v132 = vld [vmem:[%s122 + $0x1] sm:$0x1]
  %v133 = vlaneseq
  %v134 = vshrl.u32 %v133, 7
  %v135 = vsub.s32 0, %v134
  %v136 = vrot.slane %v132, %v135
  %v137 = vmul.f32 %v120, %v136
  %v138 = vmul.f32 %v121, %v136
  %v139 = vadd.f32 %v117, %v137
  %v140 = vadd.f32 %v118, %v138
  %s141 = scalar_lea.vmem %s1, 96
  %v142 = vld [vmem:[%s141] sm:$0xff]
  %v143 = vld [vmem:[%s141 + $0x8] sm:$0xff]
  %s144 = scalar_lea.vmem %s0, 12
  %v145 = vld [vmem:[%s144] sm:$0x1]
  %v146 = vlaneseq
  %v147 = vshrl.u32 %v146, 7
  %v148 = vsub.s32 0, %v147
  %v149 = vrot.slane %v145, %v148
  %v150 = vmul.f32 %v142, %v149
  %v151 = vmul.f32 %v143, %v149
  %v152 = vadd.f32 %v130, %v150
  %v153 = vadd.f32 %v131, %v151
  %v154 = vld [vmem:[%s144 + $0x1] sm:$0x1]
  %v155 = vlaneseq
  %v156 = vshrl.u32 %v155, 7
  %v157 = vsub.s32 0, %v156
  %v158 = vrot.slane %v154, %v157
  %v159 = vmul.f32 %v142, %v158
  %v160 = vmul.f32 %v143, %v158
  %v161 = vadd.f32 %v139, %v159
  %v162 = vadd.f32 %v140, %v160
  %s163 = scalar_lea.vmem %s1, 112
  %v164 = vld [vmem:[%s163] sm:$0xff]
  %v165 = vld [vmem:[%s163 + $0x8] sm:$0xff]
  %s166 = scalar_lea.vmem %s0, 14
  %v167 = vld [vmem:[%s166] sm:$0x1]
  %v168 = vlaneseq
  %v169 = vshrl.u32 %v168, 7
  %v170 = vsub.s32 0, %v169
  %v171 = vrot.slane %v167, %v170
  %v172 = vmul.f32 %v164, %v171
  %v173 = vmul.f32 %v165, %v171
  %v174 = vadd.f32 %v152, %v172
  %v175 = vadd.f32 %v153, %v173
  %v176 = vld [vmem:[%s166 + $0x1] sm:$0x1]
  %v177 = vlaneseq
  %v178 = vshrl.u32 %v177, 7
  %v179 = vsub.s32 0, %v178
  %v180 = vrot.slane %v176, %v179
  %v181 = vmul.f32 %v164, %v180
  %v182 = vmul.f32 %v165, %v180
  %v183 = vadd.f32 %v161, %v181
  %v184 = vadd.f32 %v162, %v182
  %s185 = scalar_lea.vmem %s1, 128
  %v186 = vld [vmem:[%s185] sm:$0xff]
  %v187 = vld [vmem:[%s185 + $0x8] sm:$0xff]
  %s188 = scalar_lea.vmem %s0, 16
  %v189 = vld [vmem:[%s188] sm:$0x1]
  %v190 = vlaneseq
  %v191 = vshrl.u32 %v190, 7
  %v192 = vsub.s32 0, %v191
  %v193 = vrot.slane %v189, %v192
  %v194 = vmul.f32 %v186, %v193
  %v195 = vmul.f32 %v187, %v193
  %v196 = vadd.f32 %v174, %v194
  %v197 = vadd.f32 %v175, %v195
  %v198 = vld [vmem:[%s188 + $0x1] sm:$0x1]
  %v199 = vlaneseq
  %v200 = vshrl.u32 %v199, 7
  %v201 = vsub.s32 0, %v200
  %v202 = vrot.slane %v198, %v201
  %v203 = vmul.f32 %v186, %v202
  %v204 = vmul.f32 %v187, %v202
  %v205 = vadd.f32 %v183, %v203
  %v206 = vadd.f32 %v184, %v204
  %s207 = scalar_lea.vmem %s1, 144
  %v208 = vld [vmem:[%s207] sm:$0xff]
  %v209 = vld [vmem:[%s207 + $0x8] sm:$0xff]
  %s210 = scalar_lea.vmem %s0, 18
  %v211 = vld [vmem:[%s210] sm:$0x1]
  %v212 = vlaneseq
  %v213 = vshrl.u32 %v212, 7
  %v214 = vsub.s32 0, %v213
  %v215 = vrot.slane %v211, %v214
  %v216 = vmul.f32 %v208, %v215
  %v217 = vmul.f32 %v209, %v215
  %v218 = vadd.f32 %v196, %v216
  %v219 = vadd.f32 %v197, %v217
  %v220 = vld [vmem:[%s210 + $0x1] sm:$0x1]
  %v221 = vlaneseq
  %v222 = vshrl.u32 %v221, 7
  %v223 = vsub.s32 0, %v222
  %v224 = vrot.slane %v220, %v223
  %v225 = vmul.f32 %v208, %v224
  %v226 = vmul.f32 %v209, %v224
  %v227 = vadd.f32 %v205, %v225
  %v228 = vadd.f32 %v206, %v226
  %s229 = scalar_lea.vmem %s1, 160
  %v230 = vld [vmem:[%s229] sm:$0xff]
  %v231 = vld [vmem:[%s229 + $0x8] sm:$0xff]
  %s232 = scalar_lea.vmem %s0, 20
  %v233 = vld [vmem:[%s232] sm:$0x1]
  %v234 = vlaneseq
  %v235 = vshrl.u32 %v234, 7
  %v236 = vsub.s32 0, %v235
  %v237 = vrot.slane %v233, %v236
  %v238 = vmul.f32 %v230, %v237
  %v239 = vmul.f32 %v231, %v237
  %v240 = vadd.f32 %v218, %v238
  %v241 = vadd.f32 %v219, %v239
  %v242 = vld [vmem:[%s232 + $0x1] sm:$0x1]
  %v243 = vlaneseq
  %v244 = vshrl.u32 %v243, 7
  %v245 = vsub.s32 0, %v244
  %v246 = vrot.slane %v242, %v245
  %v247 = vmul.f32 %v230, %v246
  %v248 = vmul.f32 %v231, %v246
  %v249 = vadd.f32 %v227, %v247
  %v250 = vadd.f32 %v228, %v248
  %s251 = scalar_lea.vmem %s1, 176
  %v252 = vld [vmem:[%s251] sm:$0xff]
  %v253 = vld [vmem:[%s251 + $0x8] sm:$0xff]
  %s254 = scalar_lea.vmem %s0, 22
  %v255 = vld [vmem:[%s254] sm:$0x1]
  %v256 = vlaneseq
  %v257 = vshrl.u32 %v256, 7
  %v258 = vsub.s32 0, %v257
  %v259 = vrot.slane %v255, %v258
  %v260 = vmul.f32 %v252, %v259
  %v261 = vmul.f32 %v253, %v259
  %v262 = vadd.f32 %v240, %v260
  %v263 = vadd.f32 %v241, %v261
  %v264 = vld [vmem:[%s254 + $0x1] sm:$0x1]
  %v265 = vlaneseq
  %v266 = vshrl.u32 %v265, 7
  %v267 = vsub.s32 0, %v266
  %v268 = vrot.slane %v264, %v267
  %v269 = vmul.f32 %v252, %v268
  %v270 = vmul.f32 %v253, %v268
  %v271 = vadd.f32 %v249, %v269
  %v272 = vadd.f32 %v250, %v270
  %s273 = scalar_lea.vmem %s1, 192
  %v274 = vld [vmem:[%s273] sm:$0xff]
  %v275 = vld [vmem:[%s273 + $0x8] sm:$0xff]
  %s276 = scalar_lea.vmem %s0, 24
  %v277 = vld [vmem:[%s276] sm:$0x1]
  %v278 = vlaneseq
  %v279 = vshrl.u32 %v278, 7
  %v280 = vsub.s32 0, %v279
  %v281 = vrot.slane %v277, %v280
  %v282 = vmul.f32 %v274, %v281
  %v283 = vmul.f32 %v275, %v281
  %v284 = vadd.f32 %v262, %v282
  %v285 = vadd.f32 %v263, %v283
  %v286 = vld [vmem:[%s276 + $0x1] sm:$0x1]
  %v287 = vlaneseq
  %v288 = vshrl.u32 %v287, 7
  %v289 = vsub.s32 0, %v288
  %v290 = vrot.slane %v286, %v289
  %v291 = vmul.f32 %v274, %v290
  %v292 = vmul.f32 %v275, %v290
  %v293 = vadd.f32 %v271, %v291
  %v294 = vadd.f32 %v272, %v292
  %s295 = scalar_lea.vmem %s1, 208
  %v296 = vld [vmem:[%s295] sm:$0xff]
  %v297 = vld [vmem:[%s295 + $0x8] sm:$0xff]
  %s298 = scalar_lea.vmem %s0, 26
  %v299 = vld [vmem:[%s298] sm:$0x1]
  %v300 = vlaneseq
  %v301 = vshrl.u32 %v300, 7
  %v302 = vsub.s32 0, %v301
  %v303 = vrot.slane %v299, %v302
  %v304 = vmul.f32 %v296, %v303
  %v305 = vmul.f32 %v297, %v303
  %v306 = vadd.f32 %v284, %v304
  %v307 = vadd.f32 %v285, %v305
  %v308 = vld [vmem:[%s298 + $0x1] sm:$0x1]
  %v309 = vlaneseq
  %v310 = vshrl.u32 %v309, 7
  %v311 = vsub.s32 0, %v310
  %v312 = vrot.slane %v308, %v311
  %v313 = vmul.f32 %v296, %v312
  %v314 = vmul.f32 %v297, %v312
  %v315 = vadd.f32 %v293, %v313
  %v316 = vadd.f32 %v294, %v314
  %s317 = scalar_lea.vmem %s1, 224
  %v318 = vld [vmem:[%s317] sm:$0xff]
  %v319 = vld [vmem:[%s317 + $0x8] sm:$0xff]
  %s320 = scalar_lea.vmem %s0, 28
  %v321 = vld [vmem:[%s320] sm:$0x1]
  %v322 = vlaneseq
  %v323 = vshrl.u32 %v322, 7
  %v324 = vsub.s32 0, %v323
  %v325 = vrot.slane %v321, %v324
  %v326 = vmul.f32 %v318, %v325
  %v327 = vmul.f32 %v319, %v325
  %v328 = vadd.f32 %v306, %v326
  %v329 = vadd.f32 %v307, %v327
  %v330 = vld [vmem:[%s320 + $0x1] sm:$0x1]
  %v331 = vlaneseq
  %v332 = vshrl.u32 %v331, 7
  %v333 = vsub.s32 0, %v332
  %v334 = vrot.slane %v330, %v333
  %v335 = vmul.f32 %v318, %v334
  %v336 = vmul.f32 %v319, %v334
  %v337 = vadd.f32 %v315, %v335
  %v338 = vadd.f32 %v316, %v336
  %s339 = scalar_lea.vmem %s1, 240
  %v340 = vld [vmem:[%s339] sm:$0xff]
  %v341 = vld [vmem:[%s339 + $0x8] sm:$0xff]
  %s342 = scalar_lea.vmem %s0, 30
  %v343 = vld [vmem:[%s342] sm:$0x1]
  %v344 = vlaneseq
  %v345 = vshrl.u32 %v344, 7
  %v346 = vsub.s32 0, %v345
  %v347 = vrot.slane %v343, %v346
  %v348 = vmul.f32 %v340, %v347
  %v349 = vmul.f32 %v341, %v347
  %v350 = vadd.f32 %v328, %v348
  %v351 = vadd.f32 %v329, %v349
  %v352 = vld [vmem:[%s342 + $0x1] sm:$0x1]
  %v353 = vlaneseq
  %v354 = vshrl.u32 %v353, 7
  %v355 = vsub.s32 0, %v354
  %v356 = vrot.slane %v352, %v355
  %v357 = vmul.f32 %v340, %v356
  %v358 = vmul.f32 %v341, %v356
  %v359 = vadd.f32 %v337, %v357
  %v360 = vadd.f32 %v338, %v358
  %vm361 = vcmask 261120
  %362 = vst.msk [vmem:[%s2] sm:$0xff] %vm361, %v350
  %363 = vst.msk [vmem:[%s2 + $0x8] sm:$0xff] %vm361, %v351
  %s364 = scalar_lea.vmem %s2, 16
  %365 = vst.msk [vmem:[%s364] sm:$0xff] %vm361, %v359
  %366 = vst.msk [vmem:[%s364 + $0x8] sm:$0xff] %vm361, %v360
  // Predicated region
  $region10: #{simple_block3d_forward.78} parent=0 // pred_check
    _
  $region11: #{simple_block3d_forward.78} parent=0 // pred_check_branch
    %368 = sbr.rel (0) target = $region13
  $region12: #{simple_block3d_forward.78} parent=0 // pred_region
    _
  $region13: #{simple_block3d_forward.78} parent=0 // pred_fallthru
    _
  // Predicated region
  $region14: #{simple_block3d_forward.78} parent=0 // pred_check
    _
  $region15: #{simple_block3d_forward.78} parent=0 // pred_check_branch
    %370 = sbr.rel (0) target = $region17
  $region16: #{simple_block3d_forward.78} parent=0 // pred_region
    _
  $region17: #{simple_block3d_forward.78} parent=0 // pred_fallthru
    _

// kernel: reverse.12
$region0: #{reverse.12}
  #allocation0 [shape = 's32[1]{0}', space=sflag, size = 0x4, scoped, tag = 'scoped memory for reverse.12']
  %s0 = inlined_call_operand.vmem [shape: f32[8,2,8,8,3], index: 0, kind: input, shape index: {}]
  %s1 = inlined_call_operand.vmem [shape: f32[8,2,8,8,3], index: 1, kind: output, shape index: {}]
  %s2 = scalar_lea.vmem %s0, 16
  %v3 = vld [vmem:[%s2] sm:$0xff]
  %4 = vst [vmem:[%s1] sm:$0xff] %v3
  %s5 = scalar_lea.vmem %s0, 64
  %v6 = vld [vmem:[%s5] sm:$0xff]
  %s7 = scalar_lea.vmem %s1, 48
  %8 = vst [vmem:[%s7] sm:$0xff] %v6
  %s9 = scalar_lea.vmem %s0, 112
  %v10 = vld [vmem:[%s9] sm:$0xff]
  %s11 = scalar_lea.vmem %s1, 96
  %12 = vst [vmem:[%s11] sm:$0xff] %v10
  %s13 = scalar_lea.vmem %s0, 160
  %v14 = vld [vmem:[%s13] sm:$0xff]
  %s15 = scalar_lea.vmem %s1, 144
  %16 = vst [vmem:[%s15] sm:$0xff] %v14
  %s17 = scalar_lea.vmem %s0, 208
  %v18 = vld [vmem:[%s17] sm:$0xff]
  %s19 = scalar_lea.vmem %s1, 192
  %20 = vst [vmem:[%s19] sm:$0xff] %v18
  %s21 = scalar_lea.vmem %s0, 256
  %v22 = vld [vmem:[%s21] sm:$0xff]
  %s23 = scalar_lea.vmem %s1, 240
  %24 = vst [vmem:[%s23] sm:$0xff] %v22
  %s25 = scalar_lea.vmem %s0, 304
  %v26 = vld [vmem:[%s25] sm:$0xff]
  %s27 = scalar_lea.vmem %s1, 288
  %28 = vst [vmem:[%s27] sm:$0xff] %v26
  %s29 = scalar_lea.vmem %s0, 352
  %v30 = vld [vmem:[%s29] sm:$0xff]
  %s31 = scalar_lea.vmem %s1, 336
  %32 = vst [vmem:[%s31] sm:$0xff] %v30
  %s33 = scalar_lea.vmem %s0, 40
  %v34 = vld [vmem:[%s33] sm:$0xff]
  %s35 = scalar_lea.vmem %s1, 24
  %36 = vst [vmem:[%s35] sm:$0xff] %v34
  %s37 = scalar_lea.vmem %s0, 88
  %v38 = vld [vmem:[%s37] sm:$0xff]
  %s39 = scalar_lea.vmem %s1, 72
  %40 = vst [vmem:[%s39] sm:$0xff] %v38
  %s41 = scalar_lea.vmem %s0, 136
  %v42 = vld [vmem:[%s41] sm:$0xff]
  %s43 = scalar_lea.vmem %s1, 120
  %44 = vst [vmem:[%s43] sm:$0xff] %v42
  %s45 = scalar_lea.vmem %s0, 184
  %v46 = vld [vmem:[%s45] sm:$0xff]
  %s47 = scalar_lea.vmem %s1, 168
  %48 = vst [vmem:[%s47] sm:$0xff] %v46
  %s49 = scalar_lea.vmem %s0, 232
  %v50 = vld [vmem:[%s49] sm:$0xff]
  %s51 = scalar_lea.vmem %s1, 216
  %52 = vst [vmem:[%s51] sm:$0xff] %v50
  %s53 = scalar_lea.vmem %s0, 280
  %v54 = vld [vmem:[%s53] sm:$0xff]
  %s55 = scalar_lea.vmem %s1, 264
  %56 = vst [vmem:[%s55] sm:$0xff] %v54
  %s57 = scalar_lea.vmem %s0, 328
  %v58 = vld [vmem:[%s57] sm:$0xff]
  %s59 = scalar_lea.vmem %s1, 312
  %60 = vst [vmem:[%s59] sm:$0xff] %v58
  %s61 = scalar_lea.vmem %s0, 376
  %v62 = vld [vmem:[%s61] sm:$0xff]
  %s63 = scalar_lea.vmem %s1, 360
  %64 = vst [vmem:[%s63] sm:$0xff] %v62
  %s65 = scalar_lea.vmem %s0, 8
  %v66 = vld [vmem:[%s65] sm:$0xff]
  %s67 = scalar_lea.vmem %s1, 8
  %68 = vst [vmem:[%s67] sm:$0xff] %v66
  %s69 = scalar_lea.vmem %s0, 56
  %v70 = vld [vmem:[%s69] sm:$0xff]
  %s71 = scalar_lea.vmem %s1, 56
  %72 = vst [vmem:[%s71] sm:$0xff] %v70
  %s73 = scalar_lea.vmem %s0, 104
  %v74 = vld [vmem:[%s73] sm:$0xff]
  %s75 = scalar_lea.vmem %s1, 104
  %76 = vst [vmem:[%s75] sm:$0xff] %v74
  %s77 = scalar_lea.vmem %s0, 152
  %v78 = vld [vmem:[%s77] sm:$0xff]
  %s79 = scalar_lea.vmem %s1, 152
  %80 = vst [vmem:[%s79] sm:$0xff] %v78
  %s81 = scalar_lea.vmem %s0, 200
  %v82 = vld [vmem:[%s81] sm:$0xff]
  %s83 = scalar_lea.vmem %s1, 200
  %84 = vst [vmem:[%s83] sm:$0xff] %v82
  %s85 = scalar_lea.vmem %s0, 248
  %v86 = vld [vmem:[%s85] sm:$0xff]
  %s87 = scalar_lea.vmem %s1, 248
  %88 = vst [vmem:[%s87] sm:$0xff] %v86
  %s89 = scalar_lea.vmem %s0, 296
  %v90 = vld [vmem:[%s89] sm:$0xff]
  %s91 = scalar_lea.vmem %s1, 296
  %92 = vst [vmem:[%s91] sm:$0xff] %v90
  %s93 = scalar_lea.vmem %s0, 344
  %v94 = vld [vmem:[%s93] sm:$0xff]
  %s95 = scalar_lea.vmem %s1, 344
  %96 = vst [vmem:[%s95] sm:$0xff] %v94
  %s97 = scalar_lea.vmem %s0, 32
  %v98 = vld [vmem:[%s97] sm:$0xff]
  %s99 = scalar_lea.vmem %s1, 32
  %100 = vst [vmem:[%s99] sm:$0xff] %v98
  %s101 = scalar_lea.vmem %s0, 80
  %v102 = vld [vmem:[%s101] sm:$0xff]
  %s103 = scalar_lea.vmem %s1, 80
  %104 = vst [vmem:[%s103] sm:$0xff] %v102
  %s105 = scalar_lea.vmem %s0, 128
  %v106 = vld [vmem:[%s105] sm:$0xff]
  %s107 = scalar_lea.vmem %s1, 128
  %108 = vst [vmem:[%s107] sm:$0xff] %v106
  %s109 = scalar_lea.vmem %s0, 176
  %v110 = vld [vmem:[%s109] sm:$0xff]
  %s111 = scalar_lea.vmem %s1, 176
  %112 = vst [vmem:[%s111] sm:$0xff] %v110
  %s113 = scalar_lea.vmem %s0, 224
  %v114 = vld [vmem:[%s113] sm:$0xff]
  %s115 = scalar_lea.vmem %s1, 224
  %116 = vst [vmem:[%s115] sm:$0xff] %v114
  %s117 = scalar_lea.vmem %s0, 272
  %v118 = vld [vmem:[%s117] sm:$0xff]
  %s119 = scalar_lea.vmem %s1, 272
  %120 = vst [vmem:[%s119] sm:$0xff] %v118
  %s121 = scalar_lea.vmem %s0, 320
  %v122 = vld [vmem:[%s121] sm:$0xff]
  %s123 = scalar_lea.vmem %s1, 320
  %124 = vst [vmem:[%s123] sm:$0xff] %v122
  %s125 = scalar_lea.vmem %s0, 368
  %v126 = vld [vmem:[%s125] sm:$0xff]
  %s127 = scalar_lea.vmem %s1, 368
  %128 = vst [vmem:[%s127] sm:$0xff] %v126
  %v129 = vld [vmem:[%s0] sm:$0xff]
  %s130 = scalar_lea.vmem %s1, 16
  %131 = vst [vmem:[%s130] sm:$0xff] %v129
  %s132 = scalar_lea.vmem %s0, 48
  %v133 = vld [vmem:[%s132] sm:$0xff]
  %s134 = scalar_lea.vmem %s1, 64
  %135 = vst [vmem:[%s134] sm:$0xff] %v133
  %s136 = scalar_lea.vmem %s0, 96
  %v137 = vld [vmem:[%s136] sm:$0xff]
  %s138 = scalar_lea.vmem %s1, 112
  %139 = vst [vmem:[%s138] sm:$0xff] %v137
  %s140 = scalar_lea.vmem %s0, 144
  %v141 = vld [vmem:[%s140] sm:$0xff]
  %s142 = scalar_lea.vmem %s1, 160
  %143 = vst [vmem:[%s142] sm:$0xff] %v141
  %s144 = scalar_lea.vmem %s0, 192
  %v145 = vld [vmem:[%s144] sm:$0xff]
  %s146 = scalar_lea.vmem %s1, 208
  %147 = vst [vmem:[%s146] sm:$0xff] %v145
  %s148 = scalar_lea.vmem %s0, 240
  %v149 = vld [vmem:[%s148] sm:$0xff]
  %s150 = scalar_lea.vmem %s1, 256
  %151 = vst [vmem:[%s150] sm:$0xff] %v149
  %s152 = scalar_lea.vmem %s0, 288
  %v153 = vld [vmem:[%s152] sm:$0xff]
  %s154 = scalar_lea.vmem %s1, 304
  %155 = vst [vmem:[%s154] sm:$0xff] %v153
  %s156 = scalar_lea.vmem %s0, 336
  %v157 = vld [vmem:[%s156] sm:$0xff]
  %s158 = scalar_lea.vmem %s1, 352
  %159 = vst [vmem:[%s158] sm:$0xff] %v157
  %s160 = scalar_lea.vmem %s0, 24
  %v161 = vld [vmem:[%s160] sm:$0xff]
  %s162 = scalar_lea.vmem %s1, 40
  %163 = vst [vmem:[%s162] sm:$0xff] %v161
  %s164 = scalar_lea.vmem %s0, 72
  %v165 = vld [vmem:[%s164] sm:$0xff]
  %s166 = scalar_lea.vmem %s1, 88
  %167 = vst [vmem:[%s166] sm:$0xff] %v165
  %s168 = scalar_lea.vmem %s0, 120
  %v169 = vld [vmem:[%s168] sm:$0xff]
  %s170 = scalar_lea.vmem %s1, 136
  %171 = vst [vmem:[%s170] sm:$0xff] %v169
  %s172 = scalar_lea.vmem %s0, 168
  %v173 = vld [vmem:[%s172] sm:$0xff]
  %s174 = scalar_lea.vmem %s1, 184
  %175 = vst [vmem:[%s174] sm:$0xff] %v173
  %s176 = scalar_lea.vmem %s0, 216
  %v177 = vld [vmem:[%s176] sm:$0xff]
  %s178 = scalar_lea.vmem %s1, 232
  %179 = vst [vmem:[%s178] sm:$0xff] %v177
  %s180 = scalar_lea.vmem %s0, 264
  %v181 = vld [vmem:[%s180] sm:$0xff]
  %s182 = scalar_lea.vmem %s1, 280
  %183 = vst [vmem:[%s182] sm:$0xff] %v181
  %s184 = scalar_lea.vmem %s0, 312
  %v185 = vld [vmem:[%s184] sm:$0xff]
  %s186 = scalar_lea.vmem %s1, 328
  %187 = vst [vmem:[%s186] sm:$0xff] %v185
  %s188 = scalar_lea.vmem %s0, 360
  %v189 = vld [vmem:[%s188] sm:$0xff]
  %s190 = scalar_lea.vmem %s1, 376
  %191 = vst [vmem:[%s190] sm:$0xff] %v189

// kernel: simple_block3d_forward.79
$region0: #{simple_block3d_forward.79}
  #allocation0 [shape = 'u32[]', space=smem, size = 0x4, offset = 0x4, fixed_abs, tag = 'smem constant byte address 0x4 - core index']
  #allocation1 [shape = 'u32[144,128]{1,0:T(1,128)}', space=vmem, size = 0x12000, scoped, tag = 'internal scratch']
  %s0 = inlined_call_operand.vmem [shape: f32[8,8], index: 0, kind: input, shape index: {}]
  %s1 = inlined_call_operand.vmem [shape: f32[8,1024], index: 1, kind: input, shape index: {}]
  %s2 = inlined_call_operand.vmem [shape: f32[8,1], index: 2, kind: input, shape index: {}]
  %s3 = inlined_call_operand.vmem [shape: f32[8,1024], index: 3, kind: output, shape index: {}]
  %s4 = sld [smem:[#allocation0]]
  $region45: #{simple_block3d_forward.79} parent=0
    _
  %s6 = ssub.s32 1, %s4
  %s7 = scalar_select 0, %s6, %s4
  loop: start=0, step=1, limit=4
  $region2: #{simple_block3d_forward.79} parent=0 // loop_pre_header
    _
  $region3: #{simple_block3d_forward.79} parent=0 // loop_header
    %s9 = sphi 0, %s13
    %p10 = scmp.ge.s32.totalorder %s9, 4
    %s17 = sphi 0, %s17
    %s19 = sphi 0, %s17
    %s20 = sphi 0, %s19
    %s34 = sphi 0, %s20
    %s40 = sphi 0, %s42
    %s43 = sphi 0, %s40
    %s44 = sphi 0, %s43
    %s60 = sphi 0, %s44
    %s64 = sphi 0, %s64
    %s66 = sphi 0, %s64
    %s67 = sphi 0, %s66
    %s81 = sphi 0, %s67
    %s87 = sphi 0, %s89
    %s90 = sphi 0, %s87
    %s91 = sphi 0, %s90
    %s107 = sphi 0, %s91
  $region4: #{simple_block3d_forward.79} parent=0 // loop_header_branch
    %12 = sbr.rel (%p10) target = $region8
  $region5: #{simple_block3d_forward.79} parent=0 // loop_body
    %s14 = ssub.s32 %s9, 1
    %s15 = ssub.s32 %s9, 2
    %s16 = sadd.s32 %s9, 1
    %s18 = sadd.s32 %s17, 1
    %p21 = scmp.eq.s32.totalorder %s9, 1
    %p22 = scmp.ne.s32.totalorder %s17, %s19
    %p23 = scmp.eq.s32.totalorder %s9, 0
    %p24 = por %p22, %p23
    %p25 = scmp.ne.s32.totalorder %s17, %s19
    %p26 = scmp.eq.s32.totalorder %s14, 1
    %p27 = por %p25, %p26
    %p28 = scmp.ne.s32.totalorder %s19, %s20
    %p29 = scmp.eq.s32.totalorder %s14, 0
    %p30 = por %p28, %p29
    %p31 = scmp.ne.s32.totalorder %s19, %s20
    %p32 = scmp.eq.s32.totalorder %s15, 1
    %p33 = por %p31, %p32
    %p35 = scmp.ne.s32.totalorder %s20, %s34
    %p36 = scmp.eq.s32.totalorder %s15, 0
    %p37 = por %p35, %p36
    %s38 = ssub.s32 %s9, %s16
    %p39 = scmp.eq.s32.totalorder %s38, 0
    %s41 = sadd.s32 %s40, 1
    %s42 = scalar_select %p39, %s40, %s41
    %p45 = pneg %p39
    %p46 = scmp.eq.s32.totalorder %s9, 1
    %p47 = por %p45, %p46
    %p48 = scmp.ne.s32.totalorder %s40, %s43
    %p49 = scmp.eq.s32.totalorder %s9, 0
    %p50 = por %p48, %p49
    %p51 = scmp.ne.s32.totalorder %s40, %s43
    %p52 = scmp.eq.s32.totalorder %s14, 1
    %p53 = por %p51, %p52
    %p54 = scmp.ne.s32.totalorder %s43, %s44
    %p55 = scmp.eq.s32.totalorder %s14, 0
    %p56 = por %p54, %p55
    %p57 = scmp.ne.s32.totalorder %s43, %s44
    %p58 = scmp.eq.s32.totalorder %s15, 1
    %p59 = por %p57, %p58
    %p61 = scmp.ne.s32.totalorder %s44, %s60
    %p62 = scmp.eq.s32.totalorder %s15, 0
    %p63 = por %p61, %p62
    %s65 = sadd.s32 %s64, 1
    %p68 = scmp.eq.s32.totalorder %s9, 1
    %p69 = scmp.ne.s32.totalorder %s64, %s66
    %p70 = scmp.eq.s32.totalorder %s9, 0
    %p71 = por %p69, %p70
    %p72 = scmp.ne.s32.totalorder %s64, %s66
    %p73 = scmp.eq.s32.totalorder %s14, 1
    %p74 = por %p72, %p73
    %p75 = scmp.ne.s32.totalorder %s66, %s67
    %p76 = scmp.eq.s32.totalorder %s14, 0
    %p77 = por %p75, %p76
    %p78 = scmp.ne.s32.totalorder %s66, %s67
    %p79 = scmp.eq.s32.totalorder %s15, 1
    %p80 = por %p78, %p79
    %p82 = scmp.ne.s32.totalorder %s67, %s81
    %p83 = scmp.eq.s32.totalorder %s15, 0
    %p84 = por %p82, %p83
    %s85 = ssub.s32 %s9, %s16
    %p86 = scmp.eq.s32.totalorder %s85, 0
    %s88 = sadd.s32 %s87, 1
    %s89 = scalar_select %p86, %s87, %s88
    %p92 = pneg %p86
    %p93 = scmp.eq.s32.totalorder %s9, 1
    %p94 = por %p92, %p93
    %p95 = scmp.ne.s32.totalorder %s87, %s90
    %p96 = scmp.eq.s32.totalorder %s9, 0
    %p97 = por %p95, %p96
    %p98 = scmp.ne.s32.totalorder %s87, %s90
    %p99 = scmp.eq.s32.totalorder %s14, 1
    %p100 = por %p98, %p99
    %p101 = scmp.ne.s32.totalorder %s90, %s91
    %p102 = scmp.eq.s32.totalorder %s14, 0
    %p103 = por %p101, %p102
    %p104 = scmp.ne.s32.totalorder %s90, %s91
    %p105 = scmp.eq.s32.totalorder %s15, 1
    %p106 = por %p104, %p105
    %p108 = scmp.ne.s32.totalorder %s91, %s107
    %p109 = scmp.eq.s32.totalorder %s15, 0
    %p110 = por %p108, %p109
    %p111 = scmp.le.s32.totalorder 1, %s9
    %p112 = scmp.lt.s32.totalorder %s9, 3
    %p113 = pnand %p111, %p112
    %p114 = pneg %p113
    // Predicated region
    $region9: #{simple_block3d_forward.79} parent=5 // pred_check
      _
    $region10: #{simple_block3d_forward.79} parent=5 // pred_check_branch
      %116 = sbr.rel (%p113) target = $region12
    $region11: #{simple_block3d_forward.79} parent=5 // pred_region
      %s117 = ssub.s32 %s9, 1
      // Predicated region
      $region13: #{simple_block3d_forward.79} parent=11 // pred_check
        %p118 = pneg %p30
      $region14: #{simple_block3d_forward.79} parent=11 // pred_check_branch
        %120 = sbr.rel (%p118) target = $region16
      $region15: #{simple_block3d_forward.79} parent=11 // pred_region
        _
      $region16: #{simple_block3d_forward.79} parent=11 // pred_fallthru
        _
      // Predicated region
      $region17: #{simple_block3d_forward.79} parent=11 // pred_check
        %p121 = pneg %p77
      $region18: #{simple_block3d_forward.79} parent=11 // pred_check_branch
        %123 = sbr.rel (%p121) target = $region20
      $region19: #{simple_block3d_forward.79} parent=11 // pred_region
        _
      $region20: #{simple_block3d_forward.79} parent=11 // pred_fallthru
        _
    $region12: #{simple_block3d_forward.79} parent=5 // pred_fallthru
      _
    %p124 = scmp.lt.s32.totalorder %s9, 2
    // Predicated region
    $region21: #{simple_block3d_forward.79} parent=5 // pred_check
      %p125 = pneg %p124
    $region22: #{simple_block3d_forward.79} parent=5 // pred_check_branch
      %127 = sbr.rel (%p125) target = $region24
    $region23: #{simple_block3d_forward.79} parent=5 // pred_region
      // Predicated region
      $region25: #{simple_block3d_forward.79} parent=23 // pred_check
        %p128 = pneg %p50
      $region26: #{simple_block3d_forward.79} parent=23 // pred_check_branch
        %130 = sbr.rel (%p128) target = $region28
      $region27: #{simple_block3d_forward.79} parent=23 // pred_region
        %s131 = smul.u32 4, %s9
        %p132 = scmp.lt.s32.totalorder %s131, 7
        %s133 = scalar_select %p132, %s131, 7
        %s134 = smul.addr %s133, 8
        %s135 = scalar_lea.vmem %s1, %s134
        %s136 = smul.u32 4, %s9
      $region28: #{simple_block3d_forward.79} parent=23 // pred_fallthru
        _
    $region24: #{simple_block3d_forward.79} parent=5 // pred_fallthru
      _
    %p137 = scmp.le.s32.totalorder 1, %s9
    %p138 = scmp.lt.s32.totalorder %s9, 3
    %p139 = pnand %p137, %p138
    %p140 = pneg %p139
    // Predicated region
    $region29: #{simple_block3d_forward.79} parent=5 // pred_check
      _
    $region30: #{simple_block3d_forward.79} parent=5 // pred_check_branch
      %142 = sbr.rel (%p139) target = $region32
    $region31: #{simple_block3d_forward.79} parent=5 // pred_region
      %s143 = ssub.s32 %s9, 1
      %p144 = pneg %p30
      %p145 = pneg %p27
      %s146 = smul.u32 4, %s14
      %p147 = scmp.lt.s32.totalorder %s146, 7
      %s148 = scalar_select %p147, %s146, 7
      %s149 = smul.addr %s148, 8
      %s150 = scalar_lea.vmem %s1, %s149
      %p151 = pneg %p56
      %p152 = pneg %p53
      %p153 = pneg %p77
      %p154 = pneg %p74
      %p155 = pneg %p103
      %p156 = pneg %p100
      %s157 = smul.u32 4, %s14
      %p158 = scmp.lt.s32.totalorder %s157, 7
      %s159 = scalar_select %p158, %s157, 7
      %s160 = smul.addr %s159, 8
      %s161 = scalar_lea.vmem %s3, %s160
      %s162 = smul.u32 4, %s14
      %p163 = scmp.lt.s32.totalorder %s162, 7
      %s164 = scalar_select %p163, %s162, 7
      %s165 = smul.addr %s164, 8
      %s166 = scalar_lea.vmem %s1, %s165
      %s167 = smul.u32 4, %s14
      %s168 = smul.u32 4, %s14
      %p169 = scmp.lt.s32.totalorder %s168, 7
      %s170 = scalar_select %p169, %s168, 7
      %s171 = smul.addr %s170, 8
      %s172 = scalar_lea.vmem %s3, %s171
      %s173 = smul.u32 4, %s14
      %v174 = vld [vmem:[%s0] sm:$0xff]
      %v175 = vld [vmem:[%s166] sm:$0xff]
      %v176 = vld [vmem:[%s166 + $0x8] sm:$0xff]
      %v177 = vld [vmem:[%s166 + $0x10] sm:$0xff]
      %v178 = vld [vmem:[%s166 + $0x18] sm:$0xff]
      %v179 = vld [vmem:[%s2] sm:$0xff]
      %181 = vset.pattern.permute.xlu0 0
      %182 = vperm.xlu0 %181, %v179
      %v183 = vpop.permute.xlu0 %182
      %vm185 = vcmask 64512
      %v187 = vsel %vm185, %v174, 0
      %189 = vmatprep.subr.mxu0 %v176
      %190 = vmatpush1.msra.mxu0 %v175
      %191 = vmatprep.subr.mxu0 0.0
      %192 = vmatpush1.msra.mxu0 0.0
      %193 = vmatprep.subr.mxu0 0.0
      %194 = vmatpush1.msra.mxu0 0.0
      %195 = vmatprep.subr.mxu0 0.0
      %196 = vmatpush1.msra.mxu0 0.0
      %197 = vmatprep.subr.mxu0 0.0
      %198 = vmatpush1.msra.mxu0 0.0
      %199 = vmatprep.subr.mxu0 0.0
      %200 = vmatpush1.msra.mxu0 0.0
      %201 = vmatprep.subr.mxu0 0.0
      %202 = vmatpush1.msra.mxu0 0.0
      %203 = vmatprep.subr.mxu0 0.0
      %204 = vmatpush1.msra.mxu0 0.0
      %205 = vmatprep.subr.mxu0 0.0
      %206 = vmatpush1.msra.mxu0 0.0
      %207 = vmatprep.subr.mxu0 0.0
      %208 = vmatpush1.msra.mxu0 0.0
      %209 = vmatprep.subr.mxu0 0.0
      %210 = vmatpush1.msra.mxu0 0.0
      %211 = vmatprep.subr.mxu0 0.0
      %212 = vmatpush1.msra.mxu0 0.0
      %213 = vmatprep.subr.mxu0 0.0
      %214 = vmatpush1.msra.mxu0 0.0
      %215 = vmatprep.subr.mxu0 0.0
      %216 = vmatpush1.msra.mxu0 0.0
      %217 = vmatprep.subr.mxu0 0.0
      %218 = vmatpush1.msra.mxu0 0.0
      %219 = vmatprep.subr.mxu0 0.0
      %220 = vmatpush1.msra.mxu0 0.0
      %221 = vmatprep.subr.mxu0 0.0
      %222 = vmatpush1.msra.mxu0 0.0
      %223 = vmatprep.subr.mxu0 0.0
      %224 = vmatpush1.msra.mxu0 0.0
      %225 = vmatprep.subr.mxu0 0.0
      %226 = vmatpush1.msra.mxu0 0.0
      %227 = vmatprep.subr.mxu0 0.0
      %228 = vmatpush1.msra.mxu0 0.0
      %229 = vmatprep.subr.mxu0 0.0
      %230 = vmatpush1.msra.mxu0 0.0
      %231 = vmatprep.subr.mxu0 0.0
      %232 = vmatpush1.msra.mxu0 0.0
      %233 = vmatprep.subr.mxu0 0.0
      %234 = vmatpush1.msra.mxu0 0.0
      %235 = vmatprep.subr.mxu0 0.0
      %236 = vmatpush1.msra.mxu0 0.0
      %237 = vmatprep.subr.mxu0 0.0
      %238 = vmatpush1.msra.mxu0 0.0
      %239 = vmatprep.subr.mxu0 0.0
      %240 = vmatpush1.msra.mxu0 0.0
      %241 = vmatprep.subr.mxu0 0.0
      %242 = vmatpush1.msra.mxu0 0.0
      %243 = vmatprep.subr.mxu0 0.0
      %244 = vmatpush1.msra.mxu0 0.0
      %245 = vmatprep.subr.mxu0 0.0
      %246 = vmatpush1.msra.mxu0 0.0
      %247 = vmatprep.subr.mxu0 0.0
      %248 = vmatpush1.msra.mxu0 0.0
      %249 = vmatprep.subr.mxu0 0.0
      %250 = vmatpush1.msra.mxu0 0.0
      %251 = vmatprep.subr.mxu0 0.0
      %252 = vmatpush1.msra.mxu0 0.0
      %253 = vmatprep.mubr.f32.mxu0 0.0
      %254 = vmatmul.mubr.f32.gmra.mrb[0].mxu0 %v187
      %v255 = vpop.f32.mrb[0].mxu0
      %v256 = vadd.f32 %v183, %v255
      %v257 = vpop.f32.mrb[0].mxu0
      %v258 = vadd.f32 %v183, %v257
      %259 = vdwg.mxu0
      %260 = vmatprep.subr.mxu0 %v178
      %261 = vmatpush1.msra.mxu0 %v177
      %262 = vmatprep.subr.mxu0 0.0
      %263 = vmatpush1.msra.mxu0 0.0
      %264 = vmatprep.subr.mxu0 0.0
      %265 = vmatpush1.msra.mxu0 0.0
      %266 = vmatprep.subr.mxu0 0.0
      %267 = vmatpush1.msra.mxu0 0.0
      %268 = vmatprep.subr.mxu0 0.0
      %269 = vmatpush1.msra.mxu0 0.0
      %270 = vmatprep.subr.mxu0 0.0
      %271 = vmatpush1.msra.mxu0 0.0
      %272 = vmatprep.subr.mxu0 0.0
      %273 = vmatpush1.msra.mxu0 0.0
      %274 = vmatprep.subr.mxu0 0.0
      %275 = vmatpush1.msra.mxu0 0.0
      %276 = vmatprep.subr.mxu0 0.0
      %277 = vmatpush1.msra.mxu0 0.0
      %278 = vmatprep.subr.mxu0 0.0
      %279 = vmatpush1.msra.mxu0 0.0
      %280 = vmatprep.subr.mxu0 0.0
      %281 = vmatpush1.msra.mxu0 0.0
      %282 = vmatprep.subr.mxu0 0.0
      %283 = vmatpush1.msra.mxu0 0.0
      %284 = vmatprep.subr.mxu0 0.0
      %285 = vmatpush1.msra.mxu0 0.0
      %286 = vmatprep.subr.mxu0 0.0
      %287 = vmatpush1.msra.mxu0 0.0
      %288 = vmatprep.subr.mxu0 0.0
      %289 = vmatpush1.msra.mxu0 0.0
      %290 = vmatprep.subr.mxu0 0.0
      %291 = vmatpush1.msra.mxu0 0.0
      %292 = vmatprep.subr.mxu0 0.0
      %293 = vmatpush1.msra.mxu0 0.0
      %294 = vmatprep.subr.mxu0 0.0
      %295 = vmatpush1.msra.mxu0 0.0
      %296 = vmatprep.subr.mxu0 0.0
      %297 = vmatpush1.msra.mxu0 0.0
      %298 = vmatprep.subr.mxu0 0.0
      %299 = vmatpush1.msra.mxu0 0.0
      %300 = vmatprep.subr.mxu0 0.0
      %301 = vmatpush1.msra.mxu0 0.0
      %302 = vmatprep.subr.mxu0 0.0
      %303 = vmatpush1.msra.mxu0 0.0
      %304 = vmatprep.subr.mxu0 0.0
      %305 = vmatpush1.msra.mxu0 0.0
      %306 = vmatprep.subr.mxu0 0.0
      %307 = vmatpush1.msra.mxu0 0.0
      %308 = vmatprep.subr.mxu0 0.0
      %309 = vmatpush1.msra.mxu0 0.0
      %310 = vmatprep.subr.mxu0 0.0
      %311 = vmatpush1.msra.mxu0 0.0
      %312 = vmatprep.subr.mxu0 0.0
      %313 = vmatpush1.msra.mxu0 0.0
      %314 = vmatprep.subr.mxu0 0.0
      %315 = vmatpush1.msra.mxu0 0.0
      %316 = vmatprep.subr.mxu0 0.0
      %317 = vmatpush1.msra.mxu0 0.0
      %318 = vmatprep.subr.mxu0 0.0
      %319 = vmatpush1.msra.mxu0 0.0
      %320 = vmatprep.subr.mxu0 0.0
      %321 = vmatpush1.msra.mxu0 0.0
      %322 = vmatprep.subr.mxu0 0.0
      %323 = vmatpush1.msra.mxu0 0.0
      %324 = vmatprep.mubr.f32.mxu0 0.0
      %325 = vmatmul.mubr.f32.gmra.mrb[0].mxu0 %v187
      %v326 = vpop.f32.mrb[0].mxu0
      %v327 = vadd.f32 %v183, %v326
      %v328 = vpop.f32.mrb[0].mxu0
      %v329 = vadd.f32 %v183, %v328
      %330 = vdwg.mxu0
      %331 = vst [vmem:[%s172] sm:$0xff] %v256
      %332 = vst [vmem:[%s172 + $0x8] sm:$0xff] %v258
      %333 = vst [vmem:[%s172 + $0x10] sm:$0xff] %v327
      %334 = vst [vmem:[%s172 + $0x18] sm:$0xff] %v329
      %s335 = smul.u32 4, %s14
      %p336 = scmp.lt.s32.totalorder %s335, 7
      %s337 = scalar_select %p336, %s335, 7
      %s338 = smul.addr %s337, 8
      %s339 = scalar_lea.vmem %s3, %s338
      // Predicated region
      $region33: #{simple_block3d_forward.79} parent=31 // pred_check
        %p340 = pneg %p100
      $region34: #{simple_block3d_forward.79} parent=31 // pred_check_branch
        %342 = sbr.rel (%p340) target = $region36
      $region35: #{simple_block3d_forward.79} parent=31 // pred_region
        %s343 = smul.u32 4, %s14
      $region36: #{simple_block3d_forward.79} parent=31 // pred_fallthru
        _
    $region32: #{simple_block3d_forward.79} parent=5 // pred_fallthru
      _
    %p344 = scmp.le.s32.totalorder 2, %s9
    // Predicated region
    $region37: #{simple_block3d_forward.79} parent=5 // pred_check
      %p345 = pneg %p344
    $region38: #{simple_block3d_forward.79} parent=5 // pred_check_branch
      %347 = sbr.rel (%p345) target = $region40
    $region39: #{simple_block3d_forward.79} parent=5 // pred_region
      %s348 = ssub.s32 %s9, 2
      // Predicated region
      $region41: #{simple_block3d_forward.79} parent=39 // pred_check
        %p349 = pneg %p106
      $region42: #{simple_block3d_forward.79} parent=39 // pred_check_branch
        %351 = sbr.rel (%p349) target = $region44
      $region43: #{simple_block3d_forward.79} parent=39 // pred_region
        %s352 = smul.u32 4, %s15
        %p353 = scmp.lt.s32.totalorder %s352, 7
        %s354 = scalar_select %p353, %s352, 7
        %s355 = smul.addr %s354, 8
        %s356 = scalar_lea.vmem %s3, %s355
      $region44: #{simple_block3d_forward.79} parent=39 // pred_fallthru
        _
    $region40: #{simple_block3d_forward.79} parent=5 // pred_fallthru
      _
  $region6: #{simple_block3d_forward.79} parent=0 // loop_footer
    %s13 = sadd.s32 1, %s9
  $region7: #{simple_block3d_forward.79} parent=0 // loop_footer_branch
    %8 = sbr.rel target = $region3
  $region8: #{simple_block3d_forward.79} parent=0 // loop_exit
    _

// kernel: simple_block3d_forward.80
$region0: #{simple_block3d_forward.80}
  #allocation0 [shape = 'u32[]', space=smem, size = 0x4, offset = 0x4, fixed_abs, tag = 'smem constant byte address 0x4 - core index']
  #allocation1 [shape = 'u32[144,128]{1,0:T(1,128)}', space=vmem, size = 0x12000, scoped, tag = 'internal scratch']
  %s0 = inlined_call_operand.vmem [shape: f32[8,1024], index: 0, kind: input, shape index: {}]
  %s1 = inlined_call_operand.vmem [shape: f32[8,1024], index: 1, kind: input, shape index: {}]
  %s2 = inlined_call_operand.vmem [shape: f32[8,1024], index: 2, kind: output, shape index: {}]
  %s3 = sld [smem:[#allocation0]]
  $region41: #{simple_block3d_forward.80} parent=0
    _
  %s5 = ssub.s32 1, %s3
  %s6 = scalar_select 0, %s5, %s3
  loop: start=0, step=1, limit=4
  $region2: #{simple_block3d_forward.80} parent=0 // loop_pre_header
    _
  $region3: #{simple_block3d_forward.80} parent=0 // loop_header
    %s8 = sphi 0, %s12
    %p9 = scmp.ge.s32.totalorder %s8, 4
    %s18 = sphi 0, %s20
    %s21 = sphi 0, %s18
    %s22 = sphi 0, %s21
    %s38 = sphi 0, %s22
    %s44 = sphi 0, %s46
    %s47 = sphi 0, %s44
    %s48 = sphi 0, %s47
    %s64 = sphi 0, %s48
    %s70 = sphi 0, %s72
    %s73 = sphi 0, %s70
    %s74 = sphi 0, %s73
    %s90 = sphi 0, %s74
  $region4: #{simple_block3d_forward.80} parent=0 // loop_header_branch
    %11 = sbr.rel (%p9) target = $region8
  $region5: #{simple_block3d_forward.80} parent=0 // loop_body
    %s13 = ssub.s32 %s8, 1
    %s14 = ssub.s32 %s8, 2
    %s15 = sadd.s32 %s8, 1
    %s16 = ssub.s32 %s8, %s15
    %p17 = scmp.eq.s32.totalorder %s16, 0
    %s19 = sadd.s32 %s18, 1
    %s20 = scalar_select %p17, %s18, %s19
    %p23 = pneg %p17
    %p24 = scmp.eq.s32.totalorder %s8, 1
    %p25 = por %p23, %p24
    %p26 = scmp.ne.s32.totalorder %s18, %s21
    %p27 = scmp.eq.s32.totalorder %s8, 0
    %p28 = por %p26, %p27
    %p29 = scmp.ne.s32.totalorder %s18, %s21
    %p30 = scmp.eq.s32.totalorder %s13, 1
    %p31 = por %p29, %p30
    %p32 = scmp.ne.s32.totalorder %s21, %s22
    %p33 = scmp.eq.s32.totalorder %s13, 0
    %p34 = por %p32, %p33
    %p35 = scmp.ne.s32.totalorder %s21, %s22
    %p36 = scmp.eq.s32.totalorder %s14, 1
    %p37 = por %p35, %p36
    %p39 = scmp.ne.s32.totalorder %s22, %s38
    %p40 = scmp.eq.s32.totalorder %s14, 0
    %p41 = por %p39, %p40
    %s42 = ssub.s32 %s8, %s15
    %p43 = scmp.eq.s32.totalorder %s42, 0
    %s45 = sadd.s32 %s44, 1
    %s46 = scalar_select %p43, %s44, %s45
    %p49 = pneg %p43
    %p50 = scmp.eq.s32.totalorder %s8, 1
    %p51 = por %p49, %p50
    %p52 = scmp.ne.s32.totalorder %s44, %s47
    %p53 = scmp.eq.s32.totalorder %s8, 0
    %p54 = por %p52, %p53
    %p55 = scmp.ne.s32.totalorder %s44, %s47
    %p56 = scmp.eq.s32.totalorder %s13, 1
    %p57 = por %p55, %p56
    %p58 = scmp.ne.s32.totalorder %s47, %s48
    %p59 = scmp.eq.s32.totalorder %s13, 0
    %p60 = por %p58, %p59
    %p61 = scmp.ne.s32.totalorder %s47, %s48
    %p62 = scmp.eq.s32.totalorder %s14, 1
    %p63 = por %p61, %p62
    %p65 = scmp.ne.s32.totalorder %s48, %s64
    %p66 = scmp.eq.s32.totalorder %s14, 0
    %p67 = por %p65, %p66
    %s68 = ssub.s32 %s8, %s15
    %p69 = scmp.eq.s32.totalorder %s68, 0
    %s71 = sadd.s32 %s70, 1
    %s72 = scalar_select %p69, %s70, %s71
    %p75 = pneg %p69
    %p76 = scmp.eq.s32.totalorder %s8, 1
    %p77 = por %p75, %p76
    %p78 = scmp.ne.s32.totalorder %s70, %s73
    %p79 = scmp.eq.s32.totalorder %s8, 0
    %p80 = por %p78, %p79
    %p81 = scmp.ne.s32.totalorder %s70, %s73
    %p82 = scmp.eq.s32.totalorder %s13, 1
    %p83 = por %p81, %p82
    %p84 = scmp.ne.s32.totalorder %s73, %s74
    %p85 = scmp.eq.s32.totalorder %s13, 0
    %p86 = por %p84, %p85
    %p87 = scmp.ne.s32.totalorder %s73, %s74
    %p88 = scmp.eq.s32.totalorder %s14, 1
    %p89 = por %p87, %p88
    %p91 = scmp.ne.s32.totalorder %s74, %s90
    %p92 = scmp.eq.s32.totalorder %s14, 0
    %p93 = por %p91, %p92
    %p94 = scmp.le.s32.totalorder 1, %s8
    %p95 = scmp.lt.s32.totalorder %s8, 3
    %p96 = pnand %p94, %p95
    %p97 = pneg %p96
    // Predicated region
    $region9: #{simple_block3d_forward.80} parent=5 // pred_check
      _
    $region10: #{simple_block3d_forward.80} parent=5 // pred_check_branch
      %99 = sbr.rel (%p96) target = $region12
    $region11: #{simple_block3d_forward.80} parent=5 // pred_region
      %s100 = ssub.s32 %s8, 1
    $region12: #{simple_block3d_forward.80} parent=5 // pred_fallthru
      _
    %p101 = scmp.lt.s32.totalorder %s8, 2
    // Predicated region
    $region13: #{simple_block3d_forward.80} parent=5 // pred_check
      %p102 = pneg %p101
    $region14: #{simple_block3d_forward.80} parent=5 // pred_check_branch
      %104 = sbr.rel (%p102) target = $region16
    $region15: #{simple_block3d_forward.80} parent=5 // pred_region
      // Predicated region
      $region17: #{simple_block3d_forward.80} parent=15 // pred_check
        %p105 = pneg %p28
      $region18: #{simple_block3d_forward.80} parent=15 // pred_check_branch
        %107 = sbr.rel (%p105) target = $region20
      $region19: #{simple_block3d_forward.80} parent=15 // pred_region
        %s108 = smul.u32 4, %s8
        %p109 = scmp.lt.s32.totalorder %s108, 7
        %s110 = scalar_select %p109, %s108, 7
        %s111 = smul.addr %s110, 8
        %s112 = scalar_lea.vmem %s0, %s111
        %s113 = smul.u32 4, %s8
      $region20: #{simple_block3d_forward.80} parent=15 // pred_fallthru
        _
      // Predicated region
      $region21: #{simple_block3d_forward.80} parent=15 // pred_check
        %p114 = pneg %p54
      $region22: #{simple_block3d_forward.80} parent=15 // pred_check_branch
        %116 = sbr.rel (%p114) target = $region24
      $region23: #{simple_block3d_forward.80} parent=15 // pred_region
        %s117 = smul.u32 4, %s8
        %p118 = scmp.lt.s32.totalorder %s117, 7
        %s119 = scalar_select %p118, %s117, 7
        %s120 = smul.addr %s119, 8
        %s121 = scalar_lea.vmem %s1, %s120
        %s122 = smul.u32 4, %s8
      $region24: #{simple_block3d_forward.80} parent=15 // pred_fallthru
        _
    $region16: #{simple_block3d_forward.80} parent=5 // pred_fallthru
      _
    %p123 = scmp.le.s32.totalorder 1, %s8
    %p124 = scmp.lt.s32.totalorder %s8, 3
    %p125 = pnand %p123, %p124
    %p126 = pneg %p125
    // Predicated region
    $region25: #{simple_block3d_forward.80} parent=5 // pred_check
      _
    $region26: #{simple_block3d_forward.80} parent=5 // pred_check_branch
      %128 = sbr.rel (%p125) target = $region28
    $region27: #{simple_block3d_forward.80} parent=5 // pred_region
      %s129 = ssub.s32 %s8, 1
      %s130 = smul.u32 4, %s13
      %p131 = scmp.lt.s32.totalorder %s130, 7
      %s132 = scalar_select %p131, %s130, 7
      %s133 = smul.addr %s132, 8
      %s134 = scalar_lea.vmem %s0, %s133
      %p135 = pneg %p34
      %p136 = pneg %p31
      %s137 = smul.u32 4, %s13
      %p138 = scmp.lt.s32.totalorder %s137, 7
      %s139 = scalar_select %p138, %s137, 7
      %s140 = smul.addr %s139, 8
      %s141 = scalar_lea.vmem %s1, %s140
      %p142 = pneg %p60
      %p143 = pneg %p57
      %p144 = pneg %p86
      %p145 = pneg %p83
      %s146 = smul.u32 4, %s13
      %p147 = scmp.lt.s32.totalorder %s146, 7
      %s148 = scalar_select %p147, %s146, 7
      %s149 = smul.addr %s148, 8
      %s150 = scalar_lea.vmem %s2, %s149
      %s151 = smul.u32 4, %s13
      %p152 = scmp.lt.s32.totalorder %s151, 7
      %s153 = scalar_select %p152, %s151, 7
      %s154 = smul.addr %s153, 8
      %s155 = scalar_lea.vmem %s0, %s154
      %s156 = smul.u32 4, %s13
      %s157 = smul.u32 4, %s13
      %p158 = scmp.lt.s32.totalorder %s157, 7
      %s159 = scalar_select %p158, %s157, 7
      %s160 = smul.addr %s159, 8
      %s161 = scalar_lea.vmem %s1, %s160
      %s162 = smul.u32 4, %s13
      %s163 = smul.u32 4, %s13
      %p164 = scmp.lt.s32.totalorder %s163, 7
      %s165 = scalar_select %p164, %s163, 7
      %s166 = smul.addr %s165, 8
      %s167 = scalar_lea.vmem %s2, %s166
      %s168 = smul.u32 4, %s13
      %v169 = vld [vmem:[%s155] sm:$0xff]
      %v170 = vld [vmem:[%s155 + $0x8] sm:$0xff]
      %v171 = vld [vmem:[%s155 + $0x10] sm:$0xff]
      %v172 = vld [vmem:[%s155 + $0x18] sm:$0xff]
      %v173 = vld [vmem:[%s161] sm:$0xff]
      %v174 = vld [vmem:[%s161 + $0x8] sm:$0xff]
      %v175 = vld [vmem:[%s161 + $0x10] sm:$0xff]
      %v176 = vld [vmem:[%s161 + $0x18] sm:$0xff]
      %v177 = vadd.f32 %v169, %v173
      %v178 = vadd.f32 %v170, %v174
      %v179 = vadd.f32 %v171, %v175
      %v180 = vadd.f32 %v172, %v176
      %v181 = vmax.f32 %v177, 0.0
      %v182 = vmax.f32 %v178, 0.0
      %v183 = vmax.f32 %v179, 0.0
      %v184 = vmax.f32 %v180, 0.0
      %185 = vst [vmem:[%s167] sm:$0xff] %v181
      %186 = vst [vmem:[%s167 + $0x8] sm:$0xff] %v182
      %187 = vst [vmem:[%s167 + $0x10] sm:$0xff] %v183
      %188 = vst [vmem:[%s167 + $0x18] sm:$0xff] %v184
      %s189 = smul.u32 4, %s13
      %p190 = scmp.lt.s32.totalorder %s189, 7
      %s191 = scalar_select %p190, %s189, 7
      %s192 = smul.addr %s191, 8
      %s193 = scalar_lea.vmem %s2, %s192
      // Predicated region
      $region29: #{simple_block3d_forward.80} parent=27 // pred_check
        %p194 = pneg %p83
      $region30: #{simple_block3d_forward.80} parent=27 // pred_check_branch
        %196 = sbr.rel (%p194) target = $region32
      $region31: #{simple_block3d_forward.80} parent=27 // pred_region
        %s197 = smul.u32 4, %s13
      $region32: #{simple_block3d_forward.80} parent=27 // pred_fallthru
        _
    $region28: #{simple_block3d_forward.80} parent=5 // pred_fallthru
      _
    %p198 = scmp.le.s32.totalorder 2, %s8
    // Predicated region
    $region33: #{simple_block3d_forward.80} parent=5 // pred_check
      %p199 = pneg %p198
    $region34: #{simple_block3d_forward.80} parent=5 // pred_check_branch
      %201 = sbr.rel (%p199) target = $region36
    $region35: #{simple_block3d_forward.80} parent=5 // pred_region
      %s202 = ssub.s32 %s8, 2
      // Predicated region
      $region37: #{simple_block3d_forward.80} parent=35 // pred_check
        %p203 = pneg %p89
      $region38: #{simple_block3d_forward.80} parent=35 // pred_check_branch
        %205 = sbr.rel (%p203) target = $region40
      $region39: #{simple_block3d_forward.80} parent=35 // pred_region
        %s206 = smul.u32 4, %s14
        %p207 = scmp.lt.s32.totalorder %s206, 7
        %s208 = scalar_select %p207, %s206, 7
        %s209 = smul.addr %s208, 8
        %s210 = scalar_lea.vmem %s2, %s209
      $region40: #{simple_block3d_forward.80} parent=35 // pred_fallthru
        _
    $region36: #{simple_block3d_forward.80} parent=5 // pred_fallthru
      _
  $region6: #{simple_block3d_forward.80} parent=0 // loop_footer
    %s12 = sadd.s32 1, %s8
  $region7: #{simple_block3d_forward.80} parent=0 // loop_footer_branch
    %7 = sbr.rel target = $region3
  $region8: #{simple_block3d_forward.80} parent=0 // loop_exit
    _

// kernel: simple_block3d_forward.89
$region0: #{simple_block3d_forward.89}
  #allocation0 [shape = 'u32[]', space=smem, size = 0x4, offset = 0x4, fixed_abs, tag = 'smem constant byte address 0x4 - core index']
  #allocation1 [shape = 'u32[144,128]{1,0:T(1,128)}', space=vmem, size = 0x12000, scoped, tag = 'internal scratch']
  %s0 = inlined_call_operand.vmem [shape: f32[8,216], index: 0, kind: input, shape index: {}]
  %s1 = inlined_call_operand.vmem [shape: f32[216,128], index: 1, kind: input, shape index: {}]
  %s2 = inlined_call_operand.vmem [shape: f32[8,1], index: 2, kind: input, shape index: {}]
  %s3 = inlined_call_operand.vmem [shape: f32[8,1], index: 3, kind: input, shape index: {}]
  %s4 = inlined_call_operand.vmem [shape: f32[8,128], index: 4, kind: output, shape index: {}]
  %s5 = sld [smem:[#allocation0]]
  $region26: #{simple_block3d_forward.89} parent=0
    _
  %s7 = ssub.s32 1, %s5
  %s8 = scalar_select 0, %s7, %s5
  // Predicated region
  $region2: #{simple_block3d_forward.89} parent=0 // pred_check
    _
  $region3: #{simple_block3d_forward.89} parent=0 // pred_check_branch
    %10 = sbr.rel (0) target = $region5
  $region4: #{simple_block3d_forward.89} parent=0 // pred_region
    _
  $region5: #{simple_block3d_forward.89} parent=0 // pred_fallthru
    _
  // Predicated region
  $region6: #{simple_block3d_forward.89} parent=0 // pred_check
    _
  $region7: #{simple_block3d_forward.89} parent=0 // pred_check_branch
    %12 = sbr.rel (0) target = $region9
  $region8: #{simple_block3d_forward.89} parent=0 // pred_region
    _
  $region9: #{simple_block3d_forward.89} parent=0 // pred_fallthru
    _
  // Predicated region
  $region10: #{simple_block3d_forward.89} parent=0 // pred_check
    _
  $region11: #{simple_block3d_forward.89} parent=0 // pred_check_branch
    %14 = sbr.rel (0) target = $region13
  $region12: #{simple_block3d_forward.89} parent=0 // pred_region
    _
  $region13: #{simple_block3d_forward.89} parent=0 // pred_fallthru
    _
  // Predicated region
  $region14: #{simple_block3d_forward.89} parent=0 // pred_check
    _
  $region15: #{simple_block3d_forward.89} parent=0 // pred_check_branch
    %16 = sbr.rel (0) target = $region17
  $region16: #{simple_block3d_forward.89} parent=0 // pred_region
    _
  $region17: #{simple_block3d_forward.89} parent=0 // pred_fallthru
    _
  %v17 = vld [vmem:[%s0] sm:$0xff]
  %v18 = vld [vmem:[%s0 + $0x8] sm:$0xff]
  %v19 = vld [vmem:[%s1] sm:$0xff]
  %v20 = vld [vmem:[%s1 + $0x8] sm:$0xff]
  %v21 = vld [vmem:[%s1 + $0x10] sm:$0xff]
  %v22 = vld [vmem:[%s1 + $0x18] sm:$0xff]
  %v23 = vld [vmem:[%s1 + $0x20] sm:$0xff]
  %v24 = vld [vmem:[%s1 + $0x28] sm:$0xff]
  %v25 = vld [vmem:[%s1 + $0x30] sm:$0xff]
  %v26 = vld [vmem:[%s1 + $0x38] sm:$0xff]
  %v27 = vld [vmem:[%s1 + $0x40] sm:$0xff]
  %v28 = vld [vmem:[%s1 + $0x48] sm:$0xff]
  %v29 = vld [vmem:[%s1 + $0x50] sm:$0xff]
  %v30 = vld [vmem:[%s1 + $0x58] sm:$0xff]
  %v31 = vld [vmem:[%s1 + $0x60] sm:$0xff]
  %v32 = vld [vmem:[%s1 + $0x68] sm:$0xff]
  %v33 = vld [vmem:[%s1 + $0x70] sm:$0xff]
  %v34 = vld [vmem:[%s1 + $0x78] sm:$0xff]
  %v35 = vld [vmem:[%s1 + $0x80] sm:$0xff]
  %v36 = vld [vmem:[%s1 + $0x88] sm:$0xff]
  %v37 = vld [vmem:[%s1 + $0x90] sm:$0xff]
  %v38 = vld [vmem:[%s1 + $0x98] sm:$0xff]
  %v39 = vld [vmem:[%s1 + $0xa0] sm:$0xff]
  %v40 = vld [vmem:[%s1 + $0xa8] sm:$0xff]
  %v41 = vld [vmem:[%s1 + $0xb0] sm:$0xff]
  %v42 = vld [vmem:[%s1 + $0xb8] sm:$0xff]
  %v43 = vld [vmem:[%s1 + $0xc0] sm:$0xff]
  %v44 = vld [vmem:[%s1 + $0xc8] sm:$0xff]
  %v45 = vld [vmem:[%s1 + $0xd0] sm:$0xff]
  %vm46 = vcmask 719872
  %v48 = vsel %vm46, %v18, 0
  %50 = vmatprep.subr.mxu0 0.0
  %51 = vmatpush1.msra.mxu0 %v19
  %52 = vmatprep.subr.mxu0 0.0
  %53 = vmatpush1.msra.mxu0 %v20
  %54 = vmatprep.subr.mxu0 0.0
  %55 = vmatpush1.msra.mxu0 %v21
  %56 = vmatprep.subr.mxu0 0.0
  %57 = vmatpush1.msra.mxu0 %v22
  %58 = vmatprep.subr.mxu0 0.0
  %59 = vmatpush1.msra.mxu0 %v23
  %60 = vmatprep.subr.mxu0 0.0
  %61 = vmatpush1.msra.mxu0 %v24
  %62 = vmatprep.subr.mxu0 0.0
  %63 = vmatpush1.msra.mxu0 %v25
  %64 = vmatprep.subr.mxu0 0.0
  %65 = vmatpush1.msra.mxu0 %v26
  %66 = vmatprep.subr.mxu0 0.0
  %67 = vmatpush1.msra.mxu0 %v27
  %68 = vmatprep.subr.mxu0 0.0
  %69 = vmatpush1.msra.mxu0 %v28
  %70 = vmatprep.subr.mxu0 0.0
  %71 = vmatpush1.msra.mxu0 %v29
  %72 = vmatprep.subr.mxu0 0.0
  %73 = vmatpush1.msra.mxu0 %v30
  %74 = vmatprep.subr.mxu0 0.0
  %75 = vmatpush1.msra.mxu0 %v31
  %76 = vmatprep.subr.mxu0 0.0
  %77 = vmatpush1.msra.mxu0 %v32
  %78 = vmatprep.subr.mxu0 0.0
  %79 = vmatpush1.msra.mxu0 %v33
  %80 = vmatprep.subr.mxu0 0.0
  %81 = vmatpush1.msra.mxu0 %v34
  %82 = vmatprep.subr.mxu0 0.0
  %83 = vmatpush1.msra.mxu0 %v35
  %84 = vmatprep.subr.mxu0 0.0
  %85 = vmatpush1.msra.mxu0 %v36
  %86 = vmatprep.subr.mxu0 0.0
  %87 = vmatpush1.msra.mxu0 %v37
  %88 = vmatprep.subr.mxu0 0.0
  %89 = vmatpush1.msra.mxu0 %v38
  %90 = vmatprep.subr.mxu0 0.0
  %91 = vmatpush1.msra.mxu0 %v39
  %92 = vmatprep.subr.mxu0 0.0
  %93 = vmatpush1.msra.mxu0 %v40
  %94 = vmatprep.subr.mxu0 0.0
  %95 = vmatpush1.msra.mxu0 %v41
  %96 = vmatprep.subr.mxu0 0.0
  %97 = vmatpush1.msra.mxu0 %v42
  %98 = vmatprep.subr.mxu0 0.0
  %99 = vmatpush1.msra.mxu0 %v43
  %100 = vmatprep.subr.mxu0 0.0
  %101 = vmatpush1.msra.mxu0 %v44
  %102 = vmatprep.subr.mxu0 0.0
  %103 = vmatpush1.msra.mxu0 %v45
  %104 = vmatprep.subr.mxu0 0.0
  %105 = vmatpush1.msra.mxu0 0.0
  %106 = vmatprep.subr.mxu0 0.0
  %107 = vmatpush1.msra.mxu0 0.0
  %108 = vmatprep.subr.mxu0 0.0
  %109 = vmatpush1.msra.mxu0 0.0
  %110 = vmatprep.subr.mxu0 0.0
  %111 = vmatpush1.msra.mxu0 0.0
  %112 = vmatprep.subr.mxu0 0.0
  %113 = vmatpush1.msra.mxu0 0.0
  %114 = vmatprep.mubr.f32.mxu0 %v48
  %115 = vmatmul.mubr.f32.gmra.mrb[0].mxu0 %v17
  %v116 = vpop.f32.mrb[0].mxu0
  %v117 = vadd.f32 0.0, %v116
  %v118 = vpop.f32.mrb[0].mxu0
  %119 = vdwg.mxu0
  %120 = vadd.xlane.f32.xlu0 %v117
  %v121 = vpop.xlane.xlu0 %120
  %v122 = vrcp.pop 128.0
  %v123 = vmul.f32 %v121, %v122
  %v124 = vsub.f32 %v117, %v123
  %v125 = vmul.f32 %v124, %v124
  %126 = vadd.xlane.f32.xlu0 %v125
  %v127 = vpop.xlane.xlu0 %126
  %v128 = vmul.f32 %v127, %v122
  %v129 = vld [vmem:[%s2] sm:$0xff]
  %131 = vset.pattern.permute.xlu0 0
  %132 = vperm.xlu0 %131, %v129
  %v133 = vpop.permute.xlu0 %132
  %v135 = vmul.f32 %v133, %v124
  %v136 = vadd.f32 %v128, 1e-05
  %v137 = vrsqrt.pop %v136
  %v138 = vmul.f32 %v135, %v137
  %v139 = vld [vmem:[%s3] sm:$0xff]
  %141 = vset.pattern.permute.xlu0 0
  %142 = vperm.xlu0 %141, %v139
  %v143 = vpop.permute.xlu0 %142
  %v145 = vadd.f32 %v138, %v143
  %vm146 = vcmp.gt.f32.partialorder %v145, 0.0
  %v147 = vmul.f32 %v145, 0.1
  %v148 = vsel %vm146, %v145, %v147
  %149 = vst [vmem:[%s4] sm:$0xff] %v148
  // Predicated region
  $region18: #{simple_block3d_forward.89} parent=0 // pred_check
    _
  $region19: #{simple_block3d_forward.89} parent=0 // pred_check_branch
    %151 = sbr.rel (0) target = $region21
  $region20: #{simple_block3d_forward.89} parent=0 // pred_region
    _
  $region21: #{simple_block3d_forward.89} parent=0 // pred_fallthru
    _
  // Predicated region
  $region22: #{simple_block3d_forward.89} parent=0 // pred_check
    _
  $region23: #{simple_block3d_forward.89} parent=0 // pred_check_branch
    %153 = sbr.rel (0) target = $region25
  $region24: #{simple_block3d_forward.89} parent=0 // pred_region
    _
  $region25: #{simple_block3d_forward.89} parent=0 // pred_fallthru
    _

// kernel: simple_block3d_forward.90
$region0: #{simple_block3d_forward.90}
  #allocation0 [shape = 'u32[]', space=smem, size = 0x4, offset = 0x4, fixed_abs, tag = 'smem constant byte address 0x4 - core index']
  #allocation1 [shape = 'u32[144,128]{1,0:T(1,128)}', space=vmem, size = 0x12000, scoped, tag = 'internal scratch']
  %s0 = inlined_call_operand.vmem [shape: f32[8,216], index: 0, kind: input, shape index: {}]
  %s1 = inlined_call_operand.vmem [shape: f32[216,16], index: 1, kind: input, shape index: {}]
  %s2 = inlined_call_operand.vmem [shape: f32[8,1], index: 2, kind: input, shape index: {}]
  %s3 = inlined_call_operand.vmem [shape: f32[8,1], index: 3, kind: input, shape index: {}]
  %s4 = inlined_call_operand.vmem [shape: f32[8,16], index: 4, kind: output, shape index: {}]
  %s5 = sld [smem:[#allocation0]]
  $region26: #{simple_block3d_forward.90} parent=0
    _
  %s7 = ssub.s32 1, %s5
  %s8 = scalar_select 0, %s7, %s5
  // Predicated region
  $region2: #{simple_block3d_forward.90} parent=0 // pred_check
    _
  $region3: #{simple_block3d_forward.90} parent=0 // pred_check_branch
    %10 = sbr.rel (0) target = $region5
  $region4: #{simple_block3d_forward.90} parent=0 // pred_region
    _
  $region5: #{simple_block3d_forward.90} parent=0 // pred_fallthru
    _
  // Predicated region
  $region6: #{simple_block3d_forward.90} parent=0 // pred_check
    _
  $region7: #{simple_block3d_forward.90} parent=0 // pred_check_branch
    %12 = sbr.rel (0) target = $region9
  $region8: #{simple_block3d_forward.90} parent=0 // pred_region
    _
  $region9: #{simple_block3d_forward.90} parent=0 // pred_fallthru
    _
  // Predicated region
  $region10: #{simple_block3d_forward.90} parent=0 // pred_check
    _
  $region11: #{simple_block3d_forward.90} parent=0 // pred_check_branch
    %14 = sbr.rel (0) target = $region13
  $region12: #{simple_block3d_forward.90} parent=0 // pred_region
    _
  $region13: #{simple_block3d_forward.90} parent=0 // pred_fallthru
    _
  // Predicated region
  $region14: #{simple_block3d_forward.90} parent=0 // pred_check
    _
  $region15: #{simple_block3d_forward.90} parent=0 // pred_check_branch
    %16 = sbr.rel (0) target = $region17
  $region16: #{simple_block3d_forward.90} parent=0 // pred_region
    _
  $region17: #{simple_block3d_forward.90} parent=0 // pred_fallthru
    _
  %v17 = vld [vmem:[%s0] sm:$0xff]
  %v18 = vld [vmem:[%s0 + $0x8] sm:$0xff]
  %v19 = vld [vmem:[%s1] sm:$0xff]
  %v20 = vld [vmem:[%s1 + $0x8] sm:$0xff]
  %v21 = vld [vmem:[%s1 + $0x10] sm:$0xff]
  %v22 = vld [vmem:[%s1 + $0x18] sm:$0xff]
  %v23 = vld [vmem:[%s1 + $0x20] sm:$0xff]
  %v24 = vld [vmem:[%s1 + $0x28] sm:$0xff]
  %v25 = vld [vmem:[%s1 + $0x30] sm:$0xff]
  %v26 = vld [vmem:[%s1 + $0x38] sm:$0xff]
  %v27 = vld [vmem:[%s1 + $0x40] sm:$0xff]
  %v28 = vld [vmem:[%s1 + $0x48] sm:$0xff]
  %v29 = vld [vmem:[%s1 + $0x50] sm:$0xff]
  %v30 = vld [vmem:[%s1 + $0x58] sm:$0xff]
  %v31 = vld [vmem:[%s1 + $0x60] sm:$0xff]
  %v32 = vld [vmem:[%s1 + $0x68] sm:$0xff]
  %v33 = vld [vmem:[%s1 + $0x70] sm:$0xff]
  %v34 = vld [vmem:[%s1 + $0x78] sm:$0xff]
  %v35 = vld [vmem:[%s1 + $0x80] sm:$0xff]
  %v36 = vld [vmem:[%s1 + $0x88] sm:$0xff]
  %v37 = vld [vmem:[%s1 + $0x90] sm:$0xff]
  %v38 = vld [vmem:[%s1 + $0x98] sm:$0xff]
  %v39 = vld [vmem:[%s1 + $0xa0] sm:$0xff]
  %v40 = vld [vmem:[%s1 + $0xa8] sm:$0xff]
  %v41 = vld [vmem:[%s1 + $0xb0] sm:$0xff]
  %v42 = vld [vmem:[%s1 + $0xb8] sm:$0xff]
  %v43 = vld [vmem:[%s1 + $0xc0] sm:$0xff]
  %v44 = vld [vmem:[%s1 + $0xc8] sm:$0xff]
  %v45 = vld [vmem:[%s1 + $0xd0] sm:$0xff]
  %vm46 = vcmask 719872
  %v48 = vsel %vm46, %v18, 0
  %50 = vmatprep.subr.mxu0 0.0
  %51 = vmatpush1.msra.mxu0 %v19
  %52 = vmatprep.subr.mxu0 0.0
  %53 = vmatpush1.msra.mxu0 %v20
  %54 = vmatprep.subr.mxu0 0.0
  %55 = vmatpush1.msra.mxu0 %v21
  %56 = vmatprep.subr.mxu0 0.0
  %57 = vmatpush1.msra.mxu0 %v22
  %58 = vmatprep.subr.mxu0 0.0
  %59 = vmatpush1.msra.mxu0 %v23
  %60 = vmatprep.subr.mxu0 0.0
  %61 = vmatpush1.msra.mxu0 %v24
  %62 = vmatprep.subr.mxu0 0.0
  %63 = vmatpush1.msra.mxu0 %v25
  %64 = vmatprep.subr.mxu0 0.0
  %65 = vmatpush1.msra.mxu0 %v26
  %66 = vmatprep.subr.mxu0 0.0
  %67 = vmatpush1.msra.mxu0 %v27
  %68 = vmatprep.subr.mxu0 0.0
  %69 = vmatpush1.msra.mxu0 %v28
  %70 = vmatprep.subr.mxu0 0.0
  %71 = vmatpush1.msra.mxu0 %v29
  %72 = vmatprep.subr.mxu0 0.0
  %73 = vmatpush1.msra.mxu0 %v30
  %74 = vmatprep.subr.mxu0 0.0
  %75 = vmatpush1.msra.mxu0 %v31
  %76 = vmatprep.subr.mxu0 0.0
  %77 = vmatpush1.msra.mxu0 %v32
  %78 = vmatprep.subr.mxu0 0.0
  %79 = vmatpush1.msra.mxu0 %v33
  %80 = vmatprep.subr.mxu0 0.0
  %81 = vmatpush1.msra.mxu0 %v34
  %82 = vmatprep.subr.mxu0 0.0
  %83 = vmatpush1.msra.mxu0 %v35
  %84 = vmatprep.subr.mxu0 0.0
  %85 = vmatpush1.msra.mxu0 %v36
  %86 = vmatprep.subr.mxu0 0.0
  %87 = vmatpush1.msra.mxu0 %v37
  %88 = vmatprep.subr.mxu0 0.0
  %89 = vmatpush1.msra.mxu0 %v38
  %90 = vmatprep.subr.mxu0 0.0
  %91 = vmatpush1.msra.mxu0 %v39
  %92 = vmatprep.subr.mxu0 0.0
  %93 = vmatpush1.msra.mxu0 %v40
  %94 = vmatprep.subr.mxu0 0.0
  %95 = vmatpush1.msra.mxu0 %v41
  %96 = vmatprep.subr.mxu0 0.0
  %97 = vmatpush1.msra.mxu0 %v42
  %98 = vmatprep.subr.mxu0 0.0
  %99 = vmatpush1.msra.mxu0 %v43
  %100 = vmatprep.subr.mxu0 0.0
  %101 = vmatpush1.msra.mxu0 %v44
  %102 = vmatprep.subr.mxu0 0.0
  %103 = vmatpush1.msra.mxu0 %v45
  %104 = vmatprep.subr.mxu0 0.0
  %105 = vmatpush1.msra.mxu0 0.0
  %106 = vmatprep.subr.mxu0 0.0
  %107 = vmatpush1.msra.mxu0 0.0
  %108 = vmatprep.subr.mxu0 0.0
  %109 = vmatpush1.msra.mxu0 0.0
  %110 = vmatprep.subr.mxu0 0.0
  %111 = vmatpush1.msra.mxu0 0.0
  %112 = vmatprep.subr.mxu0 0.0
  %113 = vmatpush1.msra.mxu0 0.0
  %114 = vmatprep.mubr.f32.mxu0 %v48
  %115 = vmatmul.mubr.f32.gmra.mrb[0].mxu0 %v17
  %v116 = vpop.f32.mrb[0].mxu0
  %v117 = vadd.f32 0.0, %v116
  %v118 = vpop.f32.mrb[0].mxu0
  %119 = vdwg.mxu0
  %vm120 = vcmask 130048
  %v121 = vsel %vm120, %v117, 0.0
  %122 = vadd.xlane.f32.xlu0 %v121
  %v123 = vpop.xlane.xlu0 %122
  %v124 = vrcp.pop 16.0
  %v125 = vmul.f32 %v123, %v124
  %v126 = vsub.f32 %v117, %v125
  %v127 = vmul.f32 %v126, %v126
  %v128 = vsel %vm120, %v127, 0.0
  %129 = vadd.xlane.f32.xlu0 %v128
  %v130 = vpop.xlane.xlu0 %129
  %v131 = vmul.f32 %v130, %v124
  %v132 = vld [vmem:[%s2] sm:$0xff]
  %134 = vset.pattern.permute.xlu0 0
  %135 = vperm.xlu0 %134, %v132
  %v136 = vpop.permute.xlu0 %135
  %v138 = vmul.f32 %v136, %v126
  %v139 = vadd.f32 %v131, 1e-05
  %v140 = vrsqrt.pop %v139
  %v141 = vmul.f32 %v138, %v140
  %v142 = vld [vmem:[%s3] sm:$0xff]
  %144 = vset.pattern.permute.xlu0 0
  %145 = vperm.xlu0 %144, %v142
  %v146 = vpop.permute.xlu0 %145
  %v148 = vadd.f32 %v141, %v146
  %vm149 = vcmp.gt.f32.partialorder %v148, 0.0
  %v150 = vmul.f32 %v148, 0.1
  %v151 = vsel %vm149, %v148, %v150
  %152 = vst.msk [vmem:[%s4] sm:$0xff] %vm120, %v151
  // Predicated region
  $region18: #{simple_block3d_forward.90} parent=0 // pred_check
    _
  $region19: #{simple_block3d_forward.90} parent=0 // pred_check_branch
    %154 = sbr.rel (0) target = $region21
  $region20: #{simple_block3d_forward.90} parent=0 // pred_region
    _
  $region21: #{simple_block3d_forward.90} parent=0 // pred_fallthru
    _
  // Predicated region
  $region22: #{simple_block3d_forward.90} parent=0 // pred_check
    _
  $region23: #{simple_block3d_forward.90} parent=0 // pred_check_branch
    %156 = sbr.rel (0) target = $region25
  $region24: #{simple_block3d_forward.90} parent=0 // pred_region
    _
  $region25: #{simple_block3d_forward.90} parent=0 // pred_fallthru
    _

// kernel: simple_block3d_forward.92
$region0: #{simple_block3d_forward.92}
  #allocation0 [shape = 'u32[]', space=smem, size = 0x4, offset = 0x4, fixed_abs, tag = 'smem constant byte address 0x4 - core index']
  #allocation1 [shape = 'u32[144,128]{1,0:T(1,128)}', space=vmem, size = 0x12000, scoped, tag = 'internal scratch']
  %s0 = inlined_call_operand.vmem [shape: f32[8,216], index: 0, kind: input, shape index: {}]
  %s1 = inlined_call_operand.vmem [shape: f32[216,2], index: 1, kind: input, shape index: {}]
  %s2 = inlined_call_operand.vmem [shape: f32[8,1], index: 2, kind: input, shape index: {}]
  %s3 = inlined_call_operand.vmem [shape: f32[8,1], index: 3, kind: input, shape index: {}]
  %s4 = inlined_call_operand.vmem [shape: f32[8,2], index: 4, kind: output, shape index: {}]
  %s5 = sld [smem:[#allocation0]]
  $region26: #{simple_block3d_forward.92} parent=0
    _
  %s7 = ssub.s32 1, %s5
  %s8 = scalar_select 0, %s7, %s5
  // Predicated region
  $region2: #{simple_block3d_forward.92} parent=0 // pred_check
    _
  $region3: #{simple_block3d_forward.92} parent=0 // pred_check_branch
    %10 = sbr.rel (0) target = $region5
  $region4: #{simple_block3d_forward.92} parent=0 // pred_region
    _
  $region5: #{simple_block3d_forward.92} parent=0 // pred_fallthru
    _
  // Predicated region
  $region6: #{simple_block3d_forward.92} parent=0 // pred_check
    _
  $region7: #{simple_block3d_forward.92} parent=0 // pred_check_branch
    %12 = sbr.rel (0) target = $region9
  $region8: #{simple_block3d_forward.92} parent=0 // pred_region
    _
  $region9: #{simple_block3d_forward.92} parent=0 // pred_fallthru
    _
  // Predicated region
  $region10: #{simple_block3d_forward.92} parent=0 // pred_check
    _
  $region11: #{simple_block3d_forward.92} parent=0 // pred_check_branch
    %14 = sbr.rel (0) target = $region13
  $region12: #{simple_block3d_forward.92} parent=0 // pred_region
    _
  $region13: #{simple_block3d_forward.92} parent=0 // pred_fallthru
    _
  // Predicated region
  $region14: #{simple_block3d_forward.92} parent=0 // pred_check
    _
  $region15: #{simple_block3d_forward.92} parent=0 // pred_check_branch
    %16 = sbr.rel (0) target = $region17
  $region16: #{simple_block3d_forward.92} parent=0 // pred_region
    _
  $region17: #{simple_block3d_forward.92} parent=0 // pred_fallthru
    _
  %v17 = vld [vmem:[%s0] sm:$0xff]
  %v18 = vld [vmem:[%s0 + $0x8] sm:$0xff]
  %v19 = vld [vmem:[%s1] sm:$0xff]
  %v20 = vld [vmem:[%s1 + $0x8] sm:$0xff]
  %v21 = vld [vmem:[%s1 + $0x10] sm:$0xff]
  %v22 = vld [vmem:[%s1 + $0x18] sm:$0xff]
  %v23 = vld [vmem:[%s1 + $0x20] sm:$0xff]
  %v24 = vld [vmem:[%s1 + $0x28] sm:$0xff]
  %v25 = vld [vmem:[%s1 + $0x30] sm:$0xff]
  %v26 = vld [vmem:[%s1 + $0x38] sm:$0xff]
  %v27 = vld [vmem:[%s1 + $0x40] sm:$0xff]
  %v28 = vld [vmem:[%s1 + $0x48] sm:$0xff]
  %v29 = vld [vmem:[%s1 + $0x50] sm:$0xff]
  %v30 = vld [vmem:[%s1 + $0x58] sm:$0xff]
  %v31 = vld [vmem:[%s1 + $0x60] sm:$0xff]
  %v32 = vld [vmem:[%s1 + $0x68] sm:$0xff]
  %v33 = vld [vmem:[%s1 + $0x70] sm:$0xff]
  %v34 = vld [vmem:[%s1 + $0x78] sm:$0xff]
  %v35 = vld [vmem:[%s1 + $0x80] sm:$0xff]
  %v36 = vld [vmem:[%s1 + $0x88] sm:$0xff]
  %v37 = vld [vmem:[%s1 + $0x90] sm:$0xff]
  %v38 = vld [vmem:[%s1 + $0x98] sm:$0xff]
  %v39 = vld [vmem:[%s1 + $0xa0] sm:$0xff]
  %v40 = vld [vmem:[%s1 + $0xa8] sm:$0xff]
  %v41 = vld [vmem:[%s1 + $0xb0] sm:$0xff]
  %v42 = vld [vmem:[%s1 + $0xb8] sm:$0xff]
  %v43 = vld [vmem:[%s1 + $0xc0] sm:$0xff]
  %v44 = vld [vmem:[%s1 + $0xc8] sm:$0xff]
  %v45 = vld [vmem:[%s1 + $0xd0] sm:$0xff]
  %vm46 = vcmask 719872
  %v48 = vsel %vm46, %v18, 0
  %50 = vmatprep.subr.mxu0 0.0
  %51 = vmatpush1.msra.mxu0 %v19
  %52 = vmatprep.subr.mxu0 0.0
  %53 = vmatpush1.msra.mxu0 %v20
  %54 = vmatprep.subr.mxu0 0.0
  %55 = vmatpush1.msra.mxu0 %v21
  %56 = vmatprep.subr.mxu0 0.0
  %57 = vmatpush1.msra.mxu0 %v22
  %58 = vmatprep.subr.mxu0 0.0
  %59 = vmatpush1.msra.mxu0 %v23
  %60 = vmatprep.subr.mxu0 0.0
  %61 = vmatpush1.msra.mxu0 %v24
  %62 = vmatprep.subr.mxu0 0.0
  %63 = vmatpush1.msra.mxu0 %v25
  %64 = vmatprep.subr.mxu0 0.0
  %65 = vmatpush1.msra.mxu0 %v26
  %66 = vmatprep.subr.mxu0 0.0
  %67 = vmatpush1.msra.mxu0 %v27
  %68 = vmatprep.subr.mxu0 0.0
  %69 = vmatpush1.msra.mxu0 %v28
  %70 = vmatprep.subr.mxu0 0.0
  %71 = vmatpush1.msra.mxu0 %v29
  %72 = vmatprep.subr.mxu0 0.0
  %73 = vmatpush1.msra.mxu0 %v30
  %74 = vmatprep.subr.mxu0 0.0
  %75 = vmatpush1.msra.mxu0 %v31
  %76 = vmatprep.subr.mxu0 0.0
  %77 = vmatpush1.msra.mxu0 %v32
  %78 = vmatprep.subr.mxu0 0.0
  %79 = vmatpush1.msra.mxu0 %v33
  %80 = vmatprep.subr.mxu0 0.0
  %81 = vmatpush1.msra.mxu0 %v34
  %82 = vmatprep.subr.mxu0 0.0
  %83 = vmatpush1.msra.mxu0 %v35
  %84 = vmatprep.subr.mxu0 0.0
  %85 = vmatpush1.msra.mxu0 %v36
  %86 = vmatprep.subr.mxu0 0.0
  %87 = vmatpush1.msra.mxu0 %v37
  %88 = vmatprep.subr.mxu0 0.0
  %89 = vmatpush1.msra.mxu0 %v38
  %90 = vmatprep.subr.mxu0 0.0
  %91 = vmatpush1.msra.mxu0 %v39
  %92 = vmatprep.subr.mxu0 0.0
  %93 = vmatpush1.msra.mxu0 %v40
  %94 = vmatprep.subr.mxu0 0.0
  %95 = vmatpush1.msra.mxu0 %v41
  %96 = vmatprep.subr.mxu0 0.0
  %97 = vmatpush1.msra.mxu0 %v42
  %98 = vmatprep.subr.mxu0 0.0
  %99 = vmatpush1.msra.mxu0 %v43
  %100 = vmatprep.subr.mxu0 0.0
  %101 = vmatpush1.msra.mxu0 %v44
  %102 = vmatprep.subr.mxu0 0.0
  %103 = vmatpush1.msra.mxu0 %v45
  %104 = vmatprep.subr.mxu0 0.0
  %105 = vmatpush1.msra.mxu0 0.0
  %106 = vmatprep.subr.mxu0 0.0
  %107 = vmatpush1.msra.mxu0 0.0
  %108 = vmatprep.subr.mxu0 0.0
  %109 = vmatpush1.msra.mxu0 0.0
  %110 = vmatprep.subr.mxu0 0.0
  %111 = vmatpush1.msra.mxu0 0.0
  %112 = vmatprep.subr.mxu0 0.0
  %113 = vmatpush1.msra.mxu0 0.0
  %114 = vmatprep.mubr.f32.mxu0 %v48
  %115 = vmatmul.mubr.f32.gmra.mrb[0].mxu0 %v17
  %v116 = vpop.f32.mrb[0].mxu0
  %v117 = vadd.f32 0.0, %v116
  %v118 = vpop.f32.mrb[0].mxu0
  %119 = vdwg.mxu0
  %vm120 = vcmask 15360
  %v121 = vsel %vm120, %v117, 0.0
  %122 = vadd.xlane.f32.xlu0 %v121
  %v123 = vpop.xlane.xlu0 %122
  %v124 = vrcp.pop 2.0
  %v125 = vmul.f32 %v123, %v124
  %v126 = vsub.f32 %v117, %v125
  %v127 = vmul.f32 %v126, %v126
  %v128 = vsel %vm120, %v127, 0.0
  %129 = vadd.xlane.f32.xlu0 %v128
  %v130 = vpop.xlane.xlu0 %129
  %v131 = vmul.f32 %v130, %v124
  %v132 = vld [vmem:[%s2] sm:$0xff]
  %134 = vset.pattern.permute.xlu0 0
  %135 = vperm.xlu0 %134, %v132
  %v136 = vpop.permute.xlu0 %135
  %v138 = vmul.f32 %v136, %v126
  %v139 = vadd.f32 %v131, 1e-05
  %v140 = vrsqrt.pop %v139
  %v141 = vmul.f32 %v138, %v140
  %v142 = vld [vmem:[%s3] sm:$0xff]
  %144 = vset.pattern.permute.xlu0 0
  %145 = vperm.xlu0 %144, %v142
  %v146 = vpop.permute.xlu0 %145
  %v148 = vadd.f32 %v141, %v146
  %vm149 = vcmp.gt.f32.partialorder %v148, 0.0
  %v150 = vmul.f32 %v148, 0.1
  %v151 = vsel %vm149, %v148, %v150
  %152 = vst.msk [vmem:[%s4] sm:$0xff] %vm120, %v151
  // Predicated region
  $region18: #{simple_block3d_forward.92} parent=0 // pred_check
    _
  $region19: #{simple_block3d_forward.92} parent=0 // pred_check_branch
    %154 = sbr.rel (0) target = $region21
  $region20: #{simple_block3d_forward.92} parent=0 // pred_region
    _
  $region21: #{simple_block3d_forward.92} parent=0 // pred_fallthru
    _
  // Predicated region
  $region22: #{simple_block3d_forward.92} parent=0 // pred_check
    _
  $region23: #{simple_block3d_forward.92} parent=0 // pred_check_branch
    %156 = sbr.rel (0) target = $region25
  $region24: #{simple_block3d_forward.92} parent=0 // pred_region
    _
  $region25: #{simple_block3d_forward.92} parent=0 // pred_fallthru
    _

// kernel: simple_block3d_forward.95
$region0: #{simple_block3d_forward.95}
  #allocation0 [shape = 'u32[]', space=smem, size = 0x4, offset = 0x4, fixed_abs, tag = 'smem constant byte address 0x4 - core index']
  #allocation1 [shape = 'u32[144,128]{1,0:T(1,128)}', space=vmem, size = 0x12000, scoped, tag = 'internal scratch']
  %s0 = inlined_call_operand.vmem [shape: f32[8,2], index: 0, kind: input, shape index: {}]
  %s1 = inlined_call_operand.vmem [shape: f32[8,2], index: 1, kind: input, shape index: {}]
  %s2 = inlined_call_operand.vmem [shape: f32[8,2], index: 2, kind: output, shape index: {}]
  %s3 = sld [smem:[#allocation0]]
  $region18: #{simple_block3d_forward.95} parent=0
    _
  %s5 = ssub.s32 1, %s3
  %s6 = scalar_select 0, %s5, %s3
  // Predicated region
  $region2: #{simple_block3d_forward.95} parent=0 // pred_check
    _
  $region3: #{simple_block3d_forward.95} parent=0 // pred_check_branch
    %8 = sbr.rel (0) target = $region5
  $region4: #{simple_block3d_forward.95} parent=0 // pred_region
    _
  $region5: #{simple_block3d_forward.95} parent=0 // pred_fallthru
    _
  // Predicated region
  $region6: #{simple_block3d_forward.95} parent=0 // pred_check
    _
  $region7: #{simple_block3d_forward.95} parent=0 // pred_check_branch
    %10 = sbr.rel (0) target = $region9
  $region8: #{simple_block3d_forward.95} parent=0 // pred_region
    _
  $region9: #{simple_block3d_forward.95} parent=0 // pred_fallthru
    _
  %v11 = vld [vmem:[%s0] sm:$0xff]
  %v12 = vld [vmem:[%s1] sm:$0xff]
  %v13 = vadd.f32 %v11, %v12
  %v14 = vmax.f32 %v13, 0.0
  %vm15 = vcmask 15360
  %16 = vst.msk [vmem:[%s2] sm:$0xff] %vm15, %v14
  // Predicated region
  $region10: #{simple_block3d_forward.95} parent=0 // pred_check
    _
  $region11: #{simple_block3d_forward.95} parent=0 // pred_check_branch
    %18 = sbr.rel (0) target = $region13
  $region12: #{simple_block3d_forward.95} parent=0 // pred_region
    _
  $region13: #{simple_block3d_forward.95} parent=0 // pred_fallthru
    _
  // Predicated region
  $region14: #{simple_block3d_forward.95} parent=0 // pred_check
    _
  $region15: #{simple_block3d_forward.95} parent=0 // pred_check_branch
    %20 = sbr.rel (0) target = $region17
  $region16: #{simple_block3d_forward.95} parent=0 // pred_region
    _
  $region17: #{simple_block3d_forward.95} parent=0 // pred_fallthru
    _

// kernel: tile.48
$region0: #{tile.48}
  #allocation0 [shape = 's32[1]{0}', space=sflag, size = 0x4, scoped, tag = 'scoped memory for tile.48']
  %s0 = inlined_call_operand.vmem [shape: f32[8], index: 0, kind: input, shape index: {}]
  %s1 = inlined_call_operand.vmem [shape: f32[8,8], index: 1, kind: output, shape index: {}]
  // Predicated region
  $region2: #{tile.48} parent=0 // pred_check
    _
  $region3: #{tile.48} parent=0 // pred_check_branch
    %3 = sbr.rel (0) target = $region5
  $region4: #{tile.48} parent=0 // pred_region
    _
  $region5: #{tile.48} parent=0 // pred_fallthru
    _
  %v4 = vld [vmem:[%s0] ss:$0 sm:$0xff]
  %5 = vst [vmem:[%s1] sm:$0xff] %v4

// kernel: tile.0
$region0: #{tile.0}
  %s0 = inlined_call_operand.vmem [shape: f32[8,8], index: 0, kind: input, shape index: {}]
  %s1 = inlined_call_operand.vmem [shape: f32[64,1], index: 1, kind: output, shape index: {}]
  %v2 = vld [vmem:[%s0] sm:$0xff]
  %vm3 = vcmask 7168
  %4 = vst.msk [vmem:[%s1] ss:$8 sm:$0xf] %vm3, %v2
  %5 = vst.msk [vmem:[%s1] ss:$8 sm:$0xf0] %vm3, %v2
  %v6 = vld [vmem:[%s0] sm:$0xff]
  %7 = vrot.lane.b32.xlu0 %v6, 127
  %v8 = vpop.permute.xlu0 %7
  %vm9 = vcmask 7168
  %s10 = scalar_lea.vmem %s1, 1
  %11 = vst.msk [vmem:[%s10] ss:$8 sm:$0xf] %vm9, %v8
  %s12 = scalar_lea.vmem %s1, 1
  %13 = vst.msk [vmem:[%s12] ss:$8 sm:$0xf0] %vm9, %v8
  %v14 = vld [vmem:[%s0] sm:$0xff]
  %15 = vrot.lane.b32.xlu0 %v14, 126
  %v16 = vpop.permute.xlu0 %15
  %vm17 = vcmask 7168
  %s18 = scalar_lea.vmem %s1, 2
  %19 = vst.msk [vmem:[%s18] ss:$8 sm:$0xf] %vm17, %v16
  %s20 = scalar_lea.vmem %s1, 2
  %21 = vst.msk [vmem:[%s20] ss:$8 sm:$0xf0] %vm17, %v16
  %v22 = vld [vmem:[%s0] sm:$0xff]
  %23 = vrot.lane.b32.xlu0 %v22, 125
  %v24 = vpop.permute.xlu0 %23
  %vm25 = vcmask 7168
  %s26 = scalar_lea.vmem %s1, 3
  %27 = vst.msk [vmem:[%s26] ss:$8 sm:$0xf] %vm25, %v24
  %s28 = scalar_lea.vmem %s1, 3
  %29 = vst.msk [vmem:[%s28] ss:$8 sm:$0xf0] %vm25, %v24
  %v30 = vld [vmem:[%s0] sm:$0xff]
  %31 = vrot.lane.b32.xlu0 %v30, 124
  %v32 = vpop.permute.xlu0 %31
  %vm33 = vcmask 7168
  %s34 = scalar_lea.vmem %s1, 4
  %35 = vst.msk [vmem:[%s34] ss:$8 sm:$0xf] %vm33, %v32
  %s36 = scalar_lea.vmem %s1, 4
  %37 = vst.msk [vmem:[%s36] ss:$8 sm:$0xf0] %vm33, %v32
  %v38 = vld [vmem:[%s0] sm:$0xff]
  %39 = vrot.lane.b32.xlu0 %v38, 123
  %v40 = vpop.permute.xlu0 %39
  %vm41 = vcmask 7168
  %s42 = scalar_lea.vmem %s1, 5
  %43 = vst.msk [vmem:[%s42] ss:$8 sm:$0xf] %vm41, %v40
  %s44 = scalar_lea.vmem %s1, 5
  %45 = vst.msk [vmem:[%s44] ss:$8 sm:$0xf0] %vm41, %v40
  %v46 = vld [vmem:[%s0] sm:$0xff]
  %47 = vrot.lane.b32.xlu0 %v46, 122
  %v48 = vpop.permute.xlu0 %47
  %vm49 = vcmask 7168
  %s50 = scalar_lea.vmem %s1, 6
  %51 = vst.msk [vmem:[%s50] ss:$8 sm:$0xf] %vm49, %v48
  %s52 = scalar_lea.vmem %s1, 6
  %53 = vst.msk [vmem:[%s52] ss:$8 sm:$0xf0] %vm49, %v48
  %v54 = vld [vmem:[%s0] sm:$0xff]
  %55 = vrot.lane.b32.xlu0 %v54, 121
  %v56 = vpop.permute.xlu0 %55
  %vm57 = vcmask 7168
  %s58 = scalar_lea.vmem %s1, 7
  %59 = vst.msk [vmem:[%s58] ss:$8 sm:$0xf] %vm57, %v56
  %s60 = scalar_lea.vmem %s1, 7
  %61 = vst.msk [vmem:[%s60] ss:$8 sm:$0xf0] %vm57, %v56

// kernel: simple_block3d_forward.104
$region0: #{simple_block3d_forward.104}
  #allocation0 [shape = 'u32[]', space=smem, size = 0x4, offset = 0x4, fixed_abs, tag = 'smem constant byte address 0x4 - core index']
  #allocation1 [shape = 'u32[144,128]{1,0:T(1,128)}', space=vmem, size = 0x12000, scoped, tag = 'internal scratch']
  %s0 = inlined_call_operand.vmem [shape: f32[64,216], index: 0, kind: input, shape index: {}]
  %s1 = inlined_call_operand.vmem [shape: f32[216,2], index: 1, kind: input, shape index: {}]
  %s2 = inlined_call_operand.vmem [shape: f32[64,1], index: 2, kind: input, shape index: {}]
  %s3 = inlined_call_operand.vmem [shape: f32[64,2], index: 3, kind: output, shape index: {}]
  %s4 = sld [smem:[#allocation0]]
  $region22: #{simple_block3d_forward.104} parent=0
    _
  %s6 = ssub.s32 1, %s4
  %s7 = scalar_select 0, %s6, %s4
  // Predicated region
  $region2: #{simple_block3d_forward.104} parent=0 // pred_check
    _
  $region3: #{simple_block3d_forward.104} parent=0 // pred_check_branch
    %9 = sbr.rel (0) target = $region5
  $region4: #{simple_block3d_forward.104} parent=0 // pred_region
    _
  $region5: #{simple_block3d_forward.104} parent=0 // pred_fallthru
    _
  // Predicated region
  $region6: #{simple_block3d_forward.104} parent=0 // pred_check
    _
  $region7: #{simple_block3d_forward.104} parent=0 // pred_check_branch
    %11 = sbr.rel (0) target = $region9
  $region8: #{simple_block3d_forward.104} parent=0 // pred_region
    _
  $region9: #{simple_block3d_forward.104} parent=0 // pred_fallthru
    _
  // Predicated region
  $region10: #{simple_block3d_forward.104} parent=0 // pred_check
    _
  $region11: #{simple_block3d_forward.104} parent=0 // pred_check_branch
    %13 = sbr.rel (0) target = $region13
  $region12: #{simple_block3d_forward.104} parent=0 // pred_region
    _
  $region13: #{simple_block3d_forward.104} parent=0 // pred_fallthru
    _
  %v14 = vld [vmem:[%s0] sm:$0xff]
  %v15 = vld [vmem:[%s0 + $0x8] sm:$0xff]
  %v16 = vld [vmem:[%s0 + $0x10] sm:$0xff]
  %v17 = vld [vmem:[%s0 + $0x18] sm:$0xff]
  %v18 = vld [vmem:[%s0 + $0x20] sm:$0xff]
  %v19 = vld [vmem:[%s0 + $0x28] sm:$0xff]
  %v20 = vld [vmem:[%s0 + $0x30] sm:$0xff]
  %v21 = vld [vmem:[%s0 + $0x38] sm:$0xff]
  %v22 = vld [vmem:[%s0 + $0x40] sm:$0xff]
  %v23 = vld [vmem:[%s0 + $0x48] sm:$0xff]
  %v24 = vld [vmem:[%s0 + $0x50] sm:$0xff]
  %v25 = vld [vmem:[%s0 + $0x58] sm:$0xff]
  %v26 = vld [vmem:[%s0 + $0x60] sm:$0xff]
  %v27 = vld [vmem:[%s0 + $0x68] sm:$0xff]
  %v28 = vld [vmem:[%s0 + $0x70] sm:$0xff]
  %v29 = vld [vmem:[%s0 + $0x78] sm:$0xff]
  %v30 = vld [vmem:[%s1] sm:$0xff]
  %v31 = vld [vmem:[%s1 + $0x8] sm:$0xff]
  %v32 = vld [vmem:[%s1 + $0x10] sm:$0xff]
  %v33 = vld [vmem:[%s1 + $0x18] sm:$0xff]
  %v34 = vld [vmem:[%s1 + $0x20] sm:$0xff]
  %v35 = vld [vmem:[%s1 + $0x28] sm:$0xff]
  %v36 = vld [vmem:[%s1 + $0x30] sm:$0xff]
  %v37 = vld [vmem:[%s1 + $0x38] sm:$0xff]
  %v38 = vld [vmem:[%s1 + $0x40] sm:$0xff]
  %v39 = vld [vmem:[%s1 + $0x48] sm:$0xff]
  %v40 = vld [vmem:[%s1 + $0x50] sm:$0xff]
  %v41 = vld [vmem:[%s1 + $0x58] sm:$0xff]
  %v42 = vld [vmem:[%s1 + $0x60] sm:$0xff]
  %v43 = vld [vmem:[%s1 + $0x68] sm:$0xff]
  %v44 = vld [vmem:[%s1 + $0x70] sm:$0xff]
  %v45 = vld [vmem:[%s1 + $0x78] sm:$0xff]
  %v46 = vld [vmem:[%s1 + $0x80] sm:$0xff]
  %v47 = vld [vmem:[%s1 + $0x88] sm:$0xff]
  %v48 = vld [vmem:[%s1 + $0x90] sm:$0xff]
  %v49 = vld [vmem:[%s1 + $0x98] sm:$0xff]
  %v50 = vld [vmem:[%s1 + $0xa0] sm:$0xff]
  %v51 = vld [vmem:[%s1 + $0xa8] sm:$0xff]
  %v52 = vld [vmem:[%s1 + $0xb0] sm:$0xff]
  %v53 = vld [vmem:[%s1 + $0xb8] sm:$0xff]
  %v54 = vld [vmem:[%s1 + $0xc0] sm:$0xff]
  %v55 = vld [vmem:[%s1 + $0xc8] sm:$0xff]
  %v56 = vld [vmem:[%s1 + $0xd0] sm:$0xff]
  %v57 = vld [vmem:[%s2] sm:$0xff]
  %v58 = vld [vmem:[%s2 + $0x8] sm:$0xff]
  %v59 = vld [vmem:[%s2 + $0x10] sm:$0xff]
  %v60 = vld [vmem:[%s2 + $0x18] sm:$0xff]
  %v61 = vld [vmem:[%s2 + $0x20] sm:$0xff]
  %v62 = vld [vmem:[%s2 + $0x28] sm:$0xff]
  %v63 = vld [vmem:[%s2 + $0x30] sm:$0xff]
  %v64 = vld [vmem:[%s2 + $0x38] sm:$0xff]
  %66 = vset.pattern.permute.xlu0 0
  %67 = vperm.xlu0 %66, %v57
  %v68 = vpop.permute.xlu0 %67
  %71 = vset.pattern.permute.xlu0 0
  %72 = vperm.xlu0 %71, %v58
  %v73 = vpop.permute.xlu0 %72
  %76 = vset.pattern.permute.xlu0 0
  %77 = vperm.xlu0 %76, %v59
  %v78 = vpop.permute.xlu0 %77
  %81 = vset.pattern.permute.xlu0 0
  %82 = vperm.xlu0 %81, %v60
  %v83 = vpop.permute.xlu0 %82
  %86 = vset.pattern.permute.xlu0 0
  %87 = vperm.xlu0 %86, %v61
  %v88 = vpop.permute.xlu0 %87
  %91 = vset.pattern.permute.xlu0 0
  %92 = vperm.xlu0 %91, %v62
  %v93 = vpop.permute.xlu0 %92
  %96 = vset.pattern.permute.xlu0 0
  %97 = vperm.xlu0 %96, %v63
  %v98 = vpop.permute.xlu0 %97
  %101 = vset.pattern.permute.xlu0 0
  %102 = vperm.xlu0 %101, %v64
  %v103 = vpop.permute.xlu0 %102
  %vm105 = vcmask 719872
  %v107 = vsel %vm105, %v15, 0
  %v110 = vsel %vm105, %v17, 0
  %v113 = vsel %vm105, %v19, 0
  %v116 = vsel %vm105, %v21, 0
  %v119 = vsel %vm105, %v23, 0
  %v122 = vsel %vm105, %v25, 0
  %v125 = vsel %vm105, %v27, 0
  %v128 = vsel %vm105, %v29, 0
  %130 = vmatprep.subr.mxu0 0.0
  %131 = vmatpush1.msra.mxu0 %v30
  %132 = vmatprep.subr.mxu0 0.0
  %133 = vmatpush1.msra.mxu0 %v31
  %134 = vmatprep.subr.mxu0 0.0
  %135 = vmatpush1.msra.mxu0 %v32
  %136 = vmatprep.subr.mxu0 0.0
  %137 = vmatpush1.msra.mxu0 %v33
  %138 = vmatprep.subr.mxu0 0.0
  %139 = vmatpush1.msra.mxu0 %v34
  %140 = vmatprep.subr.mxu0 0.0
  %141 = vmatpush1.msra.mxu0 %v35
  %142 = vmatprep.subr.mxu0 0.0
  %143 = vmatpush1.msra.mxu0 %v36
  %144 = vmatprep.subr.mxu0 0.0
  %145 = vmatpush1.msra.mxu0 %v37
  %146 = vmatprep.subr.mxu0 0.0
  %147 = vmatpush1.msra.mxu0 %v38
  %148 = vmatprep.subr.mxu0 0.0
  %149 = vmatpush1.msra.mxu0 %v39
  %150 = vmatprep.subr.mxu0 0.0
  %151 = vmatpush1.msra.mxu0 %v40
  %152 = vmatprep.subr.mxu0 0.0
  %153 = vmatpush1.msra.mxu0 %v41
  %154 = vmatprep.subr.mxu0 0.0
  %155 = vmatpush1.msra.mxu0 %v42
  %156 = vmatprep.subr.mxu0 0.0
  %157 = vmatpush1.msra.mxu0 %v43
  %158 = vmatprep.subr.mxu0 0.0
  %159 = vmatpush1.msra.mxu0 %v44
  %160 = vmatprep.subr.mxu0 0.0
  %161 = vmatpush1.msra.mxu0 %v45
  %162 = vmatprep.subr.mxu0 0.0
  %163 = vmatpush1.msra.mxu0 %v46
  %164 = vmatprep.subr.mxu0 0.0
  %165 = vmatpush1.msra.mxu0 %v47
  %166 = vmatprep.subr.mxu0 0.0
  %167 = vmatpush1.msra.mxu0 %v48
  %168 = vmatprep.subr.mxu0 0.0
  %169 = vmatpush1.msra.mxu0 %v49
  %170 = vmatprep.subr.mxu0 0.0
  %171 = vmatpush1.msra.mxu0 %v50
  %172 = vmatprep.subr.mxu0 0.0
  %173 = vmatpush1.msra.mxu0 %v51
  %174 = vmatprep.subr.mxu0 0.0
  %175 = vmatpush1.msra.mxu0 %v52
  %176 = vmatprep.subr.mxu0 0.0
  %177 = vmatpush1.msra.mxu0 %v53
  %178 = vmatprep.subr.mxu0 0.0
  %179 = vmatpush1.msra.mxu0 %v54
  %180 = vmatprep.subr.mxu0 0.0
  %181 = vmatpush1.msra.mxu0 %v55
  %182 = vmatprep.subr.mxu0 0.0
  %183 = vmatpush1.msra.mxu0 %v56
  %184 = vmatprep.subr.mxu0 0.0
  %185 = vmatpush1.msra.mxu0 0.0
  %186 = vmatprep.subr.mxu0 0.0
  %187 = vmatpush1.msra.mxu0 0.0
  %188 = vmatprep.subr.mxu0 0.0
  %189 = vmatpush1.msra.mxu0 0.0
  %190 = vmatprep.subr.mxu0 0.0
  %191 = vmatpush1.msra.mxu0 0.0
  %192 = vmatprep.subr.mxu0 0.0
  %193 = vmatpush1.msra.mxu0 0.0
  %194 = vmatprep.mubr.f32.mxu0 %v107
  %195 = vmatmul.mubr.f32.gmra.mrb[0].mxu0 %v14
  %v196 = vpop.f32.mrb[0].mxu0
  %v197 = vadd.f32 %v68, %v196
  %v198 = vpop.f32.mrb[0].mxu0
  %199 = vmatprep.mubr.f32.mxu0 %v110
  %200 = vmatmul.mubr.f32.gmra.mrb[0].mxu0 %v16
  %v201 = vpop.f32.mrb[0].mxu0
  %v202 = vadd.f32 %v73, %v201
  %v203 = vpop.f32.mrb[0].mxu0
  %204 = vmatprep.mubr.f32.mxu0 %v113
  %205 = vmatmul.mubr.f32.gmra.mrb[0].mxu0 %v18
  %v206 = vpop.f32.mrb[0].mxu0
  %v207 = vadd.f32 %v78, %v206
  %v208 = vpop.f32.mrb[0].mxu0
  %209 = vmatprep.mubr.f32.mxu0 %v116
  %210 = vmatmul.mubr.f32.gmra.mrb[0].mxu0 %v20
  %v211 = vpop.f32.mrb[0].mxu0
  %v212 = vadd.f32 %v83, %v211
  %v213 = vpop.f32.mrb[0].mxu0
  %214 = vmatprep.mubr.f32.mxu0 %v119
  %215 = vmatmul.mubr.f32.gmra.mrb[0].mxu0 %v22
  %v216 = vpop.f32.mrb[0].mxu0
  %v217 = vadd.f32 %v88, %v216
  %v218 = vpop.f32.mrb[0].mxu0
  %219 = vmatprep.mubr.f32.mxu0 %v122
  %220 = vmatmul.mubr.f32.gmra.mrb[0].mxu0 %v24
  %v221 = vpop.f32.mrb[0].mxu0
  %v222 = vadd.f32 %v93, %v221
  %v223 = vpop.f32.mrb[0].mxu0
  %224 = vmatprep.mubr.f32.mxu0 %v125
  %225 = vmatmul.mubr.f32.gmra.mrb[0].mxu0 %v26
  %v226 = vpop.f32.mrb[0].mxu0
  %v227 = vadd.f32 %v98, %v226
  %v228 = vpop.f32.mrb[0].mxu0
  %229 = vmatprep.mubr.f32.mxu0 %v128
  %230 = vmatmul.mubr.f32.gmra.mrb[0].mxu0 %v28
  %v231 = vpop.f32.mrb[0].mxu0
  %v232 = vadd.f32 %v103, %v231
  %v233 = vpop.f32.mrb[0].mxu0
  %234 = vdwg.mxu0
  %vm235 = vcmp.gt.f32.partialorder %v197, 0.0
  %vm236 = vcmp.gt.f32.partialorder %v202, 0.0
  %vm237 = vcmp.gt.f32.partialorder %v207, 0.0
  %vm238 = vcmp.gt.f32.partialorder %v212, 0.0
  %vm239 = vcmp.gt.f32.partialorder %v217, 0.0
  %vm240 = vcmp.gt.f32.partialorder %v222, 0.0
  %vm241 = vcmp.gt.f32.partialorder %v227, 0.0
  %vm242 = vcmp.gt.f32.partialorder %v232, 0.0
  %v243 = vmul.f32 %v197, 0.1
  %v244 = vmul.f32 %v202, 0.1
  %v245 = vmul.f32 %v207, 0.1
  %v246 = vmul.f32 %v212, 0.1
  %v247 = vmul.f32 %v217, 0.1
  %v248 = vmul.f32 %v222, 0.1
  %v249 = vmul.f32 %v227, 0.1
  %v250 = vmul.f32 %v232, 0.1
  %v251 = vsel %vm235, %v197, %v243
  %v252 = vsel %vm236, %v202, %v244
  %v253 = vsel %vm237, %v207, %v245
  %v254 = vsel %vm238, %v212, %v246
  %v255 = vsel %vm239, %v217, %v247
  %v256 = vsel %vm240, %v222, %v248
  %v257 = vsel %vm241, %v227, %v249
  %v258 = vsel %vm242, %v232, %v250
  %vm259 = vcmask 15360
  %260 = vst.msk [vmem:[%s3] sm:$0xff] %vm259, %v251
  %261 = vst.msk [vmem:[%s3 + $0x8] sm:$0xff] %vm259, %v252
  %262 = vst.msk [vmem:[%s3 + $0x10] sm:$0xff] %vm259, %v253
  %263 = vst.msk [vmem:[%s3 + $0x18] sm:$0xff] %vm259, %v254
  %264 = vst.msk [vmem:[%s3 + $0x20] sm:$0xff] %vm259, %v255
  %265 = vst.msk [vmem:[%s3 + $0x28] sm:$0xff] %vm259, %v256
  %266 = vst.msk [vmem:[%s3 + $0x30] sm:$0xff] %vm259, %v257
  %267 = vst.msk [vmem:[%s3 + $0x38] sm:$0xff] %vm259, %v258
  // Predicated region
  $region14: #{simple_block3d_forward.104} parent=0 // pred_check
    _
  $region15: #{simple_block3d_forward.104} parent=0 // pred_check_branch
    %269 = sbr.rel (0) target = $region17
  $region16: #{simple_block3d_forward.104} parent=0 // pred_region
    _
  $region17: #{simple_block3d_forward.104} parent=0 // pred_fallthru
    _
  // Predicated region
  $region18: #{simple_block3d_forward.104} parent=0 // pred_check
    _
  $region19: #{simple_block3d_forward.104} parent=0 // pred_check_branch
    %271 = sbr.rel (0) target = $region21
  $region20: #{simple_block3d_forward.104} parent=0 // pred_region
    _
  $region21: #{simple_block3d_forward.104} parent=0 // pred_fallthru
    _

// kernel: simple_block3d_forward.105
$region0: #{simple_block3d_forward.105}
  #allocation0 [shape = 'u32[]', space=smem, size = 0x4, offset = 0x4, fixed_abs, tag = 'smem constant byte address 0x4 - core index']
  #allocation1 [shape = 'u32[144,128]{1,0:T(1,128)}', space=vmem, size = 0x12000, scoped, tag = 'internal scratch']
  %s0 = inlined_call_operand.vmem [shape: f32[64,432], index: 0, kind: input, shape index: {}]
  %s1 = inlined_call_operand.vmem [shape: f32[432,16], index: 1, kind: input, shape index: {}]
  %s2 = inlined_call_operand.vmem [shape: f32[64,1], index: 2, kind: input, shape index: {}]
  %s3 = inlined_call_operand.vmem [shape: f32[64,16], index: 3, kind: output, shape index: {}]
  %s4 = sld [smem:[#allocation0]]
  $region22: #{simple_block3d_forward.105} parent=0
    _
  %s6 = ssub.s32 1, %s4
  %s7 = scalar_select 0, %s6, %s4
  // Predicated region
  $region2: #{simple_block3d_forward.105} parent=0 // pred_check
    _
  $region3: #{simple_block3d_forward.105} parent=0 // pred_check_branch
    %9 = sbr.rel (0) target = $region5
  $region4: #{simple_block3d_forward.105} parent=0 // pred_region
    _
  $region5: #{simple_block3d_forward.105} parent=0 // pred_fallthru
    _
  // Predicated region
  $region6: #{simple_block3d_forward.105} parent=0 // pred_check
    _
  $region7: #{simple_block3d_forward.105} parent=0 // pred_check_branch
    %11 = sbr.rel (0) target = $region9
  $region8: #{simple_block3d_forward.105} parent=0 // pred_region
    _
  $region9: #{simple_block3d_forward.105} parent=0 // pred_fallthru
    _
  // Predicated region
  $region10: #{simple_block3d_forward.105} parent=0 // pred_check
    _
  $region11: #{simple_block3d_forward.105} parent=0 // pred_check_branch
    %13 = sbr.rel (0) target = $region13
  $region12: #{simple_block3d_forward.105} parent=0 // pred_region
    _
  $region13: #{simple_block3d_forward.105} parent=0 // pred_fallthru
    _
  %v14 = vld [vmem:[%s0] sm:$0xff]
  %v15 = vld [vmem:[%s0 + $0x8] sm:$0xff]
  %v16 = vld [vmem:[%s0 + $0x10] sm:$0xff]
  %v17 = vld [vmem:[%s0 + $0x18] sm:$0xff]
  %v18 = vld [vmem:[%s0 + $0x20] sm:$0xff]
  %v19 = vld [vmem:[%s0 + $0x28] sm:$0xff]
  %v20 = vld [vmem:[%s0 + $0x30] sm:$0xff]
  %v21 = vld [vmem:[%s0 + $0x38] sm:$0xff]
  %v22 = vld [vmem:[%s0 + $0x40] sm:$0xff]
  %v23 = vld [vmem:[%s0 + $0x48] sm:$0xff]
  %v24 = vld [vmem:[%s0 + $0x50] sm:$0xff]
  %v25 = vld [vmem:[%s0 + $0x58] sm:$0xff]
  %v26 = vld [vmem:[%s0 + $0x60] sm:$0xff]
  %v27 = vld [vmem:[%s0 + $0x68] sm:$0xff]
  %v28 = vld [vmem:[%s0 + $0x70] sm:$0xff]
  %v29 = vld [vmem:[%s0 + $0x78] sm:$0xff]
  %v30 = vld [vmem:[%s0 + $0x80] sm:$0xff]
  %v31 = vld [vmem:[%s0 + $0x88] sm:$0xff]
  %v32 = vld [vmem:[%s0 + $0x90] sm:$0xff]
  %v33 = vld [vmem:[%s0 + $0x98] sm:$0xff]
  %v34 = vld [vmem:[%s0 + $0xa0] sm:$0xff]
  %v35 = vld [vmem:[%s0 + $0xa8] sm:$0xff]
  %v36 = vld [vmem:[%s0 + $0xb0] sm:$0xff]
  %v37 = vld [vmem:[%s0 + $0xb8] sm:$0xff]
  %v38 = vld [vmem:[%s0 + $0xc0] sm:$0xff]
  %v39 = vld [vmem:[%s0 + $0xc8] sm:$0xff]
  %v40 = vld [vmem:[%s0 + $0xd0] sm:$0xff]
  %v41 = vld [vmem:[%s0 + $0xd8] sm:$0xff]
  %v42 = vld [vmem:[%s0 + $0xe0] sm:$0xff]
  %v43 = vld [vmem:[%s0 + $0xe8] sm:$0xff]
  %v44 = vld [vmem:[%s0 + $0xf0] sm:$0xff]
  %v45 = vld [vmem:[%s0 + $0xf8] sm:$0xff]
  %v46 = vld [vmem:[%s1] sm:$0xff]
  %v47 = vld [vmem:[%s1 + $0x8] sm:$0xff]
  %v48 = vld [vmem:[%s1 + $0x10] sm:$0xff]
  %v49 = vld [vmem:[%s1 + $0x18] sm:$0xff]
  %v50 = vld [vmem:[%s1 + $0x20] sm:$0xff]
  %v51 = vld [vmem:[%s1 + $0x28] sm:$0xff]
  %v52 = vld [vmem:[%s1 + $0x30] sm:$0xff]
  %v53 = vld [vmem:[%s1 + $0x38] sm:$0xff]
  %v54 = vld [vmem:[%s1 + $0x40] sm:$0xff]
  %v55 = vld [vmem:[%s1 + $0x48] sm:$0xff]
  %v56 = vld [vmem:[%s1 + $0x50] sm:$0xff]
  %v57 = vld [vmem:[%s1 + $0x58] sm:$0xff]
  %v58 = vld [vmem:[%s1 + $0x60] sm:$0xff]
  %v59 = vld [vmem:[%s1 + $0x68] sm:$0xff]
  %v60 = vld [vmem:[%s1 + $0x70] sm:$0xff]
  %v61 = vld [vmem:[%s1 + $0x78] sm:$0xff]
  %v62 = vld [vmem:[%s1 + $0x80] sm:$0xff]
  %v63 = vld [vmem:[%s1 + $0x88] sm:$0xff]
  %v64 = vld [vmem:[%s1 + $0x90] sm:$0xff]
  %v65 = vld [vmem:[%s1 + $0x98] sm:$0xff]
  %v66 = vld [vmem:[%s1 + $0xa0] sm:$0xff]
  %v67 = vld [vmem:[%s1 + $0xa8] sm:$0xff]
  %v68 = vld [vmem:[%s1 + $0xb0] sm:$0xff]
  %v69 = vld [vmem:[%s1 + $0xb8] sm:$0xff]
  %v70 = vld [vmem:[%s1 + $0xc0] sm:$0xff]
  %v71 = vld [vmem:[%s1 + $0xc8] sm:$0xff]
  %v72 = vld [vmem:[%s1 + $0xd0] sm:$0xff]
  %v73 = vld [vmem:[%s1 + $0xd8] sm:$0xff]
  %v74 = vld [vmem:[%s1 + $0xe0] sm:$0xff]
  %v75 = vld [vmem:[%s1 + $0xe8] sm:$0xff]
  %v76 = vld [vmem:[%s1 + $0xf0] sm:$0xff]
  %v77 = vld [vmem:[%s1 + $0xf8] sm:$0xff]
  %v78 = vld [vmem:[%s1 + $0x100] sm:$0xff]
  %v79 = vld [vmem:[%s1 + $0x108] sm:$0xff]
  %v80 = vld [vmem:[%s1 + $0x110] sm:$0xff]
  %v81 = vld [vmem:[%s1 + $0x118] sm:$0xff]
  %v82 = vld [vmem:[%s1 + $0x120] sm:$0xff]
  %v83 = vld [vmem:[%s1 + $0x128] sm:$0xff]
  %v84 = vld [vmem:[%s1 + $0x130] sm:$0xff]
  %v85 = vld [vmem:[%s1 + $0x138] sm:$0xff]
  %v86 = vld [vmem:[%s1 + $0x140] sm:$0xff]
  %v87 = vld [vmem:[%s1 + $0x148] sm:$0xff]
  %v88 = vld [vmem:[%s1 + $0x150] sm:$0xff]
  %v89 = vld [vmem:[%s1 + $0x158] sm:$0xff]
  %v90 = vld [vmem:[%s1 + $0x160] sm:$0xff]
  %v91 = vld [vmem:[%s1 + $0x168] sm:$0xff]
  %v92 = vld [vmem:[%s1 + $0x170] sm:$0xff]
  %v93 = vld [vmem:[%s1 + $0x178] sm:$0xff]
  %v94 = vld [vmem:[%s1 + $0x180] sm:$0xff]
  %v95 = vld [vmem:[%s1 + $0x188] sm:$0xff]
  %v96 = vld [vmem:[%s1 + $0x190] sm:$0xff]
  %v97 = vld [vmem:[%s1 + $0x198] sm:$0xff]
  %v98 = vld [vmem:[%s1 + $0x1a0] sm:$0xff]
  %v99 = vld [vmem:[%s1 + $0x1a8] sm:$0xff]
  %v100 = vld [vmem:[%s2] sm:$0xff]
  %v101 = vld [vmem:[%s2 + $0x8] sm:$0xff]
  %v102 = vld [vmem:[%s2 + $0x10] sm:$0xff]
  %v103 = vld [vmem:[%s2 + $0x18] sm:$0xff]
  %v104 = vld [vmem:[%s2 + $0x20] sm:$0xff]
  %v105 = vld [vmem:[%s2 + $0x28] sm:$0xff]
  %v106 = vld [vmem:[%s2 + $0x30] sm:$0xff]
  %v107 = vld [vmem:[%s2 + $0x38] sm:$0xff]
  %109 = vset.pattern.permute.xlu0 0
  %110 = vperm.xlu0 %109, %v100
  %v111 = vpop.permute.xlu0 %110
  %114 = vset.pattern.permute.xlu0 0
  %115 = vperm.xlu0 %114, %v101
  %v116 = vpop.permute.xlu0 %115
  %119 = vset.pattern.permute.xlu0 0
  %120 = vperm.xlu0 %119, %v102
  %v121 = vpop.permute.xlu0 %120
  %124 = vset.pattern.permute.xlu0 0
  %125 = vperm.xlu0 %124, %v103
  %v126 = vpop.permute.xlu0 %125
  %129 = vset.pattern.permute.xlu0 0
  %130 = vperm.xlu0 %129, %v104
  %v131 = vpop.permute.xlu0 %130
  %134 = vset.pattern.permute.xlu0 0
  %135 = vperm.xlu0 %134, %v105
  %v136 = vpop.permute.xlu0 %135
  %139 = vset.pattern.permute.xlu0 0
  %140 = vperm.xlu0 %139, %v106
  %v141 = vpop.permute.xlu0 %140
  %144 = vset.pattern.permute.xlu0 0
  %145 = vperm.xlu0 %144, %v107
  %v146 = vpop.permute.xlu0 %145
  %vm148 = vcmask 392192
  %v150 = vsel %vm148, %v17, 0
  %v153 = vsel %vm148, %v21, 0
  %v156 = vsel %vm148, %v25, 0
  %v159 = vsel %vm148, %v29, 0
  %v162 = vsel %vm148, %v33, 0
  %v165 = vsel %vm148, %v37, 0
  %v168 = vsel %vm148, %v41, 0
  %v171 = vsel %vm148, %v45, 0
  %173 = vmatprep.subr.mxu0 0.0
  %174 = vmatpush1.msra.mxu0 %v46
  %175 = vmatprep.subr.mxu0 0.0
  %176 = vmatpush1.msra.mxu0 %v47
  %177 = vmatprep.subr.mxu0 0.0
  %178 = vmatpush1.msra.mxu0 %v48
  %179 = vmatprep.subr.mxu0 0.0
  %180 = vmatpush1.msra.mxu0 %v49
  %181 = vmatprep.subr.mxu0 0.0
  %182 = vmatpush1.msra.mxu0 %v50
  %183 = vmatprep.subr.mxu0 0.0
  %184 = vmatpush1.msra.mxu0 %v51
  %185 = vmatprep.subr.mxu0 0.0
  %186 = vmatpush1.msra.mxu0 %v52
  %187 = vmatprep.subr.mxu0 0.0
  %188 = vmatpush1.msra.mxu0 %v53
  %189 = vmatprep.subr.mxu0 0.0
  %190 = vmatpush1.msra.mxu0 %v54
  %191 = vmatprep.subr.mxu0 0.0
  %192 = vmatpush1.msra.mxu0 %v55
  %193 = vmatprep.subr.mxu0 0.0
  %194 = vmatpush1.msra.mxu0 %v56
  %195 = vmatprep.subr.mxu0 0.0
  %196 = vmatpush1.msra.mxu0 %v57
  %197 = vmatprep.subr.mxu0 0.0
  %198 = vmatpush1.msra.mxu0 %v58
  %199 = vmatprep.subr.mxu0 0.0
  %200 = vmatpush1.msra.mxu0 %v59
  %201 = vmatprep.subr.mxu0 0.0
  %202 = vmatpush1.msra.mxu0 %v60
  %203 = vmatprep.subr.mxu0 0.0
  %204 = vmatpush1.msra.mxu0 %v61
  %205 = vmatprep.subr.mxu0 0.0
  %206 = vmatpush1.msra.mxu0 %v62
  %207 = vmatprep.subr.mxu0 0.0
  %208 = vmatpush1.msra.mxu0 %v63
  %209 = vmatprep.subr.mxu0 0.0
  %210 = vmatpush1.msra.mxu0 %v64
  %211 = vmatprep.subr.mxu0 0.0
  %212 = vmatpush1.msra.mxu0 %v65
  %213 = vmatprep.subr.mxu0 0.0
  %214 = vmatpush1.msra.mxu0 %v66
  %215 = vmatprep.subr.mxu0 0.0
  %216 = vmatpush1.msra.mxu0 %v67
  %217 = vmatprep.subr.mxu0 0.0
  %218 = vmatpush1.msra.mxu0 %v68
  %219 = vmatprep.subr.mxu0 0.0
  %220 = vmatpush1.msra.mxu0 %v69
  %221 = vmatprep.subr.mxu0 0.0
  %222 = vmatpush1.msra.mxu0 %v70
  %223 = vmatprep.subr.mxu0 0.0
  %224 = vmatpush1.msra.mxu0 %v71
  %225 = vmatprep.subr.mxu0 0.0
  %226 = vmatpush1.msra.mxu0 %v72
  %227 = vmatprep.subr.mxu0 0.0
  %228 = vmatpush1.msra.mxu0 %v73
  %229 = vmatprep.subr.mxu0 0.0
  %230 = vmatpush1.msra.mxu0 %v74
  %231 = vmatprep.subr.mxu0 0.0
  %232 = vmatpush1.msra.mxu0 %v75
  %233 = vmatprep.subr.mxu0 0.0
  %234 = vmatpush1.msra.mxu0 %v76
  %235 = vmatprep.subr.mxu0 0.0
  %236 = vmatpush1.msra.mxu0 %v77
  %237 = vmatprep.mubr.f32.mxu0 %v15
  %238 = vmatmul.mubr.f32.gmra.mrb[0].mxu0 %v14
  %v239 = vpop.f32.mrb[0].mxu0
  %v240 = vadd.f32 %v111, %v239
  %v241 = vpop.f32.mrb[0].mxu0
  %242 = vmatprep.mubr.f32.mxu0 %v19
  %243 = vmatmul.mubr.f32.gmra.mrb[0].mxu0 %v18
  %v244 = vpop.f32.mrb[0].mxu0
  %v245 = vadd.f32 %v116, %v244
  %v246 = vpop.f32.mrb[0].mxu0
  %247 = vmatprep.mubr.f32.mxu0 %v23
  %248 = vmatmul.mubr.f32.gmra.mrb[0].mxu0 %v22
  %v249 = vpop.f32.mrb[0].mxu0
  %v250 = vadd.f32 %v121, %v249
  %v251 = vpop.f32.mrb[0].mxu0
  %252 = vmatprep.mubr.f32.mxu0 %v27
  %253 = vmatmul.mubr.f32.gmra.mrb[0].mxu0 %v26
  %v254 = vpop.f32.mrb[0].mxu0
  %v255 = vadd.f32 %v126, %v254
  %v256 = vpop.f32.mrb[0].mxu0
  %257 = vmatprep.mubr.f32.mxu0 %v31
  %258 = vmatmul.mubr.f32.gmra.mrb[0].mxu0 %v30
  %v259 = vpop.f32.mrb[0].mxu0
  %v260 = vadd.f32 %v131, %v259
  %v261 = vpop.f32.mrb[0].mxu0
  %262 = vmatprep.mubr.f32.mxu0 %v35
  %263 = vmatmul.mubr.f32.gmra.mrb[0].mxu0 %v34
  %v264 = vpop.f32.mrb[0].mxu0
  %v265 = vadd.f32 %v136, %v264
  %v266 = vpop.f32.mrb[0].mxu0
  %267 = vmatprep.mubr.f32.mxu0 %v39
  %268 = vmatmul.mubr.f32.gmra.mrb[0].mxu0 %v38
  %v269 = vpop.f32.mrb[0].mxu0
  %v270 = vadd.f32 %v141, %v269
  %v271 = vpop.f32.mrb[0].mxu0
  %272 = vmatprep.mubr.f32.mxu0 %v43
  %273 = vmatmul.mubr.f32.gmra.mrb[0].mxu0 %v42
  %v274 = vpop.f32.mrb[0].mxu0
  %v275 = vadd.f32 %v146, %v274
  %v276 = vpop.f32.mrb[0].mxu0
  %277 = vdwg.mxu0
  %278 = vmatprep.subr.mxu0 0.0
  %279 = vmatpush1.msra.mxu0 %v78
  %280 = vmatprep.subr.mxu0 0.0
  %281 = vmatpush1.msra.mxu0 %v79
  %282 = vmatprep.subr.mxu0 0.0
  %283 = vmatpush1.msra.mxu0 %v80
  %284 = vmatprep.subr.mxu0 0.0
  %285 = vmatpush1.msra.mxu0 %v81
  %286 = vmatprep.subr.mxu0 0.0
  %287 = vmatpush1.msra.mxu0 %v82
  %288 = vmatprep.subr.mxu0 0.0
  %289 = vmatpush1.msra.mxu0 %v83
  %290 = vmatprep.subr.mxu0 0.0
  %291 = vmatpush1.msra.mxu0 %v84
  %292 = vmatprep.subr.mxu0 0.0
  %293 = vmatpush1.msra.mxu0 %v85
  %294 = vmatprep.subr.mxu0 0.0
  %295 = vmatpush1.msra.mxu0 %v86
  %296 = vmatprep.subr.mxu0 0.0
  %297 = vmatpush1.msra.mxu0 %v87
  %298 = vmatprep.subr.mxu0 0.0
  %299 = vmatpush1.msra.mxu0 %v88
  %300 = vmatprep.subr.mxu0 0.0
  %301 = vmatpush1.msra.mxu0 %v89
  %302 = vmatprep.subr.mxu0 0.0
  %303 = vmatpush1.msra.mxu0 %v90
  %304 = vmatprep.subr.mxu0 0.0
  %305 = vmatpush1.msra.mxu0 %v91
  %306 = vmatprep.subr.mxu0 0.0
  %307 = vmatpush1.msra.mxu0 %v92
  %308 = vmatprep.subr.mxu0 0.0
  %309 = vmatpush1.msra.mxu0 %v93
  %310 = vmatprep.subr.mxu0 0.0
  %311 = vmatpush1.msra.mxu0 %v94
  %312 = vmatprep.subr.mxu0 0.0
  %313 = vmatpush1.msra.mxu0 %v95
  %314 = vmatprep.subr.mxu0 0.0
  %315 = vmatpush1.msra.mxu0 %v96
  %316 = vmatprep.subr.mxu0 0.0
  %317 = vmatpush1.msra.mxu0 %v97
  %318 = vmatprep.subr.mxu0 0.0
  %319 = vmatpush1.msra.mxu0 %v98
  %320 = vmatprep.subr.mxu0 0.0
  %321 = vmatpush1.msra.mxu0 %v99
  %322 = vmatprep.subr.mxu0 0.0
  %323 = vmatpush1.msra.mxu0 0.0
  %324 = vmatprep.subr.mxu0 0.0
  %325 = vmatpush1.msra.mxu0 0.0
  %326 = vmatprep.subr.mxu0 0.0
  %327 = vmatpush1.msra.mxu0 0.0
  %328 = vmatprep.subr.mxu0 0.0
  %329 = vmatpush1.msra.mxu0 0.0
  %330 = vmatprep.subr.mxu0 0.0
  %331 = vmatpush1.msra.mxu0 0.0
  %332 = vmatprep.subr.mxu0 0.0
  %333 = vmatpush1.msra.mxu0 0.0
  %334 = vmatprep.subr.mxu0 0.0
  %335 = vmatpush1.msra.mxu0 0.0
  %336 = vmatprep.subr.mxu0 0.0
  %337 = vmatpush1.msra.mxu0 0.0
  %338 = vmatprep.subr.mxu0 0.0
  %339 = vmatpush1.msra.mxu0 0.0
  %340 = vmatprep.subr.mxu0 0.0
  %341 = vmatpush1.msra.mxu0 0.0
  %342 = vmatprep.mubr.f32.mxu0 %v150
  %343 = vmatmul.mubr.f32.gmra.mrb[0].mxu0 %v16
  %v344 = vpop.f32.mrb[0].mxu0
  %v345 = vadd.f32 %v240, %v344
  %v346 = vpop.f32.mrb[0].mxu0
  %347 = vmatprep.mubr.f32.mxu0 %v153
  %348 = vmatmul.mubr.f32.gmra.mrb[0].mxu0 %v20
  %v349 = vpop.f32.mrb[0].mxu0
  %v350 = vadd.f32 %v245, %v349
  %v351 = vpop.f32.mrb[0].mxu0
  %352 = vmatprep.mubr.f32.mxu0 %v156
  %353 = vmatmul.mubr.f32.gmra.mrb[0].mxu0 %v24
  %v354 = vpop.f32.mrb[0].mxu0
  %v355 = vadd.f32 %v250, %v354
  %v356 = vpop.f32.mrb[0].mxu0
  %357 = vmatprep.mubr.f32.mxu0 %v159
  %358 = vmatmul.mubr.f32.gmra.mrb[0].mxu0 %v28
  %v359 = vpop.f32.mrb[0].mxu0
  %v360 = vadd.f32 %v255, %v359
  %v361 = vpop.f32.mrb[0].mxu0
  %362 = vmatprep.mubr.f32.mxu0 %v162
  %363 = vmatmul.mubr.f32.gmra.mrb[0].mxu0 %v32
  %v364 = vpop.f32.mrb[0].mxu0
  %v365 = vadd.f32 %v260, %v364
  %v366 = vpop.f32.mrb[0].mxu0
  %367 = vmatprep.mubr.f32.mxu0 %v165
  %368 = vmatmul.mubr.f32.gmra.mrb[0].mxu0 %v36
  %v369 = vpop.f32.mrb[0].mxu0
  %v370 = vadd.f32 %v265, %v369
  %v371 = vpop.f32.mrb[0].mxu0
  %372 = vmatprep.mubr.f32.mxu0 %v168
  %373 = vmatmul.mubr.f32.gmra.mrb[0].mxu0 %v40
  %v374 = vpop.f32.mrb[0].mxu0
  %v375 = vadd.f32 %v270, %v374
  %v376 = vpop.f32.mrb[0].mxu0
  %377 = vmatprep.mubr.f32.mxu0 %v171
  %378 = vmatmul.mubr.f32.gmra.mrb[0].mxu0 %v44
  %v379 = vpop.f32.mrb[0].mxu0
  %v380 = vadd.f32 %v275, %v379
  %v381 = vpop.f32.mrb[0].mxu0
  %382 = vdwg.mxu0
  %vm383 = vcmp.gt.f32.partialorder %v345, 0.0
  %vm384 = vcmp.gt.f32.partialorder %v350, 0.0
  %vm385 = vcmp.gt.f32.partialorder %v355, 0.0
  %vm386 = vcmp.gt.f32.partialorder %v360, 0.0
  %vm387 = vcmp.gt.f32.partialorder %v365, 0.0
  %vm388 = vcmp.gt.f32.partialorder %v370, 0.0
  %vm389 = vcmp.gt.f32.partialorder %v375, 0.0
  %vm390 = vcmp.gt.f32.partialorder %v380, 0.0
  %v391 = vmul.f32 %v345, 0.1
  %v392 = vmul.f32 %v350, 0.1
  %v393 = vmul.f32 %v355, 0.1
  %v394 = vmul.f32 %v360, 0.1
  %v395 = vmul.f32 %v365, 0.1
  %v396 = vmul.f32 %v370, 0.1
  %v397 = vmul.f32 %v375, 0.1
  %v398 = vmul.f32 %v380, 0.1
  %v399 = vsel %vm383, %v345, %v391
  %v400 = vsel %vm384, %v350, %v392
  %v401 = vsel %vm385, %v355, %v393
  %v402 = vsel %vm386, %v360, %v394
  %v403 = vsel %vm387, %v365, %v395
  %v404 = vsel %vm388, %v370, %v396
  %v405 = vsel %vm389, %v375, %v397
  %v406 = vsel %vm390, %v380, %v398
  %vm407 = vcmask 130048
  %408 = vst.msk [vmem:[%s3] sm:$0xff] %vm407, %v399
  %409 = vst.msk [vmem:[%s3 + $0x8] sm:$0xff] %vm407, %v400
  %410 = vst.msk [vmem:[%s3 + $0x10] sm:$0xff] %vm407, %v401
  %411 = vst.msk [vmem:[%s3 + $0x18] sm:$0xff] %vm407, %v402
  %412 = vst.msk [vmem:[%s3 + $0x20] sm:$0xff] %vm407, %v403
  %413 = vst.msk [vmem:[%s3 + $0x28] sm:$0xff] %vm407, %v404
  %414 = vst.msk [vmem:[%s3 + $0x30] sm:$0xff] %vm407, %v405
  %415 = vst.msk [vmem:[%s3 + $0x38] sm:$0xff] %vm407, %v406
  // Predicated region
  $region14: #{simple_block3d_forward.105} parent=0 // pred_check
    _
  $region15: #{simple_block3d_forward.105} parent=0 // pred_check_branch
    %417 = sbr.rel (0) target = $region17
  $region16: #{simple_block3d_forward.105} parent=0 // pred_region
    _
  $region17: #{simple_block3d_forward.105} parent=0 // pred_fallthru
    _
  // Predicated region
  $region18: #{simple_block3d_forward.105} parent=0 // pred_check
    _
  $region19: #{simple_block3d_forward.105} parent=0 // pred_check_branch
    %419 = sbr.rel (0) target = $region21
  $region20: #{simple_block3d_forward.105} parent=0 // pred_region
    _
  $region21: #{simple_block3d_forward.105} parent=0 // pred_fallthru
    _

// kernel: simple_block3d_forward.106
$region0: #{simple_block3d_forward.106}
  #allocation0 [shape = 'u32[]', space=smem, size = 0x4, offset = 0x4, fixed_abs, tag = 'smem constant byte address 0x4 - core index']
  #allocation1 [shape = 'u32[144,128]{1,0:T(1,128)}', space=vmem, size = 0x12000, scoped, tag = 'internal scratch']
  %s0 = inlined_call_operand.vmem [shape: f32[64,432], index: 0, kind: input, shape index: {}]
  %s1 = inlined_call_operand.vmem [shape: f32[432,128], index: 1, kind: input, shape index: {}]
  %s2 = inlined_call_operand.vmem [shape: f32[64,1], index: 2, kind: input, shape index: {}]
  %s3 = inlined_call_operand.vmem [shape: f32[64,128], index: 3, kind: output, shape index: {}]
  %s4 = sld [smem:[#allocation0]]
  $region22: #{simple_block3d_forward.106} parent=0
    _
  %s6 = ssub.s32 1, %s4
  %s7 = scalar_select 0, %s6, %s4
  // Predicated region
  $region2: #{simple_block3d_forward.106} parent=0 // pred_check
    _
  $region3: #{simple_block3d_forward.106} parent=0 // pred_check_branch
    %9 = sbr.rel (0) target = $region5
  $region4: #{simple_block3d_forward.106} parent=0 // pred_region
    _
  $region5: #{simple_block3d_forward.106} parent=0 // pred_fallthru
    _
  // Predicated region
  $region6: #{simple_block3d_forward.106} parent=0 // pred_check
    _
  $region7: #{simple_block3d_forward.106} parent=0 // pred_check_branch
    %11 = sbr.rel (0) target = $region9
  $region8: #{simple_block3d_forward.106} parent=0 // pred_region
    _
  $region9: #{simple_block3d_forward.106} parent=0 // pred_fallthru
    _
  // Predicated region
  $region10: #{simple_block3d_forward.106} parent=0 // pred_check
    _
  $region11: #{simple_block3d_forward.106} parent=0 // pred_check_branch
    %13 = sbr.rel (0) target = $region13
  $region12: #{simple_block3d_forward.106} parent=0 // pred_region
    _
  $region13: #{simple_block3d_forward.106} parent=0 // pred_fallthru
    _
  %v14 = vld [vmem:[%s0] sm:$0xff]
  %v15 = vld [vmem:[%s0 + $0x8] sm:$0xff]
  %v16 = vld [vmem:[%s0 + $0x10] sm:$0xff]
  %v17 = vld [vmem:[%s0 + $0x18] sm:$0xff]
  %v18 = vld [vmem:[%s0 + $0x20] sm:$0xff]
  %v19 = vld [vmem:[%s0 + $0x28] sm:$0xff]
  %v20 = vld [vmem:[%s0 + $0x30] sm:$0xff]
  %v21 = vld [vmem:[%s0 + $0x38] sm:$0xff]
  %v22 = vld [vmem:[%s0 + $0x40] sm:$0xff]
  %v23 = vld [vmem:[%s0 + $0x48] sm:$0xff]
  %v24 = vld [vmem:[%s0 + $0x50] sm:$0xff]
  %v25 = vld [vmem:[%s0 + $0x58] sm:$0xff]
  %v26 = vld [vmem:[%s0 + $0x60] sm:$0xff]
  %v27 = vld [vmem:[%s0 + $0x68] sm:$0xff]
  %v28 = vld [vmem:[%s0 + $0x70] sm:$0xff]
  %v29 = vld [vmem:[%s0 + $0x78] sm:$0xff]
  %v30 = vld [vmem:[%s0 + $0x80] sm:$0xff]
  %v31 = vld [vmem:[%s0 + $0x88] sm:$0xff]
  %v32 = vld [vmem:[%s0 + $0x90] sm:$0xff]
  %v33 = vld [vmem:[%s0 + $0x98] sm:$0xff]
  %v34 = vld [vmem:[%s0 + $0xa0] sm:$0xff]
  %v35 = vld [vmem:[%s0 + $0xa8] sm:$0xff]
  %v36 = vld [vmem:[%s0 + $0xb0] sm:$0xff]
  %v37 = vld [vmem:[%s0 + $0xb8] sm:$0xff]
  %v38 = vld [vmem:[%s0 + $0xc0] sm:$0xff]
  %v39 = vld [vmem:[%s0 + $0xc8] sm:$0xff]
  %v40 = vld [vmem:[%s0 + $0xd0] sm:$0xff]
  %v41 = vld [vmem:[%s0 + $0xd8] sm:$0xff]
  %v42 = vld [vmem:[%s0 + $0xe0] sm:$0xff]
  %v43 = vld [vmem:[%s0 + $0xe8] sm:$0xff]
  %v44 = vld [vmem:[%s0 + $0xf0] sm:$0xff]
  %v45 = vld [vmem:[%s0 + $0xf8] sm:$0xff]
  %v46 = vld [vmem:[%s1] sm:$0xff]
  %v47 = vld [vmem:[%s1 + $0x8] sm:$0xff]
  %v48 = vld [vmem:[%s1 + $0x10] sm:$0xff]
  %v49 = vld [vmem:[%s1 + $0x18] sm:$0xff]
  %v50 = vld [vmem:[%s1 + $0x20] sm:$0xff]
  %v51 = vld [vmem:[%s1 + $0x28] sm:$0xff]
  %v52 = vld [vmem:[%s1 + $0x30] sm:$0xff]
  %v53 = vld [vmem:[%s1 + $0x38] sm:$0xff]
  %v54 = vld [vmem:[%s1 + $0x40] sm:$0xff]
  %v55 = vld [vmem:[%s1 + $0x48] sm:$0xff]
  %v56 = vld [vmem:[%s1 + $0x50] sm:$0xff]
  %v57 = vld [vmem:[%s1 + $0x58] sm:$0xff]
  %v58 = vld [vmem:[%s1 + $0x60] sm:$0xff]
  %v59 = vld [vmem:[%s1 + $0x68] sm:$0xff]
  %v60 = vld [vmem:[%s1 + $0x70] sm:$0xff]
  %v61 = vld [vmem:[%s1 + $0x78] sm:$0xff]
  %v62 = vld [vmem:[%s1 + $0x80] sm:$0xff]
  %v63 = vld [vmem:[%s1 + $0x88] sm:$0xff]
  %v64 = vld [vmem:[%s1 + $0x90] sm:$0xff]
  %v65 = vld [vmem:[%s1 + $0x98] sm:$0xff]
  %v66 = vld [vmem:[%s1 + $0xa0] sm:$0xff]
  %v67 = vld [vmem:[%s1 + $0xa8] sm:$0xff]
  %v68 = vld [vmem:[%s1 + $0xb0] sm:$0xff]
  %v69 = vld [vmem:[%s1 + $0xb8] sm:$0xff]
  %v70 = vld [vmem:[%s1 + $0xc0] sm:$0xff]
  %v71 = vld [vmem:[%s1 + $0xc8] sm:$0xff]
  %v72 = vld [vmem:[%s1 + $0xd0] sm:$0xff]
  %v73 = vld [vmem:[%s1 + $0xd8] sm:$0xff]
  %v74 = vld [vmem:[%s1 + $0xe0] sm:$0xff]
  %v75 = vld [vmem:[%s1 + $0xe8] sm:$0xff]
  %v76 = vld [vmem:[%s1 + $0xf0] sm:$0xff]
  %v77 = vld [vmem:[%s1 + $0xf8] sm:$0xff]
  %v78 = vld [vmem:[%s1 + $0x100] sm:$0xff]
  %v79 = vld [vmem:[%s1 + $0x108] sm:$0xff]
  %v80 = vld [vmem:[%s1 + $0x110] sm:$0xff]
  %v81 = vld [vmem:[%s1 + $0x118] sm:$0xff]
  %v82 = vld [vmem:[%s1 + $0x120] sm:$0xff]
  %v83 = vld [vmem:[%s1 + $0x128] sm:$0xff]
  %v84 = vld [vmem:[%s1 + $0x130] sm:$0xff]
  %v85 = vld [vmem:[%s1 + $0x138] sm:$0xff]
  %v86 = vld [vmem:[%s1 + $0x140] sm:$0xff]
  %v87 = vld [vmem:[%s1 + $0x148] sm:$0xff]
  %v88 = vld [vmem:[%s1 + $0x150] sm:$0xff]
  %v89 = vld [vmem:[%s1 + $0x158] sm:$0xff]
  %v90 = vld [vmem:[%s1 + $0x160] sm:$0xff]
  %v91 = vld [vmem:[%s1 + $0x168] sm:$0xff]
  %v92 = vld [vmem:[%s1 + $0x170] sm:$0xff]
  %v93 = vld [vmem:[%s1 + $0x178] sm:$0xff]
  %v94 = vld [vmem:[%s1 + $0x180] sm:$0xff]
  %v95 = vld [vmem:[%s1 + $0x188] sm:$0xff]
  %v96 = vld [vmem:[%s1 + $0x190] sm:$0xff]
  %v97 = vld [vmem:[%s1 + $0x198] sm:$0xff]
  %v98 = vld [vmem:[%s1 + $0x1a0] sm:$0xff]
  %v99 = vld [vmem:[%s1 + $0x1a8] sm:$0xff]
  %v100 = vld [vmem:[%s2] sm:$0xff]
  %v101 = vld [vmem:[%s2 + $0x8] sm:$0xff]
  %v102 = vld [vmem:[%s2 + $0x10] sm:$0xff]
  %v103 = vld [vmem:[%s2 + $0x18] sm:$0xff]
  %v104 = vld [vmem:[%s2 + $0x20] sm:$0xff]
  %v105 = vld [vmem:[%s2 + $0x28] sm:$0xff]
  %v106 = vld [vmem:[%s2 + $0x30] sm:$0xff]
  %v107 = vld [vmem:[%s2 + $0x38] sm:$0xff]
  %109 = vset.pattern.permute.xlu0 0
  %110 = vperm.xlu0 %109, %v100
  %v111 = vpop.permute.xlu0 %110
  %114 = vset.pattern.permute.xlu0 0
  %115 = vperm.xlu0 %114, %v101
  %v116 = vpop.permute.xlu0 %115
  %119 = vset.pattern.permute.xlu0 0
  %120 = vperm.xlu0 %119, %v102
  %v121 = vpop.permute.xlu0 %120
  %124 = vset.pattern.permute.xlu0 0
  %125 = vperm.xlu0 %124, %v103
  %v126 = vpop.permute.xlu0 %125
  %129 = vset.pattern.permute.xlu0 0
  %130 = vperm.xlu0 %129, %v104
  %v131 = vpop.permute.xlu0 %130
  %134 = vset.pattern.permute.xlu0 0
  %135 = vperm.xlu0 %134, %v105
  %v136 = vpop.permute.xlu0 %135
  %139 = vset.pattern.permute.xlu0 0
  %140 = vperm.xlu0 %139, %v106
  %v141 = vpop.permute.xlu0 %140
  %144 = vset.pattern.permute.xlu0 0
  %145 = vperm.xlu0 %144, %v107
  %v146 = vpop.permute.xlu0 %145
  %vm148 = vcmask 392192
  %v150 = vsel %vm148, %v17, 0
  %v153 = vsel %vm148, %v21, 0
  %v156 = vsel %vm148, %v25, 0
  %v159 = vsel %vm148, %v29, 0
  %v162 = vsel %vm148, %v33, 0
  %v165 = vsel %vm148, %v37, 0
  %v168 = vsel %vm148, %v41, 0
  %v171 = vsel %vm148, %v45, 0
  %173 = vmatprep.subr.mxu0 0.0
  %174 = vmatpush1.msra.mxu0 %v46
  %175 = vmatprep.subr.mxu0 0.0
  %176 = vmatpush1.msra.mxu0 %v47
  %177 = vmatprep.subr.mxu0 0.0
  %178 = vmatpush1.msra.mxu0 %v48
  %179 = vmatprep.subr.mxu0 0.0
  %180 = vmatpush1.msra.mxu0 %v49
  %181 = vmatprep.subr.mxu0 0.0
  %182 = vmatpush1.msra.mxu0 %v50
  %183 = vmatprep.subr.mxu0 0.0
  %184 = vmatpush1.msra.mxu0 %v51
  %185 = vmatprep.subr.mxu0 0.0
  %186 = vmatpush1.msra.mxu0 %v52
  %187 = vmatprep.subr.mxu0 0.0
  %188 = vmatpush1.msra.mxu0 %v53
  %189 = vmatprep.subr.mxu0 0.0
  %190 = vmatpush1.msra.mxu0 %v54
  %191 = vmatprep.subr.mxu0 0.0
  %192 = vmatpush1.msra.mxu0 %v55
  %193 = vmatprep.subr.mxu0 0.0
  %194 = vmatpush1.msra.mxu0 %v56
  %195 = vmatprep.subr.mxu0 0.0
  %196 = vmatpush1.msra.mxu0 %v57
  %197 = vmatprep.subr.mxu0 0.0
  %198 = vmatpush1.msra.mxu0 %v58
  %199 = vmatprep.subr.mxu0 0.0
  %200 = vmatpush1.msra.mxu0 %v59
  %201 = vmatprep.subr.mxu0 0.0
  %202 = vmatpush1.msra.mxu0 %v60
  %203 = vmatprep.subr.mxu0 0.0
  %204 = vmatpush1.msra.mxu0 %v61
  %205 = vmatprep.subr.mxu0 0.0
  %206 = vmatpush1.msra.mxu0 %v62
  %207 = vmatprep.subr.mxu0 0.0
  %208 = vmatpush1.msra.mxu0 %v63
  %209 = vmatprep.subr.mxu0 0.0
  %210 = vmatpush1.msra.mxu0 %v64
  %211 = vmatprep.subr.mxu0 0.0
  %212 = vmatpush1.msra.mxu0 %v65
  %213 = vmatprep.subr.mxu0 0.0
  %214 = vmatpush1.msra.mxu0 %v66
  %215 = vmatprep.subr.mxu0 0.0
  %216 = vmatpush1.msra.mxu0 %v67
  %217 = vmatprep.subr.mxu0 0.0
  %218 = vmatpush1.msra.mxu0 %v68
  %219 = vmatprep.subr.mxu0 0.0
  %220 = vmatpush1.msra.mxu0 %v69
  %221 = vmatprep.subr.mxu0 0.0
  %222 = vmatpush1.msra.mxu0 %v70
  %223 = vmatprep.subr.mxu0 0.0
  %224 = vmatpush1.msra.mxu0 %v71
  %225 = vmatprep.subr.mxu0 0.0
  %226 = vmatpush1.msra.mxu0 %v72
  %227 = vmatprep.subr.mxu0 0.0
  %228 = vmatpush1.msra.mxu0 %v73
  %229 = vmatprep.subr.mxu0 0.0
  %230 = vmatpush1.msra.mxu0 %v74
  %231 = vmatprep.subr.mxu0 0.0
  %232 = vmatpush1.msra.mxu0 %v75
  %233 = vmatprep.subr.mxu0 0.0
  %234 = vmatpush1.msra.mxu0 %v76
  %235 = vmatprep.subr.mxu0 0.0
  %236 = vmatpush1.msra.mxu0 %v77
  %237 = vmatprep.mubr.f32.mxu0 %v15
  %238 = vmatmul.mubr.f32.gmra.mrb[0].mxu0 %v14
  %v239 = vpop.f32.mrb[0].mxu0
  %v240 = vadd.f32 %v111, %v239
  %v241 = vpop.f32.mrb[0].mxu0
  %242 = vmatprep.mubr.f32.mxu0 %v19
  %243 = vmatmul.mubr.f32.gmra.mrb[0].mxu0 %v18
  %v244 = vpop.f32.mrb[0].mxu0
  %v245 = vadd.f32 %v116, %v244
  %v246 = vpop.f32.mrb[0].mxu0
  %247 = vmatprep.mubr.f32.mxu0 %v23
  %248 = vmatmul.mubr.f32.gmra.mrb[0].mxu0 %v22
  %v249 = vpop.f32.mrb[0].mxu0
  %v250 = vadd.f32 %v121, %v249
  %v251 = vpop.f32.mrb[0].mxu0
  %252 = vmatprep.mubr.f32.mxu0 %v27
  %253 = vmatmul.mubr.f32.gmra.mrb[0].mxu0 %v26
  %v254 = vpop.f32.mrb[0].mxu0
  %v255 = vadd.f32 %v126, %v254
  %v256 = vpop.f32.mrb[0].mxu0
  %257 = vmatprep.mubr.f32.mxu0 %v31
  %258 = vmatmul.mubr.f32.gmra.mrb[0].mxu0 %v30
  %v259 = vpop.f32.mrb[0].mxu0
  %v260 = vadd.f32 %v131, %v259
  %v261 = vpop.f32.mrb[0].mxu0
  %262 = vmatprep.mubr.f32.mxu0 %v35
  %263 = vmatmul.mubr.f32.gmra.mrb[0].mxu0 %v34
  %v264 = vpop.f32.mrb[0].mxu0
  %v265 = vadd.f32 %v136, %v264
  %v266 = vpop.f32.mrb[0].mxu0
  %267 = vmatprep.mubr.f32.mxu0 %v39
  %268 = vmatmul.mubr.f32.gmra.mrb[0].mxu0 %v38
  %v269 = vpop.f32.mrb[0].mxu0
  %v270 = vadd.f32 %v141, %v269
  %v271 = vpop.f32.mrb[0].mxu0
  %272 = vmatprep.mubr.f32.mxu0 %v43
  %273 = vmatmul.mubr.f32.gmra.mrb[0].mxu0 %v42
  %v274 = vpop.f32.mrb[0].mxu0
  %v275 = vadd.f32 %v146, %v274
  %v276 = vpop.f32.mrb[0].mxu0
  %277 = vdwg.mxu0
  %278 = vmatprep.subr.mxu0 0.0
  %279 = vmatpush1.msra.mxu0 %v78
  %280 = vmatprep.subr.mxu0 0.0
  %281 = vmatpush1.msra.mxu0 %v79
  %282 = vmatprep.subr.mxu0 0.0
  %283 = vmatpush1.msra.mxu0 %v80
  %284 = vmatprep.subr.mxu0 0.0
  %285 = vmatpush1.msra.mxu0 %v81
  %286 = vmatprep.subr.mxu0 0.0
  %287 = vmatpush1.msra.mxu0 %v82
  %288 = vmatprep.subr.mxu0 0.0
  %289 = vmatpush1.msra.mxu0 %v83
  %290 = vmatprep.subr.mxu0 0.0
  %291 = vmatpush1.msra.mxu0 %v84
  %292 = vmatprep.subr.mxu0 0.0
  %293 = vmatpush1.msra.mxu0 %v85
  %294 = vmatprep.subr.mxu0 0.0
  %295 = vmatpush1.msra.mxu0 %v86
  %296 = vmatprep.subr.mxu0 0.0
  %297 = vmatpush1.msra.mxu0 %v87
  %298 = vmatprep.subr.mxu0 0.0
  %299 = vmatpush1.msra.mxu0 %v88
  %300 = vmatprep.subr.mxu0 0.0
  %301 = vmatpush1.msra.mxu0 %v89
  %302 = vmatprep.subr.mxu0 0.0
  %303 = vmatpush1.msra.mxu0 %v90
  %304 = vmatprep.subr.mxu0 0.0
  %305 = vmatpush1.msra.mxu0 %v91
  %306 = vmatprep.subr.mxu0 0.0
  %307 = vmatpush1.msra.mxu0 %v92
  %308 = vmatprep.subr.mxu0 0.0
  %309 = vmatpush1.msra.mxu0 %v93
  %310 = vmatprep.subr.mxu0 0.0
  %311 = vmatpush1.msra.mxu0 %v94
  %312 = vmatprep.subr.mxu0 0.0
  %313 = vmatpush1.msra.mxu0 %v95
  %314 = vmatprep.subr.mxu0 0.0
  %315 = vmatpush1.msra.mxu0 %v96
  %316 = vmatprep.subr.mxu0 0.0
  %317 = vmatpush1.msra.mxu0 %v97
  %318 = vmatprep.subr.mxu0 0.0
  %319 = vmatpush1.msra.mxu0 %v98
  %320 = vmatprep.subr.mxu0 0.0
  %321 = vmatpush1.msra.mxu0 %v99
  %322 = vmatprep.subr.mxu0 0.0
  %323 = vmatpush1.msra.mxu0 0.0
  %324 = vmatprep.subr.mxu0 0.0
  %325 = vmatpush1.msra.mxu0 0.0
  %326 = vmatprep.subr.mxu0 0.0
  %327 = vmatpush1.msra.mxu0 0.0
  %328 = vmatprep.subr.mxu0 0.0
  %329 = vmatpush1.msra.mxu0 0.0
  %330 = vmatprep.subr.mxu0 0.0
  %331 = vmatpush1.msra.mxu0 0.0
  %332 = vmatprep.subr.mxu0 0.0
  %333 = vmatpush1.msra.mxu0 0.0
  %334 = vmatprep.subr.mxu0 0.0
  %335 = vmatpush1.msra.mxu0 0.0
  %336 = vmatprep.subr.mxu0 0.0
  %337 = vmatpush1.msra.mxu0 0.0
  %338 = vmatprep.subr.mxu0 0.0
  %339 = vmatpush1.msra.mxu0 0.0
  %340 = vmatprep.subr.mxu0 0.0
  %341 = vmatpush1.msra.mxu0 0.0
  %342 = vmatprep.mubr.f32.mxu0 %v150
  %343 = vmatmul.mubr.f32.gmra.mrb[0].mxu0 %v16
  %v344 = vpop.f32.mrb[0].mxu0
  %v345 = vadd.f32 %v240, %v344
  %v346 = vpop.f32.mrb[0].mxu0
  %347 = vmatprep.mubr.f32.mxu0 %v153
  %348 = vmatmul.mubr.f32.gmra.mrb[0].mxu0 %v20
  %v349 = vpop.f32.mrb[0].mxu0
  %v350 = vadd.f32 %v245, %v349
  %v351 = vpop.f32.mrb[0].mxu0
  %352 = vmatprep.mubr.f32.mxu0 %v156
  %353 = vmatmul.mubr.f32.gmra.mrb[0].mxu0 %v24
  %v354 = vpop.f32.mrb[0].mxu0
  %v355 = vadd.f32 %v250, %v354
  %v356 = vpop.f32.mrb[0].mxu0
  %357 = vmatprep.mubr.f32.mxu0 %v159
  %358 = vmatmul.mubr.f32.gmra.mrb[0].mxu0 %v28
  %v359 = vpop.f32.mrb[0].mxu0
  %v360 = vadd.f32 %v255, %v359
  %v361 = vpop.f32.mrb[0].mxu0
  %362 = vmatprep.mubr.f32.mxu0 %v162
  %363 = vmatmul.mubr.f32.gmra.mrb[0].mxu0 %v32
  %v364 = vpop.f32.mrb[0].mxu0
  %v365 = vadd.f32 %v260, %v364
  %v366 = vpop.f32.mrb[0].mxu0
  %367 = vmatprep.mubr.f32.mxu0 %v165
  %368 = vmatmul.mubr.f32.gmra.mrb[0].mxu0 %v36
  %v369 = vpop.f32.mrb[0].mxu0
  %v370 = vadd.f32 %v265, %v369
  %v371 = vpop.f32.mrb[0].mxu0
  %372 = vmatprep.mubr.f32.mxu0 %v168
  %373 = vmatmul.mubr.f32.gmra.mrb[0].mxu0 %v40
  %v374 = vpop.f32.mrb[0].mxu0
  %v375 = vadd.f32 %v270, %v374
  %v376 = vpop.f32.mrb[0].mxu0
  %377 = vmatprep.mubr.f32.mxu0 %v171
  %378 = vmatmul.mubr.f32.gmra.mrb[0].mxu0 %v44
  %v379 = vpop.f32.mrb[0].mxu0
  %v380 = vadd.f32 %v275, %v379
  %v381 = vpop.f32.mrb[0].mxu0
  %382 = vdwg.mxu0
  %vm383 = vcmp.gt.f32.partialorder %v345, 0.0
  %vm384 = vcmp.gt.f32.partialorder %v350, 0.0
  %vm385 = vcmp.gt.f32.partialorder %v355, 0.0
  %vm386 = vcmp.gt.f32.partialorder %v360, 0.0
  %vm387 = vcmp.gt.f32.partialorder %v365, 0.0
  %vm388 = vcmp.gt.f32.partialorder %v370, 0.0
  %vm389 = vcmp.gt.f32.partialorder %v375, 0.0
  %vm390 = vcmp.gt.f32.partialorder %v380, 0.0
  %v391 = vmul.f32 %v345, 0.1
  %v392 = vmul.f32 %v350, 0.1
  %v393 = vmul.f32 %v355, 0.1
  %v394 = vmul.f32 %v360, 0.1
  %v395 = vmul.f32 %v365, 0.1
  %v396 = vmul.f32 %v370, 0.1
  %v397 = vmul.f32 %v375, 0.1
  %v398 = vmul.f32 %v380, 0.1
  %v399 = vsel %vm383, %v345, %v391
  %v400 = vsel %vm384, %v350, %v392
  %v401 = vsel %vm385, %v355, %v393
  %v402 = vsel %vm386, %v360, %v394
  %v403 = vsel %vm387, %v365, %v395
  %v404 = vsel %vm388, %v370, %v396
  %v405 = vsel %vm389, %v375, %v397
  %v406 = vsel %vm390, %v380, %v398
  %407 = vst [vmem:[%s3] sm:$0xff] %v399
  %408 = vst [vmem:[%s3 + $0x8] sm:$0xff] %v400
  %409 = vst [vmem:[%s3 + $0x10] sm:$0xff] %v401
  %410 = vst [vmem:[%s3 + $0x18] sm:$0xff] %v402
  %411 = vst [vmem:[%s3 + $0x20] sm:$0xff] %v403
  %412 = vst [vmem:[%s3 + $0x28] sm:$0xff] %v404
  %413 = vst [vmem:[%s3 + $0x30] sm:$0xff] %v405
  %414 = vst [vmem:[%s3 + $0x38] sm:$0xff] %v406
  // Predicated region
  $region14: #{simple_block3d_forward.106} parent=0 // pred_check
    _
  $region15: #{simple_block3d_forward.106} parent=0 // pred_check_branch
    %416 = sbr.rel (0) target = $region17
  $region16: #{simple_block3d_forward.106} parent=0 // pred_region
    _
  $region17: #{simple_block3d_forward.106} parent=0 // pred_fallthru
    _
  // Predicated region
  $region18: #{simple_block3d_forward.106} parent=0 // pred_check
    _
  $region19: #{simple_block3d_forward.106} parent=0 // pred_check_branch
    %418 = sbr.rel (0) target = $region21
  $region20: #{simple_block3d_forward.106} parent=0 // pred_region
    _
  $region21: #{simple_block3d_forward.106} parent=0 // pred_fallthru
    _

// kernel: simple_block3d_forward.108
$region0: #{simple_block3d_forward.108}
  #allocation0 [shape = 'u32[]', space=smem, size = 0x4, offset = 0x4, fixed_abs, tag = 'smem constant byte address 0x4 - core index']
  #allocation1 [shape = 'u32[144,128]{1,0:T(1,128)}', space=vmem, size = 0x12000, scoped, tag = 'internal scratch']
  %s0 = inlined_call_operand.vmem [shape: f32[8,1024], index: 0, kind: input, shape index: {}]
  %s1 = inlined_call_operand.vmem [shape: f32[8,1024], index: 1, kind: input, shape index: {}]
  %s2 = inlined_call_operand.vmem [shape: f32[8,1024], index: 2, kind: input, shape index: {}]
  %s3 = inlined_call_operand.vmem [shape: f32[8,1024], index: 3, kind: output, shape index: {}]
  %s4 = sld [smem:[#allocation0]]
  $region45: #{simple_block3d_forward.108} parent=0
    _
  %s6 = ssub.s32 1, %s4
  %s7 = scalar_select 0, %s6, %s4
  loop: start=0, step=1, limit=4
  $region2: #{simple_block3d_forward.108} parent=0 // loop_pre_header
    _
  $region3: #{simple_block3d_forward.108} parent=0 // loop_header
    %s9 = sphi 0, %s13
    %p10 = scmp.ge.s32.totalorder %s9, 4
    %s19 = sphi 0, %s21
    %s22 = sphi 0, %s19
    %s23 = sphi 0, %s22
    %s39 = sphi 0, %s23
    %s45 = sphi 0, %s47
    %s48 = sphi 0, %s45
    %s49 = sphi 0, %s48
    %s65 = sphi 0, %s49
    %s71 = sphi 0, %s73
    %s74 = sphi 0, %s71
    %s75 = sphi 0, %s74
    %s91 = sphi 0, %s75
    %s97 = sphi 0, %s99
    %s100 = sphi 0, %s97
    %s101 = sphi 0, %s100
    %s117 = sphi 0, %s101
  $region4: #{simple_block3d_forward.108} parent=0 // loop_header_branch
    %12 = sbr.rel (%p10) target = $region8
  $region5: #{simple_block3d_forward.108} parent=0 // loop_body
    %s14 = ssub.s32 %s9, 1
    %s15 = ssub.s32 %s9, 2
    %s16 = sadd.s32 %s9, 1
    %s17 = ssub.s32 %s9, %s16
    %p18 = scmp.eq.s32.totalorder %s17, 0
    %s20 = sadd.s32 %s19, 1
    %s21 = scalar_select %p18, %s19, %s20
    %p24 = pneg %p18
    %p25 = scmp.eq.s32.totalorder %s9, 1
    %p26 = por %p24, %p25
    %p27 = scmp.ne.s32.totalorder %s19, %s22
    %p28 = scmp.eq.s32.totalorder %s9, 0
    %p29 = por %p27, %p28
    %p30 = scmp.ne.s32.totalorder %s19, %s22
    %p31 = scmp.eq.s32.totalorder %s14, 1
    %p32 = por %p30, %p31
    %p33 = scmp.ne.s32.totalorder %s22, %s23
    %p34 = scmp.eq.s32.totalorder %s14, 0
    %p35 = por %p33, %p34
    %p36 = scmp.ne.s32.totalorder %s22, %s23
    %p37 = scmp.eq.s32.totalorder %s15, 1
    %p38 = por %p36, %p37
    %p40 = scmp.ne.s32.totalorder %s23, %s39
    %p41 = scmp.eq.s32.totalorder %s15, 0
    %p42 = por %p40, %p41
    %s43 = ssub.s32 %s9, %s16
    %p44 = scmp.eq.s32.totalorder %s43, 0
    %s46 = sadd.s32 %s45, 1
    %s47 = scalar_select %p44, %s45, %s46
    %p50 = pneg %p44
    %p51 = scmp.eq.s32.totalorder %s9, 1
    %p52 = por %p50, %p51
    %p53 = scmp.ne.s32.totalorder %s45, %s48
    %p54 = scmp.eq.s32.totalorder %s9, 0
    %p55 = por %p53, %p54
    %p56 = scmp.ne.s32.totalorder %s45, %s48
    %p57 = scmp.eq.s32.totalorder %s14, 1
    %p58 = por %p56, %p57
    %p59 = scmp.ne.s32.totalorder %s48, %s49
    %p60 = scmp.eq.s32.totalorder %s14, 0
    %p61 = por %p59, %p60
    %p62 = scmp.ne.s32.totalorder %s48, %s49
    %p63 = scmp.eq.s32.totalorder %s15, 1
    %p64 = por %p62, %p63
    %p66 = scmp.ne.s32.totalorder %s49, %s65
    %p67 = scmp.eq.s32.totalorder %s15, 0
    %p68 = por %p66, %p67
    %s69 = ssub.s32 %s9, %s16
    %p70 = scmp.eq.s32.totalorder %s69, 0
    %s72 = sadd.s32 %s71, 1
    %s73 = scalar_select %p70, %s71, %s72
    %p76 = pneg %p70
    %p77 = scmp.eq.s32.totalorder %s9, 1
    %p78 = por %p76, %p77
    %p79 = scmp.ne.s32.totalorder %s71, %s74
    %p80 = scmp.eq.s32.totalorder %s9, 0
    %p81 = por %p79, %p80
    %p82 = scmp.ne.s32.totalorder %s71, %s74
    %p83 = scmp.eq.s32.totalorder %s14, 1
    %p84 = por %p82, %p83
    %p85 = scmp.ne.s32.totalorder %s74, %s75
    %p86 = scmp.eq.s32.totalorder %s14, 0
    %p87 = por %p85, %p86
    %p88 = scmp.ne.s32.totalorder %s74, %s75
    %p89 = scmp.eq.s32.totalorder %s15, 1
    %p90 = por %p88, %p89
    %p92 = scmp.ne.s32.totalorder %s75, %s91
    %p93 = scmp.eq.s32.totalorder %s15, 0
    %p94 = por %p92, %p93
    %s95 = ssub.s32 %s9, %s16
    %p96 = scmp.eq.s32.totalorder %s95, 0
    %s98 = sadd.s32 %s97, 1
    %s99 = scalar_select %p96, %s97, %s98
    %p102 = pneg %p96
    %p103 = scmp.eq.s32.totalorder %s9, 1
    %p104 = por %p102, %p103
    %p105 = scmp.ne.s32.totalorder %s97, %s100
    %p106 = scmp.eq.s32.totalorder %s9, 0
    %p107 = por %p105, %p106
    %p108 = scmp.ne.s32.totalorder %s97, %s100
    %p109 = scmp.eq.s32.totalorder %s14, 1
    %p110 = por %p108, %p109
    %p111 = scmp.ne.s32.totalorder %s100, %s101
    %p112 = scmp.eq.s32.totalorder %s14, 0
    %p113 = por %p111, %p112
    %p114 = scmp.ne.s32.totalorder %s100, %s101
    %p115 = scmp.eq.s32.totalorder %s15, 1
    %p116 = por %p114, %p115
    %p118 = scmp.ne.s32.totalorder %s101, %s117
    %p119 = scmp.eq.s32.totalorder %s15, 0
    %p120 = por %p118, %p119
    %p121 = scmp.le.s32.totalorder 1, %s9
    %p122 = scmp.lt.s32.totalorder %s9, 3
    %p123 = pnand %p121, %p122
    %p124 = pneg %p123
    // Predicated region
    $region9: #{simple_block3d_forward.108} parent=5 // pred_check
      _
    $region10: #{simple_block3d_forward.108} parent=5 // pred_check_branch
      %126 = sbr.rel (%p123) target = $region12
    $region11: #{simple_block3d_forward.108} parent=5 // pred_region
      %s127 = ssub.s32 %s9, 1
    $region12: #{simple_block3d_forward.108} parent=5 // pred_fallthru
      _
    %p128 = scmp.lt.s32.totalorder %s9, 2
    // Predicated region
    $region13: #{simple_block3d_forward.108} parent=5 // pred_check
      %p129 = pneg %p128
    $region14: #{simple_block3d_forward.108} parent=5 // pred_check_branch
      %131 = sbr.rel (%p129) target = $region16
    $region15: #{simple_block3d_forward.108} parent=5 // pred_region
      // Predicated region
      $region17: #{simple_block3d_forward.108} parent=15 // pred_check
        %p132 = pneg %p29
      $region18: #{simple_block3d_forward.108} parent=15 // pred_check_branch
        %134 = sbr.rel (%p132) target = $region20
      $region19: #{simple_block3d_forward.108} parent=15 // pred_region
        %s135 = smul.u32 4, %s9
        %p136 = scmp.lt.s32.totalorder %s135, 7
        %s137 = scalar_select %p136, %s135, 7
        %s138 = smul.addr %s137, 8
        %s139 = scalar_lea.vmem %s0, %s138
        %s140 = smul.u32 4, %s9
      $region20: #{simple_block3d_forward.108} parent=15 // pred_fallthru
        _
      // Predicated region
      $region21: #{simple_block3d_forward.108} parent=15 // pred_check
        %p141 = pneg %p55
      $region22: #{simple_block3d_forward.108} parent=15 // pred_check_branch
        %143 = sbr.rel (%p141) target = $region24
      $region23: #{simple_block3d_forward.108} parent=15 // pred_region
        %s144 = smul.u32 4, %s9
        %p145 = scmp.lt.s32.totalorder %s144, 7
        %s146 = scalar_select %p145, %s144, 7
        %s147 = smul.addr %s146, 8
        %s148 = scalar_lea.vmem %s1, %s147
        %s149 = smul.u32 4, %s9
      $region24: #{simple_block3d_forward.108} parent=15 // pred_fallthru
        _
      // Predicated region
      $region25: #{simple_block3d_forward.108} parent=15 // pred_check
        %p150 = pneg %p81
      $region26: #{simple_block3d_forward.108} parent=15 // pred_check_branch
        %152 = sbr.rel (%p150) target = $region28
      $region27: #{simple_block3d_forward.108} parent=15 // pred_region
        %s153 = smul.u32 4, %s9
        %p154 = scmp.lt.s32.totalorder %s153, 7
        %s155 = scalar_select %p154, %s153, 7
        %s156 = smul.addr %s155, 8
        %s157 = scalar_lea.vmem %s2, %s156
        %s158 = smul.u32 4, %s9
      $region28: #{simple_block3d_forward.108} parent=15 // pred_fallthru
        _
    $region16: #{simple_block3d_forward.108} parent=5 // pred_fallthru
      _
    %p159 = scmp.le.s32.totalorder 1, %s9
    %p160 = scmp.lt.s32.totalorder %s9, 3
    %p161 = pnand %p159, %p160
    %p162 = pneg %p161
    // Predicated region
    $region29: #{simple_block3d_forward.108} parent=5 // pred_check
      _
    $region30: #{simple_block3d_forward.108} parent=5 // pred_check_branch
      %164 = sbr.rel (%p161) target = $region32
    $region31: #{simple_block3d_forward.108} parent=5 // pred_region
      %s165 = ssub.s32 %s9, 1
      %s166 = smul.u32 4, %s14
      %p167 = scmp.lt.s32.totalorder %s166, 7
      %s168 = scalar_select %p167, %s166, 7
      %s169 = smul.addr %s168, 8
      %s170 = scalar_lea.vmem %s0, %s169
      %p171 = pneg %p35
      %p172 = pneg %p32
      %s173 = smul.u32 4, %s14
      %p174 = scmp.lt.s32.totalorder %s173, 7
      %s175 = scalar_select %p174, %s173, 7
      %s176 = smul.addr %s175, 8
      %s177 = scalar_lea.vmem %s1, %s176
      %p178 = pneg %p61
      %p179 = pneg %p58
      %s180 = smul.u32 4, %s14
      %p181 = scmp.lt.s32.totalorder %s180, 7
      %s182 = scalar_select %p181, %s180, 7
      %s183 = smul.addr %s182, 8
      %s184 = scalar_lea.vmem %s2, %s183
      %p185 = pneg %p87
      %p186 = pneg %p84
      %p187 = pneg %p113
      %p188 = pneg %p110
      %s189 = smul.u32 4, %s14
      %p190 = scmp.lt.s32.totalorder %s189, 7
      %s191 = scalar_select %p190, %s189, 7
      %s192 = smul.addr %s191, 8
      %s193 = scalar_lea.vmem %s3, %s192
      %s194 = smul.u32 4, %s14
      %p195 = scmp.lt.s32.totalorder %s194, 7
      %s196 = scalar_select %p195, %s194, 7
      %s197 = smul.addr %s196, 8
      %s198 = scalar_lea.vmem %s0, %s197
      %s199 = smul.u32 4, %s14
      %s200 = smul.u32 4, %s14
      %p201 = scmp.lt.s32.totalorder %s200, 7
      %s202 = scalar_select %p201, %s200, 7
      %s203 = smul.addr %s202, 8
      %s204 = scalar_lea.vmem %s1, %s203
      %s205 = smul.u32 4, %s14
      %s206 = smul.u32 4, %s14
      %p207 = scmp.lt.s32.totalorder %s206, 7
      %s208 = scalar_select %p207, %s206, 7
      %s209 = smul.addr %s208, 8
      %s210 = scalar_lea.vmem %s2, %s209
      %s211 = smul.u32 4, %s14
      %s212 = smul.u32 4, %s14
      %p213 = scmp.lt.s32.totalorder %s212, 7
      %s214 = scalar_select %p213, %s212, 7
      %s215 = smul.addr %s214, 8
      %s216 = scalar_lea.vmem %s3, %s215
      %s217 = smul.u32 4, %s14
      %v218 = vld [vmem:[%s198] sm:$0xff]
      %v219 = vld [vmem:[%s198 + $0x8] sm:$0xff]
      %v220 = vld [vmem:[%s198 + $0x10] sm:$0xff]
      %v221 = vld [vmem:[%s198 + $0x18] sm:$0xff]
      %v222 = vld [vmem:[%s204] sm:$0xff]
      %v223 = vld [vmem:[%s204 + $0x8] sm:$0xff]
      %v224 = vld [vmem:[%s204 + $0x10] sm:$0xff]
      %v225 = vld [vmem:[%s204 + $0x18] sm:$0xff]
      %v226 = vadd.f32 %v218, %v222
      %v227 = vadd.f32 %v219, %v223
      %v228 = vadd.f32 %v220, %v224
      %v229 = vadd.f32 %v221, %v225
      %v230 = vld [vmem:[%s210] sm:$0xff]
      %v231 = vld [vmem:[%s210 + $0x8] sm:$0xff]
      %v232 = vld [vmem:[%s210 + $0x10] sm:$0xff]
      %v233 = vld [vmem:[%s210 + $0x18] sm:$0xff]
      %v234 = vadd.f32 %v226, %v230
      %v235 = vadd.f32 %v227, %v231
      %v236 = vadd.f32 %v228, %v232
      %v237 = vadd.f32 %v229, %v233
      %v238 = vmax.f32 %v234, 0.0
      %v239 = vmax.f32 %v235, 0.0
      %v240 = vmax.f32 %v236, 0.0
      %v241 = vmax.f32 %v237, 0.0
      %242 = vst [vmem:[%s216] sm:$0xff] %v238
      %243 = vst [vmem:[%s216 + $0x8] sm:$0xff] %v239
      %244 = vst [vmem:[%s216 + $0x10] sm:$0xff] %v240
      %245 = vst [vmem:[%s216 + $0x18] sm:$0xff] %v241
      %s246 = smul.u32 4, %s14
      %p247 = scmp.lt.s32.totalorder %s246, 7
      %s248 = scalar_select %p247, %s246, 7
      %s249 = smul.addr %s248, 8
      %s250 = scalar_lea.vmem %s3, %s249
      // Predicated region
      $region33: #{simple_block3d_forward.108} parent=31 // pred_check
        %p251 = pneg %p110
      $region34: #{simple_block3d_forward.108} parent=31 // pred_check_branch
        %253 = sbr.rel (%p251) target = $region36
      $region35: #{simple_block3d_forward.108} parent=31 // pred_region
        %s254 = smul.u32 4, %s14
      $region36: #{simple_block3d_forward.108} parent=31 // pred_fallthru
        _
    $region32: #{simple_block3d_forward.108} parent=5 // pred_fallthru
      _
    %p255 = scmp.le.s32.totalorder 2, %s9
    // Predicated region
    $region37: #{simple_block3d_forward.108} parent=5 // pred_check
      %p256 = pneg %p255
    $region38: #{simple_block3d_forward.108} parent=5 // pred_check_branch
      %258 = sbr.rel (%p256) target = $region40
    $region39: #{simple_block3d_forward.108} parent=5 // pred_region
      %s259 = ssub.s32 %s9, 2
      // Predicated region
      $region41: #{simple_block3d_forward.108} parent=39 // pred_check
        %p260 = pneg %p116
      $region42: #{simple_block3d_forward.108} parent=39 // pred_check_branch
        %262 = sbr.rel (%p260) target = $region44
      $region43: #{simple_block3d_forward.108} parent=39 // pred_region
        %s263 = smul.u32 4, %s15
        %p264 = scmp.lt.s32.totalorder %s263, 7
        %s265 = scalar_select %p264, %s263, 7
        %s266 = smul.addr %s265, 8
        %s267 = scalar_lea.vmem %s3, %s266
      $region44: #{simple_block3d_forward.108} parent=39 // pred_fallthru
        _
    $region40: #{simple_block3d_forward.108} parent=5 // pred_fallthru
      _
  $region6: #{simple_block3d_forward.108} parent=0 // loop_footer
    %s13 = sadd.s32 1, %s9
  $region7: #{simple_block3d_forward.108} parent=0 // loop_footer_branch
    %8 = sbr.rel target = $region3
  $region8: #{simple_block3d_forward.108} parent=0 // loop_exit
    _

// kernel: simple_block3d_forward.107
$region0: #{simple_block3d_forward.107}
  #allocation0 [shape = 'u32[]', space=smem, size = 0x4, offset = 0x4, fixed_abs, tag = 'smem constant byte address 0x4 - core index']
  #allocation1 [shape = 'u32[144,128]{1,0:T(1,128)}', space=vmem, size = 0x12000, scoped, tag = 'internal scratch']
  %s0 = inlined_call_operand.vmem [shape: f32[8,432], index: 0, kind: input, shape index: {}]
  %s1 = inlined_call_operand.vmem [shape: f32[432,1024], index: 1, kind: input, shape index: {}]
  %s2 = inlined_call_operand.vmem [shape: f32[8,1], index: 2, kind: input, shape index: {}]
  %s3 = inlined_call_operand.vmem [shape: f32[8,1024], index: 3, kind: output, shape index: {}]
  %s4 = sld [smem:[#allocation0]]
  $region68: #{simple_block3d_forward.107} parent=0
    _
  %s6 = ssub.s32 1, %s4
  %s7 = scalar_select 0, %s6, %s4
  $region1: #{simple_block3d_forward.107} parent=0
    #allocation2 [shape = 'u8[1769472]{0}', space=vmem, size = 0x1b0000, scoped, tag = 'input window, operand 1']
    loop: start=0, step=1, limit=4
    $region2: #{simple_block3d_forward.107} parent=1 // loop_pre_header
      _
    $region3: #{simple_block3d_forward.107} parent=1 // loop_header
      %s9 = sphi 0, %s13
      %p10 = scmp.ge.s32.totalorder %s9, 4
      %s17 = sphi 0, %s17
      %s19 = sphi 0, %s17
      %s20 = sphi 0, %s19
      %s34 = sphi 0, %s20
      %s40 = sphi 0, %s42
      %s43 = sphi 0, %s40
      %s44 = sphi 0, %s43
      %s60 = sphi 0, %s44
      %s64 = sphi 0, %s64
      %s66 = sphi 0, %s64
      %s67 = sphi 0, %s66
      %s81 = sphi 0, %s67
      %s87 = sphi 0, %s89
      %s90 = sphi 0, %s87
      %s91 = sphi 0, %s90
      %s107 = sphi 0, %s91
    $region4: #{simple_block3d_forward.107} parent=1 // loop_header_branch
      %12 = sbr.rel (%p10) target = $region8
    $region5: #{simple_block3d_forward.107} parent=1 // loop_body
      %s14 = ssub.s32 %s9, 1
      %s15 = ssub.s32 %s9, 2
      %s16 = sadd.s32 %s9, 1
      %s18 = sadd.s32 %s17, 1
      %p21 = scmp.eq.s32.totalorder %s9, 1
      %p22 = scmp.ne.s32.totalorder %s17, %s19
      %p23 = scmp.eq.s32.totalorder %s9, 0
      %p24 = por %p22, %p23
      %p25 = scmp.ne.s32.totalorder %s17, %s19
      %p26 = scmp.eq.s32.totalorder %s14, 1
      %p27 = por %p25, %p26
      %p28 = scmp.ne.s32.totalorder %s19, %s20
      %p29 = scmp.eq.s32.totalorder %s14, 0
      %p30 = por %p28, %p29
      %p31 = scmp.ne.s32.totalorder %s19, %s20
      %p32 = scmp.eq.s32.totalorder %s15, 1
      %p33 = por %p31, %p32
      %p35 = scmp.ne.s32.totalorder %s20, %s34
      %p36 = scmp.eq.s32.totalorder %s15, 0
      %p37 = por %p35, %p36
      %s38 = ssub.s32 %s9, %s16
      %p39 = scmp.eq.s32.totalorder %s38, 0
      %s41 = sadd.s32 %s40, 1
      %s42 = scalar_select %p39, %s40, %s41
      %p45 = pneg %p39
      %p46 = scmp.eq.s32.totalorder %s9, 1
      %p47 = por %p45, %p46
      %p48 = scmp.ne.s32.totalorder %s40, %s43
      %p49 = scmp.eq.s32.totalorder %s9, 0
      %p50 = por %p48, %p49
      %p51 = scmp.ne.s32.totalorder %s40, %s43
      %p52 = scmp.eq.s32.totalorder %s14, 1
      %p53 = por %p51, %p52
      %p54 = scmp.ne.s32.totalorder %s43, %s44
      %p55 = scmp.eq.s32.totalorder %s14, 0
      %p56 = por %p54, %p55
      %p57 = scmp.ne.s32.totalorder %s43, %s44
      %p58 = scmp.eq.s32.totalorder %s15, 1
      %p59 = por %p57, %p58
      %p61 = scmp.ne.s32.totalorder %s44, %s60
      %p62 = scmp.eq.s32.totalorder %s15, 0
      %p63 = por %p61, %p62
      %s65 = sadd.s32 %s64, 1
      %p68 = scmp.eq.s32.totalorder %s9, 1
      %p69 = scmp.ne.s32.totalorder %s64, %s66
      %p70 = scmp.eq.s32.totalorder %s9, 0
      %p71 = por %p69, %p70
      %p72 = scmp.ne.s32.totalorder %s64, %s66
      %p73 = scmp.eq.s32.totalorder %s14, 1
      %p74 = por %p72, %p73
      %p75 = scmp.ne.s32.totalorder %s66, %s67
      %p76 = scmp.eq.s32.totalorder %s14, 0
      %p77 = por %p75, %p76
      %p78 = scmp.ne.s32.totalorder %s66, %s67
      %p79 = scmp.eq.s32.totalorder %s15, 1
      %p80 = por %p78, %p79
      %p82 = scmp.ne.s32.totalorder %s67, %s81
      %p83 = scmp.eq.s32.totalorder %s15, 0
      %p84 = por %p82, %p83
      %s85 = ssub.s32 %s9, %s16
      %p86 = scmp.eq.s32.totalorder %s85, 0
      %s88 = sadd.s32 %s87, 1
      %s89 = scalar_select %p86, %s87, %s88
      %p92 = pneg %p86
      %p93 = scmp.eq.s32.totalorder %s9, 1
      %p94 = por %p92, %p93
      %p95 = scmp.ne.s32.totalorder %s87, %s90
      %p96 = scmp.eq.s32.totalorder %s9, 0
      %p97 = por %p95, %p96
      %p98 = scmp.ne.s32.totalorder %s87, %s90
      %p99 = scmp.eq.s32.totalorder %s14, 1
      %p100 = por %p98, %p99
      %p101 = scmp.ne.s32.totalorder %s90, %s91
      %p102 = scmp.eq.s32.totalorder %s14, 0
      %p103 = por %p101, %p102
      %p104 = scmp.ne.s32.totalorder %s90, %s91
      %p105 = scmp.eq.s32.totalorder %s15, 1
      %p106 = por %p104, %p105
      %p108 = scmp.ne.s32.totalorder %s91, %s107
      %p109 = scmp.eq.s32.totalorder %s15, 0
      %p110 = por %p108, %p109
      %p111 = scmp.le.s32.totalorder 1, %s9
      %p112 = scmp.lt.s32.totalorder %s9, 3
      %p113 = pnand %p111, %p112
      %p114 = pneg %p113
      // Predicated region
      $region9: #{simple_block3d_forward.107} parent=5 // pred_check
        _
      $region10: #{simple_block3d_forward.107} parent=5 // pred_check_branch
        %116 = sbr.rel (%p113) target = $region12
      $region11: #{simple_block3d_forward.107} parent=5 // pred_region
        %s117 = ssub.s32 %s9, 1
        // Predicated region
        $region13: #{simple_block3d_forward.107} parent=11 // pred_check
          %p118 = pneg %p30
        $region14: #{simple_block3d_forward.107} parent=11 // pred_check_branch
          %120 = sbr.rel (%p118) target = $region16
        $region15: #{simple_block3d_forward.107} parent=11 // pred_region
          _
        $region16: #{simple_block3d_forward.107} parent=11 // pred_fallthru
          _
        // Predicated region
        $region17: #{simple_block3d_forward.107} parent=11 // pred_check
          %p121 = pneg %p77
        $region18: #{simple_block3d_forward.107} parent=11 // pred_check_branch
          %123 = sbr.rel (%p121) target = $region20
        $region19: #{simple_block3d_forward.107} parent=11 // pred_region
          _
        $region20: #{simple_block3d_forward.107} parent=11 // pred_fallthru
          _
      $region12: #{simple_block3d_forward.107} parent=5 // pred_fallthru
        _
      %p124 = scmp.lt.s32.totalorder %s9, 2
      // Predicated region
      $region21: #{simple_block3d_forward.107} parent=5 // pred_check
        %p125 = pneg %p124
      $region22: #{simple_block3d_forward.107} parent=5 // pred_check_branch
        %127 = sbr.rel (%p125) target = $region24
      $region23: #{simple_block3d_forward.107} parent=5 // pred_region
        // Predicated region
        $region25: #{simple_block3d_forward.107} parent=23 // pred_check
          %p128 = pneg %p50
        $region26: #{simple_block3d_forward.107} parent=23 // pred_check_branch
          %130 = sbr.rel (%p128) target = $region28
        $region27: #{simple_block3d_forward.107} parent=23 // pred_region
          %s131 = sand.u32 %s40, 1
          %s132 = sand.u32 %s40, 1
          %s133 = smul.addr %s132, 1728
          %s134 = scalar_lea.vmem [#allocation2], %s133
          %s135 = smul.u32 4, %s9
          %s136 = smul.addr %s135, 8
          %s137 = scalar_lea.vmem %s1, %s136
          // Predicated region
          $region29: #{simple_block3d_forward.107} parent=27 // pred_check
            _
          $region30: #{simple_block3d_forward.107} parent=27 // pred_check_branch
            %139 = sbr.rel (0) target = $region32
          $region31: #{simple_block3d_forward.107} parent=27 // pred_region
            // Predicated region
            $region33: #{simple_block3d_forward.107} parent=31 // pred_check
              _
            $region34: #{simple_block3d_forward.107} parent=31 // pred_check_branch
              %141 = sbr.rel (0) target = $region36
            $region35: #{simple_block3d_forward.107} parent=31 // pred_region
              loop: start=0, step=1, limit=1
              $region37: #{simple_block3d_forward.107} parent=35 // loop_pre_header
                _
              $region38: #{simple_block3d_forward.107} parent=35 // loop_header
                %s143 = sphi 0, %s147
                %p144 = scmp.ge.s32.totalorder %s143, 1
                %s148 = sphi %s137, %s137
                %s149 = sphi %s134, %s134
              $region39: #{simple_block3d_forward.107} parent=35 // loop_header_branch
                %146 = sbr.rel (%p144) target = $region43
              $region40: #{simple_block3d_forward.107} parent=35 // loop_body
                %v150 = vld [vmem:[%s148] sm:$0xff]
                %151 = vst [vmem:[%s149] sm:$0xff] %v150
                %v152 = vld [vmem:[%s148 + $0x8] sm:$0xff]
                %153 = vst [vmem:[%s149 + $0x8] sm:$0xff] %v152
                %v154 = vld [vmem:[%s148 + $0x10] sm:$0xff]
                %155 = vst [vmem:[%s149 + $0x10] sm:$0xff] %v154
                %v156 = vld [vmem:[%s148 + $0x18] sm:$0xff]
                %157 = vst [vmem:[%s149 + $0x18] sm:$0xff] %v156
                %v158 = vld [vmem:[%s148 + $0x40] sm:$0xff]
                %159 = vst [vmem:[%s149 + $0x20] sm:$0xff] %v158
                %v160 = vld [vmem:[%s148 + $0x48] sm:$0xff]
                %161 = vst [vmem:[%s149 + $0x28] sm:$0xff] %v160
                %v162 = vld [vmem:[%s148 + $0x50] sm:$0xff]
                %163 = vst [vmem:[%s149 + $0x30] sm:$0xff] %v162
                %v164 = vld [vmem:[%s148 + $0x58] sm:$0xff]
                %165 = vst [vmem:[%s149 + $0x38] sm:$0xff] %v164
                %v166 = vld [vmem:[%s148 + $0x80] sm:$0xff]
                %167 = vst [vmem:[%s149 + $0x40] sm:$0xff] %v166
                %v168 = vld [vmem:[%s148 + $0x88] sm:$0xff]
                %169 = vst [vmem:[%s149 + $0x48] sm:$0xff] %v168
                %v170 = vld [vmem:[%s148 + $0x90] sm:$0xff]
                %171 = vst [vmem:[%s149 + $0x50] sm:$0xff] %v170
                %v172 = vld [vmem:[%s148 + $0x98] sm:$0xff]
                %173 = vst [vmem:[%s149 + $0x58] sm:$0xff] %v172
                %v174 = vld [vmem:[%s148 + $0xc0] sm:$0xff]
                %175 = vst [vmem:[%s149 + $0x60] sm:$0xff] %v174
                %v176 = vld [vmem:[%s148 + $0xc8] sm:$0xff]
                %177 = vst [vmem:[%s149 + $0x68] sm:$0xff] %v176
                %v178 = vld [vmem:[%s148 + $0xd0] sm:$0xff]
                %179 = vst [vmem:[%s149 + $0x70] sm:$0xff] %v178
                %v180 = vld [vmem:[%s148 + $0xd8] sm:$0xff]
                %181 = vst [vmem:[%s149 + $0x78] sm:$0xff] %v180
                %v182 = vld [vmem:[%s148 + $0x100] sm:$0xff]
                %183 = vst [vmem:[%s149 + $0x80] sm:$0xff] %v182
                %v184 = vld [vmem:[%s148 + $0x108] sm:$0xff]
                %185 = vst [vmem:[%s149 + $0x88] sm:$0xff] %v184
                %v186 = vld [vmem:[%s148 + $0x110] sm:$0xff]
                %187 = vst [vmem:[%s149 + $0x90] sm:$0xff] %v186
                %v188 = vld [vmem:[%s148 + $0x118] sm:$0xff]
                %189 = vst [vmem:[%s149 + $0x98] sm:$0xff] %v188
                %v190 = vld [vmem:[%s148 + $0x140] sm:$0xff]
                %191 = vst [vmem:[%s149 + $0xa0] sm:$0xff] %v190
                %v192 = vld [vmem:[%s148 + $0x148] sm:$0xff]
                %193 = vst [vmem:[%s149 + $0xa8] sm:$0xff] %v192
                %v194 = vld [vmem:[%s148 + $0x150] sm:$0xff]
                %195 = vst [vmem:[%s149 + $0xb0] sm:$0xff] %v194
                %v196 = vld [vmem:[%s148 + $0x158] sm:$0xff]
                %197 = vst [vmem:[%s149 + $0xb8] sm:$0xff] %v196
                %v198 = vld [vmem:[%s148 + $0x180] sm:$0xff]
                %199 = vst [vmem:[%s149 + $0xc0] sm:$0xff] %v198
                %v200 = vld [vmem:[%s148 + $0x188] sm:$0xff]
                %201 = vst [vmem:[%s149 + $0xc8] sm:$0xff] %v200
                %v202 = vld [vmem:[%s148 + $0x190] sm:$0xff]
                %203 = vst [vmem:[%s149 + $0xd0] sm:$0xff] %v202
                %v204 = vld [vmem:[%s148 + $0x198] sm:$0xff]
                %205 = vst [vmem:[%s149 + $0xd8] sm:$0xff] %v204
                %v206 = vld [vmem:[%s148 + $0x1c0] sm:$0xff]
                %207 = vst [vmem:[%s149 + $0xe0] sm:$0xff] %v206
                %v208 = vld [vmem:[%s148 + $0x1c8] sm:$0xff]
                %209 = vst [vmem:[%s149 + $0xe8] sm:$0xff] %v208
                %v210 = vld [vmem:[%s148 + $0x1d0] sm:$0xff]
                %211 = vst [vmem:[%s149 + $0xf0] sm:$0xff] %v210
                %v212 = vld [vmem:[%s148 + $0x1d8] sm:$0xff]
                %213 = vst [vmem:[%s149 + $0xf8] sm:$0xff] %v212
                %v214 = vld [vmem:[%s148 + $0x200] sm:$0xff]
                %215 = vst [vmem:[%s149 + $0x100] sm:$0xff] %v214
                %v216 = vld [vmem:[%s148 + $0x208] sm:$0xff]
                %217 = vst [vmem:[%s149 + $0x108] sm:$0xff] %v216
                %v218 = vld [vmem:[%s148 + $0x210] sm:$0xff]
                %219 = vst [vmem:[%s149 + $0x110] sm:$0xff] %v218
                %v220 = vld [vmem:[%s148 + $0x218] sm:$0xff]
                %221 = vst [vmem:[%s149 + $0x118] sm:$0xff] %v220
                %v222 = vld [vmem:[%s148 + $0x240] sm:$0xff]
                %223 = vst [vmem:[%s149 + $0x120] sm:$0xff] %v222
                %v224 = vld [vmem:[%s148 + $0x248] sm:$0xff]
                %225 = vst [vmem:[%s149 + $0x128] sm:$0xff] %v224
                %v226 = vld [vmem:[%s148 + $0x250] sm:$0xff]
                %227 = vst [vmem:[%s149 + $0x130] sm:$0xff] %v226
                %v228 = vld [vmem:[%s148 + $0x258] sm:$0xff]
                %229 = vst [vmem:[%s149 + $0x138] sm:$0xff] %v228
                %v230 = vld [vmem:[%s148 + $0x280] sm:$0xff]
                %231 = vst [vmem:[%s149 + $0x140] sm:$0xff] %v230
                %v232 = vld [vmem:[%s148 + $0x288] sm:$0xff]
                %233 = vst [vmem:[%s149 + $0x148] sm:$0xff] %v232
                %v234 = vld [vmem:[%s148 + $0x290] sm:$0xff]
                %235 = vst [vmem:[%s149 + $0x150] sm:$0xff] %v234
                %v236 = vld [vmem:[%s148 + $0x298] sm:$0xff]
                %237 = vst [vmem:[%s149 + $0x158] sm:$0xff] %v236
                %v238 = vld [vmem:[%s148 + $0x2c0] sm:$0xff]
                %239 = vst [vmem:[%s149 + $0x160] sm:$0xff] %v238
                %v240 = vld [vmem:[%s148 + $0x2c8] sm:$0xff]
                %241 = vst [vmem:[%s149 + $0x168] sm:$0xff] %v240
                %v242 = vld [vmem:[%s148 + $0x2d0] sm:$0xff]
                %243 = vst [vmem:[%s149 + $0x170] sm:$0xff] %v242
                %v244 = vld [vmem:[%s148 + $0x2d8] sm:$0xff]
                %245 = vst [vmem:[%s149 + $0x178] sm:$0xff] %v244
                %v246 = vld [vmem:[%s148 + $0x300] sm:$0xff]
                %247 = vst [vmem:[%s149 + $0x180] sm:$0xff] %v246
                %v248 = vld [vmem:[%s148 + $0x308] sm:$0xff]
                %249 = vst [vmem:[%s149 + $0x188] sm:$0xff] %v248
                %v250 = vld [vmem:[%s148 + $0x310] sm:$0xff]
                %251 = vst [vmem:[%s149 + $0x190] sm:$0xff] %v250
                %v252 = vld [vmem:[%s148 + $0x318] sm:$0xff]
                %253 = vst [vmem:[%s149 + $0x198] sm:$0xff] %v252
                %v254 = vld [vmem:[%s148 + $0x340] sm:$0xff]
                %255 = vst [vmem:[%s149 + $0x1a0] sm:$0xff] %v254
                %v256 = vld [vmem:[%s148 + $0x348] sm:$0xff]
                %257 = vst [vmem:[%s149 + $0x1a8] sm:$0xff] %v256
                %v258 = vld [vmem:[%s148 + $0x350] sm:$0xff]
                %259 = vst [vmem:[%s149 + $0x1b0] sm:$0xff] %v258
                %v260 = vld [vmem:[%s148 + $0x358] sm:$0xff]
                %261 = vst [vmem:[%s149 + $0x1b8] sm:$0xff] %v260
                %v262 = vld [vmem:[%s148 + $0x380] sm:$0xff]
                %263 = vst [vmem:[%s149 + $0x1c0] sm:$0xff] %v262
                %v264 = vld [vmem:[%s148 + $0x388] sm:$0xff]
                %265 = vst [vmem:[%s149 + $0x1c8] sm:$0xff] %v264
                %v266 = vld [vmem:[%s148 + $0x390] sm:$0xff]
                %267 = vst [vmem:[%s149 + $0x1d0] sm:$0xff] %v266
                %v268 = vld [vmem:[%s148 + $0x398] sm:$0xff]
                %269 = vst [vmem:[%s149 + $0x1d8] sm:$0xff] %v268
                %v270 = vld [vmem:[%s148 + $0x3c0] sm:$0xff]
                %271 = vst [vmem:[%s149 + $0x1e0] sm:$0xff] %v270
                %v272 = vld [vmem:[%s148 + $0x3c8] sm:$0xff]
                %273 = vst [vmem:[%s149 + $0x1e8] sm:$0xff] %v272
                %v274 = vld [vmem:[%s148 + $0x3d0] sm:$0xff]
                %275 = vst [vmem:[%s149 + $0x1f0] sm:$0xff] %v274
                %v276 = vld [vmem:[%s148 + $0x3d8] sm:$0xff]
                %277 = vst [vmem:[%s149 + $0x1f8] sm:$0xff] %v276
                %v278 = vld [vmem:[%s148 + $0x400] sm:$0xff]
                %279 = vst [vmem:[%s149 + $0x200] sm:$0xff] %v278
                %v280 = vld [vmem:[%s148 + $0x408] sm:$0xff]
                %281 = vst [vmem:[%s149 + $0x208] sm:$0xff] %v280
                %v282 = vld [vmem:[%s148 + $0x410] sm:$0xff]
                %283 = vst [vmem:[%s149 + $0x210] sm:$0xff] %v282
                %v284 = vld [vmem:[%s148 + $0x418] sm:$0xff]
                %285 = vst [vmem:[%s149 + $0x218] sm:$0xff] %v284
                %v286 = vld [vmem:[%s148 + $0x440] sm:$0xff]
                %287 = vst [vmem:[%s149 + $0x220] sm:$0xff] %v286
                %v288 = vld [vmem:[%s148 + $0x448] sm:$0xff]
                %289 = vst [vmem:[%s149 + $0x228] sm:$0xff] %v288
                %v290 = vld [vmem:[%s148 + $0x450] sm:$0xff]
                %291 = vst [vmem:[%s149 + $0x230] sm:$0xff] %v290
                %v292 = vld [vmem:[%s148 + $0x458] sm:$0xff]
                %293 = vst [vmem:[%s149 + $0x238] sm:$0xff] %v292
                %v294 = vld [vmem:[%s148 + $0x480] sm:$0xff]
                %295 = vst [vmem:[%s149 + $0x240] sm:$0xff] %v294
                %v296 = vld [vmem:[%s148 + $0x488] sm:$0xff]
                %297 = vst [vmem:[%s149 + $0x248] sm:$0xff] %v296
                %v298 = vld [vmem:[%s148 + $0x490] sm:$0xff]
                %299 = vst [vmem:[%s149 + $0x250] sm:$0xff] %v298
                %v300 = vld [vmem:[%s148 + $0x498] sm:$0xff]
                %301 = vst [vmem:[%s149 + $0x258] sm:$0xff] %v300
                %v302 = vld [vmem:[%s148 + $0x4c0] sm:$0xff]
                %303 = vst [vmem:[%s149 + $0x260] sm:$0xff] %v302
                %v304 = vld [vmem:[%s148 + $0x4c8] sm:$0xff]
                %305 = vst [vmem:[%s149 + $0x268] sm:$0xff] %v304
                %v306 = vld [vmem:[%s148 + $0x4d0] sm:$0xff]
                %307 = vst [vmem:[%s149 + $0x270] sm:$0xff] %v306
                %v308 = vld [vmem:[%s148 + $0x4d8] sm:$0xff]
                %309 = vst [vmem:[%s149 + $0x278] sm:$0xff] %v308
                %v310 = vld [vmem:[%s148 + $0x500] sm:$0xff]
                %311 = vst [vmem:[%s149 + $0x280] sm:$0xff] %v310
                %v312 = vld [vmem:[%s148 + $0x508] sm:$0xff]
                %313 = vst [vmem:[%s149 + $0x288] sm:$0xff] %v312
                %v314 = vld [vmem:[%s148 + $0x510] sm:$0xff]
                %315 = vst [vmem:[%s149 + $0x290] sm:$0xff] %v314
                %v316 = vld [vmem:[%s148 + $0x518] sm:$0xff]
                %317 = vst [vmem:[%s149 + $0x298] sm:$0xff] %v316
                %v318 = vld [vmem:[%s148 + $0x540] sm:$0xff]
                %319 = vst [vmem:[%s149 + $0x2a0] sm:$0xff] %v318
                %v320 = vld [vmem:[%s148 + $0x548] sm:$0xff]
                %321 = vst [vmem:[%s149 + $0x2a8] sm:$0xff] %v320
                %v322 = vld [vmem:[%s148 + $0x550] sm:$0xff]
                %323 = vst [vmem:[%s149 + $0x2b0] sm:$0xff] %v322
                %v324 = vld [vmem:[%s148 + $0x558] sm:$0xff]
                %325 = vst [vmem:[%s149 + $0x2b8] sm:$0xff] %v324
                %v326 = vld [vmem:[%s148 + $0x580] sm:$0xff]
                %327 = vst [vmem:[%s149 + $0x2c0] sm:$0xff] %v326
                %v328 = vld [vmem:[%s148 + $0x588] sm:$0xff]
                %329 = vst [vmem:[%s149 + $0x2c8] sm:$0xff] %v328
                %v330 = vld [vmem:[%s148 + $0x590] sm:$0xff]
                %331 = vst [vmem:[%s149 + $0x2d0] sm:$0xff] %v330
                %v332 = vld [vmem:[%s148 + $0x598] sm:$0xff]
                %333 = vst [vmem:[%s149 + $0x2d8] sm:$0xff] %v332
                %v334 = vld [vmem:[%s148 + $0x5c0] sm:$0xff]
                %335 = vst [vmem:[%s149 + $0x2e0] sm:$0xff] %v334
                %v336 = vld [vmem:[%s148 + $0x5c8] sm:$0xff]
                %337 = vst [vmem:[%s149 + $0x2e8] sm:$0xff] %v336
                %v338 = vld [vmem:[%s148 + $0x5d0] sm:$0xff]
                %339 = vst [vmem:[%s149 + $0x2f0] sm:$0xff] %v338
                %v340 = vld [vmem:[%s148 + $0x5d8] sm:$0xff]
                %341 = vst [vmem:[%s149 + $0x2f8] sm:$0xff] %v340
                %v342 = vld [vmem:[%s148 + $0x600] sm:$0xff]
                %343 = vst [vmem:[%s149 + $0x300] sm:$0xff] %v342
                %v344 = vld [vmem:[%s148 + $0x608] sm:$0xff]
                %345 = vst [vmem:[%s149 + $0x308] sm:$0xff] %v344
                %v346 = vld [vmem:[%s148 + $0x610] sm:$0xff]
                %347 = vst [vmem:[%s149 + $0x310] sm:$0xff] %v346
                %v348 = vld [vmem:[%s148 + $0x618] sm:$0xff]
                %349 = vst [vmem:[%s149 + $0x318] sm:$0xff] %v348
                %v350 = vld [vmem:[%s148 + $0x640] sm:$0xff]
                %351 = vst [vmem:[%s149 + $0x320] sm:$0xff] %v350
                %v352 = vld [vmem:[%s148 + $0x648] sm:$0xff]
                %353 = vst [vmem:[%s149 + $0x328] sm:$0xff] %v352
                %v354 = vld [vmem:[%s148 + $0x650] sm:$0xff]
                %355 = vst [vmem:[%s149 + $0x330] sm:$0xff] %v354
                %v356 = vld [vmem:[%s148 + $0x658] sm:$0xff]
                %357 = vst [vmem:[%s149 + $0x338] sm:$0xff] %v356
                %v358 = vld [vmem:[%s148 + $0x680] sm:$0xff]
                %359 = vst [vmem:[%s149 + $0x340] sm:$0xff] %v358
                %v360 = vld [vmem:[%s148 + $0x688] sm:$0xff]
                %361 = vst [vmem:[%s149 + $0x348] sm:$0xff] %v360
                %v362 = vld [vmem:[%s148 + $0x690] sm:$0xff]
                %363 = vst [vmem:[%s149 + $0x350] sm:$0xff] %v362
                %v364 = vld [vmem:[%s148 + $0x698] sm:$0xff]
                %365 = vst [vmem:[%s149 + $0x358] sm:$0xff] %v364
                %v366 = vld [vmem:[%s148 + $0x6c0] sm:$0xff]
                %367 = vst [vmem:[%s149 + $0x360] sm:$0xff] %v366
                %v368 = vld [vmem:[%s148 + $0x6c8] sm:$0xff]
                %369 = vst [vmem:[%s149 + $0x368] sm:$0xff] %v368
                %v370 = vld [vmem:[%s148 + $0x6d0] sm:$0xff]
                %371 = vst [vmem:[%s149 + $0x370] sm:$0xff] %v370
                %v372 = vld [vmem:[%s148 + $0x6d8] sm:$0xff]
                %373 = vst [vmem:[%s149 + $0x378] sm:$0xff] %v372
                %v374 = vld [vmem:[%s148 + $0x700] sm:$0xff]
                %375 = vst [vmem:[%s149 + $0x380] sm:$0xff] %v374
                %v376 = vld [vmem:[%s148 + $0x708] sm:$0xff]
                %377 = vst [vmem:[%s149 + $0x388] sm:$0xff] %v376
                %v378 = vld [vmem:[%s148 + $0x710] sm:$0xff]
                %379 = vst [vmem:[%s149 + $0x390] sm:$0xff] %v378
                %v380 = vld [vmem:[%s148 + $0x718] sm:$0xff]
                %381 = vst [vmem:[%s149 + $0x398] sm:$0xff] %v380
                %v382 = vld [vmem:[%s148 + $0x740] sm:$0xff]
                %383 = vst [vmem:[%s149 + $0x3a0] sm:$0xff] %v382
                %v384 = vld [vmem:[%s148 + $0x748] sm:$0xff]
                %385 = vst [vmem:[%s149 + $0x3a8] sm:$0xff] %v384
                %v386 = vld [vmem:[%s148 + $0x750] sm:$0xff]
                %387 = vst [vmem:[%s149 + $0x3b0] sm:$0xff] %v386
                %v388 = vld [vmem:[%s148 + $0x758] sm:$0xff]
                %389 = vst [vmem:[%s149 + $0x3b8] sm:$0xff] %v388
                %v390 = vld [vmem:[%s148 + $0x780] sm:$0xff]
                %391 = vst [vmem:[%s149 + $0x3c0] sm:$0xff] %v390
                %v392 = vld [vmem:[%s148 + $0x788] sm:$0xff]
                %393 = vst [vmem:[%s149 + $0x3c8] sm:$0xff] %v392
                %v394 = vld [vmem:[%s148 + $0x790] sm:$0xff]
                %395 = vst [vmem:[%s149 + $0x3d0] sm:$0xff] %v394
                %v396 = vld [vmem:[%s148 + $0x798] sm:$0xff]
                %397 = vst [vmem:[%s149 + $0x3d8] sm:$0xff] %v396
                %v398 = vld [vmem:[%s148 + $0x7c0] sm:$0xff]
                %399 = vst [vmem:[%s149 + $0x3e0] sm:$0xff] %v398
                %v400 = vld [vmem:[%s148 + $0x7c8] sm:$0xff]
                %401 = vst [vmem:[%s149 + $0x3e8] sm:$0xff] %v400
                %v402 = vld [vmem:[%s148 + $0x7d0] sm:$0xff]
                %403 = vst [vmem:[%s149 + $0x3f0] sm:$0xff] %v402
                %v404 = vld [vmem:[%s148 + $0x7d8] sm:$0xff]
                %405 = vst [vmem:[%s149 + $0x3f8] sm:$0xff] %v404
                %v406 = vld [vmem:[%s148 + $0x800] sm:$0xff]
                %407 = vst [vmem:[%s149 + $0x400] sm:$0xff] %v406
                %v408 = vld [vmem:[%s148 + $0x808] sm:$0xff]
                %409 = vst [vmem:[%s149 + $0x408] sm:$0xff] %v408
                %v410 = vld [vmem:[%s148 + $0x810] sm:$0xff]
                %411 = vst [vmem:[%s149 + $0x410] sm:$0xff] %v410
                %v412 = vld [vmem:[%s148 + $0x818] sm:$0xff]
                %413 = vst [vmem:[%s149 + $0x418] sm:$0xff] %v412
                %v414 = vld [vmem:[%s148 + $0x840] sm:$0xff]
                %415 = vst [vmem:[%s149 + $0x420] sm:$0xff] %v414
                %v416 = vld [vmem:[%s148 + $0x848] sm:$0xff]
                %417 = vst [vmem:[%s149 + $0x428] sm:$0xff] %v416
                %v418 = vld [vmem:[%s148 + $0x850] sm:$0xff]
                %419 = vst [vmem:[%s149 + $0x430] sm:$0xff] %v418
                %v420 = vld [vmem:[%s148 + $0x858] sm:$0xff]
                %421 = vst [vmem:[%s149 + $0x438] sm:$0xff] %v420
                %v422 = vld [vmem:[%s148 + $0x880] sm:$0xff]
                %423 = vst [vmem:[%s149 + $0x440] sm:$0xff] %v422
                %v424 = vld [vmem:[%s148 + $0x888] sm:$0xff]
                %425 = vst [vmem:[%s149 + $0x448] sm:$0xff] %v424
                %v426 = vld [vmem:[%s148 + $0x890] sm:$0xff]
                %427 = vst [vmem:[%s149 + $0x450] sm:$0xff] %v426
                %v428 = vld [vmem:[%s148 + $0x898] sm:$0xff]
                %429 = vst [vmem:[%s149 + $0x458] sm:$0xff] %v428
                %v430 = vld [vmem:[%s148 + $0x8c0] sm:$0xff]
                %431 = vst [vmem:[%s149 + $0x460] sm:$0xff] %v430
                %v432 = vld [vmem:[%s148 + $0x8c8] sm:$0xff]
                %433 = vst [vmem:[%s149 + $0x468] sm:$0xff] %v432
                %v434 = vld [vmem:[%s148 + $0x8d0] sm:$0xff]
                %435 = vst [vmem:[%s149 + $0x470] sm:$0xff] %v434
                %v436 = vld [vmem:[%s148 + $0x8d8] sm:$0xff]
                %437 = vst [vmem:[%s149 + $0x478] sm:$0xff] %v436
                %v438 = vld [vmem:[%s148 + $0x900] sm:$0xff]
                %439 = vst [vmem:[%s149 + $0x480] sm:$0xff] %v438
                %v440 = vld [vmem:[%s148 + $0x908] sm:$0xff]
                %441 = vst [vmem:[%s149 + $0x488] sm:$0xff] %v440
                %v442 = vld [vmem:[%s148 + $0x910] sm:$0xff]
                %443 = vst [vmem:[%s149 + $0x490] sm:$0xff] %v442
                %v444 = vld [vmem:[%s148 + $0x918] sm:$0xff]
                %445 = vst [vmem:[%s149 + $0x498] sm:$0xff] %v444
                %v446 = vld [vmem:[%s148 + $0x940] sm:$0xff]
                %447 = vst [vmem:[%s149 + $0x4a0] sm:$0xff] %v446
                %v448 = vld [vmem:[%s148 + $0x948] sm:$0xff]
                %449 = vst [vmem:[%s149 + $0x4a8] sm:$0xff] %v448
                %v450 = vld [vmem:[%s148 + $0x950] sm:$0xff]
                %451 = vst [vmem:[%s149 + $0x4b0] sm:$0xff] %v450
                %v452 = vld [vmem:[%s148 + $0x958] sm:$0xff]
                %453 = vst [vmem:[%s149 + $0x4b8] sm:$0xff] %v452
                %v454 = vld [vmem:[%s148 + $0x980] sm:$0xff]
                %455 = vst [vmem:[%s149 + $0x4c0] sm:$0xff] %v454
                %v456 = vld [vmem:[%s148 + $0x988] sm:$0xff]
                %457 = vst [vmem:[%s149 + $0x4c8] sm:$0xff] %v456
                %v458 = vld [vmem:[%s148 + $0x990] sm:$0xff]
                %459 = vst [vmem:[%s149 + $0x4d0] sm:$0xff] %v458
                %v460 = vld [vmem:[%s148 + $0x998] sm:$0xff]
                %461 = vst [vmem:[%s149 + $0x4d8] sm:$0xff] %v460
                %v462 = vld [vmem:[%s148 + $0x9c0] sm:$0xff]
                %463 = vst [vmem:[%s149 + $0x4e0] sm:$0xff] %v462
                %v464 = vld [vmem:[%s148 + $0x9c8] sm:$0xff]
                %465 = vst [vmem:[%s149 + $0x4e8] sm:$0xff] %v464
                %v466 = vld [vmem:[%s148 + $0x9d0] sm:$0xff]
                %467 = vst [vmem:[%s149 + $0x4f0] sm:$0xff] %v466
                %v468 = vld [vmem:[%s148 + $0x9d8] sm:$0xff]
                %469 = vst [vmem:[%s149 + $0x4f8] sm:$0xff] %v468
                %v470 = vld [vmem:[%s148 + $0xa00] sm:$0xff]
                %471 = vst [vmem:[%s149 + $0x500] sm:$0xff] %v470
                %v472 = vld [vmem:[%s148 + $0xa08] sm:$0xff]
                %473 = vst [vmem:[%s149 + $0x508] sm:$0xff] %v472
                %v474 = vld [vmem:[%s148 + $0xa10] sm:$0xff]
                %475 = vst [vmem:[%s149 + $0x510] sm:$0xff] %v474
                %v476 = vld [vmem:[%s148 + $0xa18] sm:$0xff]
                %477 = vst [vmem:[%s149 + $0x518] sm:$0xff] %v476
                %v478 = vld [vmem:[%s148 + $0xa40] sm:$0xff]
                %479 = vst [vmem:[%s149 + $0x520] sm:$0xff] %v478
                %v480 = vld [vmem:[%s148 + $0xa48] sm:$0xff]
                %481 = vst [vmem:[%s149 + $0x528] sm:$0xff] %v480
                %v482 = vld [vmem:[%s148 + $0xa50] sm:$0xff]
                %483 = vst [vmem:[%s149 + $0x530] sm:$0xff] %v482
                %v484 = vld [vmem:[%s148 + $0xa58] sm:$0xff]
                %485 = vst [vmem:[%s149 + $0x538] sm:$0xff] %v484
                %v486 = vld [vmem:[%s148 + $0xa80] sm:$0xff]
                %487 = vst [vmem:[%s149 + $0x540] sm:$0xff] %v486
                %v488 = vld [vmem:[%s148 + $0xa88] sm:$0xff]
                %489 = vst [vmem:[%s149 + $0x548] sm:$0xff] %v488
                %v490 = vld [vmem:[%s148 + $0xa90] sm:$0xff]
                %491 = vst [vmem:[%s149 + $0x550] sm:$0xff] %v490
                %v492 = vld [vmem:[%s148 + $0xa98] sm:$0xff]
                %493 = vst [vmem:[%s149 + $0x558] sm:$0xff] %v492
                %v494 = vld [vmem:[%s148 + $0xac0] sm:$0xff]
                %495 = vst [vmem:[%s149 + $0x560] sm:$0xff] %v494
                %v496 = vld [vmem:[%s148 + $0xac8] sm:$0xff]
                %497 = vst [vmem:[%s149 + $0x568] sm:$0xff] %v496
                %v498 = vld [vmem:[%s148 + $0xad0] sm:$0xff]
                %499 = vst [vmem:[%s149 + $0x570] sm:$0xff] %v498
                %v500 = vld [vmem:[%s148 + $0xad8] sm:$0xff]
                %501 = vst [vmem:[%s149 + $0x578] sm:$0xff] %v500
                %v502 = vld [vmem:[%s148 + $0xb00] sm:$0xff]
                %503 = vst [vmem:[%s149 + $0x580] sm:$0xff] %v502
                %v504 = vld [vmem:[%s148 + $0xb08] sm:$0xff]
                %505 = vst [vmem:[%s149 + $0x588] sm:$0xff] %v504
                %v506 = vld [vmem:[%s148 + $0xb10] sm:$0xff]
                %507 = vst [vmem:[%s149 + $0x590] sm:$0xff] %v506
                %v508 = vld [vmem:[%s148 + $0xb18] sm:$0xff]
                %509 = vst [vmem:[%s149 + $0x598] sm:$0xff] %v508
                %v510 = vld [vmem:[%s148 + $0xb40] sm:$0xff]
                %511 = vst [vmem:[%s149 + $0x5a0] sm:$0xff] %v510
                %v512 = vld [vmem:[%s148 + $0xb48] sm:$0xff]
                %513 = vst [vmem:[%s149 + $0x5a8] sm:$0xff] %v512
                %v514 = vld [vmem:[%s148 + $0xb50] sm:$0xff]
                %515 = vst [vmem:[%s149 + $0x5b0] sm:$0xff] %v514
                %v516 = vld [vmem:[%s148 + $0xb58] sm:$0xff]
                %517 = vst [vmem:[%s149 + $0x5b8] sm:$0xff] %v516
                %v518 = vld [vmem:[%s148 + $0xb80] sm:$0xff]
                %519 = vst [vmem:[%s149 + $0x5c0] sm:$0xff] %v518
                %v520 = vld [vmem:[%s148 + $0xb88] sm:$0xff]
                %521 = vst [vmem:[%s149 + $0x5c8] sm:$0xff] %v520
                %v522 = vld [vmem:[%s148 + $0xb90] sm:$0xff]
                %523 = vst [vmem:[%s149 + $0x5d0] sm:$0xff] %v522
                %v524 = vld [vmem:[%s148 + $0xb98] sm:$0xff]
                %525 = vst [vmem:[%s149 + $0x5d8] sm:$0xff] %v524
                %v526 = vld [vmem:[%s148 + $0xbc0] sm:$0xff]
                %527 = vst [vmem:[%s149 + $0x5e0] sm:$0xff] %v526
                %v528 = vld [vmem:[%s148 + $0xbc8] sm:$0xff]
                %529 = vst [vmem:[%s149 + $0x5e8] sm:$0xff] %v528
                %v530 = vld [vmem:[%s148 + $0xbd0] sm:$0xff]
                %531 = vst [vmem:[%s149 + $0x5f0] sm:$0xff] %v530
                %v532 = vld [vmem:[%s148 + $0xbd8] sm:$0xff]
                %533 = vst [vmem:[%s149 + $0x5f8] sm:$0xff] %v532
                %v534 = vld [vmem:[%s148 + $0xc00] sm:$0xff]
                %535 = vst [vmem:[%s149 + $0x600] sm:$0xff] %v534
                %v536 = vld [vmem:[%s148 + $0xc08] sm:$0xff]
                %537 = vst [vmem:[%s149 + $0x608] sm:$0xff] %v536
                %v538 = vld [vmem:[%s148 + $0xc10] sm:$0xff]
                %539 = vst [vmem:[%s149 + $0x610] sm:$0xff] %v538
                %v540 = vld [vmem:[%s148 + $0xc18] sm:$0xff]
                %541 = vst [vmem:[%s149 + $0x618] sm:$0xff] %v540
                %v542 = vld [vmem:[%s148 + $0xc40] sm:$0xff]
                %543 = vst [vmem:[%s149 + $0x620] sm:$0xff] %v542
                %v544 = vld [vmem:[%s148 + $0xc48] sm:$0xff]
                %545 = vst [vmem:[%s149 + $0x628] sm:$0xff] %v544
                %v546 = vld [vmem:[%s148 + $0xc50] sm:$0xff]
                %547 = vst [vmem:[%s149 + $0x630] sm:$0xff] %v546
                %v548 = vld [vmem:[%s148 + $0xc58] sm:$0xff]
                %549 = vst [vmem:[%s149 + $0x638] sm:$0xff] %v548
                %v550 = vld [vmem:[%s148 + $0xc80] sm:$0xff]
                %551 = vst [vmem:[%s149 + $0x640] sm:$0xff] %v550
                %v552 = vld [vmem:[%s148 + $0xc88] sm:$0xff]
                %553 = vst [vmem:[%s149 + $0x648] sm:$0xff] %v552
                %v554 = vld [vmem:[%s148 + $0xc90] sm:$0xff]
                %555 = vst [vmem:[%s149 + $0x650] sm:$0xff] %v554
                %v556 = vld [vmem:[%s148 + $0xc98] sm:$0xff]
                %557 = vst [vmem:[%s149 + $0x658] sm:$0xff] %v556
                %v558 = vld [vmem:[%s148 + $0xcc0] sm:$0xff]
                %559 = vst [vmem:[%s149 + $0x660] sm:$0xff] %v558
                %v560 = vld [vmem:[%s148 + $0xcc8] sm:$0xff]
                %561 = vst [vmem:[%s149 + $0x668] sm:$0xff] %v560
                %v562 = vld [vmem:[%s148 + $0xcd0] sm:$0xff]
                %563 = vst [vmem:[%s149 + $0x670] sm:$0xff] %v562
                %v564 = vld [vmem:[%s148 + $0xcd8] sm:$0xff]
                %565 = vst [vmem:[%s149 + $0x678] sm:$0xff] %v564
                %v566 = vld [vmem:[%s148 + $0xd00] sm:$0xff]
                %567 = vst [vmem:[%s149 + $0x680] sm:$0xff] %v566
                %v568 = vld [vmem:[%s148 + $0xd08] sm:$0xff]
                %569 = vst [vmem:[%s149 + $0x688] sm:$0xff] %v568
                %v570 = vld [vmem:[%s148 + $0xd10] sm:$0xff]
                %571 = vst [vmem:[%s149 + $0x690] sm:$0xff] %v570
                %v572 = vld [vmem:[%s148 + $0xd18] sm:$0xff]
                %573 = vst [vmem:[%s149 + $0x698] sm:$0xff] %v572
                %v574 = vld [vmem:[%s148 + $0xd40] sm:$0xff]
                %575 = vst [vmem:[%s149 + $0x6a0] sm:$0xff] %v574
                %v576 = vld [vmem:[%s148 + $0xd48] sm:$0xff]
                %577 = vst [vmem:[%s149 + $0x6a8] sm:$0xff] %v576
                %v578 = vld [vmem:[%s148 + $0xd50] sm:$0xff]
                %579 = vst [vmem:[%s149 + $0x6b0] sm:$0xff] %v578
                %v580 = vld [vmem:[%s148 + $0xd58] sm:$0xff]
                %581 = vst [vmem:[%s149 + $0x6b8] sm:$0xff] %v580
              $region41: #{simple_block3d_forward.107} parent=35 // loop_footer
                %s147 = sadd.s32 1, %s143
              $region42: #{simple_block3d_forward.107} parent=35 // loop_footer_branch
                %142 = sbr.rel target = $region38
              $region43: #{simple_block3d_forward.107} parent=35 // loop_exit
                _
            $region36: #{simple_block3d_forward.107} parent=31 // pred_fallthru
              _
            // Predicated region
            $region44: #{simple_block3d_forward.107} parent=31 // pred_check
              _
            $region45: #{simple_block3d_forward.107} parent=31 // pred_check_branch
              %583 = sbr.rel target = $region47
            $region46: #{simple_block3d_forward.107} parent=31 // pred_region
              _
            $region47: #{simple_block3d_forward.107} parent=31 // pred_fallthru
              _
          $region32: #{simple_block3d_forward.107} parent=27 // pred_fallthru
            _
          %584 = vnop
        $region28: #{simple_block3d_forward.107} parent=23 // pred_fallthru
          _
      $region24: #{simple_block3d_forward.107} parent=5 // pred_fallthru
        _
      %p585 = scmp.le.s32.totalorder 1, %s9
      %p586 = scmp.lt.s32.totalorder %s9, 3
      %p587 = pnand %p585, %p586
      %p588 = pneg %p587
      // Predicated region
      $region48: #{simple_block3d_forward.107} parent=5 // pred_check
        _
      $region49: #{simple_block3d_forward.107} parent=5 // pred_check_branch
        %590 = sbr.rel (%p587) target = $region51
      $region50: #{simple_block3d_forward.107} parent=5 // pred_region
        %s591 = ssub.s32 %s9, 1
        %s592 = sand.u32 %s43, 1
        %s593 = sand.u32 %s43, 1
        %s594 = smul.addr %s593, 1728
        %s595 = scalar_lea.vmem [#allocation2], %s594
        // Predicated region
        $region52: #{simple_block3d_forward.107} parent=50 // pred_check
          %p596 = pneg %p56
        $region53: #{simple_block3d_forward.107} parent=50 // pred_check_branch
          %598 = sbr.rel (%p596) target = $region55
        $region54: #{simple_block3d_forward.107} parent=50 // pred_region
          _
        $region55: #{simple_block3d_forward.107} parent=50 // pred_fallthru
          _
        %p599 = pneg %p30
        %p600 = pneg %p27
        %s601 = sand.u32 %s43, 1
        %s602 = sand.u32 %s43, 1
        %s603 = smul.addr %s602, 1728
        %s604 = scalar_lea.vmem [#allocation2], %s603
        %p605 = pneg %p56
        %p606 = pneg %p53
        %p607 = pneg %p77
        %p608 = pneg %p74
        %p609 = pneg %p103
        %p610 = pneg %p100
        %s611 = smul.u32 4, %s14
        %p612 = scmp.lt.s32.totalorder %s611, 7
        %s613 = scalar_select %p612, %s611, 7
        %s614 = smul.addr %s613, 8
        %s615 = scalar_lea.vmem %s3, %s614
        %s616 = smul.u32 4, %s14
        %s617 = smul.u32 4, %s14
        %p618 = scmp.lt.s32.totalorder %s617, 7
        %s619 = scalar_select %p618, %s617, 7
        %s620 = smul.addr %s619, 8
        %s621 = scalar_lea.vmem %s3, %s620
        %s622 = smul.u32 4, %s14
        %v623 = vld [vmem:[%s0] sm:$0xff]
        %v624 = vld [vmem:[%s0 + $0x8] sm:$0xff]
        %v625 = vld [vmem:[%s0 + $0x10] sm:$0xff]
        %v626 = vld [vmem:[%s0 + $0x18] sm:$0xff]
        %v627 = vld [vmem:[%s595] sm:$0xff]
        %v628 = vld [vmem:[%s595 + $0x8] sm:$0xff]
        %v629 = vld [vmem:[%s595 + $0x10] sm:$0xff]
        %v630 = vld [vmem:[%s595 + $0x18] sm:$0xff]
        %v631 = vld [vmem:[%s595 + $0x20] sm:$0xff]
        %v632 = vld [vmem:[%s595 + $0x28] sm:$0xff]
        %v633 = vld [vmem:[%s595 + $0x30] sm:$0xff]
        %v634 = vld [vmem:[%s595 + $0x38] sm:$0xff]
        %v635 = vld [vmem:[%s595 + $0x40] sm:$0xff]
        %v636 = vld [vmem:[%s595 + $0x48] sm:$0xff]
        %v637 = vld [vmem:[%s595 + $0x50] sm:$0xff]
        %v638 = vld [vmem:[%s595 + $0x58] sm:$0xff]
        %v639 = vld [vmem:[%s595 + $0x60] sm:$0xff]
        %v640 = vld [vmem:[%s595 + $0x68] sm:$0xff]
        %v641 = vld [vmem:[%s595 + $0x70] sm:$0xff]
        %v642 = vld [vmem:[%s595 + $0x78] sm:$0xff]
        %v643 = vld [vmem:[%s595 + $0x80] sm:$0xff]
        %v644 = vld [vmem:[%s595 + $0x88] sm:$0xff]
        %v645 = vld [vmem:[%s595 + $0x90] sm:$0xff]
        %v646 = vld [vmem:[%s595 + $0x98] sm:$0xff]
        %v647 = vld [vmem:[%s595 + $0xa0] sm:$0xff]
        %v648 = vld [vmem:[%s595 + $0xa8] sm:$0xff]
        %v649 = vld [vmem:[%s595 + $0xb0] sm:$0xff]
        %v650 = vld [vmem:[%s595 + $0xb8] sm:$0xff]
        %v651 = vld [vmem:[%s595 + $0xc0] sm:$0xff]
        %v652 = vld [vmem:[%s595 + $0xc8] sm:$0xff]
        %v653 = vld [vmem:[%s595 + $0xd0] sm:$0xff]
        %v654 = vld [vmem:[%s595 + $0xd8] sm:$0xff]
        %v655 = vld [vmem:[%s595 + $0xe0] sm:$0xff]
        %v656 = vld [vmem:[%s595 + $0xe8] sm:$0xff]
        %v657 = vld [vmem:[%s595 + $0xf0] sm:$0xff]
        %v658 = vld [vmem:[%s595 + $0xf8] sm:$0xff]
        %v659 = vld [vmem:[%s595 + $0x100] sm:$0xff]
        %v660 = vld [vmem:[%s595 + $0x108] sm:$0xff]
        %v661 = vld [vmem:[%s595 + $0x110] sm:$0xff]
        %v662 = vld [vmem:[%s595 + $0x118] sm:$0xff]
        %v663 = vld [vmem:[%s595 + $0x120] sm:$0xff]
        %v664 = vld [vmem:[%s595 + $0x128] sm:$0xff]
        %v665 = vld [vmem:[%s595 + $0x130] sm:$0xff]
        %v666 = vld [vmem:[%s595 + $0x138] sm:$0xff]
        %v667 = vld [vmem:[%s595 + $0x140] sm:$0xff]
        %v668 = vld [vmem:[%s595 + $0x148] sm:$0xff]
        %v669 = vld [vmem:[%s595 + $0x150] sm:$0xff]
        %v670 = vld [vmem:[%s595 + $0x158] sm:$0xff]
        %v671 = vld [vmem:[%s595 + $0x160] sm:$0xff]
        %v672 = vld [vmem:[%s595 + $0x168] sm:$0xff]
        %v673 = vld [vmem:[%s595 + $0x170] sm:$0xff]
        %v674 = vld [vmem:[%s595 + $0x178] sm:$0xff]
        %v675 = vld [vmem:[%s595 + $0x180] sm:$0xff]
        %v676 = vld [vmem:[%s595 + $0x188] sm:$0xff]
        %v677 = vld [vmem:[%s595 + $0x190] sm:$0xff]
        %v678 = vld [vmem:[%s595 + $0x198] sm:$0xff]
        %v679 = vld [vmem:[%s595 + $0x1a0] sm:$0xff]
        %v680 = vld [vmem:[%s595 + $0x1a8] sm:$0xff]
        %v681 = vld [vmem:[%s595 + $0x1b0] sm:$0xff]
        %v682 = vld [vmem:[%s595 + $0x1b8] sm:$0xff]
        %v683 = vld [vmem:[%s595 + $0x1c0] sm:$0xff]
        %v684 = vld [vmem:[%s595 + $0x1c8] sm:$0xff]
        %v685 = vld [vmem:[%s595 + $0x1d0] sm:$0xff]
        %v686 = vld [vmem:[%s595 + $0x1d8] sm:$0xff]
        %v687 = vld [vmem:[%s595 + $0x1e0] sm:$0xff]
        %v688 = vld [vmem:[%s595 + $0x1e8] sm:$0xff]
        %v689 = vld [vmem:[%s595 + $0x1f0] sm:$0xff]
        %v690 = vld [vmem:[%s595 + $0x1f8] sm:$0xff]
        %v691 = vld [vmem:[%s595 + $0x200] sm:$0xff]
        %v692 = vld [vmem:[%s595 + $0x208] sm:$0xff]
        %v693 = vld [vmem:[%s595 + $0x210] sm:$0xff]
        %v694 = vld [vmem:[%s595 + $0x218] sm:$0xff]
        %v695 = vld [vmem:[%s595 + $0x220] sm:$0xff]
        %v696 = vld [vmem:[%s595 + $0x228] sm:$0xff]
        %v697 = vld [vmem:[%s595 + $0x230] sm:$0xff]
        %v698 = vld [vmem:[%s595 + $0x238] sm:$0xff]
        %v699 = vld [vmem:[%s595 + $0x240] sm:$0xff]
        %v700 = vld [vmem:[%s595 + $0x248] sm:$0xff]
        %v701 = vld [vmem:[%s595 + $0x250] sm:$0xff]
        %v702 = vld [vmem:[%s595 + $0x258] sm:$0xff]
        %v703 = vld [vmem:[%s595 + $0x260] sm:$0xff]
        %v704 = vld [vmem:[%s595 + $0x268] sm:$0xff]
        %v705 = vld [vmem:[%s595 + $0x270] sm:$0xff]
        %v706 = vld [vmem:[%s595 + $0x278] sm:$0xff]
        %v707 = vld [vmem:[%s595 + $0x280] sm:$0xff]
        %v708 = vld [vmem:[%s595 + $0x288] sm:$0xff]
        %v709 = vld [vmem:[%s595 + $0x290] sm:$0xff]
        %v710 = vld [vmem:[%s595 + $0x298] sm:$0xff]
        %v711 = vld [vmem:[%s595 + $0x2a0] sm:$0xff]
        %v712 = vld [vmem:[%s595 + $0x2a8] sm:$0xff]
        %v713 = vld [vmem:[%s595 + $0x2b0] sm:$0xff]
        %v714 = vld [vmem:[%s595 + $0x2b8] sm:$0xff]
        %v715 = vld [vmem:[%s595 + $0x2c0] sm:$0xff]
        %v716 = vld [vmem:[%s595 + $0x2c8] sm:$0xff]
        %v717 = vld [vmem:[%s595 + $0x2d0] sm:$0xff]
        %v718 = vld [vmem:[%s595 + $0x2d8] sm:$0xff]
        %v719 = vld [vmem:[%s595 + $0x2e0] sm:$0xff]
        %v720 = vld [vmem:[%s595 + $0x2e8] sm:$0xff]
        %v721 = vld [vmem:[%s595 + $0x2f0] sm:$0xff]
        %v722 = vld [vmem:[%s595 + $0x2f8] sm:$0xff]
        %v723 = vld [vmem:[%s595 + $0x300] sm:$0xff]
        %v724 = vld [vmem:[%s595 + $0x308] sm:$0xff]
        %v725 = vld [vmem:[%s595 + $0x310] sm:$0xff]
        %v726 = vld [vmem:[%s595 + $0x318] sm:$0xff]
        %v727 = vld [vmem:[%s595 + $0x320] sm:$0xff]
        %v728 = vld [vmem:[%s595 + $0x328] sm:$0xff]
        %v729 = vld [vmem:[%s595 + $0x330] sm:$0xff]
        %v730 = vld [vmem:[%s595 + $0x338] sm:$0xff]
        %v731 = vld [vmem:[%s595 + $0x340] sm:$0xff]
        %v732 = vld [vmem:[%s595 + $0x348] sm:$0xff]
        %v733 = vld [vmem:[%s595 + $0x350] sm:$0xff]
        %v734 = vld [vmem:[%s595 + $0x358] sm:$0xff]
        %v735 = vld [vmem:[%s595 + $0x360] sm:$0xff]
        %v736 = vld [vmem:[%s595 + $0x368] sm:$0xff]
        %v737 = vld [vmem:[%s595 + $0x370] sm:$0xff]
        %v738 = vld [vmem:[%s595 + $0x378] sm:$0xff]
        %v739 = vld [vmem:[%s595 + $0x380] sm:$0xff]
        %v740 = vld [vmem:[%s595 + $0x388] sm:$0xff]
        %v741 = vld [vmem:[%s595 + $0x390] sm:$0xff]
        %v742 = vld [vmem:[%s595 + $0x398] sm:$0xff]
        %v743 = vld [vmem:[%s595 + $0x3a0] sm:$0xff]
        %v744 = vld [vmem:[%s595 + $0x3a8] sm:$0xff]
        %v745 = vld [vmem:[%s595 + $0x3b0] sm:$0xff]
        %v746 = vld [vmem:[%s595 + $0x3b8] sm:$0xff]
        %v747 = vld [vmem:[%s595 + $0x3c0] sm:$0xff]
        %v748 = vld [vmem:[%s595 + $0x3c8] sm:$0xff]
        %v749 = vld [vmem:[%s595 + $0x3d0] sm:$0xff]
        %v750 = vld [vmem:[%s595 + $0x3d8] sm:$0xff]
        %v751 = vld [vmem:[%s595 + $0x3e0] sm:$0xff]
        %v752 = vld [vmem:[%s595 + $0x3e8] sm:$0xff]
        %v753 = vld [vmem:[%s595 + $0x3f0] sm:$0xff]
        %v754 = vld [vmem:[%s595 + $0x3f8] sm:$0xff]
        %v755 = vld [vmem:[%s595 + $0x400] sm:$0xff]
        %v756 = vld [vmem:[%s595 + $0x408] sm:$0xff]
        %v757 = vld [vmem:[%s595 + $0x410] sm:$0xff]
        %v758 = vld [vmem:[%s595 + $0x418] sm:$0xff]
        %v759 = vld [vmem:[%s595 + $0x420] sm:$0xff]
        %v760 = vld [vmem:[%s595 + $0x428] sm:$0xff]
        %v761 = vld [vmem:[%s595 + $0x430] sm:$0xff]
        %v762 = vld [vmem:[%s595 + $0x438] sm:$0xff]
        %v763 = vld [vmem:[%s595 + $0x440] sm:$0xff]
        %v764 = vld [vmem:[%s595 + $0x448] sm:$0xff]
        %v765 = vld [vmem:[%s595 + $0x450] sm:$0xff]
        %v766 = vld [vmem:[%s595 + $0x458] sm:$0xff]
        %v767 = vld [vmem:[%s595 + $0x460] sm:$0xff]
        %v768 = vld [vmem:[%s595 + $0x468] sm:$0xff]
        %v769 = vld [vmem:[%s595 + $0x470] sm:$0xff]
        %v770 = vld [vmem:[%s595 + $0x478] sm:$0xff]
        %v771 = vld [vmem:[%s595 + $0x480] sm:$0xff]
        %v772 = vld [vmem:[%s595 + $0x488] sm:$0xff]
        %v773 = vld [vmem:[%s595 + $0x490] sm:$0xff]
        %v774 = vld [vmem:[%s595 + $0x498] sm:$0xff]
        %v775 = vld [vmem:[%s595 + $0x4a0] sm:$0xff]
        %v776 = vld [vmem:[%s595 + $0x4a8] sm:$0xff]
        %v777 = vld [vmem:[%s595 + $0x4b0] sm:$0xff]
        %v778 = vld [vmem:[%s595 + $0x4b8] sm:$0xff]
        %v779 = vld [vmem:[%s595 + $0x4c0] sm:$0xff]
        %v780 = vld [vmem:[%s595 + $0x4c8] sm:$0xff]
        %v781 = vld [vmem:[%s595 + $0x4d0] sm:$0xff]
        %v782 = vld [vmem:[%s595 + $0x4d8] sm:$0xff]
        %v783 = vld [vmem:[%s595 + $0x4e0] sm:$0xff]
        %v784 = vld [vmem:[%s595 + $0x4e8] sm:$0xff]
        %v785 = vld [vmem:[%s595 + $0x4f0] sm:$0xff]
        %v786 = vld [vmem:[%s595 + $0x4f8] sm:$0xff]
        %v787 = vld [vmem:[%s595 + $0x500] sm:$0xff]
        %v788 = vld [vmem:[%s595 + $0x508] sm:$0xff]
        %v789 = vld [vmem:[%s595 + $0x510] sm:$0xff]
        %v790 = vld [vmem:[%s595 + $0x518] sm:$0xff]
        %v791 = vld [vmem:[%s595 + $0x520] sm:$0xff]
        %v792 = vld [vmem:[%s595 + $0x528] sm:$0xff]
        %v793 = vld [vmem:[%s595 + $0x530] sm:$0xff]
        %v794 = vld [vmem:[%s595 + $0x538] sm:$0xff]
        %v795 = vld [vmem:[%s595 + $0x540] sm:$0xff]
        %v796 = vld [vmem:[%s595 + $0x548] sm:$0xff]
        %v797 = vld [vmem:[%s595 + $0x550] sm:$0xff]
        %v798 = vld [vmem:[%s595 + $0x558] sm:$0xff]
        %v799 = vld [vmem:[%s595 + $0x560] sm:$0xff]
        %v800 = vld [vmem:[%s595 + $0x568] sm:$0xff]
        %v801 = vld [vmem:[%s595 + $0x570] sm:$0xff]
        %v802 = vld [vmem:[%s595 + $0x578] sm:$0xff]
        %v803 = vld [vmem:[%s595 + $0x580] sm:$0xff]
        %v804 = vld [vmem:[%s595 + $0x588] sm:$0xff]
        %v805 = vld [vmem:[%s595 + $0x590] sm:$0xff]
        %v806 = vld [vmem:[%s595 + $0x598] sm:$0xff]
        %v807 = vld [vmem:[%s595 + $0x5a0] sm:$0xff]
        %v808 = vld [vmem:[%s595 + $0x5a8] sm:$0xff]
        %v809 = vld [vmem:[%s595 + $0x5b0] sm:$0xff]
        %v810 = vld [vmem:[%s595 + $0x5b8] sm:$0xff]
        %v811 = vld [vmem:[%s595 + $0x5c0] sm:$0xff]
        %v812 = vld [vmem:[%s595 + $0x5c8] sm:$0xff]
        %v813 = vld [vmem:[%s595 + $0x5d0] sm:$0xff]
        %v814 = vld [vmem:[%s595 + $0x5d8] sm:$0xff]
        %v815 = vld [vmem:[%s595 + $0x5e0] sm:$0xff]
        %v816 = vld [vmem:[%s595 + $0x5e8] sm:$0xff]
        %v817 = vld [vmem:[%s595 + $0x5f0] sm:$0xff]
        %v818 = vld [vmem:[%s595 + $0x5f8] sm:$0xff]
        %v819 = vld [vmem:[%s595 + $0x600] sm:$0xff]
        %v820 = vld [vmem:[%s595 + $0x608] sm:$0xff]
        %v821 = vld [vmem:[%s595 + $0x610] sm:$0xff]
        %v822 = vld [vmem:[%s595 + $0x618] sm:$0xff]
        %v823 = vld [vmem:[%s595 + $0x620] sm:$0xff]
        %v824 = vld [vmem:[%s595 + $0x628] sm:$0xff]
        %v825 = vld [vmem:[%s595 + $0x630] sm:$0xff]
        %v826 = vld [vmem:[%s595 + $0x638] sm:$0xff]
        %v827 = vld [vmem:[%s595 + $0x640] sm:$0xff]
        %v828 = vld [vmem:[%s595 + $0x648] sm:$0xff]
        %v829 = vld [vmem:[%s595 + $0x650] sm:$0xff]
        %v830 = vld [vmem:[%s595 + $0x658] sm:$0xff]
        %v831 = vld [vmem:[%s595 + $0x660] sm:$0xff]
        %v832 = vld [vmem:[%s595 + $0x668] sm:$0xff]
        %v833 = vld [vmem:[%s595 + $0x670] sm:$0xff]
        %v834 = vld [vmem:[%s595 + $0x678] sm:$0xff]
        %v835 = vld [vmem:[%s595 + $0x680] sm:$0xff]
        %v836 = vld [vmem:[%s595 + $0x688] sm:$0xff]
        %v837 = vld [vmem:[%s595 + $0x690] sm:$0xff]
        %v838 = vld [vmem:[%s595 + $0x698] sm:$0xff]
        %v839 = vld [vmem:[%s595 + $0x6a0] sm:$0xff]
        %v840 = vld [vmem:[%s595 + $0x6a8] sm:$0xff]
        %v841 = vld [vmem:[%s595 + $0x6b0] sm:$0xff]
        %v842 = vld [vmem:[%s595 + $0x6b8] sm:$0xff]
        %v843 = vld [vmem:[%s2] sm:$0xff]
        %845 = vset.pattern.permute.xlu0 0
        %846 = vperm.xlu0 %845, %v843
        %v847 = vpop.permute.xlu0 %846
        %vm849 = vcmask 392192
        %v851 = vsel %vm849, %v626, 0
        %853 = vmatprep.subr.mxu0 %v628
        %854 = vmatpush1.msra.mxu0 %v627
        %855 = vmatprep.subr.mxu0 %v632
        %856 = vmatpush1.msra.mxu0 %v631
        %857 = vmatprep.subr.mxu0 %v636
        %858 = vmatpush1.msra.mxu0 %v635
        %859 = vmatprep.subr.mxu0 %v640
        %860 = vmatpush1.msra.mxu0 %v639
        %861 = vmatprep.subr.mxu0 %v644
        %862 = vmatpush1.msra.mxu0 %v643
        %863 = vmatprep.subr.mxu0 %v648
        %864 = vmatpush1.msra.mxu0 %v647
        %865 = vmatprep.subr.mxu0 %v652
        %866 = vmatpush1.msra.mxu0 %v651
        %867 = vmatprep.subr.mxu0 %v656
        %868 = vmatpush1.msra.mxu0 %v655
        %869 = vmatprep.subr.mxu0 %v660
        %870 = vmatpush1.msra.mxu0 %v659
        %871 = vmatprep.subr.mxu0 %v664
        %872 = vmatpush1.msra.mxu0 %v663
        %873 = vmatprep.subr.mxu0 %v668
        %874 = vmatpush1.msra.mxu0 %v667
        %875 = vmatprep.subr.mxu0 %v672
        %876 = vmatpush1.msra.mxu0 %v671
        %877 = vmatprep.subr.mxu0 %v676
        %878 = vmatpush1.msra.mxu0 %v675
        %879 = vmatprep.subr.mxu0 %v680
        %880 = vmatpush1.msra.mxu0 %v679
        %881 = vmatprep.subr.mxu0 %v684
        %882 = vmatpush1.msra.mxu0 %v683
        %883 = vmatprep.subr.mxu0 %v688
        %884 = vmatpush1.msra.mxu0 %v687
        %885 = vmatprep.subr.mxu0 %v692
        %886 = vmatpush1.msra.mxu0 %v691
        %887 = vmatprep.subr.mxu0 %v696
        %888 = vmatpush1.msra.mxu0 %v695
        %889 = vmatprep.subr.mxu0 %v700
        %890 = vmatpush1.msra.mxu0 %v699
        %891 = vmatprep.subr.mxu0 %v704
        %892 = vmatpush1.msra.mxu0 %v703
        %893 = vmatprep.subr.mxu0 %v708
        %894 = vmatpush1.msra.mxu0 %v707
        %895 = vmatprep.subr.mxu0 %v712
        %896 = vmatpush1.msra.mxu0 %v711
        %897 = vmatprep.subr.mxu0 %v716
        %898 = vmatpush1.msra.mxu0 %v715
        %899 = vmatprep.subr.mxu0 %v720
        %900 = vmatpush1.msra.mxu0 %v719
        %901 = vmatprep.subr.mxu0 %v724
        %902 = vmatpush1.msra.mxu0 %v723
        %903 = vmatprep.subr.mxu0 %v728
        %904 = vmatpush1.msra.mxu0 %v727
        %905 = vmatprep.subr.mxu0 %v732
        %906 = vmatpush1.msra.mxu0 %v731
        %907 = vmatprep.subr.mxu0 %v736
        %908 = vmatpush1.msra.mxu0 %v735
        %909 = vmatprep.subr.mxu0 %v740
        %910 = vmatpush1.msra.mxu0 %v739
        %911 = vmatprep.subr.mxu0 %v744
        %912 = vmatpush1.msra.mxu0 %v743
        %913 = vmatprep.subr.mxu0 %v748
        %914 = vmatpush1.msra.mxu0 %v747
        %915 = vmatprep.subr.mxu0 %v752
        %916 = vmatpush1.msra.mxu0 %v751
        %917 = vmatprep.mubr.f32.mxu0 %v624
        %918 = vmatmul.mubr.f32.gmra.mrb[0].mxu0 %v623
        %v919 = vpop.f32.mrb[0].mxu0
        %v920 = vadd.f32 %v847, %v919
        %v921 = vpop.f32.mrb[0].mxu0
        %v922 = vadd.f32 %v847, %v921
        %923 = vdwg.mxu0
        %924 = vmatprep.subr.mxu0 %v756
        %925 = vmatpush1.msra.mxu0 %v755
        %926 = vmatprep.subr.mxu0 %v760
        %927 = vmatpush1.msra.mxu0 %v759
        %928 = vmatprep.subr.mxu0 %v764
        %929 = vmatpush1.msra.mxu0 %v763
        %930 = vmatprep.subr.mxu0 %v768
        %931 = vmatpush1.msra.mxu0 %v767
        %932 = vmatprep.subr.mxu0 %v772
        %933 = vmatpush1.msra.mxu0 %v771
        %934 = vmatprep.subr.mxu0 %v776
        %935 = vmatpush1.msra.mxu0 %v775
        %936 = vmatprep.subr.mxu0 %v780
        %937 = vmatpush1.msra.mxu0 %v779
        %938 = vmatprep.subr.mxu0 %v784
        %939 = vmatpush1.msra.mxu0 %v783
        %940 = vmatprep.subr.mxu0 %v788
        %941 = vmatpush1.msra.mxu0 %v787
        %942 = vmatprep.subr.mxu0 %v792
        %943 = vmatpush1.msra.mxu0 %v791
        %944 = vmatprep.subr.mxu0 %v796
        %945 = vmatpush1.msra.mxu0 %v795
        %946 = vmatprep.subr.mxu0 %v800
        %947 = vmatpush1.msra.mxu0 %v799
        %948 = vmatprep.subr.mxu0 %v804
        %949 = vmatpush1.msra.mxu0 %v803
        %950 = vmatprep.subr.mxu0 %v808
        %951 = vmatpush1.msra.mxu0 %v807
        %952 = vmatprep.subr.mxu0 %v812
        %953 = vmatpush1.msra.mxu0 %v811
        %954 = vmatprep.subr.mxu0 %v816
        %955 = vmatpush1.msra.mxu0 %v815
        %956 = vmatprep.subr.mxu0 %v820
        %957 = vmatpush1.msra.mxu0 %v819
        %958 = vmatprep.subr.mxu0 %v824
        %959 = vmatpush1.msra.mxu0 %v823
        %960 = vmatprep.subr.mxu0 %v828
        %961 = vmatpush1.msra.mxu0 %v827
        %962 = vmatprep.subr.mxu0 %v832
        %963 = vmatpush1.msra.mxu0 %v831
        %964 = vmatprep.subr.mxu0 %v836
        %965 = vmatpush1.msra.mxu0 %v835
        %966 = vmatprep.subr.mxu0 %v840
        %967 = vmatpush1.msra.mxu0 %v839
        %968 = vmatprep.subr.mxu0 0.0
        %969 = vmatpush1.msra.mxu0 0.0
        %970 = vmatprep.subr.mxu0 0.0
        %971 = vmatpush1.msra.mxu0 0.0
        %972 = vmatprep.subr.mxu0 0.0
        %973 = vmatpush1.msra.mxu0 0.0
        %974 = vmatprep.subr.mxu0 0.0
        %975 = vmatpush1.msra.mxu0 0.0
        %976 = vmatprep.subr.mxu0 0.0
        %977 = vmatpush1.msra.mxu0 0.0
        %978 = vmatprep.subr.mxu0 0.0
        %979 = vmatpush1.msra.mxu0 0.0
        %980 = vmatprep.subr.mxu0 0.0
        %981 = vmatpush1.msra.mxu0 0.0
        %982 = vmatprep.subr.mxu0 0.0
        %983 = vmatpush1.msra.mxu0 0.0
        %984 = vmatprep.subr.mxu0 0.0
        %985 = vmatpush1.msra.mxu0 0.0
        %986 = vmatprep.subr.mxu0 0.0
        %987 = vmatpush1.msra.mxu0 0.0
        %988 = vmatprep.mubr.f32.mxu0 %v851
        %989 = vmatmul.mubr.f32.gmra.mrb[0].mxu0 %v625
        %v990 = vpop.f32.mrb[0].mxu0
        %v991 = vadd.f32 %v920, %v990
        %v992 = vpop.f32.mrb[0].mxu0
        %v993 = vadd.f32 %v922, %v992
        %994 = vdwg.mxu0
        %995 = vmatprep.subr.mxu0 %v630
        %996 = vmatpush1.msra.mxu0 %v629
        %997 = vmatprep.subr.mxu0 %v634
        %998 = vmatpush1.msra.mxu0 %v633
        %999 = vmatprep.subr.mxu0 %v638
        %1000 = vmatpush1.msra.mxu0 %v637
        %1001 = vmatprep.subr.mxu0 %v642
        %1002 = vmatpush1.msra.mxu0 %v641
        %1003 = vmatprep.subr.mxu0 %v646
        %1004 = vmatpush1.msra.mxu0 %v645
        %1005 = vmatprep.subr.mxu0 %v650
        %1006 = vmatpush1.msra.mxu0 %v649
        %1007 = vmatprep.subr.mxu0 %v654
        %1008 = vmatpush1.msra.mxu0 %v653
        %1009 = vmatprep.subr.mxu0 %v658
        %1010 = vmatpush1.msra.mxu0 %v657
        %1011 = vmatprep.subr.mxu0 %v662
        %1012 = vmatpush1.msra.mxu0 %v661
        %1013 = vmatprep.subr.mxu0 %v666
        %1014 = vmatpush1.msra.mxu0 %v665
        %1015 = vmatprep.subr.mxu0 %v670
        %1016 = vmatpush1.msra.mxu0 %v669
        %1017 = vmatprep.subr.mxu0 %v674
        %1018 = vmatpush1.msra.mxu0 %v673
        %1019 = vmatprep.subr.mxu0 %v678
        %1020 = vmatpush1.msra.mxu0 %v677
        %1021 = vmatprep.subr.mxu0 %v682
        %1022 = vmatpush1.msra.mxu0 %v681
        %1023 = vmatprep.subr.mxu0 %v686
        %1024 = vmatpush1.msra.mxu0 %v685
        %1025 = vmatprep.subr.mxu0 %v690
        %1026 = vmatpush1.msra.mxu0 %v689
        %1027 = vmatprep.subr.mxu0 %v694
        %1028 = vmatpush1.msra.mxu0 %v693
        %1029 = vmatprep.subr.mxu0 %v698
        %1030 = vmatpush1.msra.mxu0 %v697
        %1031 = vmatprep.subr.mxu0 %v702
        %1032 = vmatpush1.msra.mxu0 %v701
        %1033 = vmatprep.subr.mxu0 %v706
        %1034 = vmatpush1.msra.mxu0 %v705
        %1035 = vmatprep.subr.mxu0 %v710
        %1036 = vmatpush1.msra.mxu0 %v709
        %1037 = vmatprep.subr.mxu0 %v714
        %1038 = vmatpush1.msra.mxu0 %v713
        %1039 = vmatprep.subr.mxu0 %v718
        %1040 = vmatpush1.msra.mxu0 %v717
        %1041 = vmatprep.subr.mxu0 %v722
        %1042 = vmatpush1.msra.mxu0 %v721
        %1043 = vmatprep.subr.mxu0 %v726
        %1044 = vmatpush1.msra.mxu0 %v725
        %1045 = vmatprep.subr.mxu0 %v730
        %1046 = vmatpush1.msra.mxu0 %v729
        %1047 = vmatprep.subr.mxu0 %v734
        %1048 = vmatpush1.msra.mxu0 %v733
        %1049 = vmatprep.subr.mxu0 %v738
        %1050 = vmatpush1.msra.mxu0 %v737
        %1051 = vmatprep.subr.mxu0 %v742
        %1052 = vmatpush1.msra.mxu0 %v741
        %1053 = vmatprep.subr.mxu0 %v746
        %1054 = vmatpush1.msra.mxu0 %v745
        %1055 = vmatprep.subr.mxu0 %v750
        %1056 = vmatpush1.msra.mxu0 %v749
        %1057 = vmatprep.subr.mxu0 %v754
        %1058 = vmatpush1.msra.mxu0 %v753
        %1059 = vmatprep.mubr.f32.mxu0 %v624
        %1060 = vmatmul.mubr.f32.gmra.mrb[0].mxu0 %v623
        %v1061 = vpop.f32.mrb[0].mxu0
        %v1062 = vadd.f32 %v847, %v1061
        %v1063 = vpop.f32.mrb[0].mxu0
        %v1064 = vadd.f32 %v847, %v1063
        %1065 = vdwg.mxu0
        %1066 = vmatprep.subr.mxu0 %v758
        %1067 = vmatpush1.msra.mxu0 %v757
        %1068 = vmatprep.subr.mxu0 %v762
        %1069 = vmatpush1.msra.mxu0 %v761
        %1070 = vmatprep.subr.mxu0 %v766
        %1071 = vmatpush1.msra.mxu0 %v765
        %1072 = vmatprep.subr.mxu0 %v770
        %1073 = vmatpush1.msra.mxu0 %v769
        %1074 = vmatprep.subr.mxu0 %v774
        %1075 = vmatpush1.msra.mxu0 %v773
        %1076 = vmatprep.subr.mxu0 %v778
        %1077 = vmatpush1.msra.mxu0 %v777
        %1078 = vmatprep.subr.mxu0 %v782
        %1079 = vmatpush1.msra.mxu0 %v781
        %1080 = vmatprep.subr.mxu0 %v786
        %1081 = vmatpush1.msra.mxu0 %v785
        %1082 = vmatprep.subr.mxu0 %v790
        %1083 = vmatpush1.msra.mxu0 %v789
        %1084 = vmatprep.subr.mxu0 %v794
        %1085 = vmatpush1.msra.mxu0 %v793
        %1086 = vmatprep.subr.mxu0 %v798
        %1087 = vmatpush1.msra.mxu0 %v797
        %1088 = vmatprep.subr.mxu0 %v802
        %1089 = vmatpush1.msra.mxu0 %v801
        %1090 = vmatprep.subr.mxu0 %v806
        %1091 = vmatpush1.msra.mxu0 %v805
        %1092 = vmatprep.subr.mxu0 %v810
        %1093 = vmatpush1.msra.mxu0 %v809
        %1094 = vmatprep.subr.mxu0 %v814
        %1095 = vmatpush1.msra.mxu0 %v813
        %1096 = vmatprep.subr.mxu0 %v818
        %1097 = vmatpush1.msra.mxu0 %v817
        %1098 = vmatprep.subr.mxu0 %v822
        %1099 = vmatpush1.msra.mxu0 %v821
        %1100 = vmatprep.subr.mxu0 %v826
        %1101 = vmatpush1.msra.mxu0 %v825
        %1102 = vmatprep.subr.mxu0 %v830
        %1103 = vmatpush1.msra.mxu0 %v829
        %1104 = vmatprep.subr.mxu0 %v834
        %1105 = vmatpush1.msra.mxu0 %v833
        %1106 = vmatprep.subr.mxu0 %v838
        %1107 = vmatpush1.msra.mxu0 %v837
        %1108 = vmatprep.subr.mxu0 %v842
        %1109 = vmatpush1.msra.mxu0 %v841
        %1110 = vmatprep.subr.mxu0 0.0
        %1111 = vmatpush1.msra.mxu0 0.0
        %1112 = vmatprep.subr.mxu0 0.0
        %1113 = vmatpush1.msra.mxu0 0.0
        %1114 = vmatprep.subr.mxu0 0.0
        %1115 = vmatpush1.msra.mxu0 0.0
        %1116 = vmatprep.subr.mxu0 0.0
        %1117 = vmatpush1.msra.mxu0 0.0
        %1118 = vmatprep.subr.mxu0 0.0
        %1119 = vmatpush1.msra.mxu0 0.0
        %1120 = vmatprep.subr.mxu0 0.0
        %1121 = vmatpush1.msra.mxu0 0.0
        %1122 = vmatprep.subr.mxu0 0.0
        %1123 = vmatpush1.msra.mxu0 0.0
        %1124 = vmatprep.subr.mxu0 0.0
        %1125 = vmatpush1.msra.mxu0 0.0
        %1126 = vmatprep.subr.mxu0 0.0
        %1127 = vmatpush1.msra.mxu0 0.0
        %1128 = vmatprep.subr.mxu0 0.0
        %1129 = vmatpush1.msra.mxu0 0.0
        %1130 = vmatprep.mubr.f32.mxu0 %v851
        %1131 = vmatmul.mubr.f32.gmra.mrb[0].mxu0 %v625
        %v1132 = vpop.f32.mrb[0].mxu0
        %v1133 = vadd.f32 %v1062, %v1132
        %v1134 = vpop.f32.mrb[0].mxu0
        %v1135 = vadd.f32 %v1064, %v1134
        %1136 = vdwg.mxu0
        %1137 = vst [vmem:[%s621] sm:$0xff] %v991
        %1138 = vst [vmem:[%s621 + $0x8] sm:$0xff] %v993
        %1139 = vst [vmem:[%s621 + $0x10] sm:$0xff] %v1133
        %1140 = vst [vmem:[%s621 + $0x18] sm:$0xff] %v1135
        %s1141 = smul.u32 4, %s14
        %p1142 = scmp.lt.s32.totalorder %s1141, 7
        %s1143 = scalar_select %p1142, %s1141, 7
        %s1144 = smul.addr %s1143, 8
        %s1145 = scalar_lea.vmem %s3, %s1144
        // Predicated region
        $region56: #{simple_block3d_forward.107} parent=50 // pred_check
          %p1146 = pneg %p100
        $region57: #{simple_block3d_forward.107} parent=50 // pred_check_branch
          %1148 = sbr.rel (%p1146) target = $region59
        $region58: #{simple_block3d_forward.107} parent=50 // pred_region
          %s1149 = smul.u32 4, %s14
        $region59: #{simple_block3d_forward.107} parent=50 // pred_fallthru
          _
      $region51: #{simple_block3d_forward.107} parent=5 // pred_fallthru
        _
      %p1150 = scmp.le.s32.totalorder 2, %s9
      // Predicated region
      $region60: #{simple_block3d_forward.107} parent=5 // pred_check
        %p1151 = pneg %p1150
      $region61: #{simple_block3d_forward.107} parent=5 // pred_check_branch
        %1153 = sbr.rel (%p1151) target = $region63
      $region62: #{simple_block3d_forward.107} parent=5 // pred_region
        %s1154 = ssub.s32 %s9, 2
        // Predicated region
        $region64: #{simple_block3d_forward.107} parent=62 // pred_check
          %p1155 = pneg %p106
        $region65: #{simple_block3d_forward.107} parent=62 // pred_check_branch
          %1157 = sbr.rel (%p1155) target = $region67
        $region66: #{simple_block3d_forward.107} parent=62 // pred_region
          %s1158 = smul.u32 4, %s15
          %p1159 = scmp.lt.s32.totalorder %s1158, 7
          %s1160 = scalar_select %p1159, %s1158, 7
          %s1161 = smul.addr %s1160, 8
          %s1162 = scalar_lea.vmem %s3, %s1161
        $region67: #{simple_block3d_forward.107} parent=62 // pred_fallthru
          _
      $region63: #{simple_block3d_forward.107} parent=5 // pred_fallthru
        _
    $region6: #{simple_block3d_forward.107} parent=1 // loop_footer
      %s13 = sadd.s32 1, %s9
    $region7: #{simple_block3d_forward.107} parent=1 // loop_footer_branch
      %8 = sbr.rel target = $region3
    $region8: #{simple_block3d_forward.107} parent=1 // loop_exit
      _

// kernel: simple_block3d_forward.153
$region0: #{simple_block3d_forward.153}
  #allocation0 [shape = 'u32[]', space=smem, size = 0x4, offset = 0x4, fixed_abs, tag = 'smem constant byte address 0x4 - core index']
  #allocation1 [shape = 'u32[144,128]{1,0:T(1,128)}', space=vmem, size = 0x12000, scoped, tag = 'internal scratch']
  #allocation2 [shape = 'f32[1,1]{1,0:T(1,128)S(1)}', space=vmem, size = 0x200, scoped, tag = 'scoped memory for simple_block3d_forward.153']
  %s0 = inlined_call_operand.vmem [shape: f32[8,1024], index: 0, kind: input, shape index: {}]
  %s1 = inlined_call_operand.vmem [shape: f32[128,8], index: 1, kind: input, shape index: {}]
  %s2 = inlined_call_operand.vmem [shape: f32[128,1], index: 2, kind: input, shape index: {}]
  %s3 = inlined_call_operand.vmem [shape: f32[1,128], index: 3, kind: input, shape index: {}]
  %s4 = inlined_call_operand.<no memory space> [shape: f32[1,1], index: 4, kind: input, shape index: {}]
  %s5 = inlined_call_operand.vmem [shape: f32[1,1024], index: 5, kind: output, shape index: {}]
  %s6 = sld [smem:[#allocation0]]
  $region53: #{simple_block3d_forward.153} parent=0
    _
  %s8 = ssub.s32 1, %s6
  %s9 = scalar_select 0, %s8, %s6
  %v10 = vstv %s4
  %11 = vst [vmem:[#allocation2] sm:$0x1] %v10
  loop: start=0, step=1, limit=6
  $region2: #{simple_block3d_forward.153} parent=0 // loop_pre_header
    _
  $region3: #{simple_block3d_forward.153} parent=0 // loop_header
    %s13 = sphi 0, %s17
    %p14 = scmp.ge.s32.totalorder %s13, 6
    %s23 = sphi 0, %s25
    %s26 = sphi 0, %s23
    %s27 = sphi 0, %s26
    %s43 = sphi 0, %s27
    %s47 = sphi 0, %s47
    %s49 = sphi 0, %s47
    %s50 = sphi 0, %s49
    %s64 = sphi 0, %s50
    %s68 = sphi 0, %s68
    %s70 = sphi 0, %s68
    %s71 = sphi 0, %s70
    %s85 = sphi 0, %s71
    %s89 = sphi 0, %s89
    %s91 = sphi 0, %s89
    %s92 = sphi 0, %s91
    %s106 = sphi 0, %s92
    %s110 = sphi 0, %s110
    %s112 = sphi 0, %s110
    %s113 = sphi 0, %s112
    %s127 = sphi 0, %s113
    %s133 = sphi 0, %s135
    %s136 = sphi 0, %s133
    %s137 = sphi 0, %s136
    %s153 = sphi 0, %s137
  $region4: #{simple_block3d_forward.153} parent=0 // loop_header_branch
    %16 = sbr.rel (%p14) target = $region8
  $region5: #{simple_block3d_forward.153} parent=0 // loop_body
    %s18 = ssub.s32 %s13, 1
    %s19 = ssub.s32 %s13, 2
    %s20 = sadd.s32 %s13, 1
    %s21 = ssub.s32 %s13, %s20
    %p22 = scmp.eq.s32.totalorder %s21, 0
    %s24 = sadd.s32 %s23, 1
    %s25 = scalar_select %p22, %s23, %s24
    %p28 = pneg %p22
    %p29 = scmp.eq.s32.totalorder %s13, 3
    %p30 = por %p28, %p29
    %p31 = scmp.ne.s32.totalorder %s23, %s26
    %p32 = scmp.eq.s32.totalorder %s13, 0
    %p33 = por %p31, %p32
    %p34 = scmp.ne.s32.totalorder %s23, %s26
    %p35 = scmp.eq.s32.totalorder %s18, 3
    %p36 = por %p34, %p35
    %p37 = scmp.ne.s32.totalorder %s26, %s27
    %p38 = scmp.eq.s32.totalorder %s18, 0
    %p39 = por %p37, %p38
    %p40 = scmp.ne.s32.totalorder %s26, %s27
    %p41 = scmp.eq.s32.totalorder %s19, 3
    %p42 = por %p40, %p41
    %p44 = scmp.ne.s32.totalorder %s27, %s43
    %p45 = scmp.eq.s32.totalorder %s19, 0
    %p46 = por %p44, %p45
    %s48 = sadd.s32 %s47, 1
    %p51 = scmp.eq.s32.totalorder %s13, 3
    %p52 = scmp.ne.s32.totalorder %s47, %s49
    %p53 = scmp.eq.s32.totalorder %s13, 0
    %p54 = por %p52, %p53
    %p55 = scmp.ne.s32.totalorder %s47, %s49
    %p56 = scmp.eq.s32.totalorder %s18, 3
    %p57 = por %p55, %p56
    %p58 = scmp.ne.s32.totalorder %s49, %s50
    %p59 = scmp.eq.s32.totalorder %s18, 0
    %p60 = por %p58, %p59
    %p61 = scmp.ne.s32.totalorder %s49, %s50
    %p62 = scmp.eq.s32.totalorder %s19, 3
    %p63 = por %p61, %p62
    %p65 = scmp.ne.s32.totalorder %s50, %s64
    %p66 = scmp.eq.s32.totalorder %s19, 0
    %p67 = por %p65, %p66
    %s69 = sadd.s32 %s68, 1
    %p72 = scmp.eq.s32.totalorder %s13, 3
    %p73 = scmp.ne.s32.totalorder %s68, %s70
    %p74 = scmp.eq.s32.totalorder %s13, 0
    %p75 = por %p73, %p74
    %p76 = scmp.ne.s32.totalorder %s68, %s70
    %p77 = scmp.eq.s32.totalorder %s18, 3
    %p78 = por %p76, %p77
    %p79 = scmp.ne.s32.totalorder %s70, %s71
    %p80 = scmp.eq.s32.totalorder %s18, 0
    %p81 = por %p79, %p80
    %p82 = scmp.ne.s32.totalorder %s70, %s71
    %p83 = scmp.eq.s32.totalorder %s19, 3
    %p84 = por %p82, %p83
    %p86 = scmp.ne.s32.totalorder %s71, %s85
    %p87 = scmp.eq.s32.totalorder %s19, 0
    %p88 = por %p86, %p87
    %s90 = sadd.s32 %s89, 1
    %p93 = scmp.eq.s32.totalorder %s13, 3
    %p94 = scmp.ne.s32.totalorder %s89, %s91
    %p95 = scmp.eq.s32.totalorder %s13, 0
    %p96 = por %p94, %p95
    %p97 = scmp.ne.s32.totalorder %s89, %s91
    %p98 = scmp.eq.s32.totalorder %s18, 3
    %p99 = por %p97, %p98
    %p100 = scmp.ne.s32.totalorder %s91, %s92
    %p101 = scmp.eq.s32.totalorder %s18, 0
    %p102 = por %p100, %p101
    %p103 = scmp.ne.s32.totalorder %s91, %s92
    %p104 = scmp.eq.s32.totalorder %s19, 3
    %p105 = por %p103, %p104
    %p107 = scmp.ne.s32.totalorder %s92, %s106
    %p108 = scmp.eq.s32.totalorder %s19, 0
    %p109 = por %p107, %p108
    %s111 = sadd.s32 %s110, 1
    %p114 = scmp.eq.s32.totalorder %s13, 3
    %p115 = scmp.ne.s32.totalorder %s110, %s112
    %p116 = scmp.eq.s32.totalorder %s13, 0
    %p117 = por %p115, %p116
    %p118 = scmp.ne.s32.totalorder %s110, %s112
    %p119 = scmp.eq.s32.totalorder %s18, 3
    %p120 = por %p118, %p119
    %p121 = scmp.ne.s32.totalorder %s112, %s113
    %p122 = scmp.eq.s32.totalorder %s18, 0
    %p123 = por %p121, %p122
    %p124 = scmp.ne.s32.totalorder %s112, %s113
    %p125 = scmp.eq.s32.totalorder %s19, 3
    %p126 = por %p124, %p125
    %p128 = scmp.ne.s32.totalorder %s113, %s127
    %p129 = scmp.eq.s32.totalorder %s19, 0
    %p130 = por %p128, %p129
    %s131 = ssub.s32 %s13, %s20
    %p132 = scmp.eq.s32.totalorder %s131, 0
    %s134 = sadd.s32 %s133, 1
    %s135 = scalar_select %p132, %s133, %s134
    %p138 = pneg %p132
    %p139 = scmp.eq.s32.totalorder %s13, 3
    %p140 = por %p138, %p139
    %p141 = scmp.ne.s32.totalorder %s133, %s136
    %p142 = scmp.eq.s32.totalorder %s13, 0
    %p143 = por %p141, %p142
    %p144 = scmp.ne.s32.totalorder %s133, %s136
    %p145 = scmp.eq.s32.totalorder %s18, 3
    %p146 = por %p144, %p145
    %p147 = scmp.ne.s32.totalorder %s136, %s137
    %p148 = scmp.eq.s32.totalorder %s18, 0
    %p149 = por %p147, %p148
    %p150 = scmp.ne.s32.totalorder %s136, %s137
    %p151 = scmp.eq.s32.totalorder %s19, 3
    %p152 = por %p150, %p151
    %p154 = scmp.ne.s32.totalorder %s137, %s153
    %p155 = scmp.eq.s32.totalorder %s19, 0
    %p156 = por %p154, %p155
    %p157 = scmp.le.s32.totalorder 1, %s13
    %p158 = scmp.lt.s32.totalorder %s13, 5
    %p159 = pnand %p157, %p158
    %p160 = pneg %p159
    // Predicated region
    $region9: #{simple_block3d_forward.153} parent=5 // pred_check
      _
    $region10: #{simple_block3d_forward.153} parent=5 // pred_check_branch
      %162 = sbr.rel (%p159) target = $region12
    $region11: #{simple_block3d_forward.153} parent=5 // pred_region
      %s163 = ssub.s32 %s13, 1
      // Predicated region
      $region13: #{simple_block3d_forward.153} parent=11 // pred_check
        %p164 = pneg %p60
      $region14: #{simple_block3d_forward.153} parent=11 // pred_check_branch
        %166 = sbr.rel (%p164) target = $region16
      $region15: #{simple_block3d_forward.153} parent=11 // pred_region
        _
      $region16: #{simple_block3d_forward.153} parent=11 // pred_fallthru
        _
      // Predicated region
      $region17: #{simple_block3d_forward.153} parent=11 // pred_check
        %p167 = pneg %p81
      $region18: #{simple_block3d_forward.153} parent=11 // pred_check_branch
        %169 = sbr.rel (%p167) target = $region20
      $region19: #{simple_block3d_forward.153} parent=11 // pred_region
        _
      $region20: #{simple_block3d_forward.153} parent=11 // pred_fallthru
        _
      // Predicated region
      $region21: #{simple_block3d_forward.153} parent=11 // pred_check
        %p170 = pneg %p102
      $region22: #{simple_block3d_forward.153} parent=11 // pred_check_branch
        %172 = sbr.rel (%p170) target = $region24
      $region23: #{simple_block3d_forward.153} parent=11 // pred_region
        _
      $region24: #{simple_block3d_forward.153} parent=11 // pred_fallthru
        _
      // Predicated region
      $region25: #{simple_block3d_forward.153} parent=11 // pred_check
        %p173 = pneg %p123
      $region26: #{simple_block3d_forward.153} parent=11 // pred_check_branch
        %175 = sbr.rel (%p173) target = $region28
      $region27: #{simple_block3d_forward.153} parent=11 // pred_region
        _
      $region28: #{simple_block3d_forward.153} parent=11 // pred_fallthru
        _
    $region12: #{simple_block3d_forward.153} parent=5 // pred_fallthru
      _
    %p176 = scmp.lt.s32.totalorder %s13, 4
    // Predicated region
    $region29: #{simple_block3d_forward.153} parent=5 // pred_check
      %p177 = pneg %p176
    $region30: #{simple_block3d_forward.153} parent=5 // pred_check_branch
      %179 = sbr.rel (%p177) target = $region32
    $region31: #{simple_block3d_forward.153} parent=5 // pred_region
      // Predicated region
      $region33: #{simple_block3d_forward.153} parent=31 // pred_check
        %p180 = pneg %p33
      $region34: #{simple_block3d_forward.153} parent=31 // pred_check_branch
        %182 = sbr.rel (%p180) target = $region36
      $region35: #{simple_block3d_forward.153} parent=31 // pred_region
        %s183 = smul.u32 2, %s13
        %p184 = scmp.lt.s32.totalorder %s183, 7
        %s185 = scalar_select %p184, %s183, 7
        %s186 = smul.addr %s185, 8
        %s187 = scalar_lea.vmem %s0, %s186
        %s188 = smul.u32 2, %s13
      $region36: #{simple_block3d_forward.153} parent=31 // pred_fallthru
        _
    $region32: #{simple_block3d_forward.153} parent=5 // pred_fallthru
      _
    %p189 = scmp.le.s32.totalorder 1, %s13
    %p190 = scmp.lt.s32.totalorder %s13, 5
    %p191 = pnand %p189, %p190
    %p192 = pneg %p191
    // Predicated region
    $region37: #{simple_block3d_forward.153} parent=5 // pred_check
      _
    $region38: #{simple_block3d_forward.153} parent=5 // pred_check_branch
      %194 = sbr.rel (%p191) target = $region40
    $region39: #{simple_block3d_forward.153} parent=5 // pred_region
      %s195 = ssub.s32 %s13, 1
      %s196 = smul.u32 2, %s18
      %p197 = scmp.lt.s32.totalorder %s196, 7
      %s198 = scalar_select %p197, %s196, 7
      %s199 = smul.addr %s198, 8
      %s200 = scalar_lea.vmem %s0, %s199
      %p201 = pneg %p39
      %p202 = pneg %p36
      %p203 = pneg %p60
      %p204 = pneg %p57
      %p205 = pneg %p81
      %p206 = pneg %p78
      %p207 = pneg %p102
      %p208 = pneg %p99
      %p209 = pneg %p123
      %p210 = pneg %p120
      %p211 = pneg %p149
      %p212 = pneg %p146
      %s213 = smul.u32 2, %s18
      %p214 = scmp.lt.s32.totalorder %s213, 7
      %s215 = scalar_select %p214, %s213, 7
      %s216 = scalar_lea.vmem %s5, %s215
      %s217 = smul.u32 2, %s18
      %p218 = scmp.lt.s32.totalorder %s217, 7
      %s219 = scalar_select %p218, %s217, 7
      %s220 = smul.addr %s219, 8
      %s221 = scalar_lea.vmem %s0, %s220
      %s222 = smul.u32 2, %s18
      %s223 = smul.u32 2, %s18
      %p224 = scmp.lt.s32.totalorder %s223, 7
      %s225 = scalar_select %p224, %s223, 7
      %s226 = scalar_lea.vmem %s5, %s225
      %s227 = smul.u32 2, %s18
      %v228 = vld [vmem:[%s1] sm:$0xff]
      %v229 = vld [vmem:[%s1 + $0x8] sm:$0xff]
      %v230 = vld [vmem:[%s1 + $0x10] sm:$0xff]
      %v231 = vld [vmem:[%s1 + $0x18] sm:$0xff]
      %v232 = vld [vmem:[%s1 + $0x20] sm:$0xff]
      %v233 = vld [vmem:[%s1 + $0x28] sm:$0xff]
      %v234 = vld [vmem:[%s1 + $0x30] sm:$0xff]
      %v235 = vld [vmem:[%s1 + $0x38] sm:$0xff]
      %v236 = vld [vmem:[%s1 + $0x40] sm:$0xff]
      %v237 = vld [vmem:[%s1 + $0x48] sm:$0xff]
      %v238 = vld [vmem:[%s1 + $0x50] sm:$0xff]
      %v239 = vld [vmem:[%s1 + $0x58] sm:$0xff]
      %v240 = vld [vmem:[%s1 + $0x60] sm:$0xff]
      %v241 = vld [vmem:[%s1 + $0x68] sm:$0xff]
      %v242 = vld [vmem:[%s1 + $0x70] sm:$0xff]
      %v243 = vld [vmem:[%s1 + $0x78] sm:$0xff]
      %v244 = vld [vmem:[%s221] sm:$0xff]
      %v245 = vld [vmem:[%s221 + $0x8] sm:$0xff]
      %v246 = vld [vmem:[%s2] sm:$0xff]
      %v247 = vld [vmem:[%s2 + $0x8] sm:$0xff]
      %v248 = vld [vmem:[%s2 + $0x10] sm:$0xff]
      %v249 = vld [vmem:[%s2 + $0x18] sm:$0xff]
      %v250 = vld [vmem:[%s2 + $0x20] sm:$0xff]
      %v251 = vld [vmem:[%s2 + $0x28] sm:$0xff]
      %v252 = vld [vmem:[%s2 + $0x30] sm:$0xff]
      %v253 = vld [vmem:[%s2 + $0x38] sm:$0xff]
      %v254 = vld [vmem:[%s2 + $0x40] sm:$0xff]
      %v255 = vld [vmem:[%s2 + $0x48] sm:$0xff]
      %v256 = vld [vmem:[%s2 + $0x50] sm:$0xff]
      %v257 = vld [vmem:[%s2 + $0x58] sm:$0xff]
      %v258 = vld [vmem:[%s2 + $0x60] sm:$0xff]
      %v259 = vld [vmem:[%s2 + $0x68] sm:$0xff]
      %v260 = vld [vmem:[%s2 + $0x70] sm:$0xff]
      %v261 = vld [vmem:[%s2 + $0x78] sm:$0xff]
      %263 = vset.pattern.permute.xlu0 0
      %264 = vperm.xlu0 %263, %v246
      %v265 = vpop.permute.xlu0 %264
      %268 = vset.pattern.permute.xlu0 0
      %269 = vperm.xlu0 %268, %v247
      %v270 = vpop.permute.xlu0 %269
      %273 = vset.pattern.permute.xlu0 0
      %274 = vperm.xlu0 %273, %v248
      %v275 = vpop.permute.xlu0 %274
      %278 = vset.pattern.permute.xlu0 0
      %279 = vperm.xlu0 %278, %v249
      %v280 = vpop.permute.xlu0 %279
      %283 = vset.pattern.permute.xlu0 0
      %284 = vperm.xlu0 %283, %v250
      %v285 = vpop.permute.xlu0 %284
      %288 = vset.pattern.permute.xlu0 0
      %289 = vperm.xlu0 %288, %v251
      %v290 = vpop.permute.xlu0 %289
      %293 = vset.pattern.permute.xlu0 0
      %294 = vperm.xlu0 %293, %v252
      %v295 = vpop.permute.xlu0 %294
      %298 = vset.pattern.permute.xlu0 0
      %299 = vperm.xlu0 %298, %v253
      %v300 = vpop.permute.xlu0 %299
      %303 = vset.pattern.permute.xlu0 0
      %304 = vperm.xlu0 %303, %v254
      %v305 = vpop.permute.xlu0 %304
      %308 = vset.pattern.permute.xlu0 0
      %309 = vperm.xlu0 %308, %v255
      %v310 = vpop.permute.xlu0 %309
      %313 = vset.pattern.permute.xlu0 0
      %314 = vperm.xlu0 %313, %v256
      %v315 = vpop.permute.xlu0 %314
      %318 = vset.pattern.permute.xlu0 0
      %319 = vperm.xlu0 %318, %v257
      %v320 = vpop.permute.xlu0 %319
      %323 = vset.pattern.permute.xlu0 0
      %324 = vperm.xlu0 %323, %v258
      %v325 = vpop.permute.xlu0 %324
      %328 = vset.pattern.permute.xlu0 0
      %329 = vperm.xlu0 %328, %v259
      %v330 = vpop.permute.xlu0 %329
      %333 = vset.pattern.permute.xlu0 0
      %334 = vperm.xlu0 %333, %v260
      %v335 = vpop.permute.xlu0 %334
      %338 = vset.pattern.permute.xlu0 0
      %339 = vperm.xlu0 %338, %v261
      %v340 = vpop.permute.xlu0 %339
      %vm342 = vcmask 64512
      %v344 = vsel %vm342, %v228, 0
      %v347 = vsel %vm342, %v229, 0
      %v350 = vsel %vm342, %v230, 0
      %v353 = vsel %vm342, %v231, 0
      %v356 = vsel %vm342, %v232, 0
      %v359 = vsel %vm342, %v233, 0
      %v362 = vsel %vm342, %v234, 0
      %v365 = vsel %vm342, %v235, 0
      %v368 = vsel %vm342, %v236, 0
      %v371 = vsel %vm342, %v237, 0
      %v374 = vsel %vm342, %v238, 0
      %v377 = vsel %vm342, %v239, 0
      %v380 = vsel %vm342, %v240, 0
      %v383 = vsel %vm342, %v241, 0
      %v386 = vsel %vm342, %v242, 0
      %v389 = vsel %vm342, %v243, 0
      %391 = vmatprep.subr.mxu0 %v245
      %392 = vmatpush1.msra.mxu0 %v244
      %393 = vmatprep.subr.mxu0 0.0
      %394 = vmatpush1.msra.mxu0 0.0
      %395 = vmatprep.subr.mxu0 0.0
      %396 = vmatpush1.msra.mxu0 0.0
      %397 = vmatprep.subr.mxu0 0.0
      %398 = vmatpush1.msra.mxu0 0.0
      %399 = vmatprep.subr.mxu0 0.0
      %400 = vmatpush1.msra.mxu0 0.0
      %401 = vmatprep.subr.mxu0 0.0
      %402 = vmatpush1.msra.mxu0 0.0
      %403 = vmatprep.subr.mxu0 0.0
      %404 = vmatpush1.msra.mxu0 0.0
      %405 = vmatprep.subr.mxu0 0.0
      %406 = vmatpush1.msra.mxu0 0.0
      %407 = vmatprep.subr.mxu0 0.0
      %408 = vmatpush1.msra.mxu0 0.0
      %409 = vmatprep.subr.mxu0 0.0
      %410 = vmatpush1.msra.mxu0 0.0
      %411 = vmatprep.subr.mxu0 0.0
      %412 = vmatpush1.msra.mxu0 0.0
      %413 = vmatprep.subr.mxu0 0.0
      %414 = vmatpush1.msra.mxu0 0.0
      %415 = vmatprep.subr.mxu0 0.0
      %416 = vmatpush1.msra.mxu0 0.0
      %417 = vmatprep.subr.mxu0 0.0
      %418 = vmatpush1.msra.mxu0 0.0
      %419 = vmatprep.subr.mxu0 0.0
      %420 = vmatpush1.msra.mxu0 0.0
      %421 = vmatprep.subr.mxu0 0.0
      %422 = vmatpush1.msra.mxu0 0.0
      %423 = vmatprep.subr.mxu0 0.0
      %424 = vmatpush1.msra.mxu0 0.0
      %425 = vmatprep.subr.mxu0 0.0
      %426 = vmatpush1.msra.mxu0 0.0
      %427 = vmatprep.subr.mxu0 0.0
      %428 = vmatpush1.msra.mxu0 0.0
      %429 = vmatprep.subr.mxu0 0.0
      %430 = vmatpush1.msra.mxu0 0.0
      %431 = vmatprep.subr.mxu0 0.0
      %432 = vmatpush1.msra.mxu0 0.0
      %433 = vmatprep.subr.mxu0 0.0
      %434 = vmatpush1.msra.mxu0 0.0
      %435 = vmatprep.subr.mxu0 0.0
      %436 = vmatpush1.msra.mxu0 0.0
      %437 = vmatprep.subr.mxu0 0.0
      %438 = vmatpush1.msra.mxu0 0.0
      %439 = vmatprep.subr.mxu0 0.0
      %440 = vmatpush1.msra.mxu0 0.0
      %441 = vmatprep.subr.mxu0 0.0
      %442 = vmatpush1.msra.mxu0 0.0
      %443 = vmatprep.subr.mxu0 0.0
      %444 = vmatpush1.msra.mxu0 0.0
      %445 = vmatprep.subr.mxu0 0.0
      %446 = vmatpush1.msra.mxu0 0.0
      %447 = vmatprep.subr.mxu0 0.0
      %448 = vmatpush1.msra.mxu0 0.0
      %449 = vmatprep.subr.mxu0 0.0
      %450 = vmatpush1.msra.mxu0 0.0
      %451 = vmatprep.subr.mxu0 0.0
      %452 = vmatpush1.msra.mxu0 0.0
      %453 = vmatprep.subr.mxu0 0.0
      %454 = vmatpush1.msra.mxu0 0.0
      %455 = vmatprep.mubr.f32.mxu0 0.0
      %456 = vmatmul.mubr.f32.gmra.mrb[0].mxu0 %v344
      %v457 = vpop.f32.mrb[0].mxu0
      %v458 = vadd.f32 %v265, %v457
      %v459 = vpop.f32.mrb[0].mxu0
      %v460 = vadd.f32 %v265, %v459
      %461 = vmatprep.mubr.f32.mxu0 0.0
      %462 = vmatmul.mubr.f32.gmra.mrb[0].mxu0 %v347
      %v463 = vpop.f32.mrb[0].mxu0
      %v464 = vadd.f32 %v270, %v463
      %v465 = vpop.f32.mrb[0].mxu0
      %v466 = vadd.f32 %v270, %v465
      %467 = vmatprep.mubr.f32.mxu0 0.0
      %468 = vmatmul.mubr.f32.gmra.mrb[0].mxu0 %v350
      %v469 = vpop.f32.mrb[0].mxu0
      %v470 = vadd.f32 %v275, %v469
      %v471 = vpop.f32.mrb[0].mxu0
      %v472 = vadd.f32 %v275, %v471
      %473 = vmatprep.mubr.f32.mxu0 0.0
      %474 = vmatmul.mubr.f32.gmra.mrb[0].mxu0 %v353
      %v475 = vpop.f32.mrb[0].mxu0
      %v476 = vadd.f32 %v280, %v475
      %v477 = vpop.f32.mrb[0].mxu0
      %v478 = vadd.f32 %v280, %v477
      %479 = vmatprep.mubr.f32.mxu0 0.0
      %480 = vmatmul.mubr.f32.gmra.mrb[0].mxu0 %v356
      %v481 = vpop.f32.mrb[0].mxu0
      %v482 = vadd.f32 %v285, %v481
      %v483 = vpop.f32.mrb[0].mxu0
      %v484 = vadd.f32 %v285, %v483
      %485 = vmatprep.mubr.f32.mxu0 0.0
      %486 = vmatmul.mubr.f32.gmra.mrb[0].mxu0 %v359
      %v487 = vpop.f32.mrb[0].mxu0
      %v488 = vadd.f32 %v290, %v487
      %v489 = vpop.f32.mrb[0].mxu0
      %v490 = vadd.f32 %v290, %v489
      %491 = vmatprep.mubr.f32.mxu0 0.0
      %492 = vmatmul.mubr.f32.gmra.mrb[0].mxu0 %v362
      %v493 = vpop.f32.mrb[0].mxu0
      %v494 = vadd.f32 %v295, %v493
      %v495 = vpop.f32.mrb[0].mxu0
      %v496 = vadd.f32 %v295, %v495
      %497 = vmatprep.mubr.f32.mxu0 0.0
      %498 = vmatmul.mubr.f32.gmra.mrb[0].mxu0 %v365
      %v499 = vpop.f32.mrb[0].mxu0
      %v500 = vadd.f32 %v300, %v499
      %v501 = vpop.f32.mrb[0].mxu0
      %v502 = vadd.f32 %v300, %v501
      %503 = vmatprep.mubr.f32.mxu0 0.0
      %504 = vmatmul.mubr.f32.gmra.mrb[0].mxu0 %v368
      %v505 = vpop.f32.mrb[0].mxu0
      %v506 = vadd.f32 %v305, %v505
      %v507 = vpop.f32.mrb[0].mxu0
      %v508 = vadd.f32 %v305, %v507
      %509 = vmatprep.mubr.f32.mxu0 0.0
      %510 = vmatmul.mubr.f32.gmra.mrb[0].mxu0 %v371
      %v511 = vpop.f32.mrb[0].mxu0
      %v512 = vadd.f32 %v310, %v511
      %v513 = vpop.f32.mrb[0].mxu0
      %v514 = vadd.f32 %v310, %v513
      %515 = vmatprep.mubr.f32.mxu0 0.0
      %516 = vmatmul.mubr.f32.gmra.mrb[0].mxu0 %v374
      %v517 = vpop.f32.mrb[0].mxu0
      %v518 = vadd.f32 %v315, %v517
      %v519 = vpop.f32.mrb[0].mxu0
      %v520 = vadd.f32 %v315, %v519
      %521 = vmatprep.mubr.f32.mxu0 0.0
      %522 = vmatmul.mubr.f32.gmra.mrb[0].mxu0 %v377
      %v523 = vpop.f32.mrb[0].mxu0
      %v524 = vadd.f32 %v320, %v523
      %v525 = vpop.f32.mrb[0].mxu0
      %v526 = vadd.f32 %v320, %v525
      %527 = vmatprep.mubr.f32.mxu0 0.0
      %528 = vmatmul.mubr.f32.gmra.mrb[0].mxu0 %v380
      %v529 = vpop.f32.mrb[0].mxu0
      %v530 = vadd.f32 %v325, %v529
      %v531 = vpop.f32.mrb[0].mxu0
      %v532 = vadd.f32 %v325, %v531
      %533 = vmatprep.mubr.f32.mxu0 0.0
      %534 = vmatmul.mubr.f32.gmra.mrb[0].mxu0 %v383
      %v535 = vpop.f32.mrb[0].mxu0
      %v536 = vadd.f32 %v330, %v535
      %v537 = vpop.f32.mrb[0].mxu0
      %v538 = vadd.f32 %v330, %v537
      %539 = vmatprep.mubr.f32.mxu0 0.0
      %540 = vmatmul.mubr.f32.gmra.mrb[0].mxu0 %v386
      %v541 = vpop.f32.mrb[0].mxu0
      %v542 = vadd.f32 %v335, %v541
      %v543 = vpop.f32.mrb[0].mxu0
      %v544 = vadd.f32 %v335, %v543
      %545 = vmatprep.mubr.f32.mxu0 0.0
      %546 = vmatmul.mubr.f32.gmra.mrb[0].mxu0 %v389
      %v547 = vpop.f32.mrb[0].mxu0
      %v548 = vadd.f32 %v340, %v547
      %v549 = vpop.f32.mrb[0].mxu0
      %v550 = vadd.f32 %v340, %v549
      %551 = vdwg.mxu0
      %v552 = vmax.f32 %v458, 0.0
      %v553 = vmax.f32 %v460, 0.0
      %v554 = vmax.f32 %v464, 0.0
      %v555 = vmax.f32 %v466, 0.0
      %v556 = vmax.f32 %v470, 0.0
      %v557 = vmax.f32 %v472, 0.0
      %v558 = vmax.f32 %v476, 0.0
      %v559 = vmax.f32 %v478, 0.0
      %v560 = vmax.f32 %v482, 0.0
      %v561 = vmax.f32 %v484, 0.0
      %v562 = vmax.f32 %v488, 0.0
      %v563 = vmax.f32 %v490, 0.0
      %v564 = vmax.f32 %v494, 0.0
      %v565 = vmax.f32 %v496, 0.0
      %v566 = vmax.f32 %v500, 0.0
      %v567 = vmax.f32 %v502, 0.0
      %v568 = vmax.f32 %v506, 0.0
      %v569 = vmax.f32 %v508, 0.0
      %v570 = vmax.f32 %v512, 0.0
      %v571 = vmax.f32 %v514, 0.0
      %v572 = vmax.f32 %v518, 0.0
      %v573 = vmax.f32 %v520, 0.0
      %v574 = vmax.f32 %v524, 0.0
      %v575 = vmax.f32 %v526, 0.0
      %v576 = vmax.f32 %v530, 0.0
      %v577 = vmax.f32 %v532, 0.0
      %v578 = vmax.f32 %v536, 0.0
      %v579 = vmax.f32 %v538, 0.0
      %v580 = vmax.f32 %v542, 0.0
      %v581 = vmax.f32 %v544, 0.0
      %v582 = vmax.f32 %v548, 0.0
      %v583 = vmax.f32 %v550, 0.0
      %v584 = vld [vmem:[%s3] sm:$0x1]
      %v585 = vld [vmem:[#allocation2] sm:$0x1]
      %587 = vset.pattern.permute.xlu0 0
      %588 = vperm.xlu0 %587, %v585
      %v589 = vpop.permute.xlu0 %588
      %v591 = vlaneseq
      %v592 = vshrl.u32 %v591, 7
      %v593 = vsub.s32 0, %v592
      %v594 = vrot.slane %v589, %v593
      %595 = vmatprep.subr.mxu0 %v553
      %596 = vmatpush1.msra.mxu0 %v552
      %597 = vmatprep.subr.mxu0 %v555
      %598 = vmatpush1.msra.mxu0 %v554
      %599 = vmatprep.subr.mxu0 %v557
      %600 = vmatpush1.msra.mxu0 %v556
      %601 = vmatprep.subr.mxu0 %v559
      %602 = vmatpush1.msra.mxu0 %v558
      %603 = vmatprep.subr.mxu0 %v561
      %604 = vmatpush1.msra.mxu0 %v560
      %605 = vmatprep.subr.mxu0 %v563
      %606 = vmatpush1.msra.mxu0 %v562
      %607 = vmatprep.subr.mxu0 %v565
      %608 = vmatpush1.msra.mxu0 %v564
      %609 = vmatprep.subr.mxu0 %v567
      %610 = vmatpush1.msra.mxu0 %v566
      %611 = vmatprep.subr.mxu0 %v569
      %612 = vmatpush1.msra.mxu0 %v568
      %613 = vmatprep.subr.mxu0 %v571
      %614 = vmatpush1.msra.mxu0 %v570
      %615 = vmatprep.subr.mxu0 %v573
      %616 = vmatpush1.msra.mxu0 %v572
      %617 = vmatprep.subr.mxu0 %v575
      %618 = vmatpush1.msra.mxu0 %v574
      %619 = vmatprep.subr.mxu0 %v577
      %620 = vmatpush1.msra.mxu0 %v576
      %621 = vmatprep.subr.mxu0 %v579
      %622 = vmatpush1.msra.mxu0 %v578
      %623 = vmatprep.subr.mxu0 %v581
      %624 = vmatpush1.msra.mxu0 %v580
      %625 = vmatprep.subr.mxu0 %v583
      %626 = vmatpush1.msra.mxu0 %v582
      %627 = vmatprep.subr.mxu0 0.0
      %628 = vmatpush1.msra.mxu0 0.0
      %629 = vmatprep.subr.mxu0 0.0
      %630 = vmatpush1.msra.mxu0 0.0
      %631 = vmatprep.subr.mxu0 0.0
      %632 = vmatpush1.msra.mxu0 0.0
      %633 = vmatprep.subr.mxu0 0.0
      %634 = vmatpush1.msra.mxu0 0.0
      %635 = vmatprep.subr.mxu0 0.0
      %636 = vmatpush1.msra.mxu0 0.0
      %637 = vmatprep.subr.mxu0 0.0
      %638 = vmatpush1.msra.mxu0 0.0
      %639 = vmatprep.subr.mxu0 0.0
      %640 = vmatpush1.msra.mxu0 0.0
      %641 = vmatprep.subr.mxu0 0.0
      %642 = vmatpush1.msra.mxu0 0.0
      %643 = vmatprep.subr.mxu0 0.0
      %644 = vmatpush1.msra.mxu0 0.0
      %645 = vmatprep.subr.mxu0 0.0
      %646 = vmatpush1.msra.mxu0 0.0
      %647 = vmatprep.subr.mxu0 0.0
      %648 = vmatpush1.msra.mxu0 0.0
      %649 = vmatprep.subr.mxu0 0.0
      %650 = vmatpush1.msra.mxu0 0.0
      %651 = vmatprep.subr.mxu0 0.0
      %652 = vmatpush1.msra.mxu0 0.0
      %653 = vmatprep.subr.mxu0 0.0
      %654 = vmatpush1.msra.mxu0 0.0
      %655 = vmatprep.subr.mxu0 0.0
      %656 = vmatpush1.msra.mxu0 0.0
      %657 = vmatprep.subr.mxu0 0.0
      %658 = vmatpush1.msra.mxu0 0.0
      %659 = vmatprep.mubr.f32.mxu0 0.0
      %660 = vmatmul.mubr.f32.gmra.mrb[0].mxu0 %v584
      %v661 = vpop.f32.mrb[0].mxu0
      %v662 = vadd.f32 %v594, %v661
      %v663 = vpop.f32.mrb[0].mxu0
      %v664 = vadd.f32 %v594, %v663
      %665 = vdwg.mxu0
      %v668 = vcombine.low %v662, %v664
      %v670 = vunpack.c.l.s4 1966171168
      %v671 = vunpack.c.0.s8 %v670
      %v672 = vlaneseq
      %v673 = vshrl.u32 %v672, 7
      %v674 = vsub.s32 %v671, %v673
      %v675 = vrot.slane %v668, %v674
      %v677 = vunpack.c.l.s4 1966171168
      %v678 = vunpack.c.0.s8 %v677
      %v679 = vlaneseq
      %v680 = vshrl.u32 %v679, 7
      %v681 = vsub.s32 %v678, %v680
      %v682 = vrot.slane %v675, %v681
      %v684 = vlaneseq
      %vm685 = vcmp.ge.s32.totalorder %v684, 0
      %vm686 = vcmp.lt.s32.totalorder %v684, 256
      %vm687 = vmand %vm685, %vm686
      %688 = vst.msk [vmem:[%s226] sm:$0x3] %vm687, %v682
      %s689 = smul.u32 2, %s18
      %p690 = scmp.lt.s32.totalorder %s689, 7
      %s691 = scalar_select %p690, %s689, 7
      %s692 = scalar_lea.vmem %s5, %s691
      // Predicated region
      $region41: #{simple_block3d_forward.153} parent=39 // pred_check
        %p693 = pneg %p146
      $region42: #{simple_block3d_forward.153} parent=39 // pred_check_branch
        %695 = sbr.rel (%p693) target = $region44
      $region43: #{simple_block3d_forward.153} parent=39 // pred_region
        %s696 = smul.u32 2, %s18
      $region44: #{simple_block3d_forward.153} parent=39 // pred_fallthru
        _
    $region40: #{simple_block3d_forward.153} parent=5 // pred_fallthru
      _
    %p697 = scmp.le.s32.totalorder 2, %s13
    // Predicated region
    $region45: #{simple_block3d_forward.153} parent=5 // pred_check
      %p698 = pneg %p697
    $region46: #{simple_block3d_forward.153} parent=5 // pred_check_branch
      %700 = sbr.rel (%p698) target = $region48
    $region47: #{simple_block3d_forward.153} parent=5 // pred_region
      %s701 = ssub.s32 %s13, 2
      // Predicated region
      $region49: #{simple_block3d_forward.153} parent=47 // pred_check
        %p702 = pneg %p152
      $region50: #{simple_block3d_forward.153} parent=47 // pred_check_branch
        %704 = sbr.rel (%p702) target = $region52
      $region51: #{simple_block3d_forward.153} parent=47 // pred_region
        %s705 = smul.u32 2, %s19
        %p706 = scmp.lt.s32.totalorder %s705, 7
        %s707 = scalar_select %p706, %s705, 7
        %s708 = scalar_lea.vmem %s5, %s707
      $region52: #{simple_block3d_forward.153} parent=47 // pred_fallthru
        _
    $region48: #{simple_block3d_forward.153} parent=5 // pred_fallthru
      _
  $region6: #{simple_block3d_forward.153} parent=0 // loop_footer
    %s17 = sadd.s32 1, %s13
  $region7: #{simple_block3d_forward.153} parent=0 // loop_footer_branch
    %12 = sbr.rel target = $region3
  $region8: #{simple_block3d_forward.153} parent=0 // loop_exit
    _

</llo_original>
